<compile_context>
chip_gen: v7x
topology: tpu7x:2x2x1
jax: 0.10.0
libtpu: 0.0.40
codegen_flags: <defaults>
</compile_context>

<pallas_src>
import functools

import numpy as np
import jax
import jax.numpy as jnp
from jax.experimental import pallas as pl
from jax.experimental.pallas import tpu as pltpu


# ----------------------------- Pallas kernel --------------------------------

def _mlp_kernel(*refs, n_mats, gelu_mid, has_residual):
    """Generic fused matmul kernel on a (TM, K) pixel tile.

    refs = [x, (w0, b0), ..., (w_{n-1}, b_{n-1}), [residual], out]
    Computes y = x @ w0 + b0 [-> GELU] [@ w1 + b1] [+ residual].
    """
    x_ref, out_ref = refs[0], refs[-1]
    y = x_ref[...]
    idx = 1
    for m in range(n_mats):
        w_ref, b_ref = refs[idx], refs[idx + 1]
        idx += 2
        y = jnp.dot(y, w_ref[...], preferred_element_type=jnp.float32) + b_ref[...]
        if gelu_mid and m == 0 and n_mats > 1:
            # TODO(synk): tanh approximation; PyTorch nn.GELU default is exact erf.
            y = 0.5 * y * (1.0 + jnp.tanh(0.7978845608028654 *
                                          (y + 0.044715 * y * y * y)))
    if has_residual:
        y = y + refs[idx][...]
    out_ref[...] = y.astype(out_ref.dtype)


def fused_matmul(x, mats, *, gelu_mid=False, residual=None, tm=512):
    """x: (..., K); mats: [(W, b), ...].  Tiled over the pixel dim M."""
    lead, K = x.shape[:-1], x.shape[-1]
    M = int(np.prod(lead))
    cout = mats[-1][0].shape[1]
    TM = M if M <= tm else tm                 # tm is a multiple of 8
    grid = (pl.cdiv(M, TM),)

    args = [x.reshape(M, K)]
    in_specs = [pl.BlockSpec((TM, K), lambda i: (i, 0))]
    for w, b in mats:
        kin, kout = w.shape
        args += [w, b.reshape(1, kout)]
        in_specs += [pl.BlockSpec((kin, kout), lambda i: (0, 0)),
                     pl.BlockSpec((1, kout), lambda i: (0, 0))]
    if residual is not None:
        args.append(residual.reshape(M, cout))
        in_specs.append(pl.BlockSpec((TM, cout), lambda i: (i, 0)))

    out = pl.pallas_call(
        functools.partial(_mlp_kernel, n_mats=len(mats), gelu_mid=gelu_mid,
                          has_residual=residual is not None),
        out_shape=jax.ShapeDtypeStruct((M, cout), jnp.float32),
        grid=grid,
        in_specs=in_specs,
        out_specs=pl.BlockSpec((TM, cout), lambda i: (i, 0)),
        compiler_params=pltpu.CompilerParams(
            dimension_semantics=("parallel",),
            vmem_limit_bytes=32 * 1024 * 1024),
    )(*args)
    return out.reshape(*lead, cout)


# ----------------------- layout / patch-extraction glue ---------------------

def _patches3x3(x, mode):
    """(N,H,W,C) -> (N,H,W,9C); channel order (dy, dx, c).  mode: 'zero'|'edge'."""
    N, H, W, C = x.shape
    if mode == "edge":
        xp = jnp.pad(x, ((0, 0), (1, 1), (1, 1), (0, 0)), mode="edge")
    else:
        xp = jnp.pad(x, ((0, 0), (1, 1), (1, 1), (0, 0)))
    cols = [xp[:, dy:dy + H, dx:dx + W, :] for dy in range(3) for dx in range(3)]
    return jnp.concatenate(cols, axis=-1)


def space_to_phase(y):
    """(N,2H,2W,C) -> (N,H,W,4C); channel index = rowpar*2C + colpar*C + c."""
    N, H2, W2, C = y.shape
    H, W = H2 // 2, W2 // 2
    y = y.reshape(N, H, 2, W, 2, C)
    y = jnp.transpose(y, (0, 1, 3, 2, 4, 5))
    return y.reshape(N, H, W, 4 * C)


def phase_to_space(z):
    """(N,H,W,4C) -> (N,2H,2W,C); inverse of space_to_phase."""
    N, H, W, C4 = z.shape
    C = C4 // 4
    z = z.reshape(N, H, W, 2, 2, C)
    z = jnp.transpose(z, (0, 1, 3, 2, 4, 5))
    return z.reshape(N, 2 * H, 2 * W, C)


# --------------------------- fused-weight builders ---------------------------

def _haar_phase_matrix(cq):
    """(4, cq, 4cq): maps the 4 reduced phases (a,b,c,d) to the DWT band concat
    layout [LL_0..LL_{cq-1}, LH_0, HL_0, HH_0, LH_1, ...] (band fastest)."""
    # TODO(synk): sign/band convention of pytorch_wavelets approximated.
    signs = 0.5 * np.array([[1, 1, 1, 1],      # LL   (phases a, b, c, d)
                            [1, -1, 1, -1],    # LH
                            [1, 1, -1, -1],    # HL
                            [1, -1, -1, 1]],   # HH
                           np.float32)
    Hm = np.zeros((4, cq, 4 * cq), np.float32)
    for j in range(cq):
        for p in range(4):
            Hm[p, j, j] = signs[0, p]
            Hm[p, j, cq + 3 * j + 0] = signs[1, p]
            Hm[p, j, cq + 3 * j + 1] = signs[2, p]
            Hm[p, j, cq + 3 * j + 2] = signs[3, p]
    return jnp.asarray(Hm)


def _build_wave_ff1(red_w, red_b, ff1_w, ff1_b):
    """Fold 1x1 reduction + Haar DWT + band concat into ff1: (4*fd, d1)."""
    fd, cq = red_w.shape
    Hm = _haar_phase_matrix(cq)                              # (4, cq, fd)
    Wp = jnp.einsum("ij,pjk,kl->pil", red_w, Hm, ff1_w)      # (4, fd, d1)
    W1 = Wp.reshape(4 * fd, ff1_w.shape[1])                  # phase-major rows
    b1 = ff1_b + jnp.einsum("j,pjk,kl->l", red_b, Hm, ff1_w)
    return W1, b1


def _build_convt_patch_weight(ct_w, ct_b):
    """ConvTranspose2d(ffc, fd, 4, stride=2, padding=1) (BN folded) as a
    polyphase 3x3-patch matmul: (9*ffc, 4*fd); output channels phase-major."""
    ffc, fd = ct_w.shape[0], ct_w.shape[1]
    Wt = jnp.zeros((9 * ffc, 4 * fd), jnp.float32)
    for ry in range(2):
        for rx in range(2):
            ph = ry * 2 + rx
            for dyp in range(2):
                for dxp in range(2):
                    dy, dx = ry + dyp, rx + dxp             # offset in 3x3 patch
                    ky, kx = 3 - ry - 2 * dyp, 3 - rx - 2 * dxp
                    r0 = (dy * 3 + dx) * ffc
                    Wt = Wt.at[r0:r0 + ffc, ph * fd:(ph + 1) * fd].set(
                        ct_w[:, :, ky, kx])
    bt = jnp.tile(ct_b, 4)
    return Wt, bt


def _bilinear_phase_weight(C):
    """2x bilinear upsample (align_corners=False) as a 3x3-patch matmul."""
    Wb = np.zeros((9 * C, 4 * C), np.float32)
    for ry in range(2):
        for rx in range(2):
            ph = ry * 2 + rx
            for dyp in range(2):
                for dxp in range(2):
                    dy, dx = ry + dyp, rx + dxp
                    wy = 0.25 if dyp == ry else 0.75
                    wx = 0.25 if dxp == rx else 0.75
                    for c in range(C):
                        Wb[(dy * 3 + dx) * C + c, ph * C + c] = wy * wx
    return jnp.asarray(Wb)


# ------------------------------- op wrappers ---------------------------------

def bilinear_up2x(x):
    """nn.Upsample(scale_factor=2, mode='bilinear', align_corners=False), NHWC."""
    C = x.shape[-1]
    Wb = _bilinear_phase_weight(C)
    ph = fused_matmul(_patches3x3(x, "edge"),
                      [(Wb, jnp.zeros((4 * C,), jnp.float32))])
    return phase_to_space(ph)


def conv3x3(x, w2d, b):
    """3x3 conv, stride 1, padding 1.  w2d: (9*Cin, Cout) in (dy, dx, ci) row order."""
    return fused_matmul(_patches3x3(x, "zero"), [(w2d, b)])


# --------------------------------- model ------------------------------------

def prepare_params(params):
    """Build the fused / folded weights once from raw (torch-layout) params."""
    prep = {}
    w = params["p1c1_w"]
    prep["p1c1"] = (w.reshape(-1, w.shape[-1]), params["p1c1_b"])
    w = params["p1c2_w"]
    prep["p1c2"] = (w.reshape(-1, w.shape[-1]), params["p1c2_b"])
    # final Conv3x3(fd->fd/2) folded with Conv1x1(fd/2->1)  (exact)
    w3 = params["fin1_w"].reshape(-1, params["fin1_w"].shape[-1])
    prep["final"] = (w3 @ params["fin2_w"],
                     params["fin1_b"] @ params["fin2_w"] + params["fin2_b"])
    prep["layers"] = []
    for lp in params["layers"]:
        W1, b1 = _build_wave_ff1(lp["red_w"], lp["red_b"], lp["ff1_w"], lp["ff1_b"])
        Wt, bt = _build_convt_patch_weight(lp["ct_w"], lp["ct_b"])
        prep["layers"].append(dict(W1=W1, b1=b1,
                                   W2=lp["ff2_w"], b2=lp["ff2_b"],
                                   Wt=Wt, bt=bt))
    return prep


def wavemix_sr_forward(img, prep):
    """img: NCHW (N, 3, H, W) YCbCr -> NCHW (N, 3, 2H, 2W)."""
    x = jnp.transpose(img, (0, 2, 3, 1)).astype(jnp.float32)   # -> NHWC
    y = x[..., 0:1]
    crcb = x[..., 1:3]

    # path1: Upsample(2x bilinear) -> Conv3x3(1->fd/2) -> Conv3x3(fd/2->fd)
    y = bilinear_up2x(y)
    y = conv3x3(y, *prep["p1c1"])
    y = conv3x3(y, *prep["p1c2"])

    # Waveblock stack, entirely in phase space (N, H, W, 4*fd):
    z = space_to_phase(y)
    for lp in prep["layers"]:
        # reduction + Haar DWT + concat + ff1 + GELU + ff2 (Dropout = identity)
        h = fused_matmul(z, [(lp["W1"], lp["b1"]), (lp["W2"], lp["b2"])],
                         gelu_mid=True)
        # ConvTranspose2d(4, s=2, p=1) + BN (folded), residual add fused
        z = fused_matmul(_patches3x3(h, "zero"), [(lp["Wt"], lp["bt"])],
                         residual=z)
    y = phase_to_space(z)

    # final: Conv3x3(fd->fd/2) + Conv1x1(fd/2->1), folded into one matmul
    y = fused_matmul(_patches3x3(y, "zero"), [prep["final"]])

    # path2: Upsample(2x bilinear) on CrCb
    crcb = bilinear_up2x(crcb)

    out = jnp.concatenate([y, crcb], axis=-1)                  # (N,2H,2W,3)
    return jnp.transpose(out, (0, 3, 1, 2))                    # -> NCHW


def init_params(key, *, depth=2, final_dim=16, ff_channel=16, mult=1):
    keys = iter(jax.random.split(key, 8 + 12 * depth))

    def nrm(shape, s=0.05):
        return s * jax.random.normal(next(keys), shape, jnp.float32)

    half = final_dim // 2
    params = dict(
        p1c1_w=nrm((3, 3, 1, half)), p1c1_b=nrm((half,)),
        p1c2_w=nrm((3, 3, half, final_dim)), p1c2_b=nrm((final_dim,)),
        fin1_w=nrm((3, 3, final_dim, half)), fin1_b=nrm((half,)),
        fin2_w=nrm((half, 1)), fin2_b=nrm((1,)),
        layers=[],
    )
    eps = 1e-5
    for _ in range(depth):
        gamma = 1.0 + nrm((final_dim,))
        beta = nrm((final_dim,))
        mean = jnp.zeros((final_dim,), jnp.float32)
        var = jnp.ones((final_dim,), jnp.float32)
        scale = gamma / jnp.sqrt(var + eps)
        ct_w = nrm((ff_channel, final_dim, 4, 4))              # torch (Cin,Cout,kh,kw)
        ct_b = nrm((final_dim,))
        params["layers"].append(dict(
            red_w=nrm((final_dim, final_dim // 4)), red_b=nrm((final_dim // 4,)),
            ff1_w=nrm((final_dim, final_dim * mult)), ff1_b=nrm((final_dim * mult,)),
            ff2_w=nrm((final_dim * mult, ff_channel)), ff2_b=nrm((ff_channel,)),
            ct_w=ct_w * scale[None, :, None, None],            # BatchNorm (eval) folded
            ct_b=(ct_b - mean) * scale + beta,
        ))
    return params


if __name__ == "__main__":
    key = jax.random.PRNGKey(0)
    k_img, k_par = jax.random.split(key)

    img = jax.random.normal(k_img, (2, 3, 16, 16), jnp.float32)   # NCHW YCbCr
    params = init_params(k_par, depth=2, final_dim=16, ff_channel=16, mult=1)
    prep = prepare_params(params)

    fwd = jax.jit(wavemix_sr_forward)
    out = jax.block_until_ready(fwd(img, prep))

    assert out.shape == (2, 3, 32, 32), out.shape
    assert bool(jnp.all(jnp.isfinite(out)))
    print("KERNEL_OK")
</pallas_src>

<mosaic_0001>
module attributes {stable_mosaic.version = 11 : i64} {
  func.func @_mlp_kernel(%arg0: i32, %arg1: memref<512x9xf32, #tpu.memory_space<vmem>>, %arg2: memref<9x4xf32, #tpu.memory_space<vmem>>, %arg3: memref<1x4xf32, #tpu.memory_space<vmem>>, %arg4: memref<512x4xf32, #tpu.memory_space<vmem>>) attributes {dimension_semantics = [#tpu.dimension_semantics<parallel>], iteration_bounds = array<i64: 1>, scalar_prefetch = 0 : i64, scratch_operands = 0 : i64, tpu.core_type = #tpu.core_type<tc>, window_params = [{transform_indices = @transform_0, window_bounds = array<i64: 512, 9>}, {pipeline_mode = #tpu.pipeline_mode<synchronous>, transform_indices = @transform_1, window_bounds = array<i64: 9, 4>}, {pipeline_mode = #tpu.pipeline_mode<synchronous>, transform_indices = @transform_2, window_bounds = array<i64: 1, 4>}, {transform_indices = @transform_3, window_bounds = array<i64: 512, 4>}]} {
    %c0 = arith.constant 0 : index
    %c0_0 = arith.constant 0 : index
    %0 = vector.load %arg1[%c0, %c0_0] : memref<512x9xf32, #tpu.memory_space<vmem>>, vector<512x9xf32>
    %c0_1 = arith.constant 0 : index
    %c0_2 = arith.constant 0 : index
    %1 = vector.load %arg2[%c0_1, %c0_2] : memref<9x4xf32, #tpu.memory_space<vmem>>, vector<9x4xf32>
    %cst = arith.constant dense<0.000000e+00> : vector<512x4xf32>
    %2 = tpu.matmul %0, %1, %cst {dimension_numbers = #tpu.dot_dimension_numbers<[1], [0], [0], [1], [0, 0, 1, 1], [], []>} : vector<512x9xf32>, vector<9x4xf32>, vector<512x4xf32> -> vector<512x4xf32>
    %c0_3 = arith.constant 0 : index
    %c0_4 = arith.constant 0 : index
    %3 = vector.load %arg3[%c0_3, %c0_4] : memref<1x4xf32, #tpu.memory_space<vmem>>, vector<1x4xf32>
    %4 = vector.broadcast %3 : vector<1x4xf32> to vector<512x4xf32>
    %5 = arith.addf %2, %4 : vector<512x4xf32>
    %c0_5 = arith.constant 0 : index
    %c0_6 = arith.constant 0 : index
    %6 = vector.load %arg4[%c0_5, %c0_6] : memref<512x4xf32, #tpu.memory_space<vmem>>, vector<512x4xf32>
    tpu.vector_store %arg4[%c0_5, %c0_6], %5 {strides = array<i32>} : memref<512x4xf32, #tpu.memory_space<vmem>>, vector<512x4xf32>,
    return
  }
  func.func @transform_0(%arg0: i32) -> (i32, i32) {
    %c0_i32 = arith.constant 0 : i32
    %c0_i32_0 = arith.constant 0 : i32
    return %arg0, %c0_i32 : i32, i32
  }
  func.func @transform_1(%arg0: i32) -> (i32, i32) {
    %c0_i32 = arith.constant 0 : i32
    %c0_i32_0 = arith.constant 0 : i32
    %c0_i32_1 = arith.constant 0 : i32
    return %c0_i32, %c0_i32_0 : i32, i32
  }
  func.func @transform_2(%arg0: i32) -> (i32, i32) {
    %c0_i32 = arith.constant 0 : i32
    %c0_i32_0 = arith.constant 0 : i32
    %c0_i32_1 = arith.constant 0 : i32
    return %c0_i32, %c0_i32_0 : i32, i32
  }
  func.func @transform_3(%arg0: i32) -> (i32, i32) {
    %c0_i32 = arith.constant 0 : i32
    %c0_i32_0 = arith.constant 0 : i32
    return %arg0, %c0_i32 : i32, i32
  }
}

module attributes {stable_mosaic.version = 11 : i64} {
  func.func @_mlp_kernel(%arg0: i32, %arg1: memref<512x9xf32, #tpu.memory_space<vmem>>, %arg2: memref<9x8xf32, #tpu.memory_space<vmem>>, %arg3: memref<1x8xf32, #tpu.memory_space<vmem>>, %arg4: memref<512x8xf32, #tpu.memory_space<vmem>>) attributes {dimension_semantics = [#tpu.dimension_semantics<parallel>], iteration_bounds = array<i64: 4>, scalar_prefetch = 0 : i64, scratch_operands = 0 : i64, tpu.core_type = #tpu.core_type<tc>, window_params = [{transform_indices = @transform_0, window_bounds = array<i64: 512, 9>}, {pipeline_mode = #tpu.pipeline_mode<synchronous>, transform_indices = @transform_1, window_bounds = array<i64: 9, 8>}, {pipeline_mode = #tpu.pipeline_mode<synchronous>, transform_indices = @transform_2, window_bounds = array<i64: 1, 8>}, {transform_indices = @transform_3, window_bounds = array<i64: 512, 8>}]} {
    %c0 = arith.constant 0 : index
    %c0_0 = arith.constant 0 : index
    %0 = vector.load %arg1[%c0, %c0_0] : memref<512x9xf32, #tpu.memory_space<vmem>>, vector<512x9xf32>
    %c0_1 = arith.constant 0 : index
    %c0_2 = arith.constant 0 : index
    %1 = vector.load %arg2[%c0_1, %c0_2] : memref<9x8xf32, #tpu.memory_space<vmem>>, vector<9x8xf32>
    %cst = arith.constant dense<0.000000e+00> : vector<512x8xf32>
    %2 = tpu.matmul %0, %1, %cst {dimension_numbers = #tpu.dot_dimension_numbers<[1], [0], [0], [1], [0, 0, 1, 1], [], []>} : vector<512x9xf32>, vector<9x8xf32>, vector<512x8xf32> -> vector<512x8xf32>
    %c0_3 = arith.constant 0 : index
    %c0_4 = arith.constant 0 : index
    %3 = vector.load %arg3[%c0_3, %c0_4] : memref<1x8xf32, #tpu.memory_space<vmem>>, vector<1x8xf32>
    %4 = vector.broadcast %3 : vector<1x8xf32> to vector<512x8xf32>
    %5 = arith.addf %2, %4 : vector<512x8xf32>
    %c0_5 = arith.constant 0 : index
    %c0_6 = arith.constant 0 : index
    %6 = vector.load %arg4[%c0_5, %c0_6] : memref<512x8xf32, #tpu.memory_space<vmem>>, vector<512x8xf32>
    tpu.vector_store %arg4[%c0_5, %c0_6], %5 {strides = array<i32>} : memref<512x8xf32, #tpu.memory_space<vmem>>, vector<512x8xf32>,
    return
  }
  func.func @transform_0(%arg0: i32) -> (i32, i32) {
    %c0_i32 = arith.constant 0 : i32
    %c0_i32_0 = arith.constant 0 : i32
    return %arg0, %c0_i32 : i32, i32
  }
  func.func @transform_1(%arg0: i32) -> (i32, i32) {
    %c0_i32 = arith.constant 0 : i32
    %c0_i32_0 = arith.constant 0 : i32
    %c0_i32_1 = arith.constant 0 : i32
    return %c0_i32, %c0_i32_0 : i32, i32
  }
  func.func @transform_2(%arg0: i32) -> (i32, i32) {
    %c0_i32 = arith.constant 0 : i32
    %c0_i32_0 = arith.constant 0 : i32
    %c0_i32_1 = arith.constant 0 : i32
    return %c0_i32, %c0_i32_0 : i32, i32
  }
  func.func @transform_3(%arg0: i32) -> (i32, i32) {
    %c0_i32 = arith.constant 0 : i32
    %c0_i32_0 = arith.constant 0 : i32
    return %arg0, %c0_i32 : i32, i32
  }
}

module attributes {stable_mosaic.version = 11 : i64} {
  func.func @_mlp_kernel(%arg0: i32, %arg1: memref<512x72xf32, #tpu.memory_space<vmem>>, %arg2: memref<72x16xf32, #tpu.memory_space<vmem>>, %arg3: memref<1x16xf32, #tpu.memory_space<vmem>>, %arg4: memref<512x16xf32, #tpu.memory_space<vmem>>) attributes {dimension_semantics = [#tpu.dimension_semantics<parallel>], iteration_bounds = array<i64: 4>, scalar_prefetch = 0 : i64, scratch_operands = 0 : i64, tpu.core_type = #tpu.core_type<tc>, window_params = [{transform_indices = @transform_0, window_bounds = array<i64: 512, 72>}, {pipeline_mode = #tpu.pipeline_mode<synchronous>, transform_indices = @transform_1, window_bounds = array<i64: 72, 16>}, {pipeline_mode = #tpu.pipeline_mode<synchronous>, transform_indices = @transform_2, window_bounds = array<i64: 1, 16>}, {transform_indices = @transform_3, window_bounds = array<i64: 512, 16>}]} {
    %c0 = arith.constant 0 : index
    %c0_0 = arith.constant 0 : index
    %0 = vector.load %arg1[%c0, %c0_0] : memref<512x72xf32, #tpu.memory_space<vmem>>, vector<512x72xf32>
    %c0_1 = arith.constant 0 : index
    %c0_2 = arith.constant 0 : index
    %1 = vector.load %arg2[%c0_1, %c0_2] : memref<72x16xf32, #tpu.memory_space<vmem>>, vector<72x16xf32>
    %cst = arith.constant dense<0.000000e+00> : vector<512x16xf32>
    %2 = tpu.matmul %0, %1, %cst {dimension_numbers = #tpu.dot_dimension_numbers<[1], [0], [0], [1], [0, 0, 1, 1], [], []>} : vector<512x72xf32>, vector<72x16xf32>, vector<512x16xf32> -> vector<512x16xf32>
    %c0_3 = arith.constant 0 : index
    %c0_4 = arith.constant 0 : index
    %3 = vector.load %arg3[%c0_3, %c0_4] : memref<1x16xf32, #tpu.memory_space<vmem>>, vector<1x16xf32>
    %4 = vector.broadcast %3 : vector<1x16xf32> to vector<512x16xf32>
    %5 = arith.addf %2, %4 : vector<512x16xf32>
    %c0_5 = arith.constant 0 : index
    %c0_6 = arith.constant 0 : index
    %6 = vector.load %arg4[%c0_5, %c0_6] : memref<512x16xf32, #tpu.memory_space<vmem>>, vector<512x16xf32>
    tpu.vector_store %arg4[%c0_5, %c0_6], %5 {strides = array<i32>} : memref<512x16xf32, #tpu.memory_space<vmem>>, vector<512x16xf32>,
    return
  }
  func.func @transform_0(%arg0: i32) -> (i32, i32) {
    %c0_i32 = arith.constant 0 : i32
    %c0_i32_0 = arith.constant 0 : i32
    return %arg0, %c0_i32 : i32, i32
  }
  func.func @transform_1(%arg0: i32) -> (i32, i32) {
    %c0_i32 = arith.constant 0 : i32
    %c0_i32_0 = arith.constant 0 : i32
    %c0_i32_1 = arith.constant 0 : i32
    return %c0_i32, %c0_i32_0 : i32, i32
  }
  func.func @transform_2(%arg0: i32) -> (i32, i32) {
    %c0_i32 = arith.constant 0 : i32
    %c0_i32_0 = arith.constant 0 : i32
    %c0_i32_1 = arith.constant 0 : i32
    return %c0_i32, %c0_i32_0 : i32, i32
  }
  func.func @transform_3(%arg0: i32) -> (i32, i32) {
    %c0_i32 = arith.constant 0 : i32
    %c0_i32_0 = arith.constant 0 : i32
    return %arg0, %c0_i32 : i32, i32
  }
}

module attributes {stable_mosaic.version = 11 : i64} {
  func.func @_mlp_kernel(%arg0: i32, %arg1: memref<512x64xf32, #tpu.memory_space<vmem>>, %arg2: memref<64x16xf32, #tpu.memory_space<vmem>>, %arg3: memref<1x16xf32, #tpu.memory_space<vmem>>, %arg4: memref<16x16xf32, #tpu.memory_space<vmem>>, %arg5: memref<1x16xf32, #tpu.memory_space<vmem>>, %arg6: memref<512x16xf32, #tpu.memory_space<vmem>>) attributes {dimension_semantics = [#tpu.dimension_semantics<parallel>], iteration_bounds = array<i64: 1>, scalar_prefetch = 0 : i64, scratch_operands = 0 : i64, tpu.core_type = #tpu.core_type<tc>, window_params = [{transform_indices = @transform_0, window_bounds = array<i64: 512, 64>}, {pipeline_mode = #tpu.pipeline_mode<synchronous>, transform_indices = @transform_1, window_bounds = array<i64: 64, 16>}, {pipeline_mode = #tpu.pipeline_mode<synchronous>, transform_indices = @transform_2, window_bounds = array<i64: 1, 16>}, {pipeline_mode = #tpu.pipeline_mode<synchronous>, transform_indices = @transform_3, window_bounds = array<i64: 16, 16>}, {pipeline_mode = #tpu.pipeline_mode<synchronous>, transform_indices = @transform_4, window_bounds = array<i64: 1, 16>}, {transform_indices = @transform_5, window_bounds = array<i64: 512, 16>}]} {
    %c0 = arith.constant 0 : index
    %c0_0 = arith.constant 0 : index
    %0 = vector.load %arg1[%c0, %c0_0] : memref<512x64xf32, #tpu.memory_space<vmem>>, vector<512x64xf32>
    %c0_1 = arith.constant 0 : index
    %c0_2 = arith.constant 0 : index
    %1 = vector.load %arg2[%c0_1, %c0_2] : memref<64x16xf32, #tpu.memory_space<vmem>>, vector<64x16xf32>
    %cst = arith.constant dense<0.000000e+00> : vector<512x16xf32>
    %2 = tpu.matmul %0, %1, %cst {dimension_numbers = #tpu.dot_dimension_numbers<[1], [0], [0], [1], [0, 0, 1, 1], [], []>} : vector<512x64xf32>, vector<64x16xf32>, vector<512x16xf32> -> vector<512x16xf32>
    %c0_3 = arith.constant 0 : index
    %c0_4 = arith.constant 0 : index
    %3 = vector.load %arg3[%c0_3, %c0_4] : memref<1x16xf32, #tpu.memory_space<vmem>>, vector<1x16xf32>
    %4 = vector.broadcast %3 : vector<1x16xf32> to vector<512x16xf32>
    %5 = arith.addf %2, %4 : vector<512x16xf32>
    %cst_5 = arith.constant 5.000000e-01 : f32
    %6 = vector.broadcast %cst_5 : f32 to vector<512x16xf32>
    %7 = arith.mulf %6, %5 : vector<512x16xf32>
    %cst_6 = arith.constant 4.471500e-02 : f32
    %8 = vector.broadcast %cst_6 : f32 to vector<512x16xf32>
    %9 = arith.mulf %8, %5 : vector<512x16xf32>
    %10 = arith.mulf %9, %5 : vector<512x16xf32>
    %11 = arith.mulf %10, %5 : vector<512x16xf32>
    %12 = arith.addf %5, %11 : vector<512x16xf32>
    %cst_7 = arith.constant 0.797884583 : f32
    %13 = vector.broadcast %cst_7 : f32 to vector<512x16xf32>
    %14 = arith.mulf %13, %12 : vector<512x16xf32>
    %15 = math.tanh %14 : vector<512x16xf32>
    %cst_8 = arith.constant 1.000000e+00 : f32
    %16 = vector.broadcast %cst_8 : f32 to vector<512x16xf32>
    %17 = arith.addf %16, %15 : vector<512x16xf32>
    %18 = arith.mulf %7, %17 : vector<512x16xf32>
    %c0_9 = arith.constant 0 : index
    %c0_10 = arith.constant 0 : index
    %19 = vector.load %arg4[%c0_9, %c0_10] : memref<16x16xf32, #tpu.memory_space<vmem>>, vector<16x16xf32>
    %cst_11 = arith.constant dense<0.000000e+00> : vector<512x16xf32>
    %20 = tpu.matmul %18, %19, %cst_11 {dimension_numbers = #tpu.dot_dimension_numbers<[1], [0], [0], [1], [0, 0, 1, 1], [], []>} : vector<512x16xf32>, vector<16x16xf32>, vector<512x16xf32> -> vector<512x16xf32>
    %c0_12 = arith.constant 0 : index
    %c0_13 = arith.constant 0 : index
    %21 = vector.load %arg5[%c0_12, %c0_13] : memref<1x16xf32, #tpu.memory_space<vmem>>, vector<1x16xf32>
    %22 = vector.broadcast %21 : vector<1x16xf32> to vector<512x16xf32>
    %23 = arith.addf %20, %22 : vector<512x16xf32>
    %c0_14 = arith.constant 0 : index
    %c0_15 = arith.constant 0 : index
    %24 = vector.load %arg6[%c0_14, %c0_15] : memref<512x16xf32, #tpu.memory_space<vmem>>, vector<512x16xf32>
    tpu.vector_store %arg6[%c0_14, %c0_15], %23 {strides = array<i32>} : memref<512x16xf32, #tpu.memory_space<vmem>>, vector<512x16xf32>,
    return
  }
  func.func @transform_0(%arg0: i32) -> (i32, i32) {
    %c0_i32 = arith.constant 0 : i32
    %c0_i32_0 = arith.constant 0 : i32
    return %arg0, %c0_i32 : i32, i32
  }
  func.func @transform_1(%arg0: i32) -> (i32, i32) {
    %c0_i32 = arith.constant 0 : i32
    %c0_i32_0 = arith.constant 0 : i32
    %c0_i32_1 = arith.constant 0 : i32
    return %c0_i32, %c0_i32_0 : i32, i32
  }
  func.func @transform_2(%arg0: i32) -> (i32, i32) {
    %c0_i32 = arith.constant 0 : i32
    %c0_i32_0 = arith.constant 0 : i32
    %c0_i32_1 = arith.constant 0 : i32
    return %c0_i32, %c0_i32_0 : i32, i32
  }
  func.func @transform_3(%arg0: i32) -> (i32, i32) {
    %c0_i32 = arith.constant 0 : i32
    %c0_i32_0 = arith.constant 0 : i32
    %c0_i32_1 = arith.constant 0 : i32
    return %c0_i32, %c0_i32_0 : i32, i32
  }
  func.func @transform_4(%arg0: i32) -> (i32, i32) {
    %c0_i32 = arith.constant 0 : i32
    %c0_i32_0 = arith.constant 0 : i32
    %c0_i32_1 = arith.constant 0 : i32
    return %c0_i32, %c0_i32_0 : i32, i32
  }
  func.func @transform_5(%arg0: i32) -> (i32, i32) {
    %c0_i32 = arith.constant 0 : i32
    %c0_i32_0 = arith.constant 0 : i32
    return %arg0, %c0_i32 : i32, i32
  }
}

module attributes {stable_mosaic.version = 11 : i64} {
  func.func @_mlp_kernel(%arg0: i32, %arg1: memref<512x144xf32, #tpu.memory_space<vmem>>, %arg2: memref<144x64xf32, #tpu.memory_space<vmem>>, %arg3: memref<1x64xf32, #tpu.memory_space<vmem>>, %arg4: memref<512x64xf32, #tpu.memory_space<vmem>>, %arg5: memref<512x64xf32, #tpu.memory_space<vmem>>) attributes {dimension_semantics = [#tpu.dimension_semantics<parallel>], iteration_bounds = array<i64: 1>, scalar_prefetch = 0 : i64, scratch_operands = 0 : i64, tpu.core_type = #tpu.core_type<tc>, window_params = [{transform_indices = @transform_0, window_bounds = array<i64: 512, 144>}, {pipeline_mode = #tpu.pipeline_mode<synchronous>, transform_indices = @transform_1, window_bounds = array<i64: 144, 64>}, {pipeline_mode = #tpu.pipeline_mode<synchronous>, transform_indices = @transform_2, window_bounds = array<i64: 1, 64>}, {transform_indices = @transform_3, window_bounds = array<i64: 512, 64>}, {transform_indices = @transform_4, window_bounds = array<i64: 512, 64>}]} {
    %c0 = arith.constant 0 : index
    %c0_0 = arith.constant 0 : index
    %0 = vector.load %arg1[%c0, %c0_0] : memref<512x144xf32, #tpu.memory_space<vmem>>, vector<512x144xf32>
    %c0_1 = arith.constant 0 : index
    %c0_2 = arith.constant 0 : index
    %1 = vector.load %arg2[%c0_1, %c0_2] : memref<144x64xf32, #tpu.memory_space<vmem>>, vector<144x64xf32>
    %cst = arith.constant dense<0.000000e+00> : vector<512x64xf32>
    %2 = tpu.matmul %0, %1, %cst {dimension_numbers = #tpu.dot_dimension_numbers<[1], [0], [0], [1], [0, 0, 1, 1], [], []>} : vector<512x144xf32>, vector<144x64xf32>, vector<512x64xf32> -> vector<512x64xf32>
    %c0_3 = arith.constant 0 : index
    %c0_4 = arith.constant 0 : index
    %3 = vector.load %arg3[%c0_3, %c0_4] : memref<1x64xf32, #tpu.memory_space<vmem>>, vector<1x64xf32>
    %4 = vector.broadcast %3 : vector<1x64xf32> to vector<512x64xf32>
    %5 = arith.addf %2, %4 : vector<512x64xf32>
    %c0_5 = arith.constant 0 : index
    %c0_6 = arith.constant 0 : index
    %6 = vector.load %arg4[%c0_5, %c0_6] : memref<512x64xf32, #tpu.memory_space<vmem>>, vector<512x64xf32>
    %7 = arith.addf %5, %6 : vector<512x64xf32>
    %c0_7 = arith.constant 0 : index
    %c0_8 = arith.constant 0 : index
    %8 = vector.load %arg5[%c0_7, %c0_8] : memref<512x64xf32, #tpu.memory_space<vmem>>, vector<512x64xf32>
    tpu.vector_store %arg5[%c0_7, %c0_8], %7 {strides = array<i32>} : memref<512x64xf32, #tpu.memory_space<vmem>>, vector<512x64xf32>,
    return
  }
  func.func @transform_0(%arg0: i32) -> (i32, i32) {
    %c0_i32 = arith.constant 0 : i32
    %c0_i32_0 = arith.constant 0 : i32
    return %arg0, %c0_i32 : i32, i32
  }
  func.func @transform_1(%arg0: i32) -> (i32, i32) {
    %c0_i32 = arith.constant 0 : i32
    %c0_i32_0 = arith.constant 0 : i32
    %c0_i32_1 = arith.constant 0 : i32
    return %c0_i32, %c0_i32_0 : i32, i32
  }
  func.func @transform_2(%arg0: i32) -> (i32, i32) {
    %c0_i32 = arith.constant 0 : i32
    %c0_i32_0 = arith.constant 0 : i32
    %c0_i32_1 = arith.constant 0 : i32
    return %c0_i32, %c0_i32_0 : i32, i32
  }
  func.func @transform_3(%arg0: i32) -> (i32, i32) {
    %c0_i32 = arith.constant 0 : i32
    %c0_i32_0 = arith.constant 0 : i32
    return %arg0, %c0_i32 : i32, i32
  }
  func.func @transform_4(%arg0: i32) -> (i32, i32) {
    %c0_i32 = arith.constant 0 : i32
    %c0_i32_0 = arith.constant 0 : i32
    return %arg0, %c0_i32 : i32, i32
  }
}

module attributes {stable_mosaic.version = 11 : i64} {
  func.func @_mlp_kernel(%arg0: i32, %arg1: memref<512x144xf32, #tpu.memory_space<vmem>>, %arg2: memref<144x1xf32, #tpu.memory_space<vmem>>, %arg3: memref<1x1xf32, #tpu.memory_space<vmem>>, %arg4: memref<512x1xf32, #tpu.memory_space<vmem>>) attributes {dimension_semantics = [#tpu.dimension_semantics<parallel>], iteration_bounds = array<i64: 4>, scalar_prefetch = 0 : i64, scratch_operands = 0 : i64, tpu.core_type = #tpu.core_type<tc>, window_params = [{transform_indices = @transform_0, window_bounds = array<i64: 512, 144>}, {pipeline_mode = #tpu.pipeline_mode<synchronous>, transform_indices = @transform_1, window_bounds = array<i64: 144, 1>}, {pipeline_mode = #tpu.pipeline_mode<synchronous>, transform_indices = @transform_2, window_bounds = array<i64: 1, 1>}, {transform_indices = @transform_3, window_bounds = array<i64: 512, 1>}]} {
    %c0 = arith.constant 0 : index
    %c0_0 = arith.constant 0 : index
    %0 = vector.load %arg1[%c0, %c0_0] : memref<512x144xf32, #tpu.memory_space<vmem>>, vector<512x144xf32>
    %c0_1 = arith.constant 0 : index
    %c0_2 = arith.constant 0 : index
    %1 = vector.load %arg2[%c0_1, %c0_2] : memref<144x1xf32, #tpu.memory_space<vmem>>, vector<144x1xf32>
    %cst = arith.constant dense<0.000000e+00> : vector<512x1xf32>
    %2 = tpu.matmul %0, %1, %cst {dimension_numbers = #tpu.dot_dimension_numbers<[1], [0], [0], [1], [0, 0, 1, 1], [], []>} : vector<512x144xf32>, vector<144x1xf32>, vector<512x1xf32> -> vector<512x1xf32>
    %c0_3 = arith.constant 0 : index
    %c0_4 = arith.constant 0 : index
    %3 = vector.load %arg3[%c0_3, %c0_4] : memref<1x1xf32, #tpu.memory_space<vmem>>, vector<1x1xf32>
    %4 = vector.broadcast %3 : vector<1x1xf32> to vector<512x1xf32>
    %5 = arith.addf %2, %4 : vector<512x1xf32>
    %c0_5 = arith.constant 0 : index
    %c0_6 = arith.constant 0 : index
    %6 = vector.load %arg4[%c0_5, %c0_6] : memref<512x1xf32, #tpu.memory_space<vmem>>, vector<512x1xf32>
    tpu.vector_store %arg4[%c0_5, %c0_6], %5 {strides = array<i32>} : memref<512x1xf32, #tpu.memory_space<vmem>>, vector<512x1xf32>,
    return
  }
  func.func @transform_0(%arg0: i32) -> (i32, i32) {
    %c0_i32 = arith.constant 0 : i32
    %c0_i32_0 = arith.constant 0 : i32
    return %arg0, %c0_i32 : i32, i32
  }
  func.func @transform_1(%arg0: i32) -> (i32, i32) {
    %c0_i32 = arith.constant 0 : i32
    %c0_i32_0 = arith.constant 0 : i32
    %c0_i32_1 = arith.constant 0 : i32
    return %c0_i32, %c0_i32_0 : i32, i32
  }
  func.func @transform_2(%arg0: i32) -> (i32, i32) {
    %c0_i32 = arith.constant 0 : i32
    %c0_i32_0 = arith.constant 0 : i32
    %c0_i32_1 = arith.constant 0 : i32
    return %c0_i32, %c0_i32_0 : i32, i32
  }
  func.func @transform_3(%arg0: i32) -> (i32, i32) {
    %c0_i32 = arith.constant 0 : i32
    %c0_i32_0 = arith.constant 0 : i32
    return %arg0, %c0_i32 : i32, i32
  }
}

module attributes {stable_mosaic.version = 11 : i64} {
  func.func @_mlp_kernel(%arg0: i32, %arg1: memref<512x18xf32, #tpu.memory_space<vmem>>, %arg2: memref<18x8xf32, #tpu.memory_space<vmem>>, %arg3: memref<1x8xf32, #tpu.memory_space<vmem>>, %arg4: memref<512x8xf32, #tpu.memory_space<vmem>>) attributes {dimension_semantics = [#tpu.dimension_semantics<parallel>], iteration_bounds = array<i64: 1>, scalar_prefetch = 0 : i64, scratch_operands = 0 : i64, tpu.core_type = #tpu.core_type<tc>, window_params = [{transform_indices = @transform_0, window_bounds = array<i64: 512, 18>}, {pipeline_mode = #tpu.pipeline_mode<synchronous>, transform_indices = @transform_1, window_bounds = array<i64: 18, 8>}, {pipeline_mode = #tpu.pipeline_mode<synchronous>, transform_indices = @transform_2, window_bounds = array<i64: 1, 8>}, {transform_indices = @transform_3, window_bounds = array<i64: 512, 8>}]} {
    %c0 = arith.constant 0 : index
    %c0_0 = arith.constant 0 : index
    %0 = vector.load %arg1[%c0, %c0_0] : memref<512x18xf32, #tpu.memory_space<vmem>>, vector<512x18xf32>
    %c0_1 = arith.constant 0 : index
    %c0_2 = arith.constant 0 : index
    %1 = vector.load %arg2[%c0_1, %c0_2] : memref<18x8xf32, #tpu.memory_space<vmem>>, vector<18x8xf32>
    %cst = arith.constant dense<0.000000e+00> : vector<512x8xf32>
    %2 = tpu.matmul %0, %1, %cst {dimension_numbers = #tpu.dot_dimension_numbers<[1], [0], [0], [1], [0, 0, 1, 1], [], []>} : vector<512x18xf32>, vector<18x8xf32>, vector<512x8xf32> -> vector<512x8xf32>
    %c0_3 = arith.constant 0 : index
    %c0_4 = arith.constant 0 : index
    %3 = vector.load %arg3[%c0_3, %c0_4] : memref<1x8xf32, #tpu.memory_space<vmem>>, vector<1x8xf32>
    %4 = vector.broadcast %3 : vector<1x8xf32> to vector<512x8xf32>
    %5 = arith.addf %2, %4 : vector<512x8xf32>
    %c0_5 = arith.constant 0 : index
    %c0_6 = arith.constant 0 : index
    %6 = vector.load %arg4[%c0_5, %c0_6] : memref<512x8xf32, #tpu.memory_space<vmem>>, vector<512x8xf32>
    tpu.vector_store %arg4[%c0_5, %c0_6], %5 {strides = array<i32>} : memref<512x8xf32, #tpu.memory_space<vmem>>, vector<512x8xf32>,
    return
  }
  func.func @transform_0(%arg0: i32) -> (i32, i32) {
    %c0_i32 = arith.constant 0 : i32
    %c0_i32_0 = arith.constant 0 : i32
    return %arg0, %c0_i32 : i32, i32
  }
  func.func @transform_1(%arg0: i32) -> (i32, i32) {
    %c0_i32 = arith.constant 0 : i32
    %c0_i32_0 = arith.constant 0 : i32
    %c0_i32_1 = arith.constant 0 : i32
    return %c0_i32, %c0_i32_0 : i32, i32
  }
  func.func @transform_2(%arg0: i32) -> (i32, i32) {
    %c0_i32 = arith.constant 0 : i32
    %c0_i32_0 = arith.constant 0 : i32
    %c0_i32_1 = arith.constant 0 : i32
    return %c0_i32, %c0_i32_0 : i32, i32
  }
  func.func @transform_3(%arg0: i32) -> (i32, i32) {
    %c0_i32 = arith.constant 0 : i32
    %c0_i32_0 = arith.constant 0 : i32
    return %arg0, %c0_i32 : i32, i32
  }
}

</mosaic_0001>

<llo_original>
// kernel: wavemix_sr_forward.9
$region0: #{wavemix_sr_forward.9}
  #allocation0 [shape = 'u32[]', space=smem, size = 0x4, offset = 0x4, fixed_abs, tag = 'smem constant byte address 0x4 - core index']
  #allocation1 [shape = 'u32[144,128]{1,0:T(1,128)}', space=vmem, size = 0x12000, scoped, tag = 'internal scratch']
  %s0 = inlined_call_operand.vmem [shape: f32[512,9], index: 0, kind: input, shape index: {}]
  %s1 = inlined_call_operand.hbm [shape: f32[9,4], index: 1, kind: input, shape index: {}]
  %s2 = inlined_call_operand.vmem [shape: f32[1,4], index: 2, kind: input, shape index: {}]
  %s3 = inlined_call_operand.vmem [shape: f32[512,4], index: 3, kind: output, shape index: {}]
  %s4 = sld [smem:[#allocation0]]
  $region26: #{wavemix_sr_forward.9} parent=0
    _
  %s6 = ssub.s32 1, %s4
  %s7 = scalar_select 0, %s6, %s4
  $region1: #{wavemix_sr_forward.9} parent=0
    #allocation2 [shape = 'u8[8192]{0}', space=vmem, size = 0x2000, scoped, tag = 'input window, operand 1, single buffered']
    #allocation3 [shape = 's32[1]{0}', space=sflag, size = 0x4, scoped, tag = 'scoped memory for wavemix_sr_forward.9']
    %8 = vsyncpa [#allocation3], 0
    // Predicated region
    $region2: #{wavemix_sr_forward.9} parent=1 // pred_check
      _
    $region3: #{wavemix_sr_forward.9} parent=1 // pred_check_branch
      %10 = sbr.rel (0) target = $region5
    $region4: #{wavemix_sr_forward.9} parent=1 // pred_region
      _
    $region5: #{wavemix_sr_forward.9} parent=1 // pred_fallthru
      _
    // Predicated region
    $region6: #{wavemix_sr_forward.9} parent=1 // pred_check
      _
    $region7: #{wavemix_sr_forward.9} parent=1 // pred_check_branch
      %12 = sbr.rel (0) target = $region9
    $region8: #{wavemix_sr_forward.9} parent=1 // pred_region
      %s14 = ssub.s32 256, 256
      %15 = vsyncadd [#allocation3], %s14
      %s16 = sshll.u32 [#allocation2], 4
      %s17 = int_to_ptr.vmem [resolvable:$true] %s16
      %22 = dma.hbm_to_vmem [thread:$0]  %s1, 256, %s17, [#allocation3], 128, 128, 8
    $region9: #{wavemix_sr_forward.9} parent=1 // pred_fallthru
      _
    // Predicated region
    $region10: #{wavemix_sr_forward.9} parent=1 // pred_check
      _
    $region11: #{wavemix_sr_forward.9} parent=1 // pred_check_branch
      %24 = sbr.rel (0) target = $region13
    $region12: #{wavemix_sr_forward.9} parent=1 // pred_region
      _
    $region13: #{wavemix_sr_forward.9} parent=1 // pred_fallthru
      _
    // Predicated region
    $region14: #{wavemix_sr_forward.9} parent=1 // pred_check
      _
    $region15: #{wavemix_sr_forward.9} parent=1 // pred_check_branch
      %26 = sbr.rel (0) target = $region17
    $region16: #{wavemix_sr_forward.9} parent=1 // pred_region
      %27 = dma.done [#allocation3], 256
    $region17: #{wavemix_sr_forward.9} parent=1 // pred_fallthru
      _
    %v28 = vld [vmem:[%s0] sm:$0xff]
    %v29 = vld [vmem:[%s0 + $0x8] sm:$0xff]
    %v30 = vld [vmem:[%s0 + $0x10] sm:$0xff]
    %v31 = vld [vmem:[%s0 + $0x18] sm:$0xff]
    %v32 = vld [vmem:[%s0 + $0x20] sm:$0xff]
    %v33 = vld [vmem:[%s0 + $0x28] sm:$0xff]
    %v34 = vld [vmem:[%s0 + $0x30] sm:$0xff]
    %v35 = vld [vmem:[%s0 + $0x38] sm:$0xff]
    %v36 = vld [vmem:[%s0 + $0x40] sm:$0xff]
    %v37 = vld [vmem:[%s0 + $0x48] sm:$0xff]
    %v38 = vld [vmem:[%s0 + $0x50] sm:$0xff]
    %v39 = vld [vmem:[%s0 + $0x58] sm:$0xff]
    %v40 = vld [vmem:[%s0 + $0x60] sm:$0xff]
    %v41 = vld [vmem:[%s0 + $0x68] sm:$0xff]
    %v42 = vld [vmem:[%s0 + $0x70] sm:$0xff]
    %v43 = vld [vmem:[%s0 + $0x78] sm:$0xff]
    %v44 = vld [vmem:[%s0 + $0x80] sm:$0xff]
    %v45 = vld [vmem:[%s0 + $0x88] sm:$0xff]
    %v46 = vld [vmem:[%s0 + $0x90] sm:$0xff]
    %v47 = vld [vmem:[%s0 + $0x98] sm:$0xff]
    %v48 = vld [vmem:[%s0 + $0xa0] sm:$0xff]
    %v49 = vld [vmem:[%s0 + $0xa8] sm:$0xff]
    %v50 = vld [vmem:[%s0 + $0xb0] sm:$0xff]
    %v51 = vld [vmem:[%s0 + $0xb8] sm:$0xff]
    %v52 = vld [vmem:[%s0 + $0xc0] sm:$0xff]
    %v53 = vld [vmem:[%s0 + $0xc8] sm:$0xff]
    %v54 = vld [vmem:[%s0 + $0xd0] sm:$0xff]
    %v55 = vld [vmem:[%s0 + $0xd8] sm:$0xff]
    %v56 = vld [vmem:[%s0 + $0xe0] sm:$0xff]
    %v57 = vld [vmem:[%s0 + $0xe8] sm:$0xff]
    %v58 = vld [vmem:[%s0 + $0xf0] sm:$0xff]
    %v59 = vld [vmem:[%s0 + $0xf8] sm:$0xff]
    %v60 = vld [vmem:[%s0 + $0x100] sm:$0xff]
    %v61 = vld [vmem:[%s0 + $0x108] sm:$0xff]
    %v62 = vld [vmem:[%s0 + $0x110] sm:$0xff]
    %v63 = vld [vmem:[%s0 + $0x118] sm:$0xff]
    %v64 = vld [vmem:[%s0 + $0x120] sm:$0xff]
    %v65 = vld [vmem:[%s0 + $0x128] sm:$0xff]
    %v66 = vld [vmem:[%s0 + $0x130] sm:$0xff]
    %v67 = vld [vmem:[%s0 + $0x138] sm:$0xff]
    %v68 = vld [vmem:[%s0 + $0x140] sm:$0xff]
    %v69 = vld [vmem:[%s0 + $0x148] sm:$0xff]
    %v70 = vld [vmem:[%s0 + $0x150] sm:$0xff]
    %v71 = vld [vmem:[%s0 + $0x158] sm:$0xff]
    %v72 = vld [vmem:[%s0 + $0x160] sm:$0xff]
    %v73 = vld [vmem:[%s0 + $0x168] sm:$0xff]
    %v74 = vld [vmem:[%s0 + $0x170] sm:$0xff]
    %v75 = vld [vmem:[%s0 + $0x178] sm:$0xff]
    %v76 = vld [vmem:[%s0 + $0x180] sm:$0xff]
    %v77 = vld [vmem:[%s0 + $0x188] sm:$0xff]
    %v78 = vld [vmem:[%s0 + $0x190] sm:$0xff]
    %v79 = vld [vmem:[%s0 + $0x198] sm:$0xff]
    %v80 = vld [vmem:[%s0 + $0x1a0] sm:$0xff]
    %v81 = vld [vmem:[%s0 + $0x1a8] sm:$0xff]
    %v82 = vld [vmem:[%s0 + $0x1b0] sm:$0xff]
    %v83 = vld [vmem:[%s0 + $0x1b8] sm:$0xff]
    %v84 = vld [vmem:[%s0 + $0x1c0] sm:$0xff]
    %v85 = vld [vmem:[%s0 + $0x1c8] sm:$0xff]
    %v86 = vld [vmem:[%s0 + $0x1d0] sm:$0xff]
    %v87 = vld [vmem:[%s0 + $0x1d8] sm:$0xff]
    %v88 = vld [vmem:[%s0 + $0x1e0] sm:$0xff]
    %v89 = vld [vmem:[%s0 + $0x1e8] sm:$0xff]
    %v90 = vld [vmem:[%s0 + $0x1f0] sm:$0xff]
    %v91 = vld [vmem:[%s0 + $0x1f8] sm:$0xff]
    %v92 = vld [vmem:[#allocation2] sm:$0xff]
    %v93 = vld [vmem:[#allocation2 + $0x8] sm:$0x1]
    %v94 = vld [vmem:[%s2] sm:$0x1]
    %v96 = vlaneseq
    %v97 = vshrl.u32 %v96, 7
    %v98 = vsub.s32 0, %v97
    %v99 = vrot.slane %v94, %v98
    %vm101 = vcmask 72704
    %v103 = vsel %vm101, %v28, 0
    %v106 = vsel %vm101, %v29, 0
    %v109 = vsel %vm101, %v30, 0
    %v112 = vsel %vm101, %v31, 0
    %v115 = vsel %vm101, %v32, 0
    %v118 = vsel %vm101, %v33, 0
    %v121 = vsel %vm101, %v34, 0
    %v124 = vsel %vm101, %v35, 0
    %v127 = vsel %vm101, %v36, 0
    %v130 = vsel %vm101, %v37, 0
    %v133 = vsel %vm101, %v38, 0
    %v136 = vsel %vm101, %v39, 0
    %v139 = vsel %vm101, %v40, 0
    %v142 = vsel %vm101, %v41, 0
    %v145 = vsel %vm101, %v42, 0
    %v148 = vsel %vm101, %v43, 0
    %v151 = vsel %vm101, %v44, 0
    %v154 = vsel %vm101, %v45, 0
    %v157 = vsel %vm101, %v46, 0
    %v160 = vsel %vm101, %v47, 0
    %v163 = vsel %vm101, %v48, 0
    %v166 = vsel %vm101, %v49, 0
    %v169 = vsel %vm101, %v50, 0
    %v172 = vsel %vm101, %v51, 0
    %v175 = vsel %vm101, %v52, 0
    %v178 = vsel %vm101, %v53, 0
    %v181 = vsel %vm101, %v54, 0
    %v184 = vsel %vm101, %v55, 0
    %v187 = vsel %vm101, %v56, 0
    %v190 = vsel %vm101, %v57, 0
    %v193 = vsel %vm101, %v58, 0
    %v196 = vsel %vm101, %v59, 0
    %v199 = vsel %vm101, %v60, 0
    %v202 = vsel %vm101, %v61, 0
    %v205 = vsel %vm101, %v62, 0
    %v208 = vsel %vm101, %v63, 0
    %v211 = vsel %vm101, %v64, 0
    %v214 = vsel %vm101, %v65, 0
    %v217 = vsel %vm101, %v66, 0
    %v220 = vsel %vm101, %v67, 0
    %v223 = vsel %vm101, %v68, 0
    %v226 = vsel %vm101, %v69, 0
    %v229 = vsel %vm101, %v70, 0
    %v232 = vsel %vm101, %v71, 0
    %v235 = vsel %vm101, %v72, 0
    %v238 = vsel %vm101, %v73, 0
    %v241 = vsel %vm101, %v74, 0
    %v244 = vsel %vm101, %v75, 0
    %v247 = vsel %vm101, %v76, 0
    %v250 = vsel %vm101, %v77, 0
    %v253 = vsel %vm101, %v78, 0
    %v256 = vsel %vm101, %v79, 0
    %v259 = vsel %vm101, %v80, 0
    %v262 = vsel %vm101, %v81, 0
    %v265 = vsel %vm101, %v82, 0
    %v268 = vsel %vm101, %v83, 0
    %v271 = vsel %vm101, %v84, 0
    %v274 = vsel %vm101, %v85, 0
    %v277 = vsel %vm101, %v86, 0
    %v280 = vsel %vm101, %v87, 0
    %v283 = vsel %vm101, %v88, 0
    %v286 = vsel %vm101, %v89, 0
    %v289 = vsel %vm101, %v90, 0
    %v292 = vsel %vm101, %v91, 0
    %vm294 = vcmask 1040384
    %v296 = vsel %vm294, %v93, 0
    %298 = vmatprep.subr.mxu0 0.0
    %299 = vmatpush1.msra.mxu0 %v92
    %300 = vmatprep.subr.mxu0 0.0
    %301 = vmatpush1.msra.mxu0 %v296
    %302 = vmatprep.subr.mxu0 0.0
    %303 = vmatpush1.msra.mxu0 0.0
    %304 = vmatprep.subr.mxu0 0.0
    %305 = vmatpush1.msra.mxu0 0.0
    %306 = vmatprep.subr.mxu0 0.0
    %307 = vmatpush1.msra.mxu0 0.0
    %308 = vmatprep.subr.mxu0 0.0
    %309 = vmatpush1.msra.mxu0 0.0
    %310 = vmatprep.subr.mxu0 0.0
    %311 = vmatpush1.msra.mxu0 0.0
    %312 = vmatprep.subr.mxu0 0.0
    %313 = vmatpush1.msra.mxu0 0.0
    %314 = vmatprep.subr.mxu0 0.0
    %315 = vmatpush1.msra.mxu0 0.0
    %316 = vmatprep.subr.mxu0 0.0
    %317 = vmatpush1.msra.mxu0 0.0
    %318 = vmatprep.subr.mxu0 0.0
    %319 = vmatpush1.msra.mxu0 0.0
    %320 = vmatprep.subr.mxu0 0.0
    %321 = vmatpush1.msra.mxu0 0.0
    %322 = vmatprep.subr.mxu0 0.0
    %323 = vmatpush1.msra.mxu0 0.0
    %324 = vmatprep.subr.mxu0 0.0
    %325 = vmatpush1.msra.mxu0 0.0
    %326 = vmatprep.subr.mxu0 0.0
    %327 = vmatpush1.msra.mxu0 0.0
    %328 = vmatprep.subr.mxu0 0.0
    %329 = vmatpush1.msra.mxu0 0.0
    %330 = vmatprep.subr.mxu0 0.0
    %331 = vmatpush1.msra.mxu0 0.0
    %332 = vmatprep.subr.mxu0 0.0
    %333 = vmatpush1.msra.mxu0 0.0
    %334 = vmatprep.subr.mxu0 0.0
    %335 = vmatpush1.msra.mxu0 0.0
    %336 = vmatprep.subr.mxu0 0.0
    %337 = vmatpush1.msra.mxu0 0.0
    %338 = vmatprep.subr.mxu0 0.0
    %339 = vmatpush1.msra.mxu0 0.0
    %340 = vmatprep.subr.mxu0 0.0
    %341 = vmatpush1.msra.mxu0 0.0
    %342 = vmatprep.subr.mxu0 0.0
    %343 = vmatpush1.msra.mxu0 0.0
    %344 = vmatprep.subr.mxu0 0.0
    %345 = vmatpush1.msra.mxu0 0.0
    %346 = vmatprep.subr.mxu0 0.0
    %347 = vmatpush1.msra.mxu0 0.0
    %348 = vmatprep.subr.mxu0 0.0
    %349 = vmatpush1.msra.mxu0 0.0
    %350 = vmatprep.subr.mxu0 0.0
    %351 = vmatpush1.msra.mxu0 0.0
    %352 = vmatprep.subr.mxu0 0.0
    %353 = vmatpush1.msra.mxu0 0.0
    %354 = vmatprep.subr.mxu0 0.0
    %355 = vmatpush1.msra.mxu0 0.0
    %356 = vmatprep.subr.mxu0 0.0
    %357 = vmatpush1.msra.mxu0 0.0
    %358 = vmatprep.subr.mxu0 0.0
    %359 = vmatpush1.msra.mxu0 0.0
    %360 = vmatprep.subr.mxu0 0.0
    %361 = vmatpush1.msra.mxu0 0.0
    %362 = vmatprep.mubr.f32.mxu0 0.0
    %363 = vmatmul.mubr.f32.gmra.mrb[0].mxu0 %v103
    %v364 = vpop.f32.mrb[0].mxu0
    %v365 = vadd.f32 %v99, %v364
    %v366 = vpop.f32.mrb[0].mxu0
    %367 = vmatprep.mubr.f32.mxu0 0.0
    %368 = vmatmul.mubr.f32.gmra.mrb[0].mxu0 %v106
    %v369 = vpop.f32.mrb[0].mxu0
    %v370 = vadd.f32 %v99, %v369
    %v371 = vpop.f32.mrb[0].mxu0
    %372 = vmatprep.mubr.f32.mxu0 0.0
    %373 = vmatmul.mubr.f32.gmra.mrb[0].mxu0 %v109
    %v374 = vpop.f32.mrb[0].mxu0
    %v375 = vadd.f32 %v99, %v374
    %v376 = vpop.f32.mrb[0].mxu0
    %377 = vmatprep.mubr.f32.mxu0 0.0
    %378 = vmatmul.mubr.f32.gmra.mrb[0].mxu0 %v112
    %v379 = vpop.f32.mrb[0].mxu0
    %v380 = vadd.f32 %v99, %v379
    %v381 = vpop.f32.mrb[0].mxu0
    %382 = vmatprep.mubr.f32.mxu0 0.0
    %383 = vmatmul.mubr.f32.gmra.mrb[0].mxu0 %v115
    %v384 = vpop.f32.mrb[0].mxu0
    %v385 = vadd.f32 %v99, %v384
    %v386 = vpop.f32.mrb[0].mxu0
    %387 = vmatprep.mubr.f32.mxu0 0.0
    %388 = vmatmul.mubr.f32.gmra.mrb[0].mxu0 %v118
    %v389 = vpop.f32.mrb[0].mxu0
    %v390 = vadd.f32 %v99, %v389
    %v391 = vpop.f32.mrb[0].mxu0
    %392 = vmatprep.mubr.f32.mxu0 0.0
    %393 = vmatmul.mubr.f32.gmra.mrb[0].mxu0 %v121
    %v394 = vpop.f32.mrb[0].mxu0
    %v395 = vadd.f32 %v99, %v394
    %v396 = vpop.f32.mrb[0].mxu0
    %397 = vmatprep.mubr.f32.mxu0 0.0
    %398 = vmatmul.mubr.f32.gmra.mrb[0].mxu0 %v124
    %v399 = vpop.f32.mrb[0].mxu0
    %v400 = vadd.f32 %v99, %v399
    %v401 = vpop.f32.mrb[0].mxu0
    %402 = vmatprep.mubr.f32.mxu0 0.0
    %403 = vmatmul.mubr.f32.gmra.mrb[0].mxu0 %v127
    %v404 = vpop.f32.mrb[0].mxu0
    %v405 = vadd.f32 %v99, %v404
    %v406 = vpop.f32.mrb[0].mxu0
    %407 = vmatprep.mubr.f32.mxu0 0.0
    %408 = vmatmul.mubr.f32.gmra.mrb[0].mxu0 %v130
    %v409 = vpop.f32.mrb[0].mxu0
    %v410 = vadd.f32 %v99, %v409
    %v411 = vpop.f32.mrb[0].mxu0
    %412 = vmatprep.mubr.f32.mxu0 0.0
    %413 = vmatmul.mubr.f32.gmra.mrb[0].mxu0 %v133
    %v414 = vpop.f32.mrb[0].mxu0
    %v415 = vadd.f32 %v99, %v414
    %v416 = vpop.f32.mrb[0].mxu0
    %417 = vmatprep.mubr.f32.mxu0 0.0
    %418 = vmatmul.mubr.f32.gmra.mrb[0].mxu0 %v136
    %v419 = vpop.f32.mrb[0].mxu0
    %v420 = vadd.f32 %v99, %v419
    %v421 = vpop.f32.mrb[0].mxu0
    %422 = vmatprep.mubr.f32.mxu0 0.0
    %423 = vmatmul.mubr.f32.gmra.mrb[0].mxu0 %v139
    %v424 = vpop.f32.mrb[0].mxu0
    %v425 = vadd.f32 %v99, %v424
    %v426 = vpop.f32.mrb[0].mxu0
    %427 = vmatprep.mubr.f32.mxu0 0.0
    %428 = vmatmul.mubr.f32.gmra.mrb[0].mxu0 %v142
    %v429 = vpop.f32.mrb[0].mxu0
    %v430 = vadd.f32 %v99, %v429
    %v431 = vpop.f32.mrb[0].mxu0
    %432 = vmatprep.mubr.f32.mxu0 0.0
    %433 = vmatmul.mubr.f32.gmra.mrb[0].mxu0 %v145
    %v434 = vpop.f32.mrb[0].mxu0
    %v435 = vadd.f32 %v99, %v434
    %v436 = vpop.f32.mrb[0].mxu0
    %437 = vmatprep.mubr.f32.mxu0 0.0
    %438 = vmatmul.mubr.f32.gmra.mrb[0].mxu0 %v148
    %v439 = vpop.f32.mrb[0].mxu0
    %v440 = vadd.f32 %v99, %v439
    %v441 = vpop.f32.mrb[0].mxu0
    %442 = vmatprep.mubr.f32.mxu0 0.0
    %443 = vmatmul.mubr.f32.gmra.mrb[0].mxu0 %v151
    %v444 = vpop.f32.mrb[0].mxu0
    %v445 = vadd.f32 %v99, %v444
    %v446 = vpop.f32.mrb[0].mxu0
    %447 = vmatprep.mubr.f32.mxu0 0.0
    %448 = vmatmul.mubr.f32.gmra.mrb[0].mxu0 %v154
    %v449 = vpop.f32.mrb[0].mxu0
    %v450 = vadd.f32 %v99, %v449
    %v451 = vpop.f32.mrb[0].mxu0
    %452 = vmatprep.mubr.f32.mxu0 0.0
    %453 = vmatmul.mubr.f32.gmra.mrb[0].mxu0 %v157
    %v454 = vpop.f32.mrb[0].mxu0
    %v455 = vadd.f32 %v99, %v454
    %v456 = vpop.f32.mrb[0].mxu0
    %457 = vmatprep.mubr.f32.mxu0 0.0
    %458 = vmatmul.mubr.f32.gmra.mrb[0].mxu0 %v160
    %v459 = vpop.f32.mrb[0].mxu0
    %v460 = vadd.f32 %v99, %v459
    %v461 = vpop.f32.mrb[0].mxu0
    %462 = vmatprep.mubr.f32.mxu0 0.0
    %463 = vmatmul.mubr.f32.gmra.mrb[0].mxu0 %v163
    %v464 = vpop.f32.mrb[0].mxu0
    %v465 = vadd.f32 %v99, %v464
    %v466 = vpop.f32.mrb[0].mxu0
    %467 = vmatprep.mubr.f32.mxu0 0.0
    %468 = vmatmul.mubr.f32.gmra.mrb[0].mxu0 %v166
    %v469 = vpop.f32.mrb[0].mxu0
    %v470 = vadd.f32 %v99, %v469
    %v471 = vpop.f32.mrb[0].mxu0
    %472 = vmatprep.mubr.f32.mxu0 0.0
    %473 = vmatmul.mubr.f32.gmra.mrb[0].mxu0 %v169
    %v474 = vpop.f32.mrb[0].mxu0
    %v475 = vadd.f32 %v99, %v474
    %v476 = vpop.f32.mrb[0].mxu0
    %477 = vmatprep.mubr.f32.mxu0 0.0
    %478 = vmatmul.mubr.f32.gmra.mrb[0].mxu0 %v172
    %v479 = vpop.f32.mrb[0].mxu0
    %v480 = vadd.f32 %v99, %v479
    %v481 = vpop.f32.mrb[0].mxu0
    %482 = vmatprep.mubr.f32.mxu0 0.0
    %483 = vmatmul.mubr.f32.gmra.mrb[0].mxu0 %v175
    %v484 = vpop.f32.mrb[0].mxu0
    %v485 = vadd.f32 %v99, %v484
    %v486 = vpop.f32.mrb[0].mxu0
    %487 = vmatprep.mubr.f32.mxu0 0.0
    %488 = vmatmul.mubr.f32.gmra.mrb[0].mxu0 %v178
    %v489 = vpop.f32.mrb[0].mxu0
    %v490 = vadd.f32 %v99, %v489
    %v491 = vpop.f32.mrb[0].mxu0
    %492 = vmatprep.mubr.f32.mxu0 0.0
    %493 = vmatmul.mubr.f32.gmra.mrb[0].mxu0 %v181
    %v494 = vpop.f32.mrb[0].mxu0
    %v495 = vadd.f32 %v99, %v494
    %v496 = vpop.f32.mrb[0].mxu0
    %497 = vmatprep.mubr.f32.mxu0 0.0
    %498 = vmatmul.mubr.f32.gmra.mrb[0].mxu0 %v184
    %v499 = vpop.f32.mrb[0].mxu0
    %v500 = vadd.f32 %v99, %v499
    %v501 = vpop.f32.mrb[0].mxu0
    %502 = vmatprep.mubr.f32.mxu0 0.0
    %503 = vmatmul.mubr.f32.gmra.mrb[0].mxu0 %v187
    %v504 = vpop.f32.mrb[0].mxu0
    %v505 = vadd.f32 %v99, %v504
    %v506 = vpop.f32.mrb[0].mxu0
    %507 = vmatprep.mubr.f32.mxu0 0.0
    %508 = vmatmul.mubr.f32.gmra.mrb[0].mxu0 %v190
    %v509 = vpop.f32.mrb[0].mxu0
    %v510 = vadd.f32 %v99, %v509
    %v511 = vpop.f32.mrb[0].mxu0
    %512 = vmatprep.mubr.f32.mxu0 0.0
    %513 = vmatmul.mubr.f32.gmra.mrb[0].mxu0 %v193
    %v514 = vpop.f32.mrb[0].mxu0
    %v515 = vadd.f32 %v99, %v514
    %v516 = vpop.f32.mrb[0].mxu0
    %517 = vmatprep.mubr.f32.mxu0 0.0
    %518 = vmatmul.mubr.f32.gmra.mrb[0].mxu0 %v196
    %v519 = vpop.f32.mrb[0].mxu0
    %v520 = vadd.f32 %v99, %v519
    %v521 = vpop.f32.mrb[0].mxu0
    %522 = vmatprep.mubr.f32.mxu0 0.0
    %523 = vmatmul.mubr.f32.gmra.mrb[0].mxu0 %v199
    %v524 = vpop.f32.mrb[0].mxu0
    %v525 = vadd.f32 %v99, %v524
    %v526 = vpop.f32.mrb[0].mxu0
    %527 = vmatprep.mubr.f32.mxu0 0.0
    %528 = vmatmul.mubr.f32.gmra.mrb[0].mxu0 %v202
    %v529 = vpop.f32.mrb[0].mxu0
    %v530 = vadd.f32 %v99, %v529
    %v531 = vpop.f32.mrb[0].mxu0
    %532 = vmatprep.mubr.f32.mxu0 0.0
    %533 = vmatmul.mubr.f32.gmra.mrb[0].mxu0 %v205
    %v534 = vpop.f32.mrb[0].mxu0
    %v535 = vadd.f32 %v99, %v534
    %v536 = vpop.f32.mrb[0].mxu0
    %537 = vmatprep.mubr.f32.mxu0 0.0
    %538 = vmatmul.mubr.f32.gmra.mrb[0].mxu0 %v208
    %v539 = vpop.f32.mrb[0].mxu0
    %v540 = vadd.f32 %v99, %v539
    %v541 = vpop.f32.mrb[0].mxu0
    %542 = vmatprep.mubr.f32.mxu0 0.0
    %543 = vmatmul.mubr.f32.gmra.mrb[0].mxu0 %v211
    %v544 = vpop.f32.mrb[0].mxu0
    %v545 = vadd.f32 %v99, %v544
    %v546 = vpop.f32.mrb[0].mxu0
    %547 = vmatprep.mubr.f32.mxu0 0.0
    %548 = vmatmul.mubr.f32.gmra.mrb[0].mxu0 %v214
    %v549 = vpop.f32.mrb[0].mxu0
    %v550 = vadd.f32 %v99, %v549
    %v551 = vpop.f32.mrb[0].mxu0
    %552 = vmatprep.mubr.f32.mxu0 0.0
    %553 = vmatmul.mubr.f32.gmra.mrb[0].mxu0 %v217
    %v554 = vpop.f32.mrb[0].mxu0
    %v555 = vadd.f32 %v99, %v554
    %v556 = vpop.f32.mrb[0].mxu0
    %557 = vmatprep.mubr.f32.mxu0 0.0
    %558 = vmatmul.mubr.f32.gmra.mrb[0].mxu0 %v220
    %v559 = vpop.f32.mrb[0].mxu0
    %v560 = vadd.f32 %v99, %v559
    %v561 = vpop.f32.mrb[0].mxu0
    %562 = vmatprep.mubr.f32.mxu0 0.0
    %563 = vmatmul.mubr.f32.gmra.mrb[0].mxu0 %v223
    %v564 = vpop.f32.mrb[0].mxu0
    %v565 = vadd.f32 %v99, %v564
    %v566 = vpop.f32.mrb[0].mxu0
    %567 = vmatprep.mubr.f32.mxu0 0.0
    %568 = vmatmul.mubr.f32.gmra.mrb[0].mxu0 %v226
    %v569 = vpop.f32.mrb[0].mxu0
    %v570 = vadd.f32 %v99, %v569
    %v571 = vpop.f32.mrb[0].mxu0
    %572 = vmatprep.mubr.f32.mxu0 0.0
    %573 = vmatmul.mubr.f32.gmra.mrb[0].mxu0 %v229
    %v574 = vpop.f32.mrb[0].mxu0
    %v575 = vadd.f32 %v99, %v574
    %v576 = vpop.f32.mrb[0].mxu0
    %577 = vmatprep.mubr.f32.mxu0 0.0
    %578 = vmatmul.mubr.f32.gmra.mrb[0].mxu0 %v232
    %v579 = vpop.f32.mrb[0].mxu0
    %v580 = vadd.f32 %v99, %v579
    %v581 = vpop.f32.mrb[0].mxu0
    %582 = vmatprep.mubr.f32.mxu0 0.0
    %583 = vmatmul.mubr.f32.gmra.mrb[0].mxu0 %v235
    %v584 = vpop.f32.mrb[0].mxu0
    %v585 = vadd.f32 %v99, %v584
    %v586 = vpop.f32.mrb[0].mxu0
    %587 = vmatprep.mubr.f32.mxu0 0.0
    %588 = vmatmul.mubr.f32.gmra.mrb[0].mxu0 %v238
    %v589 = vpop.f32.mrb[0].mxu0
    %v590 = vadd.f32 %v99, %v589
    %v591 = vpop.f32.mrb[0].mxu0
    %592 = vmatprep.mubr.f32.mxu0 0.0
    %593 = vmatmul.mubr.f32.gmra.mrb[0].mxu0 %v241
    %v594 = vpop.f32.mrb[0].mxu0
    %v595 = vadd.f32 %v99, %v594
    %v596 = vpop.f32.mrb[0].mxu0
    %597 = vmatprep.mubr.f32.mxu0 0.0
    %598 = vmatmul.mubr.f32.gmra.mrb[0].mxu0 %v244
    %v599 = vpop.f32.mrb[0].mxu0
    %v600 = vadd.f32 %v99, %v599
    %v601 = vpop.f32.mrb[0].mxu0
    %602 = vmatprep.mubr.f32.mxu0 0.0
    %603 = vmatmul.mubr.f32.gmra.mrb[0].mxu0 %v247
    %v604 = vpop.f32.mrb[0].mxu0
    %v605 = vadd.f32 %v99, %v604
    %v606 = vpop.f32.mrb[0].mxu0
    %607 = vmatprep.mubr.f32.mxu0 0.0
    %608 = vmatmul.mubr.f32.gmra.mrb[0].mxu0 %v250
    %v609 = vpop.f32.mrb[0].mxu0
    %v610 = vadd.f32 %v99, %v609
    %v611 = vpop.f32.mrb[0].mxu0
    %612 = vmatprep.mubr.f32.mxu0 0.0
    %613 = vmatmul.mubr.f32.gmra.mrb[0].mxu0 %v253
    %v614 = vpop.f32.mrb[0].mxu0
    %v615 = vadd.f32 %v99, %v614
    %v616 = vpop.f32.mrb[0].mxu0
    %617 = vmatprep.mubr.f32.mxu0 0.0
    %618 = vmatmul.mubr.f32.gmra.mrb[0].mxu0 %v256
    %v619 = vpop.f32.mrb[0].mxu0
    %v620 = vadd.f32 %v99, %v619
    %v621 = vpop.f32.mrb[0].mxu0
    %622 = vmatprep.mubr.f32.mxu0 0.0
    %623 = vmatmul.mubr.f32.gmra.mrb[0].mxu0 %v259
    %v624 = vpop.f32.mrb[0].mxu0
    %v625 = vadd.f32 %v99, %v624
    %v626 = vpop.f32.mrb[0].mxu0
    %627 = vmatprep.mubr.f32.mxu0 0.0
    %628 = vmatmul.mubr.f32.gmra.mrb[0].mxu0 %v262
    %v629 = vpop.f32.mrb[0].mxu0
    %v630 = vadd.f32 %v99, %v629
    %v631 = vpop.f32.mrb[0].mxu0
    %632 = vmatprep.mubr.f32.mxu0 0.0
    %633 = vmatmul.mubr.f32.gmra.mrb[0].mxu0 %v265
    %v634 = vpop.f32.mrb[0].mxu0
    %v635 = vadd.f32 %v99, %v634
    %v636 = vpop.f32.mrb[0].mxu0
    %637 = vmatprep.mubr.f32.mxu0 0.0
    %638 = vmatmul.mubr.f32.gmra.mrb[0].mxu0 %v268
    %v639 = vpop.f32.mrb[0].mxu0
    %v640 = vadd.f32 %v99, %v639
    %v641 = vpop.f32.mrb[0].mxu0
    %642 = vmatprep.mubr.f32.mxu0 0.0
    %643 = vmatmul.mubr.f32.gmra.mrb[0].mxu0 %v271
    %v644 = vpop.f32.mrb[0].mxu0
    %v645 = vadd.f32 %v99, %v644
    %v646 = vpop.f32.mrb[0].mxu0
    %647 = vmatprep.mubr.f32.mxu0 0.0
    %648 = vmatmul.mubr.f32.gmra.mrb[0].mxu0 %v274
    %v649 = vpop.f32.mrb[0].mxu0
    %v650 = vadd.f32 %v99, %v649
    %v651 = vpop.f32.mrb[0].mxu0
    %652 = vmatprep.mubr.f32.mxu0 0.0
    %653 = vmatmul.mubr.f32.gmra.mrb[0].mxu0 %v277
    %v654 = vpop.f32.mrb[0].mxu0
    %v655 = vadd.f32 %v99, %v654
    %v656 = vpop.f32.mrb[0].mxu0
    %657 = vmatprep.mubr.f32.mxu0 0.0
    %658 = vmatmul.mubr.f32.gmra.mrb[0].mxu0 %v280
    %v659 = vpop.f32.mrb[0].mxu0
    %v660 = vadd.f32 %v99, %v659
    %v661 = vpop.f32.mrb[0].mxu0
    %662 = vmatprep.mubr.f32.mxu0 0.0
    %663 = vmatmul.mubr.f32.gmra.mrb[0].mxu0 %v283
    %v664 = vpop.f32.mrb[0].mxu0
    %v665 = vadd.f32 %v99, %v664
    %v666 = vpop.f32.mrb[0].mxu0
    %667 = vmatprep.mubr.f32.mxu0 0.0
    %668 = vmatmul.mubr.f32.gmra.mrb[0].mxu0 %v286
    %v669 = vpop.f32.mrb[0].mxu0
    %v670 = vadd.f32 %v99, %v669
    %v671 = vpop.f32.mrb[0].mxu0
    %672 = vmatprep.mubr.f32.mxu0 0.0
    %673 = vmatmul.mubr.f32.gmra.mrb[0].mxu0 %v289
    %v674 = vpop.f32.mrb[0].mxu0
    %v675 = vadd.f32 %v99, %v674
    %v676 = vpop.f32.mrb[0].mxu0
    %677 = vmatprep.mubr.f32.mxu0 0.0
    %678 = vmatmul.mubr.f32.gmra.mrb[0].mxu0 %v292
    %v679 = vpop.f32.mrb[0].mxu0
    %v680 = vadd.f32 %v99, %v679
    %v681 = vpop.f32.mrb[0].mxu0
    %682 = vdwg.mxu0
    %vm683 = vcmask 31744
    %684 = vst.msk [vmem:[%s3] sm:$0xff] %vm683, %v365
    %685 = vst.msk [vmem:[%s3 + $0x8] sm:$0xff] %vm683, %v370
    %686 = vst.msk [vmem:[%s3 + $0x10] sm:$0xff] %vm683, %v375
    %687 = vst.msk [vmem:[%s3 + $0x18] sm:$0xff] %vm683, %v380
    %688 = vst.msk [vmem:[%s3 + $0x20] sm:$0xff] %vm683, %v385
    %689 = vst.msk [vmem:[%s3 + $0x28] sm:$0xff] %vm683, %v390
    %690 = vst.msk [vmem:[%s3 + $0x30] sm:$0xff] %vm683, %v395
    %691 = vst.msk [vmem:[%s3 + $0x38] sm:$0xff] %vm683, %v400
    %692 = vst.msk [vmem:[%s3 + $0x40] sm:$0xff] %vm683, %v405
    %693 = vst.msk [vmem:[%s3 + $0x48] sm:$0xff] %vm683, %v410
    %694 = vst.msk [vmem:[%s3 + $0x50] sm:$0xff] %vm683, %v415
    %695 = vst.msk [vmem:[%s3 + $0x58] sm:$0xff] %vm683, %v420
    %696 = vst.msk [vmem:[%s3 + $0x60] sm:$0xff] %vm683, %v425
    %697 = vst.msk [vmem:[%s3 + $0x68] sm:$0xff] %vm683, %v430
    %698 = vst.msk [vmem:[%s3 + $0x70] sm:$0xff] %vm683, %v435
    %699 = vst.msk [vmem:[%s3 + $0x78] sm:$0xff] %vm683, %v440
    %700 = vst.msk [vmem:[%s3 + $0x80] sm:$0xff] %vm683, %v445
    %701 = vst.msk [vmem:[%s3 + $0x88] sm:$0xff] %vm683, %v450
    %702 = vst.msk [vmem:[%s3 + $0x90] sm:$0xff] %vm683, %v455
    %703 = vst.msk [vmem:[%s3 + $0x98] sm:$0xff] %vm683, %v460
    %704 = vst.msk [vmem:[%s3 + $0xa0] sm:$0xff] %vm683, %v465
    %705 = vst.msk [vmem:[%s3 + $0xa8] sm:$0xff] %vm683, %v470
    %706 = vst.msk [vmem:[%s3 + $0xb0] sm:$0xff] %vm683, %v475
    %707 = vst.msk [vmem:[%s3 + $0xb8] sm:$0xff] %vm683, %v480
    %708 = vst.msk [vmem:[%s3 + $0xc0] sm:$0xff] %vm683, %v485
    %709 = vst.msk [vmem:[%s3 + $0xc8] sm:$0xff] %vm683, %v490
    %710 = vst.msk [vmem:[%s3 + $0xd0] sm:$0xff] %vm683, %v495
    %711 = vst.msk [vmem:[%s3 + $0xd8] sm:$0xff] %vm683, %v500
    %712 = vst.msk [vmem:[%s3 + $0xe0] sm:$0xff] %vm683, %v505
    %713 = vst.msk [vmem:[%s3 + $0xe8] sm:$0xff] %vm683, %v510
    %714 = vst.msk [vmem:[%s3 + $0xf0] sm:$0xff] %vm683, %v515
    %715 = vst.msk [vmem:[%s3 + $0xf8] sm:$0xff] %vm683, %v520
    %716 = vst.msk [vmem:[%s3 + $0x100] sm:$0xff] %vm683, %v525
    %717 = vst.msk [vmem:[%s3 + $0x108] sm:$0xff] %vm683, %v530
    %718 = vst.msk [vmem:[%s3 + $0x110] sm:$0xff] %vm683, %v535
    %719 = vst.msk [vmem:[%s3 + $0x118] sm:$0xff] %vm683, %v540
    %720 = vst.msk [vmem:[%s3 + $0x120] sm:$0xff] %vm683, %v545
    %721 = vst.msk [vmem:[%s3 + $0x128] sm:$0xff] %vm683, %v550
    %722 = vst.msk [vmem:[%s3 + $0x130] sm:$0xff] %vm683, %v555
    %723 = vst.msk [vmem:[%s3 + $0x138] sm:$0xff] %vm683, %v560
    %724 = vst.msk [vmem:[%s3 + $0x140] sm:$0xff] %vm683, %v565
    %725 = vst.msk [vmem:[%s3 + $0x148] sm:$0xff] %vm683, %v570
    %726 = vst.msk [vmem:[%s3 + $0x150] sm:$0xff] %vm683, %v575
    %727 = vst.msk [vmem:[%s3 + $0x158] sm:$0xff] %vm683, %v580
    %728 = vst.msk [vmem:[%s3 + $0x160] sm:$0xff] %vm683, %v585
    %729 = vst.msk [vmem:[%s3 + $0x168] sm:$0xff] %vm683, %v590
    %730 = vst.msk [vmem:[%s3 + $0x170] sm:$0xff] %vm683, %v595
    %731 = vst.msk [vmem:[%s3 + $0x178] sm:$0xff] %vm683, %v600
    %732 = vst.msk [vmem:[%s3 + $0x180] sm:$0xff] %vm683, %v605
    %733 = vst.msk [vmem:[%s3 + $0x188] sm:$0xff] %vm683, %v610
    %734 = vst.msk [vmem:[%s3 + $0x190] sm:$0xff] %vm683, %v615
    %735 = vst.msk [vmem:[%s3 + $0x198] sm:$0xff] %vm683, %v620
    %736 = vst.msk [vmem:[%s3 + $0x1a0] sm:$0xff] %vm683, %v625
    %737 = vst.msk [vmem:[%s3 + $0x1a8] sm:$0xff] %vm683, %v630
    %738 = vst.msk [vmem:[%s3 + $0x1b0] sm:$0xff] %vm683, %v635
    %739 = vst.msk [vmem:[%s3 + $0x1b8] sm:$0xff] %vm683, %v640
    %740 = vst.msk [vmem:[%s3 + $0x1c0] sm:$0xff] %vm683, %v645
    %741 = vst.msk [vmem:[%s3 + $0x1c8] sm:$0xff] %vm683, %v650
    %742 = vst.msk [vmem:[%s3 + $0x1d0] sm:$0xff] %vm683, %v655
    %743 = vst.msk [vmem:[%s3 + $0x1d8] sm:$0xff] %vm683, %v660
    %744 = vst.msk [vmem:[%s3 + $0x1e0] sm:$0xff] %vm683, %v665
    %745 = vst.msk [vmem:[%s3 + $0x1e8] sm:$0xff] %vm683, %v670
    %746 = vst.msk [vmem:[%s3 + $0x1f0] sm:$0xff] %vm683, %v675
    %747 = vst.msk [vmem:[%s3 + $0x1f8] sm:$0xff] %vm683, %v680
    // Predicated region
    $region18: #{wavemix_sr_forward.9} parent=1 // pred_check
      _
    $region19: #{wavemix_sr_forward.9} parent=1 // pred_check_branch
      %749 = sbr.rel (0) target = $region21
    $region20: #{wavemix_sr_forward.9} parent=1 // pred_region
      _
    $region21: #{wavemix_sr_forward.9} parent=1 // pred_fallthru
      _
    // Predicated region
    $region22: #{wavemix_sr_forward.9} parent=1 // pred_check
      _
    $region23: #{wavemix_sr_forward.9} parent=1 // pred_check_branch
      %751 = sbr.rel (0) target = $region25
    $region24: #{wavemix_sr_forward.9} parent=1 // pred_region
      _
    $region25: #{wavemix_sr_forward.9} parent=1 // pred_fallthru
      _
    %752 = vsyncpa [#allocation3], 1

// kernel: wavemix_sr_forward.10
$region0: #{wavemix_sr_forward.10}
  #allocation0 [shape = 'u32[]', space=smem, size = 0x4, offset = 0x4, fixed_abs, tag = 'smem constant byte address 0x4 - core index']
  #allocation1 [shape = 'u32[144,128]{1,0:T(1,128)}', space=vmem, size = 0x12000, scoped, tag = 'internal scratch']
  %s0 = inlined_call_operand.vmem [shape: f32[2048,9], index: 0, kind: input, shape index: {}]
  %s1 = inlined_call_operand.vmem [shape: f32[9,8], index: 1, kind: input, shape index: {}]
  %s2 = inlined_call_operand.vmem [shape: f32[1,8], index: 2, kind: input, shape index: {}]
  %s3 = inlined_call_operand.vmem [shape: f32[2048,8], index: 3, kind: output, shape index: {}]
  %s4 = sld [smem:[#allocation0]]
  $region45: #{wavemix_sr_forward.10} parent=0
    _
  %s6 = ssub.s32 1, %s4
  %s7 = scalar_select 0, %s6, %s4
  loop: start=0, step=1, limit=6
  $region2: #{wavemix_sr_forward.10} parent=0 // loop_pre_header
    _
  $region3: #{wavemix_sr_forward.10} parent=0 // loop_header
    %s9 = sphi 0, %s13
    %p10 = scmp.ge.s32.totalorder %s9, 6
    %s19 = sphi 0, %s21
    %s22 = sphi 0, %s19
    %s23 = sphi 0, %s22
    %s39 = sphi 0, %s23
    %s43 = sphi 0, %s43
    %s45 = sphi 0, %s43
    %s46 = sphi 0, %s45
    %s60 = sphi 0, %s46
    %s64 = sphi 0, %s64
    %s66 = sphi 0, %s64
    %s67 = sphi 0, %s66
    %s81 = sphi 0, %s67
    %s87 = sphi 0, %s89
    %s90 = sphi 0, %s87
    %s91 = sphi 0, %s90
    %s107 = sphi 0, %s91
  $region4: #{wavemix_sr_forward.10} parent=0 // loop_header_branch
    %12 = sbr.rel (%p10) target = $region8
  $region5: #{wavemix_sr_forward.10} parent=0 // loop_body
    %s14 = ssub.s32 %s9, 1
    %s15 = ssub.s32 %s9, 2
    %s16 = sadd.s32 %s9, 1
    %s17 = ssub.s32 %s9, %s16
    %p18 = scmp.eq.s32.totalorder %s17, 0
    %s20 = sadd.s32 %s19, 1
    %s21 = scalar_select %p18, %s19, %s20
    %p24 = pneg %p18
    %p25 = scmp.eq.s32.totalorder %s9, 3
    %p26 = por %p24, %p25
    %p27 = scmp.ne.s32.totalorder %s19, %s22
    %p28 = scmp.eq.s32.totalorder %s9, 0
    %p29 = por %p27, %p28
    %p30 = scmp.ne.s32.totalorder %s19, %s22
    %p31 = scmp.eq.s32.totalorder %s14, 3
    %p32 = por %p30, %p31
    %p33 = scmp.ne.s32.totalorder %s22, %s23
    %p34 = scmp.eq.s32.totalorder %s14, 0
    %p35 = por %p33, %p34
    %p36 = scmp.ne.s32.totalorder %s22, %s23
    %p37 = scmp.eq.s32.totalorder %s15, 3
    %p38 = por %p36, %p37
    %p40 = scmp.ne.s32.totalorder %s23, %s39
    %p41 = scmp.eq.s32.totalorder %s15, 0
    %p42 = por %p40, %p41
    %s44 = sadd.s32 %s43, 1
    %p47 = scmp.eq.s32.totalorder %s9, 3
    %p48 = scmp.ne.s32.totalorder %s43, %s45
    %p49 = scmp.eq.s32.totalorder %s9, 0
    %p50 = por %p48, %p49
    %p51 = scmp.ne.s32.totalorder %s43, %s45
    %p52 = scmp.eq.s32.totalorder %s14, 3
    %p53 = por %p51, %p52
    %p54 = scmp.ne.s32.totalorder %s45, %s46
    %p55 = scmp.eq.s32.totalorder %s14, 0
    %p56 = por %p54, %p55
    %p57 = scmp.ne.s32.totalorder %s45, %s46
    %p58 = scmp.eq.s32.totalorder %s15, 3
    %p59 = por %p57, %p58
    %p61 = scmp.ne.s32.totalorder %s46, %s60
    %p62 = scmp.eq.s32.totalorder %s15, 0
    %p63 = por %p61, %p62
    %s65 = sadd.s32 %s64, 1
    %p68 = scmp.eq.s32.totalorder %s9, 3
    %p69 = scmp.ne.s32.totalorder %s64, %s66
    %p70 = scmp.eq.s32.totalorder %s9, 0
    %p71 = por %p69, %p70
    %p72 = scmp.ne.s32.totalorder %s64, %s66
    %p73 = scmp.eq.s32.totalorder %s14, 3
    %p74 = por %p72, %p73
    %p75 = scmp.ne.s32.totalorder %s66, %s67
    %p76 = scmp.eq.s32.totalorder %s14, 0
    %p77 = por %p75, %p76
    %p78 = scmp.ne.s32.totalorder %s66, %s67
    %p79 = scmp.eq.s32.totalorder %s15, 3
    %p80 = por %p78, %p79
    %p82 = scmp.ne.s32.totalorder %s67, %s81
    %p83 = scmp.eq.s32.totalorder %s15, 0
    %p84 = por %p82, %p83
    %s85 = ssub.s32 %s9, %s16
    %p86 = scmp.eq.s32.totalorder %s85, 0
    %s88 = sadd.s32 %s87, 1
    %s89 = scalar_select %p86, %s87, %s88
    %p92 = pneg %p86
    %p93 = scmp.eq.s32.totalorder %s9, 3
    %p94 = por %p92, %p93
    %p95 = scmp.ne.s32.totalorder %s87, %s90
    %p96 = scmp.eq.s32.totalorder %s9, 0
    %p97 = por %p95, %p96
    %p98 = scmp.ne.s32.totalorder %s87, %s90
    %p99 = scmp.eq.s32.totalorder %s14, 3
    %p100 = por %p98, %p99
    %p101 = scmp.ne.s32.totalorder %s90, %s91
    %p102 = scmp.eq.s32.totalorder %s14, 0
    %p103 = por %p101, %p102
    %p104 = scmp.ne.s32.totalorder %s90, %s91
    %p105 = scmp.eq.s32.totalorder %s15, 3
    %p106 = por %p104, %p105
    %p108 = scmp.ne.s32.totalorder %s91, %s107
    %p109 = scmp.eq.s32.totalorder %s15, 0
    %p110 = por %p108, %p109
    %p111 = scmp.le.s32.totalorder 1, %s9
    %p112 = scmp.lt.s32.totalorder %s9, 5
    %p113 = pnand %p111, %p112
    %p114 = pneg %p113
    // Predicated region
    $region9: #{wavemix_sr_forward.10} parent=5 // pred_check
      _
    $region10: #{wavemix_sr_forward.10} parent=5 // pred_check_branch
      %116 = sbr.rel (%p113) target = $region12
    $region11: #{wavemix_sr_forward.10} parent=5 // pred_region
      %s117 = ssub.s32 %s9, 1
      // Predicated region
      $region13: #{wavemix_sr_forward.10} parent=11 // pred_check
        %p118 = pneg %p56
      $region14: #{wavemix_sr_forward.10} parent=11 // pred_check_branch
        %120 = sbr.rel (%p118) target = $region16
      $region15: #{wavemix_sr_forward.10} parent=11 // pred_region
        _
      $region16: #{wavemix_sr_forward.10} parent=11 // pred_fallthru
        _
      // Predicated region
      $region17: #{wavemix_sr_forward.10} parent=11 // pred_check
        %p121 = pneg %p77
      $region18: #{wavemix_sr_forward.10} parent=11 // pred_check_branch
        %123 = sbr.rel (%p121) target = $region20
      $region19: #{wavemix_sr_forward.10} parent=11 // pred_region
        _
      $region20: #{wavemix_sr_forward.10} parent=11 // pred_fallthru
        _
    $region12: #{wavemix_sr_forward.10} parent=5 // pred_fallthru
      _
    %p124 = scmp.lt.s32.totalorder %s9, 4
    // Predicated region
    $region21: #{wavemix_sr_forward.10} parent=5 // pred_check
      %p125 = pneg %p124
    $region22: #{wavemix_sr_forward.10} parent=5 // pred_check_branch
      %127 = sbr.rel (%p125) target = $region24
    $region23: #{wavemix_sr_forward.10} parent=5 // pred_region
      // Predicated region
      $region25: #{wavemix_sr_forward.10} parent=23 // pred_check
        %p128 = pneg %p29
      $region26: #{wavemix_sr_forward.10} parent=23 // pred_check_branch
        %130 = sbr.rel (%p128) target = $region28
      $region27: #{wavemix_sr_forward.10} parent=23 // pred_region
        %s131 = smul.u32 64, %s9
        %p132 = scmp.lt.s32.totalorder %s131, 255
        %s133 = scalar_select %p132, %s131, 255
        %s134 = smul.addr %s133, 8
        %s135 = scalar_lea.vmem %s0, %s134
        %s136 = smul.u32 64, %s9
      $region28: #{wavemix_sr_forward.10} parent=23 // pred_fallthru
        _
    $region24: #{wavemix_sr_forward.10} parent=5 // pred_fallthru
      _
    %p137 = scmp.le.s32.totalorder 1, %s9
    %p138 = scmp.lt.s32.totalorder %s9, 5
    %p139 = pnand %p137, %p138
    %p140 = pneg %p139
    // Predicated region
    $region29: #{wavemix_sr_forward.10} parent=5 // pred_check
      _
    $region30: #{wavemix_sr_forward.10} parent=5 // pred_check_branch
      %142 = sbr.rel (%p139) target = $region32
    $region31: #{wavemix_sr_forward.10} parent=5 // pred_region
      %s143 = ssub.s32 %s9, 1
      %s144 = smul.u32 64, %s14
      %p145 = scmp.lt.s32.totalorder %s144, 255
      %s146 = scalar_select %p145, %s144, 255
      %s147 = smul.addr %s146, 8
      %s148 = scalar_lea.vmem %s0, %s147
      %p149 = pneg %p35
      %p150 = pneg %p32
      %p151 = pneg %p56
      %p152 = pneg %p53
      %p153 = pneg %p77
      %p154 = pneg %p74
      %p155 = pneg %p103
      %p156 = pneg %p100
      %s157 = smul.u32 64, %s14
      %p158 = scmp.lt.s32.totalorder %s157, 255
      %s159 = scalar_select %p158, %s157, 255
      %s160 = smul.addr %s159, 8
      %s161 = scalar_lea.vmem %s3, %s160
      %s162 = smul.u32 64, %s14
      %p163 = scmp.lt.s32.totalorder %s162, 255
      %s164 = scalar_select %p163, %s162, 255
      %s165 = smul.addr %s164, 8
      %s166 = scalar_lea.vmem %s0, %s165
      %s167 = smul.u32 64, %s14
      %s168 = smul.u32 64, %s14
      %p169 = scmp.lt.s32.totalorder %s168, 255
      %s170 = scalar_select %p169, %s168, 255
      %s171 = smul.addr %s170, 8
      %s172 = scalar_lea.vmem %s3, %s171
      %s173 = smul.u32 64, %s14
      %v174 = vld [vmem:[%s166] sm:$0xff]
      %v175 = vld [vmem:[%s166 + $0x8] sm:$0xff]
      %v176 = vld [vmem:[%s166 + $0x10] sm:$0xff]
      %v177 = vld [vmem:[%s166 + $0x18] sm:$0xff]
      %v178 = vld [vmem:[%s166 + $0x20] sm:$0xff]
      %v179 = vld [vmem:[%s166 + $0x28] sm:$0xff]
      %v180 = vld [vmem:[%s166 + $0x30] sm:$0xff]
      %v181 = vld [vmem:[%s166 + $0x38] sm:$0xff]
      %v182 = vld [vmem:[%s166 + $0x40] sm:$0xff]
      %v183 = vld [vmem:[%s166 + $0x48] sm:$0xff]
      %v184 = vld [vmem:[%s166 + $0x50] sm:$0xff]
      %v185 = vld [vmem:[%s166 + $0x58] sm:$0xff]
      %v186 = vld [vmem:[%s166 + $0x60] sm:$0xff]
      %v187 = vld [vmem:[%s166 + $0x68] sm:$0xff]
      %v188 = vld [vmem:[%s166 + $0x70] sm:$0xff]
      %v189 = vld [vmem:[%s166 + $0x78] sm:$0xff]
      %v190 = vld [vmem:[%s166 + $0x80] sm:$0xff]
      %v191 = vld [vmem:[%s166 + $0x88] sm:$0xff]
      %v192 = vld [vmem:[%s166 + $0x90] sm:$0xff]
      %v193 = vld [vmem:[%s166 + $0x98] sm:$0xff]
      %v194 = vld [vmem:[%s166 + $0xa0] sm:$0xff]
      %v195 = vld [vmem:[%s166 + $0xa8] sm:$0xff]
      %v196 = vld [vmem:[%s166 + $0xb0] sm:$0xff]
      %v197 = vld [vmem:[%s166 + $0xb8] sm:$0xff]
      %v198 = vld [vmem:[%s166 + $0xc0] sm:$0xff]
      %v199 = vld [vmem:[%s166 + $0xc8] sm:$0xff]
      %v200 = vld [vmem:[%s166 + $0xd0] sm:$0xff]
      %v201 = vld [vmem:[%s166 + $0xd8] sm:$0xff]
      %v202 = vld [vmem:[%s166 + $0xe0] sm:$0xff]
      %v203 = vld [vmem:[%s166 + $0xe8] sm:$0xff]
      %v204 = vld [vmem:[%s166 + $0xf0] sm:$0xff]
      %v205 = vld [vmem:[%s166 + $0xf8] sm:$0xff]
      %v206 = vld [vmem:[%s166 + $0x100] sm:$0xff]
      %v207 = vld [vmem:[%s166 + $0x108] sm:$0xff]
      %v208 = vld [vmem:[%s166 + $0x110] sm:$0xff]
      %v209 = vld [vmem:[%s166 + $0x118] sm:$0xff]
      %v210 = vld [vmem:[%s166 + $0x120] sm:$0xff]
      %v211 = vld [vmem:[%s166 + $0x128] sm:$0xff]
      %v212 = vld [vmem:[%s166 + $0x130] sm:$0xff]
      %v213 = vld [vmem:[%s166 + $0x138] sm:$0xff]
      %v214 = vld [vmem:[%s166 + $0x140] sm:$0xff]
      %v215 = vld [vmem:[%s166 + $0x148] sm:$0xff]
      %v216 = vld [vmem:[%s166 + $0x150] sm:$0xff]
      %v217 = vld [vmem:[%s166 + $0x158] sm:$0xff]
      %v218 = vld [vmem:[%s166 + $0x160] sm:$0xff]
      %v219 = vld [vmem:[%s166 + $0x168] sm:$0xff]
      %v220 = vld [vmem:[%s166 + $0x170] sm:$0xff]
      %v221 = vld [vmem:[%s166 + $0x178] sm:$0xff]
      %v222 = vld [vmem:[%s166 + $0x180] sm:$0xff]
      %v223 = vld [vmem:[%s166 + $0x188] sm:$0xff]
      %v224 = vld [vmem:[%s166 + $0x190] sm:$0xff]
      %v225 = vld [vmem:[%s166 + $0x198] sm:$0xff]
      %v226 = vld [vmem:[%s166 + $0x1a0] sm:$0xff]
      %v227 = vld [vmem:[%s166 + $0x1a8] sm:$0xff]
      %v228 = vld [vmem:[%s166 + $0x1b0] sm:$0xff]
      %v229 = vld [vmem:[%s166 + $0x1b8] sm:$0xff]
      %v230 = vld [vmem:[%s166 + $0x1c0] sm:$0xff]
      %v231 = vld [vmem:[%s166 + $0x1c8] sm:$0xff]
      %v232 = vld [vmem:[%s166 + $0x1d0] sm:$0xff]
      %v233 = vld [vmem:[%s166 + $0x1d8] sm:$0xff]
      %v234 = vld [vmem:[%s166 + $0x1e0] sm:$0xff]
      %v235 = vld [vmem:[%s166 + $0x1e8] sm:$0xff]
      %v236 = vld [vmem:[%s166 + $0x1f0] sm:$0xff]
      %v237 = vld [vmem:[%s166 + $0x1f8] sm:$0xff]
      %v238 = vld [vmem:[%s1] sm:$0xff]
      %v239 = vld [vmem:[%s1 + $0x8] sm:$0x1]
      %v240 = vld [vmem:[%s2] sm:$0x1]
      %v242 = vlaneseq
      %v243 = vshrl.u32 %v242, 7
      %v244 = vsub.s32 0, %v243
      %v245 = vrot.slane %v240, %v244
      %vm247 = vcmask 72704
      %v249 = vsel %vm247, %v174, 0
      %v252 = vsel %vm247, %v175, 0
      %v255 = vsel %vm247, %v176, 0
      %v258 = vsel %vm247, %v177, 0
      %v261 = vsel %vm247, %v178, 0
      %v264 = vsel %vm247, %v179, 0
      %v267 = vsel %vm247, %v180, 0
      %v270 = vsel %vm247, %v181, 0
      %v273 = vsel %vm247, %v182, 0
      %v276 = vsel %vm247, %v183, 0
      %v279 = vsel %vm247, %v184, 0
      %v282 = vsel %vm247, %v185, 0
      %v285 = vsel %vm247, %v186, 0
      %v288 = vsel %vm247, %v187, 0
      %v291 = vsel %vm247, %v188, 0
      %v294 = vsel %vm247, %v189, 0
      %v297 = vsel %vm247, %v190, 0
      %v300 = vsel %vm247, %v191, 0
      %v303 = vsel %vm247, %v192, 0
      %v306 = vsel %vm247, %v193, 0
      %v309 = vsel %vm247, %v194, 0
      %v312 = vsel %vm247, %v195, 0
      %v315 = vsel %vm247, %v196, 0
      %v318 = vsel %vm247, %v197, 0
      %v321 = vsel %vm247, %v198, 0
      %v324 = vsel %vm247, %v199, 0
      %v327 = vsel %vm247, %v200, 0
      %v330 = vsel %vm247, %v201, 0
      %v333 = vsel %vm247, %v202, 0
      %v336 = vsel %vm247, %v203, 0
      %v339 = vsel %vm247, %v204, 0
      %v342 = vsel %vm247, %v205, 0
      %v345 = vsel %vm247, %v206, 0
      %v348 = vsel %vm247, %v207, 0
      %v351 = vsel %vm247, %v208, 0
      %v354 = vsel %vm247, %v209, 0
      %v357 = vsel %vm247, %v210, 0
      %v360 = vsel %vm247, %v211, 0
      %v363 = vsel %vm247, %v212, 0
      %v366 = vsel %vm247, %v213, 0
      %v369 = vsel %vm247, %v214, 0
      %v372 = vsel %vm247, %v215, 0
      %v375 = vsel %vm247, %v216, 0
      %v378 = vsel %vm247, %v217, 0
      %v381 = vsel %vm247, %v218, 0
      %v384 = vsel %vm247, %v219, 0
      %v387 = vsel %vm247, %v220, 0
      %v390 = vsel %vm247, %v221, 0
      %v393 = vsel %vm247, %v222, 0
      %v396 = vsel %vm247, %v223, 0
      %v399 = vsel %vm247, %v224, 0
      %v402 = vsel %vm247, %v225, 0
      %v405 = vsel %vm247, %v226, 0
      %v408 = vsel %vm247, %v227, 0
      %v411 = vsel %vm247, %v228, 0
      %v414 = vsel %vm247, %v229, 0
      %v417 = vsel %vm247, %v230, 0
      %v420 = vsel %vm247, %v231, 0
      %v423 = vsel %vm247, %v232, 0
      %v426 = vsel %vm247, %v233, 0
      %v429 = vsel %vm247, %v234, 0
      %v432 = vsel %vm247, %v235, 0
      %v435 = vsel %vm247, %v236, 0
      %v438 = vsel %vm247, %v237, 0
      %vm440 = vcmask 1040384
      %v442 = vsel %vm440, %v239, 0
      %444 = vmatprep.subr.mxu0 0.0
      %445 = vmatpush1.msra.mxu0 %v238
      %446 = vmatprep.subr.mxu0 0.0
      %447 = vmatpush1.msra.mxu0 %v442
      %448 = vmatprep.subr.mxu0 0.0
      %449 = vmatpush1.msra.mxu0 0.0
      %450 = vmatprep.subr.mxu0 0.0
      %451 = vmatpush1.msra.mxu0 0.0
      %452 = vmatprep.subr.mxu0 0.0
      %453 = vmatpush1.msra.mxu0 0.0
      %454 = vmatprep.subr.mxu0 0.0
      %455 = vmatpush1.msra.mxu0 0.0
      %456 = vmatprep.subr.mxu0 0.0
      %457 = vmatpush1.msra.mxu0 0.0
      %458 = vmatprep.subr.mxu0 0.0
      %459 = vmatpush1.msra.mxu0 0.0
      %460 = vmatprep.subr.mxu0 0.0
      %461 = vmatpush1.msra.mxu0 0.0
      %462 = vmatprep.subr.mxu0 0.0
      %463 = vmatpush1.msra.mxu0 0.0
      %464 = vmatprep.subr.mxu0 0.0
      %465 = vmatpush1.msra.mxu0 0.0
      %466 = vmatprep.subr.mxu0 0.0
      %467 = vmatpush1.msra.mxu0 0.0
      %468 = vmatprep.subr.mxu0 0.0
      %469 = vmatpush1.msra.mxu0 0.0
      %470 = vmatprep.subr.mxu0 0.0
      %471 = vmatpush1.msra.mxu0 0.0
      %472 = vmatprep.subr.mxu0 0.0
      %473 = vmatpush1.msra.mxu0 0.0
      %474 = vmatprep.subr.mxu0 0.0
      %475 = vmatpush1.msra.mxu0 0.0
      %476 = vmatprep.subr.mxu0 0.0
      %477 = vmatpush1.msra.mxu0 0.0
      %478 = vmatprep.subr.mxu0 0.0
      %479 = vmatpush1.msra.mxu0 0.0
      %480 = vmatprep.subr.mxu0 0.0
      %481 = vmatpush1.msra.mxu0 0.0
      %482 = vmatprep.subr.mxu0 0.0
      %483 = vmatpush1.msra.mxu0 0.0
      %484 = vmatprep.subr.mxu0 0.0
      %485 = vmatpush1.msra.mxu0 0.0
      %486 = vmatprep.subr.mxu0 0.0
      %487 = vmatpush1.msra.mxu0 0.0
      %488 = vmatprep.subr.mxu0 0.0
      %489 = vmatpush1.msra.mxu0 0.0
      %490 = vmatprep.subr.mxu0 0.0
      %491 = vmatpush1.msra.mxu0 0.0
      %492 = vmatprep.subr.mxu0 0.0
      %493 = vmatpush1.msra.mxu0 0.0
      %494 = vmatprep.subr.mxu0 0.0
      %495 = vmatpush1.msra.mxu0 0.0
      %496 = vmatprep.subr.mxu0 0.0
      %497 = vmatpush1.msra.mxu0 0.0
      %498 = vmatprep.subr.mxu0 0.0
      %499 = vmatpush1.msra.mxu0 0.0
      %500 = vmatprep.subr.mxu0 0.0
      %501 = vmatpush1.msra.mxu0 0.0
      %502 = vmatprep.subr.mxu0 0.0
      %503 = vmatpush1.msra.mxu0 0.0
      %504 = vmatprep.subr.mxu0 0.0
      %505 = vmatpush1.msra.mxu0 0.0
      %506 = vmatprep.subr.mxu0 0.0
      %507 = vmatpush1.msra.mxu0 0.0
      %508 = vmatprep.mubr.f32.mxu0 0.0
      %509 = vmatmul.mubr.f32.gmra.mrb[0].mxu0 %v249
      %v510 = vpop.f32.mrb[0].mxu0
      %v511 = vadd.f32 %v245, %v510
      %v512 = vpop.f32.mrb[0].mxu0
      %513 = vmatprep.mubr.f32.mxu0 0.0
      %514 = vmatmul.mubr.f32.gmra.mrb[0].mxu0 %v252
      %v515 = vpop.f32.mrb[0].mxu0
      %v516 = vadd.f32 %v245, %v515
      %v517 = vpop.f32.mrb[0].mxu0
      %518 = vmatprep.mubr.f32.mxu0 0.0
      %519 = vmatmul.mubr.f32.gmra.mrb[0].mxu0 %v255
      %v520 = vpop.f32.mrb[0].mxu0
      %v521 = vadd.f32 %v245, %v520
      %v522 = vpop.f32.mrb[0].mxu0
      %523 = vmatprep.mubr.f32.mxu0 0.0
      %524 = vmatmul.mubr.f32.gmra.mrb[0].mxu0 %v258
      %v525 = vpop.f32.mrb[0].mxu0
      %v526 = vadd.f32 %v245, %v525
      %v527 = vpop.f32.mrb[0].mxu0
      %528 = vmatprep.mubr.f32.mxu0 0.0
      %529 = vmatmul.mubr.f32.gmra.mrb[0].mxu0 %v261
      %v530 = vpop.f32.mrb[0].mxu0
      %v531 = vadd.f32 %v245, %v530
      %v532 = vpop.f32.mrb[0].mxu0
      %533 = vmatprep.mubr.f32.mxu0 0.0
      %534 = vmatmul.mubr.f32.gmra.mrb[0].mxu0 %v264
      %v535 = vpop.f32.mrb[0].mxu0
      %v536 = vadd.f32 %v245, %v535
      %v537 = vpop.f32.mrb[0].mxu0
      %538 = vmatprep.mubr.f32.mxu0 0.0
      %539 = vmatmul.mubr.f32.gmra.mrb[0].mxu0 %v267
      %v540 = vpop.f32.mrb[0].mxu0
      %v541 = vadd.f32 %v245, %v540
      %v542 = vpop.f32.mrb[0].mxu0
      %543 = vmatprep.mubr.f32.mxu0 0.0
      %544 = vmatmul.mubr.f32.gmra.mrb[0].mxu0 %v270
      %v545 = vpop.f32.mrb[0].mxu0
      %v546 = vadd.f32 %v245, %v545
      %v547 = vpop.f32.mrb[0].mxu0
      %548 = vmatprep.mubr.f32.mxu0 0.0
      %549 = vmatmul.mubr.f32.gmra.mrb[0].mxu0 %v273
      %v550 = vpop.f32.mrb[0].mxu0
      %v551 = vadd.f32 %v245, %v550
      %v552 = vpop.f32.mrb[0].mxu0
      %553 = vmatprep.mubr.f32.mxu0 0.0
      %554 = vmatmul.mubr.f32.gmra.mrb[0].mxu0 %v276
      %v555 = vpop.f32.mrb[0].mxu0
      %v556 = vadd.f32 %v245, %v555
      %v557 = vpop.f32.mrb[0].mxu0
      %558 = vmatprep.mubr.f32.mxu0 0.0
      %559 = vmatmul.mubr.f32.gmra.mrb[0].mxu0 %v279
      %v560 = vpop.f32.mrb[0].mxu0
      %v561 = vadd.f32 %v245, %v560
      %v562 = vpop.f32.mrb[0].mxu0
      %563 = vmatprep.mubr.f32.mxu0 0.0
      %564 = vmatmul.mubr.f32.gmra.mrb[0].mxu0 %v282
      %v565 = vpop.f32.mrb[0].mxu0
      %v566 = vadd.f32 %v245, %v565
      %v567 = vpop.f32.mrb[0].mxu0
      %568 = vmatprep.mubr.f32.mxu0 0.0
      %569 = vmatmul.mubr.f32.gmra.mrb[0].mxu0 %v285
      %v570 = vpop.f32.mrb[0].mxu0
      %v571 = vadd.f32 %v245, %v570
      %v572 = vpop.f32.mrb[0].mxu0
      %573 = vmatprep.mubr.f32.mxu0 0.0
      %574 = vmatmul.mubr.f32.gmra.mrb[0].mxu0 %v288
      %v575 = vpop.f32.mrb[0].mxu0
      %v576 = vadd.f32 %v245, %v575
      %v577 = vpop.f32.mrb[0].mxu0
      %578 = vmatprep.mubr.f32.mxu0 0.0
      %579 = vmatmul.mubr.f32.gmra.mrb[0].mxu0 %v291
      %v580 = vpop.f32.mrb[0].mxu0
      %v581 = vadd.f32 %v245, %v580
      %v582 = vpop.f32.mrb[0].mxu0
      %583 = vmatprep.mubr.f32.mxu0 0.0
      %584 = vmatmul.mubr.f32.gmra.mrb[0].mxu0 %v294
      %v585 = vpop.f32.mrb[0].mxu0
      %v586 = vadd.f32 %v245, %v585
      %v587 = vpop.f32.mrb[0].mxu0
      %588 = vmatprep.mubr.f32.mxu0 0.0
      %589 = vmatmul.mubr.f32.gmra.mrb[0].mxu0 %v297
      %v590 = vpop.f32.mrb[0].mxu0
      %v591 = vadd.f32 %v245, %v590
      %v592 = vpop.f32.mrb[0].mxu0
      %593 = vmatprep.mubr.f32.mxu0 0.0
      %594 = vmatmul.mubr.f32.gmra.mrb[0].mxu0 %v300
      %v595 = vpop.f32.mrb[0].mxu0
      %v596 = vadd.f32 %v245, %v595
      %v597 = vpop.f32.mrb[0].mxu0
      %598 = vmatprep.mubr.f32.mxu0 0.0
      %599 = vmatmul.mubr.f32.gmra.mrb[0].mxu0 %v303
      %v600 = vpop.f32.mrb[0].mxu0
      %v601 = vadd.f32 %v245, %v600
      %v602 = vpop.f32.mrb[0].mxu0
      %603 = vmatprep.mubr.f32.mxu0 0.0
      %604 = vmatmul.mubr.f32.gmra.mrb[0].mxu0 %v306
      %v605 = vpop.f32.mrb[0].mxu0
      %v606 = vadd.f32 %v245, %v605
      %v607 = vpop.f32.mrb[0].mxu0
      %608 = vmatprep.mubr.f32.mxu0 0.0
      %609 = vmatmul.mubr.f32.gmra.mrb[0].mxu0 %v309
      %v610 = vpop.f32.mrb[0].mxu0
      %v611 = vadd.f32 %v245, %v610
      %v612 = vpop.f32.mrb[0].mxu0
      %613 = vmatprep.mubr.f32.mxu0 0.0
      %614 = vmatmul.mubr.f32.gmra.mrb[0].mxu0 %v312
      %v615 = vpop.f32.mrb[0].mxu0
      %v616 = vadd.f32 %v245, %v615
      %v617 = vpop.f32.mrb[0].mxu0
      %618 = vmatprep.mubr.f32.mxu0 0.0
      %619 = vmatmul.mubr.f32.gmra.mrb[0].mxu0 %v315
      %v620 = vpop.f32.mrb[0].mxu0
      %v621 = vadd.f32 %v245, %v620
      %v622 = vpop.f32.mrb[0].mxu0
      %623 = vmatprep.mubr.f32.mxu0 0.0
      %624 = vmatmul.mubr.f32.gmra.mrb[0].mxu0 %v318
      %v625 = vpop.f32.mrb[0].mxu0
      %v626 = vadd.f32 %v245, %v625
      %v627 = vpop.f32.mrb[0].mxu0
      %628 = vmatprep.mubr.f32.mxu0 0.0
      %629 = vmatmul.mubr.f32.gmra.mrb[0].mxu0 %v321
      %v630 = vpop.f32.mrb[0].mxu0
      %v631 = vadd.f32 %v245, %v630
      %v632 = vpop.f32.mrb[0].mxu0
      %633 = vmatprep.mubr.f32.mxu0 0.0
      %634 = vmatmul.mubr.f32.gmra.mrb[0].mxu0 %v324
      %v635 = vpop.f32.mrb[0].mxu0
      %v636 = vadd.f32 %v245, %v635
      %v637 = vpop.f32.mrb[0].mxu0
      %638 = vmatprep.mubr.f32.mxu0 0.0
      %639 = vmatmul.mubr.f32.gmra.mrb[0].mxu0 %v327
      %v640 = vpop.f32.mrb[0].mxu0
      %v641 = vadd.f32 %v245, %v640
      %v642 = vpop.f32.mrb[0].mxu0
      %643 = vmatprep.mubr.f32.mxu0 0.0
      %644 = vmatmul.mubr.f32.gmra.mrb[0].mxu0 %v330
      %v645 = vpop.f32.mrb[0].mxu0
      %v646 = vadd.f32 %v245, %v645
      %v647 = vpop.f32.mrb[0].mxu0
      %648 = vmatprep.mubr.f32.mxu0 0.0
      %649 = vmatmul.mubr.f32.gmra.mrb[0].mxu0 %v333
      %v650 = vpop.f32.mrb[0].mxu0
      %v651 = vadd.f32 %v245, %v650
      %v652 = vpop.f32.mrb[0].mxu0
      %653 = vmatprep.mubr.f32.mxu0 0.0
      %654 = vmatmul.mubr.f32.gmra.mrb[0].mxu0 %v336
      %v655 = vpop.f32.mrb[0].mxu0
      %v656 = vadd.f32 %v245, %v655
      %v657 = vpop.f32.mrb[0].mxu0
      %658 = vmatprep.mubr.f32.mxu0 0.0
      %659 = vmatmul.mubr.f32.gmra.mrb[0].mxu0 %v339
      %v660 = vpop.f32.mrb[0].mxu0
      %v661 = vadd.f32 %v245, %v660
      %v662 = vpop.f32.mrb[0].mxu0
      %663 = vmatprep.mubr.f32.mxu0 0.0
      %664 = vmatmul.mubr.f32.gmra.mrb[0].mxu0 %v342
      %v665 = vpop.f32.mrb[0].mxu0
      %v666 = vadd.f32 %v245, %v665
      %v667 = vpop.f32.mrb[0].mxu0
      %668 = vmatprep.mubr.f32.mxu0 0.0
      %669 = vmatmul.mubr.f32.gmra.mrb[0].mxu0 %v345
      %v670 = vpop.f32.mrb[0].mxu0
      %v671 = vadd.f32 %v245, %v670
      %v672 = vpop.f32.mrb[0].mxu0
      %673 = vmatprep.mubr.f32.mxu0 0.0
      %674 = vmatmul.mubr.f32.gmra.mrb[0].mxu0 %v348
      %v675 = vpop.f32.mrb[0].mxu0
      %v676 = vadd.f32 %v245, %v675
      %v677 = vpop.f32.mrb[0].mxu0
      %678 = vmatprep.mubr.f32.mxu0 0.0
      %679 = vmatmul.mubr.f32.gmra.mrb[0].mxu0 %v351
      %v680 = vpop.f32.mrb[0].mxu0
      %v681 = vadd.f32 %v245, %v680
      %v682 = vpop.f32.mrb[0].mxu0
      %683 = vmatprep.mubr.f32.mxu0 0.0
      %684 = vmatmul.mubr.f32.gmra.mrb[0].mxu0 %v354
      %v685 = vpop.f32.mrb[0].mxu0
      %v686 = vadd.f32 %v245, %v685
      %v687 = vpop.f32.mrb[0].mxu0
      %688 = vmatprep.mubr.f32.mxu0 0.0
      %689 = vmatmul.mubr.f32.gmra.mrb[0].mxu0 %v357
      %v690 = vpop.f32.mrb[0].mxu0
      %v691 = vadd.f32 %v245, %v690
      %v692 = vpop.f32.mrb[0].mxu0
      %693 = vmatprep.mubr.f32.mxu0 0.0
      %694 = vmatmul.mubr.f32.gmra.mrb[0].mxu0 %v360
      %v695 = vpop.f32.mrb[0].mxu0
      %v696 = vadd.f32 %v245, %v695
      %v697 = vpop.f32.mrb[0].mxu0
      %698 = vmatprep.mubr.f32.mxu0 0.0
      %699 = vmatmul.mubr.f32.gmra.mrb[0].mxu0 %v363
      %v700 = vpop.f32.mrb[0].mxu0
      %v701 = vadd.f32 %v245, %v700
      %v702 = vpop.f32.mrb[0].mxu0
      %703 = vmatprep.mubr.f32.mxu0 0.0
      %704 = vmatmul.mubr.f32.gmra.mrb[0].mxu0 %v366
      %v705 = vpop.f32.mrb[0].mxu0
      %v706 = vadd.f32 %v245, %v705
      %v707 = vpop.f32.mrb[0].mxu0
      %708 = vmatprep.mubr.f32.mxu0 0.0
      %709 = vmatmul.mubr.f32.gmra.mrb[0].mxu0 %v369
      %v710 = vpop.f32.mrb[0].mxu0
      %v711 = vadd.f32 %v245, %v710
      %v712 = vpop.f32.mrb[0].mxu0
      %713 = vmatprep.mubr.f32.mxu0 0.0
      %714 = vmatmul.mubr.f32.gmra.mrb[0].mxu0 %v372
      %v715 = vpop.f32.mrb[0].mxu0
      %v716 = vadd.f32 %v245, %v715
      %v717 = vpop.f32.mrb[0].mxu0
      %718 = vmatprep.mubr.f32.mxu0 0.0
      %719 = vmatmul.mubr.f32.gmra.mrb[0].mxu0 %v375
      %v720 = vpop.f32.mrb[0].mxu0
      %v721 = vadd.f32 %v245, %v720
      %v722 = vpop.f32.mrb[0].mxu0
      %723 = vmatprep.mubr.f32.mxu0 0.0
      %724 = vmatmul.mubr.f32.gmra.mrb[0].mxu0 %v378
      %v725 = vpop.f32.mrb[0].mxu0
      %v726 = vadd.f32 %v245, %v725
      %v727 = vpop.f32.mrb[0].mxu0
      %728 = vmatprep.mubr.f32.mxu0 0.0
      %729 = vmatmul.mubr.f32.gmra.mrb[0].mxu0 %v381
      %v730 = vpop.f32.mrb[0].mxu0
      %v731 = vadd.f32 %v245, %v730
      %v732 = vpop.f32.mrb[0].mxu0
      %733 = vmatprep.mubr.f32.mxu0 0.0
      %734 = vmatmul.mubr.f32.gmra.mrb[0].mxu0 %v384
      %v735 = vpop.f32.mrb[0].mxu0
      %v736 = vadd.f32 %v245, %v735
      %v737 = vpop.f32.mrb[0].mxu0
      %738 = vmatprep.mubr.f32.mxu0 0.0
      %739 = vmatmul.mubr.f32.gmra.mrb[0].mxu0 %v387
      %v740 = vpop.f32.mrb[0].mxu0
      %v741 = vadd.f32 %v245, %v740
      %v742 = vpop.f32.mrb[0].mxu0
      %743 = vmatprep.mubr.f32.mxu0 0.0
      %744 = vmatmul.mubr.f32.gmra.mrb[0].mxu0 %v390
      %v745 = vpop.f32.mrb[0].mxu0
      %v746 = vadd.f32 %v245, %v745
      %v747 = vpop.f32.mrb[0].mxu0
      %748 = vmatprep.mubr.f32.mxu0 0.0
      %749 = vmatmul.mubr.f32.gmra.mrb[0].mxu0 %v393
      %v750 = vpop.f32.mrb[0].mxu0
      %v751 = vadd.f32 %v245, %v750
      %v752 = vpop.f32.mrb[0].mxu0
      %753 = vmatprep.mubr.f32.mxu0 0.0
      %754 = vmatmul.mubr.f32.gmra.mrb[0].mxu0 %v396
      %v755 = vpop.f32.mrb[0].mxu0
      %v756 = vadd.f32 %v245, %v755
      %v757 = vpop.f32.mrb[0].mxu0
      %758 = vmatprep.mubr.f32.mxu0 0.0
      %759 = vmatmul.mubr.f32.gmra.mrb[0].mxu0 %v399
      %v760 = vpop.f32.mrb[0].mxu0
      %v761 = vadd.f32 %v245, %v760
      %v762 = vpop.f32.mrb[0].mxu0
      %763 = vmatprep.mubr.f32.mxu0 0.0
      %764 = vmatmul.mubr.f32.gmra.mrb[0].mxu0 %v402
      %v765 = vpop.f32.mrb[0].mxu0
      %v766 = vadd.f32 %v245, %v765
      %v767 = vpop.f32.mrb[0].mxu0
      %768 = vmatprep.mubr.f32.mxu0 0.0
      %769 = vmatmul.mubr.f32.gmra.mrb[0].mxu0 %v405
      %v770 = vpop.f32.mrb[0].mxu0
      %v771 = vadd.f32 %v245, %v770
      %v772 = vpop.f32.mrb[0].mxu0
      %773 = vmatprep.mubr.f32.mxu0 0.0
      %774 = vmatmul.mubr.f32.gmra.mrb[0].mxu0 %v408
      %v775 = vpop.f32.mrb[0].mxu0
      %v776 = vadd.f32 %v245, %v775
      %v777 = vpop.f32.mrb[0].mxu0
      %778 = vmatprep.mubr.f32.mxu0 0.0
      %779 = vmatmul.mubr.f32.gmra.mrb[0].mxu0 %v411
      %v780 = vpop.f32.mrb[0].mxu0
      %v781 = vadd.f32 %v245, %v780
      %v782 = vpop.f32.mrb[0].mxu0
      %783 = vmatprep.mubr.f32.mxu0 0.0
      %784 = vmatmul.mubr.f32.gmra.mrb[0].mxu0 %v414
      %v785 = vpop.f32.mrb[0].mxu0
      %v786 = vadd.f32 %v245, %v785
      %v787 = vpop.f32.mrb[0].mxu0
      %788 = vmatprep.mubr.f32.mxu0 0.0
      %789 = vmatmul.mubr.f32.gmra.mrb[0].mxu0 %v417
      %v790 = vpop.f32.mrb[0].mxu0
      %v791 = vadd.f32 %v245, %v790
      %v792 = vpop.f32.mrb[0].mxu0
      %793 = vmatprep.mubr.f32.mxu0 0.0
      %794 = vmatmul.mubr.f32.gmra.mrb[0].mxu0 %v420
      %v795 = vpop.f32.mrb[0].mxu0
      %v796 = vadd.f32 %v245, %v795
      %v797 = vpop.f32.mrb[0].mxu0
      %798 = vmatprep.mubr.f32.mxu0 0.0
      %799 = vmatmul.mubr.f32.gmra.mrb[0].mxu0 %v423
      %v800 = vpop.f32.mrb[0].mxu0
      %v801 = vadd.f32 %v245, %v800
      %v802 = vpop.f32.mrb[0].mxu0
      %803 = vmatprep.mubr.f32.mxu0 0.0
      %804 = vmatmul.mubr.f32.gmra.mrb[0].mxu0 %v426
      %v805 = vpop.f32.mrb[0].mxu0
      %v806 = vadd.f32 %v245, %v805
      %v807 = vpop.f32.mrb[0].mxu0
      %808 = vmatprep.mubr.f32.mxu0 0.0
      %809 = vmatmul.mubr.f32.gmra.mrb[0].mxu0 %v429
      %v810 = vpop.f32.mrb[0].mxu0
      %v811 = vadd.f32 %v245, %v810
      %v812 = vpop.f32.mrb[0].mxu0
      %813 = vmatprep.mubr.f32.mxu0 0.0
      %814 = vmatmul.mubr.f32.gmra.mrb[0].mxu0 %v432
      %v815 = vpop.f32.mrb[0].mxu0
      %v816 = vadd.f32 %v245, %v815
      %v817 = vpop.f32.mrb[0].mxu0
      %818 = vmatprep.mubr.f32.mxu0 0.0
      %819 = vmatmul.mubr.f32.gmra.mrb[0].mxu0 %v435
      %v820 = vpop.f32.mrb[0].mxu0
      %v821 = vadd.f32 %v245, %v820
      %v822 = vpop.f32.mrb[0].mxu0
      %823 = vmatprep.mubr.f32.mxu0 0.0
      %824 = vmatmul.mubr.f32.gmra.mrb[0].mxu0 %v438
      %v825 = vpop.f32.mrb[0].mxu0
      %v826 = vadd.f32 %v245, %v825
      %v827 = vpop.f32.mrb[0].mxu0
      %828 = vdwg.mxu0
      %vm829 = vcmask 64512
      %830 = vst.msk [vmem:[%s172] sm:$0xff] %vm829, %v511
      %831 = vst.msk [vmem:[%s172 + $0x8] sm:$0xff] %vm829, %v516
      %832 = vst.msk [vmem:[%s172 + $0x10] sm:$0xff] %vm829, %v521
      %833 = vst.msk [vmem:[%s172 + $0x18] sm:$0xff] %vm829, %v526
      %834 = vst.msk [vmem:[%s172 + $0x20] sm:$0xff] %vm829, %v531
      %835 = vst.msk [vmem:[%s172 + $0x28] sm:$0xff] %vm829, %v536
      %836 = vst.msk [vmem:[%s172 + $0x30] sm:$0xff] %vm829, %v541
      %837 = vst.msk [vmem:[%s172 + $0x38] sm:$0xff] %vm829, %v546
      %838 = vst.msk [vmem:[%s172 + $0x40] sm:$0xff] %vm829, %v551
      %839 = vst.msk [vmem:[%s172 + $0x48] sm:$0xff] %vm829, %v556
      %840 = vst.msk [vmem:[%s172 + $0x50] sm:$0xff] %vm829, %v561
      %841 = vst.msk [vmem:[%s172 + $0x58] sm:$0xff] %vm829, %v566
      %842 = vst.msk [vmem:[%s172 + $0x60] sm:$0xff] %vm829, %v571
      %843 = vst.msk [vmem:[%s172 + $0x68] sm:$0xff] %vm829, %v576
      %844 = vst.msk [vmem:[%s172 + $0x70] sm:$0xff] %vm829, %v581
      %845 = vst.msk [vmem:[%s172 + $0x78] sm:$0xff] %vm829, %v586
      %846 = vst.msk [vmem:[%s172 + $0x80] sm:$0xff] %vm829, %v591
      %847 = vst.msk [vmem:[%s172 + $0x88] sm:$0xff] %vm829, %v596
      %848 = vst.msk [vmem:[%s172 + $0x90] sm:$0xff] %vm829, %v601
      %849 = vst.msk [vmem:[%s172 + $0x98] sm:$0xff] %vm829, %v606
      %850 = vst.msk [vmem:[%s172 + $0xa0] sm:$0xff] %vm829, %v611
      %851 = vst.msk [vmem:[%s172 + $0xa8] sm:$0xff] %vm829, %v616
      %852 = vst.msk [vmem:[%s172 + $0xb0] sm:$0xff] %vm829, %v621
      %853 = vst.msk [vmem:[%s172 + $0xb8] sm:$0xff] %vm829, %v626
      %854 = vst.msk [vmem:[%s172 + $0xc0] sm:$0xff] %vm829, %v631
      %855 = vst.msk [vmem:[%s172 + $0xc8] sm:$0xff] %vm829, %v636
      %856 = vst.msk [vmem:[%s172 + $0xd0] sm:$0xff] %vm829, %v641
      %857 = vst.msk [vmem:[%s172 + $0xd8] sm:$0xff] %vm829, %v646
      %858 = vst.msk [vmem:[%s172 + $0xe0] sm:$0xff] %vm829, %v651
      %859 = vst.msk [vmem:[%s172 + $0xe8] sm:$0xff] %vm829, %v656
      %860 = vst.msk [vmem:[%s172 + $0xf0] sm:$0xff] %vm829, %v661
      %861 = vst.msk [vmem:[%s172 + $0xf8] sm:$0xff] %vm829, %v666
      %862 = vst.msk [vmem:[%s172 + $0x100] sm:$0xff] %vm829, %v671
      %863 = vst.msk [vmem:[%s172 + $0x108] sm:$0xff] %vm829, %v676
      %864 = vst.msk [vmem:[%s172 + $0x110] sm:$0xff] %vm829, %v681
      %865 = vst.msk [vmem:[%s172 + $0x118] sm:$0xff] %vm829, %v686
      %866 = vst.msk [vmem:[%s172 + $0x120] sm:$0xff] %vm829, %v691
      %867 = vst.msk [vmem:[%s172 + $0x128] sm:$0xff] %vm829, %v696
      %868 = vst.msk [vmem:[%s172 + $0x130] sm:$0xff] %vm829, %v701
      %869 = vst.msk [vmem:[%s172 + $0x138] sm:$0xff] %vm829, %v706
      %870 = vst.msk [vmem:[%s172 + $0x140] sm:$0xff] %vm829, %v711
      %871 = vst.msk [vmem:[%s172 + $0x148] sm:$0xff] %vm829, %v716
      %872 = vst.msk [vmem:[%s172 + $0x150] sm:$0xff] %vm829, %v721
      %873 = vst.msk [vmem:[%s172 + $0x158] sm:$0xff] %vm829, %v726
      %874 = vst.msk [vmem:[%s172 + $0x160] sm:$0xff] %vm829, %v731
      %875 = vst.msk [vmem:[%s172 + $0x168] sm:$0xff] %vm829, %v736
      %876 = vst.msk [vmem:[%s172 + $0x170] sm:$0xff] %vm829, %v741
      %877 = vst.msk [vmem:[%s172 + $0x178] sm:$0xff] %vm829, %v746
      %878 = vst.msk [vmem:[%s172 + $0x180] sm:$0xff] %vm829, %v751
      %879 = vst.msk [vmem:[%s172 + $0x188] sm:$0xff] %vm829, %v756
      %880 = vst.msk [vmem:[%s172 + $0x190] sm:$0xff] %vm829, %v761
      %881 = vst.msk [vmem:[%s172 + $0x198] sm:$0xff] %vm829, %v766
      %882 = vst.msk [vmem:[%s172 + $0x1a0] sm:$0xff] %vm829, %v771
      %883 = vst.msk [vmem:[%s172 + $0x1a8] sm:$0xff] %vm829, %v776
      %884 = vst.msk [vmem:[%s172 + $0x1b0] sm:$0xff] %vm829, %v781
      %885 = vst.msk [vmem:[%s172 + $0x1b8] sm:$0xff] %vm829, %v786
      %886 = vst.msk [vmem:[%s172 + $0x1c0] sm:$0xff] %vm829, %v791
      %887 = vst.msk [vmem:[%s172 + $0x1c8] sm:$0xff] %vm829, %v796
      %888 = vst.msk [vmem:[%s172 + $0x1d0] sm:$0xff] %vm829, %v801
      %889 = vst.msk [vmem:[%s172 + $0x1d8] sm:$0xff] %vm829, %v806
      %890 = vst.msk [vmem:[%s172 + $0x1e0] sm:$0xff] %vm829, %v811
      %891 = vst.msk [vmem:[%s172 + $0x1e8] sm:$0xff] %vm829, %v816
      %892 = vst.msk [vmem:[%s172 + $0x1f0] sm:$0xff] %vm829, %v821
      %893 = vst.msk [vmem:[%s172 + $0x1f8] sm:$0xff] %vm829, %v826
      %s894 = smul.u32 64, %s14
      %p895 = scmp.lt.s32.totalorder %s894, 255
      %s896 = scalar_select %p895, %s894, 255
      %s897 = smul.addr %s896, 8
      %s898 = scalar_lea.vmem %s3, %s897
      // Predicated region
      $region33: #{wavemix_sr_forward.10} parent=31 // pred_check
        %p899 = pneg %p100
      $region34: #{wavemix_sr_forward.10} parent=31 // pred_check_branch
        %901 = sbr.rel (%p899) target = $region36
      $region35: #{wavemix_sr_forward.10} parent=31 // pred_region
        %s902 = smul.u32 64, %s14
      $region36: #{wavemix_sr_forward.10} parent=31 // pred_fallthru
        _
    $region32: #{wavemix_sr_forward.10} parent=5 // pred_fallthru
      _
    %p903 = scmp.le.s32.totalorder 2, %s9
    // Predicated region
    $region37: #{wavemix_sr_forward.10} parent=5 // pred_check
      %p904 = pneg %p903
    $region38: #{wavemix_sr_forward.10} parent=5 // pred_check_branch
      %906 = sbr.rel (%p904) target = $region40
    $region39: #{wavemix_sr_forward.10} parent=5 // pred_region
      %s907 = ssub.s32 %s9, 2
      // Predicated region
      $region41: #{wavemix_sr_forward.10} parent=39 // pred_check
        %p908 = pneg %p106
      $region42: #{wavemix_sr_forward.10} parent=39 // pred_check_branch
        %910 = sbr.rel (%p908) target = $region44
      $region43: #{wavemix_sr_forward.10} parent=39 // pred_region
        %s911 = smul.u32 64, %s15
        %p912 = scmp.lt.s32.totalorder %s911, 255
        %s913 = scalar_select %p912, %s911, 255
        %s914 = smul.addr %s913, 8
        %s915 = scalar_lea.vmem %s3, %s914
      $region44: #{wavemix_sr_forward.10} parent=39 // pred_fallthru
        _
    $region40: #{wavemix_sr_forward.10} parent=5 // pred_fallthru
      _
  $region6: #{wavemix_sr_forward.10} parent=0 // loop_footer
    %s13 = sadd.s32 1, %s9
  $region7: #{wavemix_sr_forward.10} parent=0 // loop_footer_branch
    %8 = sbr.rel target = $region3
  $region8: #{wavemix_sr_forward.10} parent=0 // loop_exit
    _

// kernel: wavemix_sr_forward.11
$region0: #{wavemix_sr_forward.11}
  #allocation0 [shape = 'u32[]', space=smem, size = 0x4, offset = 0x4, fixed_abs, tag = 'smem constant byte address 0x4 - core index']
  #allocation1 [shape = 'u32[144,128]{1,0:T(1,128)}', space=vmem, size = 0x12000, scoped, tag = 'internal scratch']
  %s0 = inlined_call_operand.vmem [shape: f32[2048,72], index: 0, kind: input, shape index: {}]
  %s1 = inlined_call_operand.vmem [shape: f32[72,16], index: 1, kind: input, shape index: {}]
  %s2 = inlined_call_operand.vmem [shape: f32[1,16], index: 2, kind: input, shape index: {}]
  %s3 = inlined_call_operand.vmem [shape: f32[2048,16], index: 3, kind: output, shape index: {}]
  %s4 = sld [smem:[#allocation0]]
  $region45: #{wavemix_sr_forward.11} parent=0
    _
  %s6 = ssub.s32 1, %s4
  %s7 = scalar_select 0, %s6, %s4
  loop: start=0, step=1, limit=6
  $region2: #{wavemix_sr_forward.11} parent=0 // loop_pre_header
    _
  $region3: #{wavemix_sr_forward.11} parent=0 // loop_header
    %s9 = sphi 0, %s13
    %p10 = scmp.ge.s32.totalorder %s9, 6
    %s19 = sphi 0, %s21
    %s22 = sphi 0, %s19
    %s23 = sphi 0, %s22
    %s39 = sphi 0, %s23
    %s43 = sphi 0, %s43
    %s45 = sphi 0, %s43
    %s46 = sphi 0, %s45
    %s60 = sphi 0, %s46
    %s64 = sphi 0, %s64
    %s66 = sphi 0, %s64
    %s67 = sphi 0, %s66
    %s81 = sphi 0, %s67
    %s87 = sphi 0, %s89
    %s90 = sphi 0, %s87
    %s91 = sphi 0, %s90
    %s107 = sphi 0, %s91
  $region4: #{wavemix_sr_forward.11} parent=0 // loop_header_branch
    %12 = sbr.rel (%p10) target = $region8
  $region5: #{wavemix_sr_forward.11} parent=0 // loop_body
    %s14 = ssub.s32 %s9, 1
    %s15 = ssub.s32 %s9, 2
    %s16 = sadd.s32 %s9, 1
    %s17 = ssub.s32 %s9, %s16
    %p18 = scmp.eq.s32.totalorder %s17, 0
    %s20 = sadd.s32 %s19, 1
    %s21 = scalar_select %p18, %s19, %s20
    %p24 = pneg %p18
    %p25 = scmp.eq.s32.totalorder %s9, 3
    %p26 = por %p24, %p25
    %p27 = scmp.ne.s32.totalorder %s19, %s22
    %p28 = scmp.eq.s32.totalorder %s9, 0
    %p29 = por %p27, %p28
    %p30 = scmp.ne.s32.totalorder %s19, %s22
    %p31 = scmp.eq.s32.totalorder %s14, 3
    %p32 = por %p30, %p31
    %p33 = scmp.ne.s32.totalorder %s22, %s23
    %p34 = scmp.eq.s32.totalorder %s14, 0
    %p35 = por %p33, %p34
    %p36 = scmp.ne.s32.totalorder %s22, %s23
    %p37 = scmp.eq.s32.totalorder %s15, 3
    %p38 = por %p36, %p37
    %p40 = scmp.ne.s32.totalorder %s23, %s39
    %p41 = scmp.eq.s32.totalorder %s15, 0
    %p42 = por %p40, %p41
    %s44 = sadd.s32 %s43, 1
    %p47 = scmp.eq.s32.totalorder %s9, 3
    %p48 = scmp.ne.s32.totalorder %s43, %s45
    %p49 = scmp.eq.s32.totalorder %s9, 0
    %p50 = por %p48, %p49
    %p51 = scmp.ne.s32.totalorder %s43, %s45
    %p52 = scmp.eq.s32.totalorder %s14, 3
    %p53 = por %p51, %p52
    %p54 = scmp.ne.s32.totalorder %s45, %s46
    %p55 = scmp.eq.s32.totalorder %s14, 0
    %p56 = por %p54, %p55
    %p57 = scmp.ne.s32.totalorder %s45, %s46
    %p58 = scmp.eq.s32.totalorder %s15, 3
    %p59 = por %p57, %p58
    %p61 = scmp.ne.s32.totalorder %s46, %s60
    %p62 = scmp.eq.s32.totalorder %s15, 0
    %p63 = por %p61, %p62
    %s65 = sadd.s32 %s64, 1
    %p68 = scmp.eq.s32.totalorder %s9, 3
    %p69 = scmp.ne.s32.totalorder %s64, %s66
    %p70 = scmp.eq.s32.totalorder %s9, 0
    %p71 = por %p69, %p70
    %p72 = scmp.ne.s32.totalorder %s64, %s66
    %p73 = scmp.eq.s32.totalorder %s14, 3
    %p74 = por %p72, %p73
    %p75 = scmp.ne.s32.totalorder %s66, %s67
    %p76 = scmp.eq.s32.totalorder %s14, 0
    %p77 = por %p75, %p76
    %p78 = scmp.ne.s32.totalorder %s66, %s67
    %p79 = scmp.eq.s32.totalorder %s15, 3
    %p80 = por %p78, %p79
    %p82 = scmp.ne.s32.totalorder %s67, %s81
    %p83 = scmp.eq.s32.totalorder %s15, 0
    %p84 = por %p82, %p83
    %s85 = ssub.s32 %s9, %s16
    %p86 = scmp.eq.s32.totalorder %s85, 0
    %s88 = sadd.s32 %s87, 1
    %s89 = scalar_select %p86, %s87, %s88
    %p92 = pneg %p86
    %p93 = scmp.eq.s32.totalorder %s9, 3
    %p94 = por %p92, %p93
    %p95 = scmp.ne.s32.totalorder %s87, %s90
    %p96 = scmp.eq.s32.totalorder %s9, 0
    %p97 = por %p95, %p96
    %p98 = scmp.ne.s32.totalorder %s87, %s90
    %p99 = scmp.eq.s32.totalorder %s14, 3
    %p100 = por %p98, %p99
    %p101 = scmp.ne.s32.totalorder %s90, %s91
    %p102 = scmp.eq.s32.totalorder %s14, 0
    %p103 = por %p101, %p102
    %p104 = scmp.ne.s32.totalorder %s90, %s91
    %p105 = scmp.eq.s32.totalorder %s15, 3
    %p106 = por %p104, %p105
    %p108 = scmp.ne.s32.totalorder %s91, %s107
    %p109 = scmp.eq.s32.totalorder %s15, 0
    %p110 = por %p108, %p109
    %p111 = scmp.le.s32.totalorder 1, %s9
    %p112 = scmp.lt.s32.totalorder %s9, 5
    %p113 = pnand %p111, %p112
    %p114 = pneg %p113
    // Predicated region
    $region9: #{wavemix_sr_forward.11} parent=5 // pred_check
      _
    $region10: #{wavemix_sr_forward.11} parent=5 // pred_check_branch
      %116 = sbr.rel (%p113) target = $region12
    $region11: #{wavemix_sr_forward.11} parent=5 // pred_region
      %s117 = ssub.s32 %s9, 1
      // Predicated region
      $region13: #{wavemix_sr_forward.11} parent=11 // pred_check
        %p118 = pneg %p56
      $region14: #{wavemix_sr_forward.11} parent=11 // pred_check_branch
        %120 = sbr.rel (%p118) target = $region16
      $region15: #{wavemix_sr_forward.11} parent=11 // pred_region
        _
      $region16: #{wavemix_sr_forward.11} parent=11 // pred_fallthru
        _
      // Predicated region
      $region17: #{wavemix_sr_forward.11} parent=11 // pred_check
        %p121 = pneg %p77
      $region18: #{wavemix_sr_forward.11} parent=11 // pred_check_branch
        %123 = sbr.rel (%p121) target = $region20
      $region19: #{wavemix_sr_forward.11} parent=11 // pred_region
        _
      $region20: #{wavemix_sr_forward.11} parent=11 // pred_fallthru
        _
    $region12: #{wavemix_sr_forward.11} parent=5 // pred_fallthru
      _
    %p124 = scmp.lt.s32.totalorder %s9, 4
    // Predicated region
    $region21: #{wavemix_sr_forward.11} parent=5 // pred_check
      %p125 = pneg %p124
    $region22: #{wavemix_sr_forward.11} parent=5 // pred_check_branch
      %127 = sbr.rel (%p125) target = $region24
    $region23: #{wavemix_sr_forward.11} parent=5 // pred_region
      // Predicated region
      $region25: #{wavemix_sr_forward.11} parent=23 // pred_check
        %p128 = pneg %p29
      $region26: #{wavemix_sr_forward.11} parent=23 // pred_check_branch
        %130 = sbr.rel (%p128) target = $region28
      $region27: #{wavemix_sr_forward.11} parent=23 // pred_region
        %s131 = smul.u32 64, %s9
        %p132 = scmp.lt.s32.totalorder %s131, 255
        %s133 = scalar_select %p132, %s131, 255
        %s134 = smul.addr %s133, 8
        %s135 = scalar_lea.vmem %s0, %s134
        %s136 = smul.u32 64, %s9
      $region28: #{wavemix_sr_forward.11} parent=23 // pred_fallthru
        _
    $region24: #{wavemix_sr_forward.11} parent=5 // pred_fallthru
      _
    %p137 = scmp.le.s32.totalorder 1, %s9
    %p138 = scmp.lt.s32.totalorder %s9, 5
    %p139 = pnand %p137, %p138
    %p140 = pneg %p139
    // Predicated region
    $region29: #{wavemix_sr_forward.11} parent=5 // pred_check
      _
    $region30: #{wavemix_sr_forward.11} parent=5 // pred_check_branch
      %142 = sbr.rel (%p139) target = $region32
    $region31: #{wavemix_sr_forward.11} parent=5 // pred_region
      %s143 = ssub.s32 %s9, 1
      %s144 = smul.u32 64, %s14
      %p145 = scmp.lt.s32.totalorder %s144, 255
      %s146 = scalar_select %p145, %s144, 255
      %s147 = smul.addr %s146, 8
      %s148 = scalar_lea.vmem %s0, %s147
      %p149 = pneg %p35
      %p150 = pneg %p32
      %p151 = pneg %p56
      %p152 = pneg %p53
      %p153 = pneg %p77
      %p154 = pneg %p74
      %p155 = pneg %p103
      %p156 = pneg %p100
      %s157 = smul.u32 64, %s14
      %p158 = scmp.lt.s32.totalorder %s157, 255
      %s159 = scalar_select %p158, %s157, 255
      %s160 = smul.addr %s159, 8
      %s161 = scalar_lea.vmem %s3, %s160
      %s162 = smul.u32 64, %s14
      %p163 = scmp.lt.s32.totalorder %s162, 255
      %s164 = scalar_select %p163, %s162, 255
      %s165 = smul.addr %s164, 8
      %s166 = scalar_lea.vmem %s0, %s165
      %s167 = smul.u32 64, %s14
      %s168 = smul.u32 64, %s14
      %p169 = scmp.lt.s32.totalorder %s168, 255
      %s170 = scalar_select %p169, %s168, 255
      %s171 = smul.addr %s170, 8
      %s172 = scalar_lea.vmem %s3, %s171
      %s173 = smul.u32 64, %s14
      %v174 = vld [vmem:[%s166] sm:$0xff]
      %v175 = vld [vmem:[%s166 + $0x8] sm:$0xff]
      %v176 = vld [vmem:[%s166 + $0x10] sm:$0xff]
      %v177 = vld [vmem:[%s166 + $0x18] sm:$0xff]
      %v178 = vld [vmem:[%s166 + $0x20] sm:$0xff]
      %v179 = vld [vmem:[%s166 + $0x28] sm:$0xff]
      %v180 = vld [vmem:[%s166 + $0x30] sm:$0xff]
      %v181 = vld [vmem:[%s166 + $0x38] sm:$0xff]
      %v182 = vld [vmem:[%s166 + $0x40] sm:$0xff]
      %v183 = vld [vmem:[%s166 + $0x48] sm:$0xff]
      %v184 = vld [vmem:[%s166 + $0x50] sm:$0xff]
      %v185 = vld [vmem:[%s166 + $0x58] sm:$0xff]
      %v186 = vld [vmem:[%s166 + $0x60] sm:$0xff]
      %v187 = vld [vmem:[%s166 + $0x68] sm:$0xff]
      %v188 = vld [vmem:[%s166 + $0x70] sm:$0xff]
      %v189 = vld [vmem:[%s166 + $0x78] sm:$0xff]
      %v190 = vld [vmem:[%s166 + $0x80] sm:$0xff]
      %v191 = vld [vmem:[%s166 + $0x88] sm:$0xff]
      %v192 = vld [vmem:[%s166 + $0x90] sm:$0xff]
      %v193 = vld [vmem:[%s166 + $0x98] sm:$0xff]
      %v194 = vld [vmem:[%s166 + $0xa0] sm:$0xff]
      %v195 = vld [vmem:[%s166 + $0xa8] sm:$0xff]
      %v196 = vld [vmem:[%s166 + $0xb0] sm:$0xff]
      %v197 = vld [vmem:[%s166 + $0xb8] sm:$0xff]
      %v198 = vld [vmem:[%s166 + $0xc0] sm:$0xff]
      %v199 = vld [vmem:[%s166 + $0xc8] sm:$0xff]
      %v200 = vld [vmem:[%s166 + $0xd0] sm:$0xff]
      %v201 = vld [vmem:[%s166 + $0xd8] sm:$0xff]
      %v202 = vld [vmem:[%s166 + $0xe0] sm:$0xff]
      %v203 = vld [vmem:[%s166 + $0xe8] sm:$0xff]
      %v204 = vld [vmem:[%s166 + $0xf0] sm:$0xff]
      %v205 = vld [vmem:[%s166 + $0xf8] sm:$0xff]
      %v206 = vld [vmem:[%s166 + $0x100] sm:$0xff]
      %v207 = vld [vmem:[%s166 + $0x108] sm:$0xff]
      %v208 = vld [vmem:[%s166 + $0x110] sm:$0xff]
      %v209 = vld [vmem:[%s166 + $0x118] sm:$0xff]
      %v210 = vld [vmem:[%s166 + $0x120] sm:$0xff]
      %v211 = vld [vmem:[%s166 + $0x128] sm:$0xff]
      %v212 = vld [vmem:[%s166 + $0x130] sm:$0xff]
      %v213 = vld [vmem:[%s166 + $0x138] sm:$0xff]
      %v214 = vld [vmem:[%s166 + $0x140] sm:$0xff]
      %v215 = vld [vmem:[%s166 + $0x148] sm:$0xff]
      %v216 = vld [vmem:[%s166 + $0x150] sm:$0xff]
      %v217 = vld [vmem:[%s166 + $0x158] sm:$0xff]
      %v218 = vld [vmem:[%s166 + $0x160] sm:$0xff]
      %v219 = vld [vmem:[%s166 + $0x168] sm:$0xff]
      %v220 = vld [vmem:[%s166 + $0x170] sm:$0xff]
      %v221 = vld [vmem:[%s166 + $0x178] sm:$0xff]
      %v222 = vld [vmem:[%s166 + $0x180] sm:$0xff]
      %v223 = vld [vmem:[%s166 + $0x188] sm:$0xff]
      %v224 = vld [vmem:[%s166 + $0x190] sm:$0xff]
      %v225 = vld [vmem:[%s166 + $0x198] sm:$0xff]
      %v226 = vld [vmem:[%s166 + $0x1a0] sm:$0xff]
      %v227 = vld [vmem:[%s166 + $0x1a8] sm:$0xff]
      %v228 = vld [vmem:[%s166 + $0x1b0] sm:$0xff]
      %v229 = vld [vmem:[%s166 + $0x1b8] sm:$0xff]
      %v230 = vld [vmem:[%s166 + $0x1c0] sm:$0xff]
      %v231 = vld [vmem:[%s166 + $0x1c8] sm:$0xff]
      %v232 = vld [vmem:[%s166 + $0x1d0] sm:$0xff]
      %v233 = vld [vmem:[%s166 + $0x1d8] sm:$0xff]
      %v234 = vld [vmem:[%s166 + $0x1e0] sm:$0xff]
      %v235 = vld [vmem:[%s166 + $0x1e8] sm:$0xff]
      %v236 = vld [vmem:[%s166 + $0x1f0] sm:$0xff]
      %v237 = vld [vmem:[%s166 + $0x1f8] sm:$0xff]
      %v238 = vld [vmem:[%s1] sm:$0xff]
      %v239 = vld [vmem:[%s1 + $0x8] sm:$0xff]
      %v240 = vld [vmem:[%s1 + $0x10] sm:$0xff]
      %v241 = vld [vmem:[%s1 + $0x18] sm:$0xff]
      %v242 = vld [vmem:[%s1 + $0x20] sm:$0xff]
      %v243 = vld [vmem:[%s1 + $0x28] sm:$0xff]
      %v244 = vld [vmem:[%s1 + $0x30] sm:$0xff]
      %v245 = vld [vmem:[%s1 + $0x38] sm:$0xff]
      %v246 = vld [vmem:[%s1 + $0x40] sm:$0xff]
      %v247 = vld [vmem:[%s2] sm:$0x1]
      %v249 = vlaneseq
      %v250 = vshrl.u32 %v249, 7
      %v251 = vsub.s32 0, %v250
      %v252 = vrot.slane %v247, %v251
      %vm254 = vcmask 588800
      %v256 = vsel %vm254, %v174, 0
      %v259 = vsel %vm254, %v175, 0
      %v262 = vsel %vm254, %v176, 0
      %v265 = vsel %vm254, %v177, 0
      %v268 = vsel %vm254, %v178, 0
      %v271 = vsel %vm254, %v179, 0
      %v274 = vsel %vm254, %v180, 0
      %v277 = vsel %vm254, %v181, 0
      %v280 = vsel %vm254, %v182, 0
      %v283 = vsel %vm254, %v183, 0
      %v286 = vsel %vm254, %v184, 0
      %v289 = vsel %vm254, %v185, 0
      %v292 = vsel %vm254, %v186, 0
      %v295 = vsel %vm254, %v187, 0
      %v298 = vsel %vm254, %v188, 0
      %v301 = vsel %vm254, %v189, 0
      %v304 = vsel %vm254, %v190, 0
      %v307 = vsel %vm254, %v191, 0
      %v310 = vsel %vm254, %v192, 0
      %v313 = vsel %vm254, %v193, 0
      %v316 = vsel %vm254, %v194, 0
      %v319 = vsel %vm254, %v195, 0
      %v322 = vsel %vm254, %v196, 0
      %v325 = vsel %vm254, %v197, 0
      %v328 = vsel %vm254, %v198, 0
      %v331 = vsel %vm254, %v199, 0
      %v334 = vsel %vm254, %v200, 0
      %v337 = vsel %vm254, %v201, 0
      %v340 = vsel %vm254, %v202, 0
      %v343 = vsel %vm254, %v203, 0
      %v346 = vsel %vm254, %v204, 0
      %v349 = vsel %vm254, %v205, 0
      %v352 = vsel %vm254, %v206, 0
      %v355 = vsel %vm254, %v207, 0
      %v358 = vsel %vm254, %v208, 0
      %v361 = vsel %vm254, %v209, 0
      %v364 = vsel %vm254, %v210, 0
      %v367 = vsel %vm254, %v211, 0
      %v370 = vsel %vm254, %v212, 0
      %v373 = vsel %vm254, %v213, 0
      %v376 = vsel %vm254, %v214, 0
      %v379 = vsel %vm254, %v215, 0
      %v382 = vsel %vm254, %v216, 0
      %v385 = vsel %vm254, %v217, 0
      %v388 = vsel %vm254, %v218, 0
      %v391 = vsel %vm254, %v219, 0
      %v394 = vsel %vm254, %v220, 0
      %v397 = vsel %vm254, %v221, 0
      %v400 = vsel %vm254, %v222, 0
      %v403 = vsel %vm254, %v223, 0
      %v406 = vsel %vm254, %v224, 0
      %v409 = vsel %vm254, %v225, 0
      %v412 = vsel %vm254, %v226, 0
      %v415 = vsel %vm254, %v227, 0
      %v418 = vsel %vm254, %v228, 0
      %v421 = vsel %vm254, %v229, 0
      %v424 = vsel %vm254, %v230, 0
      %v427 = vsel %vm254, %v231, 0
      %v430 = vsel %vm254, %v232, 0
      %v433 = vsel %vm254, %v233, 0
      %v436 = vsel %vm254, %v234, 0
      %v439 = vsel %vm254, %v235, 0
      %v442 = vsel %vm254, %v236, 0
      %v445 = vsel %vm254, %v237, 0
      %447 = vmatprep.subr.mxu0 0.0
      %448 = vmatpush1.msra.mxu0 %v238
      %449 = vmatprep.subr.mxu0 0.0
      %450 = vmatpush1.msra.mxu0 %v239
      %451 = vmatprep.subr.mxu0 0.0
      %452 = vmatpush1.msra.mxu0 %v240
      %453 = vmatprep.subr.mxu0 0.0
      %454 = vmatpush1.msra.mxu0 %v241
      %455 = vmatprep.subr.mxu0 0.0
      %456 = vmatpush1.msra.mxu0 %v242
      %457 = vmatprep.subr.mxu0 0.0
      %458 = vmatpush1.msra.mxu0 %v243
      %459 = vmatprep.subr.mxu0 0.0
      %460 = vmatpush1.msra.mxu0 %v244
      %461 = vmatprep.subr.mxu0 0.0
      %462 = vmatpush1.msra.mxu0 %v245
      %463 = vmatprep.subr.mxu0 0.0
      %464 = vmatpush1.msra.mxu0 %v246
      %465 = vmatprep.subr.mxu0 0.0
      %466 = vmatpush1.msra.mxu0 0.0
      %467 = vmatprep.subr.mxu0 0.0
      %468 = vmatpush1.msra.mxu0 0.0
      %469 = vmatprep.subr.mxu0 0.0
      %470 = vmatpush1.msra.mxu0 0.0
      %471 = vmatprep.subr.mxu0 0.0
      %472 = vmatpush1.msra.mxu0 0.0
      %473 = vmatprep.subr.mxu0 0.0
      %474 = vmatpush1.msra.mxu0 0.0
      %475 = vmatprep.subr.mxu0 0.0
      %476 = vmatpush1.msra.mxu0 0.0
      %477 = vmatprep.subr.mxu0 0.0
      %478 = vmatpush1.msra.mxu0 0.0
      %479 = vmatprep.subr.mxu0 0.0
      %480 = vmatpush1.msra.mxu0 0.0
      %481 = vmatprep.subr.mxu0 0.0
      %482 = vmatpush1.msra.mxu0 0.0
      %483 = vmatprep.subr.mxu0 0.0
      %484 = vmatpush1.msra.mxu0 0.0
      %485 = vmatprep.subr.mxu0 0.0
      %486 = vmatpush1.msra.mxu0 0.0
      %487 = vmatprep.subr.mxu0 0.0
      %488 = vmatpush1.msra.mxu0 0.0
      %489 = vmatprep.subr.mxu0 0.0
      %490 = vmatpush1.msra.mxu0 0.0
      %491 = vmatprep.subr.mxu0 0.0
      %492 = vmatpush1.msra.mxu0 0.0
      %493 = vmatprep.subr.mxu0 0.0
      %494 = vmatpush1.msra.mxu0 0.0
      %495 = vmatprep.subr.mxu0 0.0
      %496 = vmatpush1.msra.mxu0 0.0
      %497 = vmatprep.subr.mxu0 0.0
      %498 = vmatpush1.msra.mxu0 0.0
      %499 = vmatprep.subr.mxu0 0.0
      %500 = vmatpush1.msra.mxu0 0.0
      %501 = vmatprep.subr.mxu0 0.0
      %502 = vmatpush1.msra.mxu0 0.0
      %503 = vmatprep.subr.mxu0 0.0
      %504 = vmatpush1.msra.mxu0 0.0
      %505 = vmatprep.subr.mxu0 0.0
      %506 = vmatpush1.msra.mxu0 0.0
      %507 = vmatprep.subr.mxu0 0.0
      %508 = vmatpush1.msra.mxu0 0.0
      %509 = vmatprep.subr.mxu0 0.0
      %510 = vmatpush1.msra.mxu0 0.0
      %511 = vmatprep.mubr.f32.mxu0 0.0
      %512 = vmatmul.mubr.f32.gmra.mrb[0].mxu0 %v256
      %v513 = vpop.f32.mrb[0].mxu0
      %v514 = vadd.f32 %v252, %v513
      %v515 = vpop.f32.mrb[0].mxu0
      %516 = vmatprep.mubr.f32.mxu0 0.0
      %517 = vmatmul.mubr.f32.gmra.mrb[0].mxu0 %v259
      %v518 = vpop.f32.mrb[0].mxu0
      %v519 = vadd.f32 %v252, %v518
      %v520 = vpop.f32.mrb[0].mxu0
      %521 = vmatprep.mubr.f32.mxu0 0.0
      %522 = vmatmul.mubr.f32.gmra.mrb[0].mxu0 %v262
      %v523 = vpop.f32.mrb[0].mxu0
      %v524 = vadd.f32 %v252, %v523
      %v525 = vpop.f32.mrb[0].mxu0
      %526 = vmatprep.mubr.f32.mxu0 0.0
      %527 = vmatmul.mubr.f32.gmra.mrb[0].mxu0 %v265
      %v528 = vpop.f32.mrb[0].mxu0
      %v529 = vadd.f32 %v252, %v528
      %v530 = vpop.f32.mrb[0].mxu0
      %531 = vmatprep.mubr.f32.mxu0 0.0
      %532 = vmatmul.mubr.f32.gmra.mrb[0].mxu0 %v268
      %v533 = vpop.f32.mrb[0].mxu0
      %v534 = vadd.f32 %v252, %v533
      %v535 = vpop.f32.mrb[0].mxu0
      %536 = vmatprep.mubr.f32.mxu0 0.0
      %537 = vmatmul.mubr.f32.gmra.mrb[0].mxu0 %v271
      %v538 = vpop.f32.mrb[0].mxu0
      %v539 = vadd.f32 %v252, %v538
      %v540 = vpop.f32.mrb[0].mxu0
      %541 = vmatprep.mubr.f32.mxu0 0.0
      %542 = vmatmul.mubr.f32.gmra.mrb[0].mxu0 %v274
      %v543 = vpop.f32.mrb[0].mxu0
      %v544 = vadd.f32 %v252, %v543
      %v545 = vpop.f32.mrb[0].mxu0
      %546 = vmatprep.mubr.f32.mxu0 0.0
      %547 = vmatmul.mubr.f32.gmra.mrb[0].mxu0 %v277
      %v548 = vpop.f32.mrb[0].mxu0
      %v549 = vadd.f32 %v252, %v548
      %v550 = vpop.f32.mrb[0].mxu0
      %551 = vmatprep.mubr.f32.mxu0 0.0
      %552 = vmatmul.mubr.f32.gmra.mrb[0].mxu0 %v280
      %v553 = vpop.f32.mrb[0].mxu0
      %v554 = vadd.f32 %v252, %v553
      %v555 = vpop.f32.mrb[0].mxu0
      %556 = vmatprep.mubr.f32.mxu0 0.0
      %557 = vmatmul.mubr.f32.gmra.mrb[0].mxu0 %v283
      %v558 = vpop.f32.mrb[0].mxu0
      %v559 = vadd.f32 %v252, %v558
      %v560 = vpop.f32.mrb[0].mxu0
      %561 = vmatprep.mubr.f32.mxu0 0.0
      %562 = vmatmul.mubr.f32.gmra.mrb[0].mxu0 %v286
      %v563 = vpop.f32.mrb[0].mxu0
      %v564 = vadd.f32 %v252, %v563
      %v565 = vpop.f32.mrb[0].mxu0
      %566 = vmatprep.mubr.f32.mxu0 0.0
      %567 = vmatmul.mubr.f32.gmra.mrb[0].mxu0 %v289
      %v568 = vpop.f32.mrb[0].mxu0
      %v569 = vadd.f32 %v252, %v568
      %v570 = vpop.f32.mrb[0].mxu0
      %571 = vmatprep.mubr.f32.mxu0 0.0
      %572 = vmatmul.mubr.f32.gmra.mrb[0].mxu0 %v292
      %v573 = vpop.f32.mrb[0].mxu0
      %v574 = vadd.f32 %v252, %v573
      %v575 = vpop.f32.mrb[0].mxu0
      %576 = vmatprep.mubr.f32.mxu0 0.0
      %577 = vmatmul.mubr.f32.gmra.mrb[0].mxu0 %v295
      %v578 = vpop.f32.mrb[0].mxu0
      %v579 = vadd.f32 %v252, %v578
      %v580 = vpop.f32.mrb[0].mxu0
      %581 = vmatprep.mubr.f32.mxu0 0.0
      %582 = vmatmul.mubr.f32.gmra.mrb[0].mxu0 %v298
      %v583 = vpop.f32.mrb[0].mxu0
      %v584 = vadd.f32 %v252, %v583
      %v585 = vpop.f32.mrb[0].mxu0
      %586 = vmatprep.mubr.f32.mxu0 0.0
      %587 = vmatmul.mubr.f32.gmra.mrb[0].mxu0 %v301
      %v588 = vpop.f32.mrb[0].mxu0
      %v589 = vadd.f32 %v252, %v588
      %v590 = vpop.f32.mrb[0].mxu0
      %591 = vmatprep.mubr.f32.mxu0 0.0
      %592 = vmatmul.mubr.f32.gmra.mrb[0].mxu0 %v304
      %v593 = vpop.f32.mrb[0].mxu0
      %v594 = vadd.f32 %v252, %v593
      %v595 = vpop.f32.mrb[0].mxu0
      %596 = vmatprep.mubr.f32.mxu0 0.0
      %597 = vmatmul.mubr.f32.gmra.mrb[0].mxu0 %v307
      %v598 = vpop.f32.mrb[0].mxu0
      %v599 = vadd.f32 %v252, %v598
      %v600 = vpop.f32.mrb[0].mxu0
      %601 = vmatprep.mubr.f32.mxu0 0.0
      %602 = vmatmul.mubr.f32.gmra.mrb[0].mxu0 %v310
      %v603 = vpop.f32.mrb[0].mxu0
      %v604 = vadd.f32 %v252, %v603
      %v605 = vpop.f32.mrb[0].mxu0
      %606 = vmatprep.mubr.f32.mxu0 0.0
      %607 = vmatmul.mubr.f32.gmra.mrb[0].mxu0 %v313
      %v608 = vpop.f32.mrb[0].mxu0
      %v609 = vadd.f32 %v252, %v608
      %v610 = vpop.f32.mrb[0].mxu0
      %611 = vmatprep.mubr.f32.mxu0 0.0
      %612 = vmatmul.mubr.f32.gmra.mrb[0].mxu0 %v316
      %v613 = vpop.f32.mrb[0].mxu0
      %v614 = vadd.f32 %v252, %v613
      %v615 = vpop.f32.mrb[0].mxu0
      %616 = vmatprep.mubr.f32.mxu0 0.0
      %617 = vmatmul.mubr.f32.gmra.mrb[0].mxu0 %v319
      %v618 = vpop.f32.mrb[0].mxu0
      %v619 = vadd.f32 %v252, %v618
      %v620 = vpop.f32.mrb[0].mxu0
      %621 = vmatprep.mubr.f32.mxu0 0.0
      %622 = vmatmul.mubr.f32.gmra.mrb[0].mxu0 %v322
      %v623 = vpop.f32.mrb[0].mxu0
      %v624 = vadd.f32 %v252, %v623
      %v625 = vpop.f32.mrb[0].mxu0
      %626 = vmatprep.mubr.f32.mxu0 0.0
      %627 = vmatmul.mubr.f32.gmra.mrb[0].mxu0 %v325
      %v628 = vpop.f32.mrb[0].mxu0
      %v629 = vadd.f32 %v252, %v628
      %v630 = vpop.f32.mrb[0].mxu0
      %631 = vmatprep.mubr.f32.mxu0 0.0
      %632 = vmatmul.mubr.f32.gmra.mrb[0].mxu0 %v328
      %v633 = vpop.f32.mrb[0].mxu0
      %v634 = vadd.f32 %v252, %v633
      %v635 = vpop.f32.mrb[0].mxu0
      %636 = vmatprep.mubr.f32.mxu0 0.0
      %637 = vmatmul.mubr.f32.gmra.mrb[0].mxu0 %v331
      %v638 = vpop.f32.mrb[0].mxu0
      %v639 = vadd.f32 %v252, %v638
      %v640 = vpop.f32.mrb[0].mxu0
      %641 = vmatprep.mubr.f32.mxu0 0.0
      %642 = vmatmul.mubr.f32.gmra.mrb[0].mxu0 %v334
      %v643 = vpop.f32.mrb[0].mxu0
      %v644 = vadd.f32 %v252, %v643
      %v645 = vpop.f32.mrb[0].mxu0
      %646 = vmatprep.mubr.f32.mxu0 0.0
      %647 = vmatmul.mubr.f32.gmra.mrb[0].mxu0 %v337
      %v648 = vpop.f32.mrb[0].mxu0
      %v649 = vadd.f32 %v252, %v648
      %v650 = vpop.f32.mrb[0].mxu0
      %651 = vmatprep.mubr.f32.mxu0 0.0
      %652 = vmatmul.mubr.f32.gmra.mrb[0].mxu0 %v340
      %v653 = vpop.f32.mrb[0].mxu0
      %v654 = vadd.f32 %v252, %v653
      %v655 = vpop.f32.mrb[0].mxu0
      %656 = vmatprep.mubr.f32.mxu0 0.0
      %657 = vmatmul.mubr.f32.gmra.mrb[0].mxu0 %v343
      %v658 = vpop.f32.mrb[0].mxu0
      %v659 = vadd.f32 %v252, %v658
      %v660 = vpop.f32.mrb[0].mxu0
      %661 = vmatprep.mubr.f32.mxu0 0.0
      %662 = vmatmul.mubr.f32.gmra.mrb[0].mxu0 %v346
      %v663 = vpop.f32.mrb[0].mxu0
      %v664 = vadd.f32 %v252, %v663
      %v665 = vpop.f32.mrb[0].mxu0
      %666 = vmatprep.mubr.f32.mxu0 0.0
      %667 = vmatmul.mubr.f32.gmra.mrb[0].mxu0 %v349
      %v668 = vpop.f32.mrb[0].mxu0
      %v669 = vadd.f32 %v252, %v668
      %v670 = vpop.f32.mrb[0].mxu0
      %671 = vmatprep.mubr.f32.mxu0 0.0
      %672 = vmatmul.mubr.f32.gmra.mrb[0].mxu0 %v352
      %v673 = vpop.f32.mrb[0].mxu0
      %v674 = vadd.f32 %v252, %v673
      %v675 = vpop.f32.mrb[0].mxu0
      %676 = vmatprep.mubr.f32.mxu0 0.0
      %677 = vmatmul.mubr.f32.gmra.mrb[0].mxu0 %v355
      %v678 = vpop.f32.mrb[0].mxu0
      %v679 = vadd.f32 %v252, %v678
      %v680 = vpop.f32.mrb[0].mxu0
      %681 = vmatprep.mubr.f32.mxu0 0.0
      %682 = vmatmul.mubr.f32.gmra.mrb[0].mxu0 %v358
      %v683 = vpop.f32.mrb[0].mxu0
      %v684 = vadd.f32 %v252, %v683
      %v685 = vpop.f32.mrb[0].mxu0
      %686 = vmatprep.mubr.f32.mxu0 0.0
      %687 = vmatmul.mubr.f32.gmra.mrb[0].mxu0 %v361
      %v688 = vpop.f32.mrb[0].mxu0
      %v689 = vadd.f32 %v252, %v688
      %v690 = vpop.f32.mrb[0].mxu0
      %691 = vmatprep.mubr.f32.mxu0 0.0
      %692 = vmatmul.mubr.f32.gmra.mrb[0].mxu0 %v364
      %v693 = vpop.f32.mrb[0].mxu0
      %v694 = vadd.f32 %v252, %v693
      %v695 = vpop.f32.mrb[0].mxu0
      %696 = vmatprep.mubr.f32.mxu0 0.0
      %697 = vmatmul.mubr.f32.gmra.mrb[0].mxu0 %v367
      %v698 = vpop.f32.mrb[0].mxu0
      %v699 = vadd.f32 %v252, %v698
      %v700 = vpop.f32.mrb[0].mxu0
      %701 = vmatprep.mubr.f32.mxu0 0.0
      %702 = vmatmul.mubr.f32.gmra.mrb[0].mxu0 %v370
      %v703 = vpop.f32.mrb[0].mxu0
      %v704 = vadd.f32 %v252, %v703
      %v705 = vpop.f32.mrb[0].mxu0
      %706 = vmatprep.mubr.f32.mxu0 0.0
      %707 = vmatmul.mubr.f32.gmra.mrb[0].mxu0 %v373
      %v708 = vpop.f32.mrb[0].mxu0
      %v709 = vadd.f32 %v252, %v708
      %v710 = vpop.f32.mrb[0].mxu0
      %711 = vmatprep.mubr.f32.mxu0 0.0
      %712 = vmatmul.mubr.f32.gmra.mrb[0].mxu0 %v376
      %v713 = vpop.f32.mrb[0].mxu0
      %v714 = vadd.f32 %v252, %v713
      %v715 = vpop.f32.mrb[0].mxu0
      %716 = vmatprep.mubr.f32.mxu0 0.0
      %717 = vmatmul.mubr.f32.gmra.mrb[0].mxu0 %v379
      %v718 = vpop.f32.mrb[0].mxu0
      %v719 = vadd.f32 %v252, %v718
      %v720 = vpop.f32.mrb[0].mxu0
      %721 = vmatprep.mubr.f32.mxu0 0.0
      %722 = vmatmul.mubr.f32.gmra.mrb[0].mxu0 %v382
      %v723 = vpop.f32.mrb[0].mxu0
      %v724 = vadd.f32 %v252, %v723
      %v725 = vpop.f32.mrb[0].mxu0
      %726 = vmatprep.mubr.f32.mxu0 0.0
      %727 = vmatmul.mubr.f32.gmra.mrb[0].mxu0 %v385
      %v728 = vpop.f32.mrb[0].mxu0
      %v729 = vadd.f32 %v252, %v728
      %v730 = vpop.f32.mrb[0].mxu0
      %731 = vmatprep.mubr.f32.mxu0 0.0
      %732 = vmatmul.mubr.f32.gmra.mrb[0].mxu0 %v388
      %v733 = vpop.f32.mrb[0].mxu0
      %v734 = vadd.f32 %v252, %v733
      %v735 = vpop.f32.mrb[0].mxu0
      %736 = vmatprep.mubr.f32.mxu0 0.0
      %737 = vmatmul.mubr.f32.gmra.mrb[0].mxu0 %v391
      %v738 = vpop.f32.mrb[0].mxu0
      %v739 = vadd.f32 %v252, %v738
      %v740 = vpop.f32.mrb[0].mxu0
      %741 = vmatprep.mubr.f32.mxu0 0.0
      %742 = vmatmul.mubr.f32.gmra.mrb[0].mxu0 %v394
      %v743 = vpop.f32.mrb[0].mxu0
      %v744 = vadd.f32 %v252, %v743
      %v745 = vpop.f32.mrb[0].mxu0
      %746 = vmatprep.mubr.f32.mxu0 0.0
      %747 = vmatmul.mubr.f32.gmra.mrb[0].mxu0 %v397
      %v748 = vpop.f32.mrb[0].mxu0
      %v749 = vadd.f32 %v252, %v748
      %v750 = vpop.f32.mrb[0].mxu0
      %751 = vmatprep.mubr.f32.mxu0 0.0
      %752 = vmatmul.mubr.f32.gmra.mrb[0].mxu0 %v400
      %v753 = vpop.f32.mrb[0].mxu0
      %v754 = vadd.f32 %v252, %v753
      %v755 = vpop.f32.mrb[0].mxu0
      %756 = vmatprep.mubr.f32.mxu0 0.0
      %757 = vmatmul.mubr.f32.gmra.mrb[0].mxu0 %v403
      %v758 = vpop.f32.mrb[0].mxu0
      %v759 = vadd.f32 %v252, %v758
      %v760 = vpop.f32.mrb[0].mxu0
      %761 = vmatprep.mubr.f32.mxu0 0.0
      %762 = vmatmul.mubr.f32.gmra.mrb[0].mxu0 %v406
      %v763 = vpop.f32.mrb[0].mxu0
      %v764 = vadd.f32 %v252, %v763
      %v765 = vpop.f32.mrb[0].mxu0
      %766 = vmatprep.mubr.f32.mxu0 0.0
      %767 = vmatmul.mubr.f32.gmra.mrb[0].mxu0 %v409
      %v768 = vpop.f32.mrb[0].mxu0
      %v769 = vadd.f32 %v252, %v768
      %v770 = vpop.f32.mrb[0].mxu0
      %771 = vmatprep.mubr.f32.mxu0 0.0
      %772 = vmatmul.mubr.f32.gmra.mrb[0].mxu0 %v412
      %v773 = vpop.f32.mrb[0].mxu0
      %v774 = vadd.f32 %v252, %v773
      %v775 = vpop.f32.mrb[0].mxu0
      %776 = vmatprep.mubr.f32.mxu0 0.0
      %777 = vmatmul.mubr.f32.gmra.mrb[0].mxu0 %v415
      %v778 = vpop.f32.mrb[0].mxu0
      %v779 = vadd.f32 %v252, %v778
      %v780 = vpop.f32.mrb[0].mxu0
      %781 = vmatprep.mubr.f32.mxu0 0.0
      %782 = vmatmul.mubr.f32.gmra.mrb[0].mxu0 %v418
      %v783 = vpop.f32.mrb[0].mxu0
      %v784 = vadd.f32 %v252, %v783
      %v785 = vpop.f32.mrb[0].mxu0
      %786 = vmatprep.mubr.f32.mxu0 0.0
      %787 = vmatmul.mubr.f32.gmra.mrb[0].mxu0 %v421
      %v788 = vpop.f32.mrb[0].mxu0
      %v789 = vadd.f32 %v252, %v788
      %v790 = vpop.f32.mrb[0].mxu0
      %791 = vmatprep.mubr.f32.mxu0 0.0
      %792 = vmatmul.mubr.f32.gmra.mrb[0].mxu0 %v424
      %v793 = vpop.f32.mrb[0].mxu0
      %v794 = vadd.f32 %v252, %v793
      %v795 = vpop.f32.mrb[0].mxu0
      %796 = vmatprep.mubr.f32.mxu0 0.0
      %797 = vmatmul.mubr.f32.gmra.mrb[0].mxu0 %v427
      %v798 = vpop.f32.mrb[0].mxu0
      %v799 = vadd.f32 %v252, %v798
      %v800 = vpop.f32.mrb[0].mxu0
      %801 = vmatprep.mubr.f32.mxu0 0.0
      %802 = vmatmul.mubr.f32.gmra.mrb[0].mxu0 %v430
      %v803 = vpop.f32.mrb[0].mxu0
      %v804 = vadd.f32 %v252, %v803
      %v805 = vpop.f32.mrb[0].mxu0
      %806 = vmatprep.mubr.f32.mxu0 0.0
      %807 = vmatmul.mubr.f32.gmra.mrb[0].mxu0 %v433
      %v808 = vpop.f32.mrb[0].mxu0
      %v809 = vadd.f32 %v252, %v808
      %v810 = vpop.f32.mrb[0].mxu0
      %811 = vmatprep.mubr.f32.mxu0 0.0
      %812 = vmatmul.mubr.f32.gmra.mrb[0].mxu0 %v436
      %v813 = vpop.f32.mrb[0].mxu0
      %v814 = vadd.f32 %v252, %v813
      %v815 = vpop.f32.mrb[0].mxu0
      %816 = vmatprep.mubr.f32.mxu0 0.0
      %817 = vmatmul.mubr.f32.gmra.mrb[0].mxu0 %v439
      %v818 = vpop.f32.mrb[0].mxu0
      %v819 = vadd.f32 %v252, %v818
      %v820 = vpop.f32.mrb[0].mxu0
      %821 = vmatprep.mubr.f32.mxu0 0.0
      %822 = vmatmul.mubr.f32.gmra.mrb[0].mxu0 %v442
      %v823 = vpop.f32.mrb[0].mxu0
      %v824 = vadd.f32 %v252, %v823
      %v825 = vpop.f32.mrb[0].mxu0
      %826 = vmatprep.mubr.f32.mxu0 0.0
      %827 = vmatmul.mubr.f32.gmra.mrb[0].mxu0 %v445
      %v828 = vpop.f32.mrb[0].mxu0
      %v829 = vadd.f32 %v252, %v828
      %v830 = vpop.f32.mrb[0].mxu0
      %831 = vdwg.mxu0
      %vm832 = vcmask 130048
      %833 = vst.msk [vmem:[%s172] sm:$0xff] %vm832, %v514
      %834 = vst.msk [vmem:[%s172 + $0x8] sm:$0xff] %vm832, %v519
      %835 = vst.msk [vmem:[%s172 + $0x10] sm:$0xff] %vm832, %v524
      %836 = vst.msk [vmem:[%s172 + $0x18] sm:$0xff] %vm832, %v529
      %837 = vst.msk [vmem:[%s172 + $0x20] sm:$0xff] %vm832, %v534
      %838 = vst.msk [vmem:[%s172 + $0x28] sm:$0xff] %vm832, %v539
      %839 = vst.msk [vmem:[%s172 + $0x30] sm:$0xff] %vm832, %v544
      %840 = vst.msk [vmem:[%s172 + $0x38] sm:$0xff] %vm832, %v549
      %841 = vst.msk [vmem:[%s172 + $0x40] sm:$0xff] %vm832, %v554
      %842 = vst.msk [vmem:[%s172 + $0x48] sm:$0xff] %vm832, %v559
      %843 = vst.msk [vmem:[%s172 + $0x50] sm:$0xff] %vm832, %v564
      %844 = vst.msk [vmem:[%s172 + $0x58] sm:$0xff] %vm832, %v569
      %845 = vst.msk [vmem:[%s172 + $0x60] sm:$0xff] %vm832, %v574
      %846 = vst.msk [vmem:[%s172 + $0x68] sm:$0xff] %vm832, %v579
      %847 = vst.msk [vmem:[%s172 + $0x70] sm:$0xff] %vm832, %v584
      %848 = vst.msk [vmem:[%s172 + $0x78] sm:$0xff] %vm832, %v589
      %849 = vst.msk [vmem:[%s172 + $0x80] sm:$0xff] %vm832, %v594
      %850 = vst.msk [vmem:[%s172 + $0x88] sm:$0xff] %vm832, %v599
      %851 = vst.msk [vmem:[%s172 + $0x90] sm:$0xff] %vm832, %v604
      %852 = vst.msk [vmem:[%s172 + $0x98] sm:$0xff] %vm832, %v609
      %853 = vst.msk [vmem:[%s172 + $0xa0] sm:$0xff] %vm832, %v614
      %854 = vst.msk [vmem:[%s172 + $0xa8] sm:$0xff] %vm832, %v619
      %855 = vst.msk [vmem:[%s172 + $0xb0] sm:$0xff] %vm832, %v624
      %856 = vst.msk [vmem:[%s172 + $0xb8] sm:$0xff] %vm832, %v629
      %857 = vst.msk [vmem:[%s172 + $0xc0] sm:$0xff] %vm832, %v634
      %858 = vst.msk [vmem:[%s172 + $0xc8] sm:$0xff] %vm832, %v639
      %859 = vst.msk [vmem:[%s172 + $0xd0] sm:$0xff] %vm832, %v644
      %860 = vst.msk [vmem:[%s172 + $0xd8] sm:$0xff] %vm832, %v649
      %861 = vst.msk [vmem:[%s172 + $0xe0] sm:$0xff] %vm832, %v654
      %862 = vst.msk [vmem:[%s172 + $0xe8] sm:$0xff] %vm832, %v659
      %863 = vst.msk [vmem:[%s172 + $0xf0] sm:$0xff] %vm832, %v664
      %864 = vst.msk [vmem:[%s172 + $0xf8] sm:$0xff] %vm832, %v669
      %865 = vst.msk [vmem:[%s172 + $0x100] sm:$0xff] %vm832, %v674
      %866 = vst.msk [vmem:[%s172 + $0x108] sm:$0xff] %vm832, %v679
      %867 = vst.msk [vmem:[%s172 + $0x110] sm:$0xff] %vm832, %v684
      %868 = vst.msk [vmem:[%s172 + $0x118] sm:$0xff] %vm832, %v689
      %869 = vst.msk [vmem:[%s172 + $0x120] sm:$0xff] %vm832, %v694
      %870 = vst.msk [vmem:[%s172 + $0x128] sm:$0xff] %vm832, %v699
      %871 = vst.msk [vmem:[%s172 + $0x130] sm:$0xff] %vm832, %v704
      %872 = vst.msk [vmem:[%s172 + $0x138] sm:$0xff] %vm832, %v709
      %873 = vst.msk [vmem:[%s172 + $0x140] sm:$0xff] %vm832, %v714
      %874 = vst.msk [vmem:[%s172 + $0x148] sm:$0xff] %vm832, %v719
      %875 = vst.msk [vmem:[%s172 + $0x150] sm:$0xff] %vm832, %v724
      %876 = vst.msk [vmem:[%s172 + $0x158] sm:$0xff] %vm832, %v729
      %877 = vst.msk [vmem:[%s172 + $0x160] sm:$0xff] %vm832, %v734
      %878 = vst.msk [vmem:[%s172 + $0x168] sm:$0xff] %vm832, %v739
      %879 = vst.msk [vmem:[%s172 + $0x170] sm:$0xff] %vm832, %v744
      %880 = vst.msk [vmem:[%s172 + $0x178] sm:$0xff] %vm832, %v749
      %881 = vst.msk [vmem:[%s172 + $0x180] sm:$0xff] %vm832, %v754
      %882 = vst.msk [vmem:[%s172 + $0x188] sm:$0xff] %vm832, %v759
      %883 = vst.msk [vmem:[%s172 + $0x190] sm:$0xff] %vm832, %v764
      %884 = vst.msk [vmem:[%s172 + $0x198] sm:$0xff] %vm832, %v769
      %885 = vst.msk [vmem:[%s172 + $0x1a0] sm:$0xff] %vm832, %v774
      %886 = vst.msk [vmem:[%s172 + $0x1a8] sm:$0xff] %vm832, %v779
      %887 = vst.msk [vmem:[%s172 + $0x1b0] sm:$0xff] %vm832, %v784
      %888 = vst.msk [vmem:[%s172 + $0x1b8] sm:$0xff] %vm832, %v789
      %889 = vst.msk [vmem:[%s172 + $0x1c0] sm:$0xff] %vm832, %v794
      %890 = vst.msk [vmem:[%s172 + $0x1c8] sm:$0xff] %vm832, %v799
      %891 = vst.msk [vmem:[%s172 + $0x1d0] sm:$0xff] %vm832, %v804
      %892 = vst.msk [vmem:[%s172 + $0x1d8] sm:$0xff] %vm832, %v809
      %893 = vst.msk [vmem:[%s172 + $0x1e0] sm:$0xff] %vm832, %v814
      %894 = vst.msk [vmem:[%s172 + $0x1e8] sm:$0xff] %vm832, %v819
      %895 = vst.msk [vmem:[%s172 + $0x1f0] sm:$0xff] %vm832, %v824
      %896 = vst.msk [vmem:[%s172 + $0x1f8] sm:$0xff] %vm832, %v829
      %s897 = smul.u32 64, %s14
      %p898 = scmp.lt.s32.totalorder %s897, 255
      %s899 = scalar_select %p898, %s897, 255
      %s900 = smul.addr %s899, 8
      %s901 = scalar_lea.vmem %s3, %s900
      // Predicated region
      $region33: #{wavemix_sr_forward.11} parent=31 // pred_check
        %p902 = pneg %p100
      $region34: #{wavemix_sr_forward.11} parent=31 // pred_check_branch
        %904 = sbr.rel (%p902) target = $region36
      $region35: #{wavemix_sr_forward.11} parent=31 // pred_region
        %s905 = smul.u32 64, %s14
      $region36: #{wavemix_sr_forward.11} parent=31 // pred_fallthru
        _
    $region32: #{wavemix_sr_forward.11} parent=5 // pred_fallthru
      _
    %p906 = scmp.le.s32.totalorder 2, %s9
    // Predicated region
    $region37: #{wavemix_sr_forward.11} parent=5 // pred_check
      %p907 = pneg %p906
    $region38: #{wavemix_sr_forward.11} parent=5 // pred_check_branch
      %909 = sbr.rel (%p907) target = $region40
    $region39: #{wavemix_sr_forward.11} parent=5 // pred_region
      %s910 = ssub.s32 %s9, 2
      // Predicated region
      $region41: #{wavemix_sr_forward.11} parent=39 // pred_check
        %p911 = pneg %p106
      $region42: #{wavemix_sr_forward.11} parent=39 // pred_check_branch
        %913 = sbr.rel (%p911) target = $region44
      $region43: #{wavemix_sr_forward.11} parent=39 // pred_region
        %s914 = smul.u32 64, %s15
        %p915 = scmp.lt.s32.totalorder %s914, 255
        %s916 = scalar_select %p915, %s914, 255
        %s917 = smul.addr %s916, 8
        %s918 = scalar_lea.vmem %s3, %s917
      $region44: #{wavemix_sr_forward.11} parent=39 // pred_fallthru
        _
    $region40: #{wavemix_sr_forward.11} parent=5 // pred_fallthru
      _
  $region6: #{wavemix_sr_forward.11} parent=0 // loop_footer
    %s13 = sadd.s32 1, %s9
  $region7: #{wavemix_sr_forward.11} parent=0 // loop_footer_branch
    %8 = sbr.rel target = $region3
  $region8: #{wavemix_sr_forward.11} parent=0 // loop_exit
    _

// kernel: wavemix_sr_forward.12
$region0: #{wavemix_sr_forward.12}
  #allocation0 [shape = 'u32[]', space=smem, size = 0x4, offset = 0x4, fixed_abs, tag = 'smem constant byte address 0x4 - core index']
  #allocation1 [shape = 'u32[144,128]{1,0:T(1,128)}', space=vmem, size = 0x12000, scoped, tag = 'internal scratch']
  %s0 = inlined_call_operand.vmem [shape: f32[512,64], index: 0, kind: input, shape index: {}]
  %s1 = inlined_call_operand.vmem [shape: f32[64,16], index: 1, kind: input, shape index: {}]
  %s2 = inlined_call_operand.vmem [shape: f32[1,16], index: 2, kind: input, shape index: {}]
  %s3 = inlined_call_operand.vmem [shape: f32[16,16], index: 3, kind: input, shape index: {}]
  %s4 = inlined_call_operand.vmem [shape: f32[1,16], index: 4, kind: input, shape index: {}]
  %s5 = inlined_call_operand.vmem [shape: f32[512,16], index: 5, kind: output, shape index: {}]
  %s6 = sld [smem:[#allocation0]]
  $region30: #{wavemix_sr_forward.12} parent=0
    _
  %s8 = ssub.s32 1, %s6
  %s9 = scalar_select 0, %s8, %s6
  // Predicated region
  $region2: #{wavemix_sr_forward.12} parent=0 // pred_check
    _
  $region3: #{wavemix_sr_forward.12} parent=0 // pred_check_branch
    %11 = sbr.rel (0) target = $region5
  $region4: #{wavemix_sr_forward.12} parent=0 // pred_region
    _
  $region5: #{wavemix_sr_forward.12} parent=0 // pred_fallthru
    _
  // Predicated region
  $region6: #{wavemix_sr_forward.12} parent=0 // pred_check
    _
  $region7: #{wavemix_sr_forward.12} parent=0 // pred_check_branch
    %13 = sbr.rel (0) target = $region9
  $region8: #{wavemix_sr_forward.12} parent=0 // pred_region
    _
  $region9: #{wavemix_sr_forward.12} parent=0 // pred_fallthru
    _
  // Predicated region
  $region10: #{wavemix_sr_forward.12} parent=0 // pred_check
    _
  $region11: #{wavemix_sr_forward.12} parent=0 // pred_check_branch
    %15 = sbr.rel (0) target = $region13
  $region12: #{wavemix_sr_forward.12} parent=0 // pred_region
    _
  $region13: #{wavemix_sr_forward.12} parent=0 // pred_fallthru
    _
  // Predicated region
  $region14: #{wavemix_sr_forward.12} parent=0 // pred_check
    _
  $region15: #{wavemix_sr_forward.12} parent=0 // pred_check_branch
    %17 = sbr.rel (0) target = $region17
  $region16: #{wavemix_sr_forward.12} parent=0 // pred_region
    _
  $region17: #{wavemix_sr_forward.12} parent=0 // pred_fallthru
    _
  // Predicated region
  $region18: #{wavemix_sr_forward.12} parent=0 // pred_check
    _
  $region19: #{wavemix_sr_forward.12} parent=0 // pred_check_branch
    %19 = sbr.rel (0) target = $region21
  $region20: #{wavemix_sr_forward.12} parent=0 // pred_region
    _
  $region21: #{wavemix_sr_forward.12} parent=0 // pred_fallthru
    _
  %v20 = vld [vmem:[%s0] sm:$0xff]
  %v21 = vld [vmem:[%s0 + $0x8] sm:$0xff]
  %v22 = vld [vmem:[%s0 + $0x10] sm:$0xff]
  %v23 = vld [vmem:[%s0 + $0x18] sm:$0xff]
  %v24 = vld [vmem:[%s0 + $0x20] sm:$0xff]
  %v25 = vld [vmem:[%s0 + $0x28] sm:$0xff]
  %v26 = vld [vmem:[%s0 + $0x30] sm:$0xff]
  %v27 = vld [vmem:[%s0 + $0x38] sm:$0xff]
  %v28 = vld [vmem:[%s0 + $0x40] sm:$0xff]
  %v29 = vld [vmem:[%s0 + $0x48] sm:$0xff]
  %v30 = vld [vmem:[%s0 + $0x50] sm:$0xff]
  %v31 = vld [vmem:[%s0 + $0x58] sm:$0xff]
  %v32 = vld [vmem:[%s0 + $0x60] sm:$0xff]
  %v33 = vld [vmem:[%s0 + $0x68] sm:$0xff]
  %v34 = vld [vmem:[%s0 + $0x70] sm:$0xff]
  %v35 = vld [vmem:[%s0 + $0x78] sm:$0xff]
  %v36 = vld [vmem:[%s0 + $0x80] sm:$0xff]
  %v37 = vld [vmem:[%s0 + $0x88] sm:$0xff]
  %v38 = vld [vmem:[%s0 + $0x90] sm:$0xff]
  %v39 = vld [vmem:[%s0 + $0x98] sm:$0xff]
  %v40 = vld [vmem:[%s0 + $0xa0] sm:$0xff]
  %v41 = vld [vmem:[%s0 + $0xa8] sm:$0xff]
  %v42 = vld [vmem:[%s0 + $0xb0] sm:$0xff]
  %v43 = vld [vmem:[%s0 + $0xb8] sm:$0xff]
  %v44 = vld [vmem:[%s0 + $0xc0] sm:$0xff]
  %v45 = vld [vmem:[%s0 + $0xc8] sm:$0xff]
  %v46 = vld [vmem:[%s0 + $0xd0] sm:$0xff]
  %v47 = vld [vmem:[%s0 + $0xd8] sm:$0xff]
  %v48 = vld [vmem:[%s0 + $0xe0] sm:$0xff]
  %v49 = vld [vmem:[%s0 + $0xe8] sm:$0xff]
  %v50 = vld [vmem:[%s0 + $0xf0] sm:$0xff]
  %v51 = vld [vmem:[%s0 + $0xf8] sm:$0xff]
  %v52 = vld [vmem:[%s0 + $0x100] sm:$0xff]
  %v53 = vld [vmem:[%s0 + $0x108] sm:$0xff]
  %v54 = vld [vmem:[%s0 + $0x110] sm:$0xff]
  %v55 = vld [vmem:[%s0 + $0x118] sm:$0xff]
  %v56 = vld [vmem:[%s0 + $0x120] sm:$0xff]
  %v57 = vld [vmem:[%s0 + $0x128] sm:$0xff]
  %v58 = vld [vmem:[%s0 + $0x130] sm:$0xff]
  %v59 = vld [vmem:[%s0 + $0x138] sm:$0xff]
  %v60 = vld [vmem:[%s0 + $0x140] sm:$0xff]
  %v61 = vld [vmem:[%s0 + $0x148] sm:$0xff]
  %v62 = vld [vmem:[%s0 + $0x150] sm:$0xff]
  %v63 = vld [vmem:[%s0 + $0x158] sm:$0xff]
  %v64 = vld [vmem:[%s0 + $0x160] sm:$0xff]
  %v65 = vld [vmem:[%s0 + $0x168] sm:$0xff]
  %v66 = vld [vmem:[%s0 + $0x170] sm:$0xff]
  %v67 = vld [vmem:[%s0 + $0x178] sm:$0xff]
  %v68 = vld [vmem:[%s0 + $0x180] sm:$0xff]
  %v69 = vld [vmem:[%s0 + $0x188] sm:$0xff]
  %v70 = vld [vmem:[%s0 + $0x190] sm:$0xff]
  %v71 = vld [vmem:[%s0 + $0x198] sm:$0xff]
  %v72 = vld [vmem:[%s0 + $0x1a0] sm:$0xff]
  %v73 = vld [vmem:[%s0 + $0x1a8] sm:$0xff]
  %v74 = vld [vmem:[%s0 + $0x1b0] sm:$0xff]
  %v75 = vld [vmem:[%s0 + $0x1b8] sm:$0xff]
  %v76 = vld [vmem:[%s0 + $0x1c0] sm:$0xff]
  %v77 = vld [vmem:[%s0 + $0x1c8] sm:$0xff]
  %v78 = vld [vmem:[%s0 + $0x1d0] sm:$0xff]
  %v79 = vld [vmem:[%s0 + $0x1d8] sm:$0xff]
  %v80 = vld [vmem:[%s0 + $0x1e0] sm:$0xff]
  %v81 = vld [vmem:[%s0 + $0x1e8] sm:$0xff]
  %v82 = vld [vmem:[%s0 + $0x1f0] sm:$0xff]
  %v83 = vld [vmem:[%s0 + $0x1f8] sm:$0xff]
  %v84 = vld [vmem:[%s1] sm:$0xff]
  %v85 = vld [vmem:[%s1 + $0x8] sm:$0xff]
  %v86 = vld [vmem:[%s1 + $0x10] sm:$0xff]
  %v87 = vld [vmem:[%s1 + $0x18] sm:$0xff]
  %v88 = vld [vmem:[%s1 + $0x20] sm:$0xff]
  %v89 = vld [vmem:[%s1 + $0x28] sm:$0xff]
  %v90 = vld [vmem:[%s1 + $0x30] sm:$0xff]
  %v91 = vld [vmem:[%s1 + $0x38] sm:$0xff]
  %v92 = vld [vmem:[%s2] sm:$0x1]
  %v94 = vlaneseq
  %v95 = vshrl.u32 %v94, 7
  %v96 = vsub.s32 0, %v95
  %v97 = vrot.slane %v92, %v96
  %vm99 = vcmask 523264
  %v101 = vsel %vm99, %v20, 0
  %v104 = vsel %vm99, %v21, 0
  %v107 = vsel %vm99, %v22, 0
  %v110 = vsel %vm99, %v23, 0
  %v113 = vsel %vm99, %v24, 0
  %v116 = vsel %vm99, %v25, 0
  %v119 = vsel %vm99, %v26, 0
  %v122 = vsel %vm99, %v27, 0
  %v125 = vsel %vm99, %v28, 0
  %v128 = vsel %vm99, %v29, 0
  %v131 = vsel %vm99, %v30, 0
  %v134 = vsel %vm99, %v31, 0
  %v137 = vsel %vm99, %v32, 0
  %v140 = vsel %vm99, %v33, 0
  %v143 = vsel %vm99, %v34, 0
  %v146 = vsel %vm99, %v35, 0
  %v149 = vsel %vm99, %v36, 0
  %v152 = vsel %vm99, %v37, 0
  %v155 = vsel %vm99, %v38, 0
  %v158 = vsel %vm99, %v39, 0
  %v161 = vsel %vm99, %v40, 0
  %v164 = vsel %vm99, %v41, 0
  %v167 = vsel %vm99, %v42, 0
  %v170 = vsel %vm99, %v43, 0
  %v173 = vsel %vm99, %v44, 0
  %v176 = vsel %vm99, %v45, 0
  %v179 = vsel %vm99, %v46, 0
  %v182 = vsel %vm99, %v47, 0
  %v185 = vsel %vm99, %v48, 0
  %v188 = vsel %vm99, %v49, 0
  %v191 = vsel %vm99, %v50, 0
  %v194 = vsel %vm99, %v51, 0
  %v197 = vsel %vm99, %v52, 0
  %v200 = vsel %vm99, %v53, 0
  %v203 = vsel %vm99, %v54, 0
  %v206 = vsel %vm99, %v55, 0
  %v209 = vsel %vm99, %v56, 0
  %v212 = vsel %vm99, %v57, 0
  %v215 = vsel %vm99, %v58, 0
  %v218 = vsel %vm99, %v59, 0
  %v221 = vsel %vm99, %v60, 0
  %v224 = vsel %vm99, %v61, 0
  %v227 = vsel %vm99, %v62, 0
  %v230 = vsel %vm99, %v63, 0
  %v233 = vsel %vm99, %v64, 0
  %v236 = vsel %vm99, %v65, 0
  %v239 = vsel %vm99, %v66, 0
  %v242 = vsel %vm99, %v67, 0
  %v245 = vsel %vm99, %v68, 0
  %v248 = vsel %vm99, %v69, 0
  %v251 = vsel %vm99, %v70, 0
  %v254 = vsel %vm99, %v71, 0
  %v257 = vsel %vm99, %v72, 0
  %v260 = vsel %vm99, %v73, 0
  %v263 = vsel %vm99, %v74, 0
  %v266 = vsel %vm99, %v75, 0
  %v269 = vsel %vm99, %v76, 0
  %v272 = vsel %vm99, %v77, 0
  %v275 = vsel %vm99, %v78, 0
  %v278 = vsel %vm99, %v79, 0
  %v281 = vsel %vm99, %v80, 0
  %v284 = vsel %vm99, %v81, 0
  %v287 = vsel %vm99, %v82, 0
  %v290 = vsel %vm99, %v83, 0
  %292 = vmatprep.subr.mxu0 0.0
  %293 = vmatpush1.msra.mxu0 %v84
  %294 = vmatprep.subr.mxu0 0.0
  %295 = vmatpush1.msra.mxu0 %v85
  %296 = vmatprep.subr.mxu0 0.0
  %297 = vmatpush1.msra.mxu0 %v86
  %298 = vmatprep.subr.mxu0 0.0
  %299 = vmatpush1.msra.mxu0 %v87
  %300 = vmatprep.subr.mxu0 0.0
  %301 = vmatpush1.msra.mxu0 %v88
  %302 = vmatprep.subr.mxu0 0.0
  %303 = vmatpush1.msra.mxu0 %v89
  %304 = vmatprep.subr.mxu0 0.0
  %305 = vmatpush1.msra.mxu0 %v90
  %306 = vmatprep.subr.mxu0 0.0
  %307 = vmatpush1.msra.mxu0 %v91
  %308 = vmatprep.subr.mxu0 0.0
  %309 = vmatpush1.msra.mxu0 0.0
  %310 = vmatprep.subr.mxu0 0.0
  %311 = vmatpush1.msra.mxu0 0.0
  %312 = vmatprep.subr.mxu0 0.0
  %313 = vmatpush1.msra.mxu0 0.0
  %314 = vmatprep.subr.mxu0 0.0
  %315 = vmatpush1.msra.mxu0 0.0
  %316 = vmatprep.subr.mxu0 0.0
  %317 = vmatpush1.msra.mxu0 0.0
  %318 = vmatprep.subr.mxu0 0.0
  %319 = vmatpush1.msra.mxu0 0.0
  %320 = vmatprep.subr.mxu0 0.0
  %321 = vmatpush1.msra.mxu0 0.0
  %322 = vmatprep.subr.mxu0 0.0
  %323 = vmatpush1.msra.mxu0 0.0
  %324 = vmatprep.subr.mxu0 0.0
  %325 = vmatpush1.msra.mxu0 0.0
  %326 = vmatprep.subr.mxu0 0.0
  %327 = vmatpush1.msra.mxu0 0.0
  %328 = vmatprep.subr.mxu0 0.0
  %329 = vmatpush1.msra.mxu0 0.0
  %330 = vmatprep.subr.mxu0 0.0
  %331 = vmatpush1.msra.mxu0 0.0
  %332 = vmatprep.subr.mxu0 0.0
  %333 = vmatpush1.msra.mxu0 0.0
  %334 = vmatprep.subr.mxu0 0.0
  %335 = vmatpush1.msra.mxu0 0.0
  %336 = vmatprep.subr.mxu0 0.0
  %337 = vmatpush1.msra.mxu0 0.0
  %338 = vmatprep.subr.mxu0 0.0
  %339 = vmatpush1.msra.mxu0 0.0
  %340 = vmatprep.subr.mxu0 0.0
  %341 = vmatpush1.msra.mxu0 0.0
  %342 = vmatprep.subr.mxu0 0.0
  %343 = vmatpush1.msra.mxu0 0.0
  %344 = vmatprep.subr.mxu0 0.0
  %345 = vmatpush1.msra.mxu0 0.0
  %346 = vmatprep.subr.mxu0 0.0
  %347 = vmatpush1.msra.mxu0 0.0
  %348 = vmatprep.subr.mxu0 0.0
  %349 = vmatpush1.msra.mxu0 0.0
  %350 = vmatprep.subr.mxu0 0.0
  %351 = vmatpush1.msra.mxu0 0.0
  %352 = vmatprep.subr.mxu0 0.0
  %353 = vmatpush1.msra.mxu0 0.0
  %354 = vmatprep.subr.mxu0 0.0
  %355 = vmatpush1.msra.mxu0 0.0
  %356 = vmatprep.mubr.f32.mxu0 0.0
  %357 = vmatmul.mubr.f32.gmra.mrb[0].mxu0 %v101
  %v358 = vpop.f32.mrb[0].mxu0
  %v359 = vadd.f32 %v97, %v358
  %v360 = vpop.f32.mrb[0].mxu0
  %361 = vmatprep.mubr.f32.mxu0 0.0
  %362 = vmatmul.mubr.f32.gmra.mrb[0].mxu0 %v104
  %v363 = vpop.f32.mrb[0].mxu0
  %v364 = vadd.f32 %v97, %v363
  %v365 = vpop.f32.mrb[0].mxu0
  %366 = vmatprep.mubr.f32.mxu0 0.0
  %367 = vmatmul.mubr.f32.gmra.mrb[0].mxu0 %v107
  %v368 = vpop.f32.mrb[0].mxu0
  %v369 = vadd.f32 %v97, %v368
  %v370 = vpop.f32.mrb[0].mxu0
  %371 = vmatprep.mubr.f32.mxu0 0.0
  %372 = vmatmul.mubr.f32.gmra.mrb[0].mxu0 %v110
  %v373 = vpop.f32.mrb[0].mxu0
  %v374 = vadd.f32 %v97, %v373
  %v375 = vpop.f32.mrb[0].mxu0
  %376 = vmatprep.mubr.f32.mxu0 0.0
  %377 = vmatmul.mubr.f32.gmra.mrb[0].mxu0 %v113
  %v378 = vpop.f32.mrb[0].mxu0
  %v379 = vadd.f32 %v97, %v378
  %v380 = vpop.f32.mrb[0].mxu0
  %381 = vmatprep.mubr.f32.mxu0 0.0
  %382 = vmatmul.mubr.f32.gmra.mrb[0].mxu0 %v116
  %v383 = vpop.f32.mrb[0].mxu0
  %v384 = vadd.f32 %v97, %v383
  %v385 = vpop.f32.mrb[0].mxu0
  %386 = vmatprep.mubr.f32.mxu0 0.0
  %387 = vmatmul.mubr.f32.gmra.mrb[0].mxu0 %v119
  %v388 = vpop.f32.mrb[0].mxu0
  %v389 = vadd.f32 %v97, %v388
  %v390 = vpop.f32.mrb[0].mxu0
  %391 = vmatprep.mubr.f32.mxu0 0.0
  %392 = vmatmul.mubr.f32.gmra.mrb[0].mxu0 %v122
  %v393 = vpop.f32.mrb[0].mxu0
  %v394 = vadd.f32 %v97, %v393
  %v395 = vpop.f32.mrb[0].mxu0
  %396 = vmatprep.mubr.f32.mxu0 0.0
  %397 = vmatmul.mubr.f32.gmra.mrb[0].mxu0 %v125
  %v398 = vpop.f32.mrb[0].mxu0
  %v399 = vadd.f32 %v97, %v398
  %v400 = vpop.f32.mrb[0].mxu0
  %401 = vmatprep.mubr.f32.mxu0 0.0
  %402 = vmatmul.mubr.f32.gmra.mrb[0].mxu0 %v128
  %v403 = vpop.f32.mrb[0].mxu0
  %v404 = vadd.f32 %v97, %v403
  %v405 = vpop.f32.mrb[0].mxu0
  %406 = vmatprep.mubr.f32.mxu0 0.0
  %407 = vmatmul.mubr.f32.gmra.mrb[0].mxu0 %v131
  %v408 = vpop.f32.mrb[0].mxu0
  %v409 = vadd.f32 %v97, %v408
  %v410 = vpop.f32.mrb[0].mxu0
  %411 = vmatprep.mubr.f32.mxu0 0.0
  %412 = vmatmul.mubr.f32.gmra.mrb[0].mxu0 %v134
  %v413 = vpop.f32.mrb[0].mxu0
  %v414 = vadd.f32 %v97, %v413
  %v415 = vpop.f32.mrb[0].mxu0
  %416 = vmatprep.mubr.f32.mxu0 0.0
  %417 = vmatmul.mubr.f32.gmra.mrb[0].mxu0 %v137
  %v418 = vpop.f32.mrb[0].mxu0
  %v419 = vadd.f32 %v97, %v418
  %v420 = vpop.f32.mrb[0].mxu0
  %421 = vmatprep.mubr.f32.mxu0 0.0
  %422 = vmatmul.mubr.f32.gmra.mrb[0].mxu0 %v140
  %v423 = vpop.f32.mrb[0].mxu0
  %v424 = vadd.f32 %v97, %v423
  %v425 = vpop.f32.mrb[0].mxu0
  %426 = vmatprep.mubr.f32.mxu0 0.0
  %427 = vmatmul.mubr.f32.gmra.mrb[0].mxu0 %v143
  %v428 = vpop.f32.mrb[0].mxu0
  %v429 = vadd.f32 %v97, %v428
  %v430 = vpop.f32.mrb[0].mxu0
  %431 = vmatprep.mubr.f32.mxu0 0.0
  %432 = vmatmul.mubr.f32.gmra.mrb[0].mxu0 %v146
  %v433 = vpop.f32.mrb[0].mxu0
  %v434 = vadd.f32 %v97, %v433
  %v435 = vpop.f32.mrb[0].mxu0
  %436 = vmatprep.mubr.f32.mxu0 0.0
  %437 = vmatmul.mubr.f32.gmra.mrb[0].mxu0 %v149
  %v438 = vpop.f32.mrb[0].mxu0
  %v439 = vadd.f32 %v97, %v438
  %v440 = vpop.f32.mrb[0].mxu0
  %441 = vmatprep.mubr.f32.mxu0 0.0
  %442 = vmatmul.mubr.f32.gmra.mrb[0].mxu0 %v152
  %v443 = vpop.f32.mrb[0].mxu0
  %v444 = vadd.f32 %v97, %v443
  %v445 = vpop.f32.mrb[0].mxu0
  %446 = vmatprep.mubr.f32.mxu0 0.0
  %447 = vmatmul.mubr.f32.gmra.mrb[0].mxu0 %v155
  %v448 = vpop.f32.mrb[0].mxu0
  %v449 = vadd.f32 %v97, %v448
  %v450 = vpop.f32.mrb[0].mxu0
  %451 = vmatprep.mubr.f32.mxu0 0.0
  %452 = vmatmul.mubr.f32.gmra.mrb[0].mxu0 %v158
  %v453 = vpop.f32.mrb[0].mxu0
  %v454 = vadd.f32 %v97, %v453
  %v455 = vpop.f32.mrb[0].mxu0
  %456 = vmatprep.mubr.f32.mxu0 0.0
  %457 = vmatmul.mubr.f32.gmra.mrb[0].mxu0 %v161
  %v458 = vpop.f32.mrb[0].mxu0
  %v459 = vadd.f32 %v97, %v458
  %v460 = vpop.f32.mrb[0].mxu0
  %461 = vmatprep.mubr.f32.mxu0 0.0
  %462 = vmatmul.mubr.f32.gmra.mrb[0].mxu0 %v164
  %v463 = vpop.f32.mrb[0].mxu0
  %v464 = vadd.f32 %v97, %v463
  %v465 = vpop.f32.mrb[0].mxu0
  %466 = vmatprep.mubr.f32.mxu0 0.0
  %467 = vmatmul.mubr.f32.gmra.mrb[0].mxu0 %v167
  %v468 = vpop.f32.mrb[0].mxu0
  %v469 = vadd.f32 %v97, %v468
  %v470 = vpop.f32.mrb[0].mxu0
  %471 = vmatprep.mubr.f32.mxu0 0.0
  %472 = vmatmul.mubr.f32.gmra.mrb[0].mxu0 %v170
  %v473 = vpop.f32.mrb[0].mxu0
  %v474 = vadd.f32 %v97, %v473
  %v475 = vpop.f32.mrb[0].mxu0
  %476 = vmatprep.mubr.f32.mxu0 0.0
  %477 = vmatmul.mubr.f32.gmra.mrb[0].mxu0 %v173
  %v478 = vpop.f32.mrb[0].mxu0
  %v479 = vadd.f32 %v97, %v478
  %v480 = vpop.f32.mrb[0].mxu0
  %481 = vmatprep.mubr.f32.mxu0 0.0
  %482 = vmatmul.mubr.f32.gmra.mrb[0].mxu0 %v176
  %v483 = vpop.f32.mrb[0].mxu0
  %v484 = vadd.f32 %v97, %v483
  %v485 = vpop.f32.mrb[0].mxu0
  %486 = vmatprep.mubr.f32.mxu0 0.0
  %487 = vmatmul.mubr.f32.gmra.mrb[0].mxu0 %v179
  %v488 = vpop.f32.mrb[0].mxu0
  %v489 = vadd.f32 %v97, %v488
  %v490 = vpop.f32.mrb[0].mxu0
  %491 = vmatprep.mubr.f32.mxu0 0.0
  %492 = vmatmul.mubr.f32.gmra.mrb[0].mxu0 %v182
  %v493 = vpop.f32.mrb[0].mxu0
  %v494 = vadd.f32 %v97, %v493
  %v495 = vpop.f32.mrb[0].mxu0
  %496 = vmatprep.mubr.f32.mxu0 0.0
  %497 = vmatmul.mubr.f32.gmra.mrb[0].mxu0 %v185
  %v498 = vpop.f32.mrb[0].mxu0
  %v499 = vadd.f32 %v97, %v498
  %v500 = vpop.f32.mrb[0].mxu0
  %501 = vmatprep.mubr.f32.mxu0 0.0
  %502 = vmatmul.mubr.f32.gmra.mrb[0].mxu0 %v188
  %v503 = vpop.f32.mrb[0].mxu0
  %v504 = vadd.f32 %v97, %v503
  %v505 = vpop.f32.mrb[0].mxu0
  %506 = vmatprep.mubr.f32.mxu0 0.0
  %507 = vmatmul.mubr.f32.gmra.mrb[0].mxu0 %v191
  %v508 = vpop.f32.mrb[0].mxu0
  %v509 = vadd.f32 %v97, %v508
  %v510 = vpop.f32.mrb[0].mxu0
  %511 = vmatprep.mubr.f32.mxu0 0.0
  %512 = vmatmul.mubr.f32.gmra.mrb[0].mxu0 %v194
  %v513 = vpop.f32.mrb[0].mxu0
  %v514 = vadd.f32 %v97, %v513
  %v515 = vpop.f32.mrb[0].mxu0
  %516 = vmatprep.mubr.f32.mxu0 0.0
  %517 = vmatmul.mubr.f32.gmra.mrb[0].mxu0 %v197
  %v518 = vpop.f32.mrb[0].mxu0
  %v519 = vadd.f32 %v97, %v518
  %v520 = vpop.f32.mrb[0].mxu0
  %521 = vmatprep.mubr.f32.mxu0 0.0
  %522 = vmatmul.mubr.f32.gmra.mrb[0].mxu0 %v200
  %v523 = vpop.f32.mrb[0].mxu0
  %v524 = vadd.f32 %v97, %v523
  %v525 = vpop.f32.mrb[0].mxu0
  %526 = vmatprep.mubr.f32.mxu0 0.0
  %527 = vmatmul.mubr.f32.gmra.mrb[0].mxu0 %v203
  %v528 = vpop.f32.mrb[0].mxu0
  %v529 = vadd.f32 %v97, %v528
  %v530 = vpop.f32.mrb[0].mxu0
  %531 = vmatprep.mubr.f32.mxu0 0.0
  %532 = vmatmul.mubr.f32.gmra.mrb[0].mxu0 %v206
  %v533 = vpop.f32.mrb[0].mxu0
  %v534 = vadd.f32 %v97, %v533
  %v535 = vpop.f32.mrb[0].mxu0
  %536 = vmatprep.mubr.f32.mxu0 0.0
  %537 = vmatmul.mubr.f32.gmra.mrb[0].mxu0 %v209
  %v538 = vpop.f32.mrb[0].mxu0
  %v539 = vadd.f32 %v97, %v538
  %v540 = vpop.f32.mrb[0].mxu0
  %541 = vmatprep.mubr.f32.mxu0 0.0
  %542 = vmatmul.mubr.f32.gmra.mrb[0].mxu0 %v212
  %v543 = vpop.f32.mrb[0].mxu0
  %v544 = vadd.f32 %v97, %v543
  %v545 = vpop.f32.mrb[0].mxu0
  %546 = vmatprep.mubr.f32.mxu0 0.0
  %547 = vmatmul.mubr.f32.gmra.mrb[0].mxu0 %v215
  %v548 = vpop.f32.mrb[0].mxu0
  %v549 = vadd.f32 %v97, %v548
  %v550 = vpop.f32.mrb[0].mxu0
  %551 = vmatprep.mubr.f32.mxu0 0.0
  %552 = vmatmul.mubr.f32.gmra.mrb[0].mxu0 %v218
  %v553 = vpop.f32.mrb[0].mxu0
  %v554 = vadd.f32 %v97, %v553
  %v555 = vpop.f32.mrb[0].mxu0
  %556 = vmatprep.mubr.f32.mxu0 0.0
  %557 = vmatmul.mubr.f32.gmra.mrb[0].mxu0 %v221
  %v558 = vpop.f32.mrb[0].mxu0
  %v559 = vadd.f32 %v97, %v558
  %v560 = vpop.f32.mrb[0].mxu0
  %561 = vmatprep.mubr.f32.mxu0 0.0
  %562 = vmatmul.mubr.f32.gmra.mrb[0].mxu0 %v224
  %v563 = vpop.f32.mrb[0].mxu0
  %v564 = vadd.f32 %v97, %v563
  %v565 = vpop.f32.mrb[0].mxu0
  %566 = vmatprep.mubr.f32.mxu0 0.0
  %567 = vmatmul.mubr.f32.gmra.mrb[0].mxu0 %v227
  %v568 = vpop.f32.mrb[0].mxu0
  %v569 = vadd.f32 %v97, %v568
  %v570 = vpop.f32.mrb[0].mxu0
  %571 = vmatprep.mubr.f32.mxu0 0.0
  %572 = vmatmul.mubr.f32.gmra.mrb[0].mxu0 %v230
  %v573 = vpop.f32.mrb[0].mxu0
  %v574 = vadd.f32 %v97, %v573
  %v575 = vpop.f32.mrb[0].mxu0
  %576 = vmatprep.mubr.f32.mxu0 0.0
  %577 = vmatmul.mubr.f32.gmra.mrb[0].mxu0 %v233
  %v578 = vpop.f32.mrb[0].mxu0
  %v579 = vadd.f32 %v97, %v578
  %v580 = vpop.f32.mrb[0].mxu0
  %581 = vmatprep.mubr.f32.mxu0 0.0
  %582 = vmatmul.mubr.f32.gmra.mrb[0].mxu0 %v236
  %v583 = vpop.f32.mrb[0].mxu0
  %v584 = vadd.f32 %v97, %v583
  %v585 = vpop.f32.mrb[0].mxu0
  %586 = vmatprep.mubr.f32.mxu0 0.0
  %587 = vmatmul.mubr.f32.gmra.mrb[0].mxu0 %v239
  %v588 = vpop.f32.mrb[0].mxu0
  %v589 = vadd.f32 %v97, %v588
  %v590 = vpop.f32.mrb[0].mxu0
  %591 = vmatprep.mubr.f32.mxu0 0.0
  %592 = vmatmul.mubr.f32.gmra.mrb[0].mxu0 %v242
  %v593 = vpop.f32.mrb[0].mxu0
  %v594 = vadd.f32 %v97, %v593
  %v595 = vpop.f32.mrb[0].mxu0
  %596 = vmatprep.mubr.f32.mxu0 0.0
  %597 = vmatmul.mubr.f32.gmra.mrb[0].mxu0 %v245
  %v598 = vpop.f32.mrb[0].mxu0
  %v599 = vadd.f32 %v97, %v598
  %v600 = vpop.f32.mrb[0].mxu0
  %601 = vmatprep.mubr.f32.mxu0 0.0
  %602 = vmatmul.mubr.f32.gmra.mrb[0].mxu0 %v248
  %v603 = vpop.f32.mrb[0].mxu0
  %v604 = vadd.f32 %v97, %v603
  %v605 = vpop.f32.mrb[0].mxu0
  %606 = vmatprep.mubr.f32.mxu0 0.0
  %607 = vmatmul.mubr.f32.gmra.mrb[0].mxu0 %v251
  %v608 = vpop.f32.mrb[0].mxu0
  %v609 = vadd.f32 %v97, %v608
  %v610 = vpop.f32.mrb[0].mxu0
  %611 = vmatprep.mubr.f32.mxu0 0.0
  %612 = vmatmul.mubr.f32.gmra.mrb[0].mxu0 %v254
  %v613 = vpop.f32.mrb[0].mxu0
  %v614 = vadd.f32 %v97, %v613
  %v615 = vpop.f32.mrb[0].mxu0
  %616 = vmatprep.mubr.f32.mxu0 0.0
  %617 = vmatmul.mubr.f32.gmra.mrb[0].mxu0 %v257
  %v618 = vpop.f32.mrb[0].mxu0
  %v619 = vadd.f32 %v97, %v618
  %v620 = vpop.f32.mrb[0].mxu0
  %621 = vmatprep.mubr.f32.mxu0 0.0
  %622 = vmatmul.mubr.f32.gmra.mrb[0].mxu0 %v260
  %v623 = vpop.f32.mrb[0].mxu0
  %v624 = vadd.f32 %v97, %v623
  %v625 = vpop.f32.mrb[0].mxu0
  %626 = vmatprep.mubr.f32.mxu0 0.0
  %627 = vmatmul.mubr.f32.gmra.mrb[0].mxu0 %v263
  %v628 = vpop.f32.mrb[0].mxu0
  %v629 = vadd.f32 %v97, %v628
  %v630 = vpop.f32.mrb[0].mxu0
  %631 = vmatprep.mubr.f32.mxu0 0.0
  %632 = vmatmul.mubr.f32.gmra.mrb[0].mxu0 %v266
  %v633 = vpop.f32.mrb[0].mxu0
  %v634 = vadd.f32 %v97, %v633
  %v635 = vpop.f32.mrb[0].mxu0
  %636 = vmatprep.mubr.f32.mxu0 0.0
  %637 = vmatmul.mubr.f32.gmra.mrb[0].mxu0 %v269
  %v638 = vpop.f32.mrb[0].mxu0
  %v639 = vadd.f32 %v97, %v638
  %v640 = vpop.f32.mrb[0].mxu0
  %641 = vmatprep.mubr.f32.mxu0 0.0
  %642 = vmatmul.mubr.f32.gmra.mrb[0].mxu0 %v272
  %v643 = vpop.f32.mrb[0].mxu0
  %v644 = vadd.f32 %v97, %v643
  %v645 = vpop.f32.mrb[0].mxu0
  %646 = vmatprep.mubr.f32.mxu0 0.0
  %647 = vmatmul.mubr.f32.gmra.mrb[0].mxu0 %v275
  %v648 = vpop.f32.mrb[0].mxu0
  %v649 = vadd.f32 %v97, %v648
  %v650 = vpop.f32.mrb[0].mxu0
  %651 = vmatprep.mubr.f32.mxu0 0.0
  %652 = vmatmul.mubr.f32.gmra.mrb[0].mxu0 %v278
  %v653 = vpop.f32.mrb[0].mxu0
  %v654 = vadd.f32 %v97, %v653
  %v655 = vpop.f32.mrb[0].mxu0
  %656 = vmatprep.mubr.f32.mxu0 0.0
  %657 = vmatmul.mubr.f32.gmra.mrb[0].mxu0 %v281
  %v658 = vpop.f32.mrb[0].mxu0
  %v659 = vadd.f32 %v97, %v658
  %v660 = vpop.f32.mrb[0].mxu0
  %661 = vmatprep.mubr.f32.mxu0 0.0
  %662 = vmatmul.mubr.f32.gmra.mrb[0].mxu0 %v284
  %v663 = vpop.f32.mrb[0].mxu0
  %v664 = vadd.f32 %v97, %v663
  %v665 = vpop.f32.mrb[0].mxu0
  %666 = vmatprep.mubr.f32.mxu0 0.0
  %667 = vmatmul.mubr.f32.gmra.mrb[0].mxu0 %v287
  %v668 = vpop.f32.mrb[0].mxu0
  %v669 = vadd.f32 %v97, %v668
  %v670 = vpop.f32.mrb[0].mxu0
  %671 = vmatprep.mubr.f32.mxu0 0.0
  %672 = vmatmul.mubr.f32.gmra.mrb[0].mxu0 %v290
  %v673 = vpop.f32.mrb[0].mxu0
  %v674 = vadd.f32 %v97, %v673
  %v675 = vpop.f32.mrb[0].mxu0
  %676 = vdwg.mxu0
  %v677 = vmul.f32 %v359, 0.5
  %v678 = vmul.f32 %v364, 0.5
  %v679 = vmul.f32 %v369, 0.5
  %v680 = vmul.f32 %v374, 0.5
  %v681 = vmul.f32 %v379, 0.5
  %v682 = vmul.f32 %v384, 0.5
  %v683 = vmul.f32 %v389, 0.5
  %v684 = vmul.f32 %v394, 0.5
  %v685 = vmul.f32 %v399, 0.5
  %v686 = vmul.f32 %v404, 0.5
  %v687 = vmul.f32 %v409, 0.5
  %v688 = vmul.f32 %v414, 0.5
  %v689 = vmul.f32 %v419, 0.5
  %v690 = vmul.f32 %v424, 0.5
  %v691 = vmul.f32 %v429, 0.5
  %v692 = vmul.f32 %v434, 0.5
  %v693 = vmul.f32 %v439, 0.5
  %v694 = vmul.f32 %v444, 0.5
  %v695 = vmul.f32 %v449, 0.5
  %v696 = vmul.f32 %v454, 0.5
  %v697 = vmul.f32 %v459, 0.5
  %v698 = vmul.f32 %v464, 0.5
  %v699 = vmul.f32 %v469, 0.5
  %v700 = vmul.f32 %v474, 0.5
  %v701 = vmul.f32 %v479, 0.5
  %v702 = vmul.f32 %v484, 0.5
  %v703 = vmul.f32 %v489, 0.5
  %v704 = vmul.f32 %v494, 0.5
  %v705 = vmul.f32 %v499, 0.5
  %v706 = vmul.f32 %v504, 0.5
  %v707 = vmul.f32 %v509, 0.5
  %v708 = vmul.f32 %v514, 0.5
  %v709 = vmul.f32 %v519, 0.5
  %v710 = vmul.f32 %v524, 0.5
  %v711 = vmul.f32 %v529, 0.5
  %v712 = vmul.f32 %v534, 0.5
  %v713 = vmul.f32 %v539, 0.5
  %v714 = vmul.f32 %v544, 0.5
  %v715 = vmul.f32 %v549, 0.5
  %v716 = vmul.f32 %v554, 0.5
  %v717 = vmul.f32 %v559, 0.5
  %v718 = vmul.f32 %v564, 0.5
  %v719 = vmul.f32 %v569, 0.5
  %v720 = vmul.f32 %v574, 0.5
  %v721 = vmul.f32 %v579, 0.5
  %v722 = vmul.f32 %v584, 0.5
  %v723 = vmul.f32 %v589, 0.5
  %v724 = vmul.f32 %v594, 0.5
  %v725 = vmul.f32 %v599, 0.5
  %v726 = vmul.f32 %v604, 0.5
  %v727 = vmul.f32 %v609, 0.5
  %v728 = vmul.f32 %v614, 0.5
  %v729 = vmul.f32 %v619, 0.5
  %v730 = vmul.f32 %v624, 0.5
  %v731 = vmul.f32 %v629, 0.5
  %v732 = vmul.f32 %v634, 0.5
  %v733 = vmul.f32 %v639, 0.5
  %v734 = vmul.f32 %v644, 0.5
  %v735 = vmul.f32 %v649, 0.5
  %v736 = vmul.f32 %v654, 0.5
  %v737 = vmul.f32 %v659, 0.5
  %v738 = vmul.f32 %v664, 0.5
  %v739 = vmul.f32 %v669, 0.5
  %v740 = vmul.f32 %v674, 0.5
  %v741 = vmul.f32 %v359, 0.044715
  %v742 = vmul.f32 %v364, 0.044715
  %v743 = vmul.f32 %v369, 0.044715
  %v744 = vmul.f32 %v374, 0.044715
  %v745 = vmul.f32 %v379, 0.044715
  %v746 = vmul.f32 %v384, 0.044715
  %v747 = vmul.f32 %v389, 0.044715
  %v748 = vmul.f32 %v394, 0.044715
  %v749 = vmul.f32 %v399, 0.044715
  %v750 = vmul.f32 %v404, 0.044715
  %v751 = vmul.f32 %v409, 0.044715
  %v752 = vmul.f32 %v414, 0.044715
  %v753 = vmul.f32 %v419, 0.044715
  %v754 = vmul.f32 %v424, 0.044715
  %v755 = vmul.f32 %v429, 0.044715
  %v756 = vmul.f32 %v434, 0.044715
  %v757 = vmul.f32 %v439, 0.044715
  %v758 = vmul.f32 %v444, 0.044715
  %v759 = vmul.f32 %v449, 0.044715
  %v760 = vmul.f32 %v454, 0.044715
  %v761 = vmul.f32 %v459, 0.044715
  %v762 = vmul.f32 %v464, 0.044715
  %v763 = vmul.f32 %v469, 0.044715
  %v764 = vmul.f32 %v474, 0.044715
  %v765 = vmul.f32 %v479, 0.044715
  %v766 = vmul.f32 %v484, 0.044715
  %v767 = vmul.f32 %v489, 0.044715
  %v768 = vmul.f32 %v494, 0.044715
  %v769 = vmul.f32 %v499, 0.044715
  %v770 = vmul.f32 %v504, 0.044715
  %v771 = vmul.f32 %v509, 0.044715
  %v772 = vmul.f32 %v514, 0.044715
  %v773 = vmul.f32 %v519, 0.044715
  %v774 = vmul.f32 %v524, 0.044715
  %v775 = vmul.f32 %v529, 0.044715
  %v776 = vmul.f32 %v534, 0.044715
  %v777 = vmul.f32 %v539, 0.044715
  %v778 = vmul.f32 %v544, 0.044715
  %v779 = vmul.f32 %v549, 0.044715
  %v780 = vmul.f32 %v554, 0.044715
  %v781 = vmul.f32 %v559, 0.044715
  %v782 = vmul.f32 %v564, 0.044715
  %v783 = vmul.f32 %v569, 0.044715
  %v784 = vmul.f32 %v574, 0.044715
  %v785 = vmul.f32 %v579, 0.044715
  %v786 = vmul.f32 %v584, 0.044715
  %v787 = vmul.f32 %v589, 0.044715
  %v788 = vmul.f32 %v594, 0.044715
  %v789 = vmul.f32 %v599, 0.044715
  %v790 = vmul.f32 %v604, 0.044715
  %v791 = vmul.f32 %v609, 0.044715
  %v792 = vmul.f32 %v614, 0.044715
  %v793 = vmul.f32 %v619, 0.044715
  %v794 = vmul.f32 %v624, 0.044715
  %v795 = vmul.f32 %v629, 0.044715
  %v796 = vmul.f32 %v634, 0.044715
  %v797 = vmul.f32 %v639, 0.044715
  %v798 = vmul.f32 %v644, 0.044715
  %v799 = vmul.f32 %v649, 0.044715
  %v800 = vmul.f32 %v654, 0.044715
  %v801 = vmul.f32 %v659, 0.044715
  %v802 = vmul.f32 %v664, 0.044715
  %v803 = vmul.f32 %v669, 0.044715
  %v804 = vmul.f32 %v674, 0.044715
  %v805 = vmul.f32 %v741, %v359
  %v806 = vmul.f32 %v742, %v364
  %v807 = vmul.f32 %v743, %v369
  %v808 = vmul.f32 %v744, %v374
  %v809 = vmul.f32 %v745, %v379
  %v810 = vmul.f32 %v746, %v384
  %v811 = vmul.f32 %v747, %v389
  %v812 = vmul.f32 %v748, %v394
  %v813 = vmul.f32 %v749, %v399
  %v814 = vmul.f32 %v750, %v404
  %v815 = vmul.f32 %v751, %v409
  %v816 = vmul.f32 %v752, %v414
  %v817 = vmul.f32 %v753, %v419
  %v818 = vmul.f32 %v754, %v424
  %v819 = vmul.f32 %v755, %v429
  %v820 = vmul.f32 %v756, %v434
  %v821 = vmul.f32 %v757, %v439
  %v822 = vmul.f32 %v758, %v444
  %v823 = vmul.f32 %v759, %v449
  %v824 = vmul.f32 %v760, %v454
  %v825 = vmul.f32 %v761, %v459
  %v826 = vmul.f32 %v762, %v464
  %v827 = vmul.f32 %v763, %v469
  %v828 = vmul.f32 %v764, %v474
  %v829 = vmul.f32 %v765, %v479
  %v830 = vmul.f32 %v766, %v484
  %v831 = vmul.f32 %v767, %v489
  %v832 = vmul.f32 %v768, %v494
  %v833 = vmul.f32 %v769, %v499
  %v834 = vmul.f32 %v770, %v504
  %v835 = vmul.f32 %v771, %v509
  %v836 = vmul.f32 %v772, %v514
  %v837 = vmul.f32 %v773, %v519
  %v838 = vmul.f32 %v774, %v524
  %v839 = vmul.f32 %v775, %v529
  %v840 = vmul.f32 %v776, %v534
  %v841 = vmul.f32 %v777, %v539
  %v842 = vmul.f32 %v778, %v544
  %v843 = vmul.f32 %v779, %v549
  %v844 = vmul.f32 %v780, %v554
  %v845 = vmul.f32 %v781, %v559
  %v846 = vmul.f32 %v782, %v564
  %v847 = vmul.f32 %v783, %v569
  %v848 = vmul.f32 %v784, %v574
  %v849 = vmul.f32 %v785, %v579
  %v850 = vmul.f32 %v786, %v584
  %v851 = vmul.f32 %v787, %v589
  %v852 = vmul.f32 %v788, %v594
  %v853 = vmul.f32 %v789, %v599
  %v854 = vmul.f32 %v790, %v604
  %v855 = vmul.f32 %v791, %v609
  %v856 = vmul.f32 %v792, %v614
  %v857 = vmul.f32 %v793, %v619
  %v858 = vmul.f32 %v794, %v624
  %v859 = vmul.f32 %v795, %v629
  %v860 = vmul.f32 %v796, %v634
  %v861 = vmul.f32 %v797, %v639
  %v862 = vmul.f32 %v798, %v644
  %v863 = vmul.f32 %v799, %v649
  %v864 = vmul.f32 %v800, %v654
  %v865 = vmul.f32 %v801, %v659
  %v866 = vmul.f32 %v802, %v664
  %v867 = vmul.f32 %v803, %v669
  %v868 = vmul.f32 %v804, %v674
  %v869 = vmul.f32 %v805, %v359
  %v870 = vmul.f32 %v806, %v364
  %v871 = vmul.f32 %v807, %v369
  %v872 = vmul.f32 %v808, %v374
  %v873 = vmul.f32 %v809, %v379
  %v874 = vmul.f32 %v810, %v384
  %v875 = vmul.f32 %v811, %v389
  %v876 = vmul.f32 %v812, %v394
  %v877 = vmul.f32 %v813, %v399
  %v878 = vmul.f32 %v814, %v404
  %v879 = vmul.f32 %v815, %v409
  %v880 = vmul.f32 %v816, %v414
  %v881 = vmul.f32 %v817, %v419
  %v882 = vmul.f32 %v818, %v424
  %v883 = vmul.f32 %v819, %v429
  %v884 = vmul.f32 %v820, %v434
  %v885 = vmul.f32 %v821, %v439
  %v886 = vmul.f32 %v822, %v444
  %v887 = vmul.f32 %v823, %v449
  %v888 = vmul.f32 %v824, %v454
  %v889 = vmul.f32 %v825, %v459
  %v890 = vmul.f32 %v826, %v464
  %v891 = vmul.f32 %v827, %v469
  %v892 = vmul.f32 %v828, %v474
  %v893 = vmul.f32 %v829, %v479
  %v894 = vmul.f32 %v830, %v484
  %v895 = vmul.f32 %v831, %v489
  %v896 = vmul.f32 %v832, %v494
  %v897 = vmul.f32 %v833, %v499
  %v898 = vmul.f32 %v834, %v504
  %v899 = vmul.f32 %v835, %v509
  %v900 = vmul.f32 %v836, %v514
  %v901 = vmul.f32 %v837, %v519
  %v902 = vmul.f32 %v838, %v524
  %v903 = vmul.f32 %v839, %v529
  %v904 = vmul.f32 %v840, %v534
  %v905 = vmul.f32 %v841, %v539
  %v906 = vmul.f32 %v842, %v544
  %v907 = vmul.f32 %v843, %v549
  %v908 = vmul.f32 %v844, %v554
  %v909 = vmul.f32 %v845, %v559
  %v910 = vmul.f32 %v846, %v564
  %v911 = vmul.f32 %v847, %v569
  %v912 = vmul.f32 %v848, %v574
  %v913 = vmul.f32 %v849, %v579
  %v914 = vmul.f32 %v850, %v584
  %v915 = vmul.f32 %v851, %v589
  %v916 = vmul.f32 %v852, %v594
  %v917 = vmul.f32 %v853, %v599
  %v918 = vmul.f32 %v854, %v604
  %v919 = vmul.f32 %v855, %v609
  %v920 = vmul.f32 %v856, %v614
  %v921 = vmul.f32 %v857, %v619
  %v922 = vmul.f32 %v858, %v624
  %v923 = vmul.f32 %v859, %v629
  %v924 = vmul.f32 %v860, %v634
  %v925 = vmul.f32 %v861, %v639
  %v926 = vmul.f32 %v862, %v644
  %v927 = vmul.f32 %v863, %v649
  %v928 = vmul.f32 %v864, %v654
  %v929 = vmul.f32 %v865, %v659
  %v930 = vmul.f32 %v866, %v664
  %v931 = vmul.f32 %v867, %v669
  %v932 = vmul.f32 %v868, %v674
  %v933 = vadd.f32 %v359, %v869
  %v934 = vadd.f32 %v364, %v870
  %v935 = vadd.f32 %v369, %v871
  %v936 = vadd.f32 %v374, %v872
  %v937 = vadd.f32 %v379, %v873
  %v938 = vadd.f32 %v384, %v874
  %v939 = vadd.f32 %v389, %v875
  %v940 = vadd.f32 %v394, %v876
  %v941 = vadd.f32 %v399, %v877
  %v942 = vadd.f32 %v404, %v878
  %v943 = vadd.f32 %v409, %v879
  %v944 = vadd.f32 %v414, %v880
  %v945 = vadd.f32 %v419, %v881
  %v946 = vadd.f32 %v424, %v882
  %v947 = vadd.f32 %v429, %v883
  %v948 = vadd.f32 %v434, %v884
  %v949 = vadd.f32 %v439, %v885
  %v950 = vadd.f32 %v444, %v886
  %v951 = vadd.f32 %v449, %v887
  %v952 = vadd.f32 %v454, %v888
  %v953 = vadd.f32 %v459, %v889
  %v954 = vadd.f32 %v464, %v890
  %v955 = vadd.f32 %v469, %v891
  %v956 = vadd.f32 %v474, %v892
  %v957 = vadd.f32 %v479, %v893
  %v958 = vadd.f32 %v484, %v894
  %v959 = vadd.f32 %v489, %v895
  %v960 = vadd.f32 %v494, %v896
  %v961 = vadd.f32 %v499, %v897
  %v962 = vadd.f32 %v504, %v898
  %v963 = vadd.f32 %v509, %v899
  %v964 = vadd.f32 %v514, %v900
  %v965 = vadd.f32 %v519, %v901
  %v966 = vadd.f32 %v524, %v902
  %v967 = vadd.f32 %v529, %v903
  %v968 = vadd.f32 %v534, %v904
  %v969 = vadd.f32 %v539, %v905
  %v970 = vadd.f32 %v544, %v906
  %v971 = vadd.f32 %v549, %v907
  %v972 = vadd.f32 %v554, %v908
  %v973 = vadd.f32 %v559, %v909
  %v974 = vadd.f32 %v564, %v910
  %v975 = vadd.f32 %v569, %v911
  %v976 = vadd.f32 %v574, %v912
  %v977 = vadd.f32 %v579, %v913
  %v978 = vadd.f32 %v584, %v914
  %v979 = vadd.f32 %v589, %v915
  %v980 = vadd.f32 %v594, %v916
  %v981 = vadd.f32 %v599, %v917
  %v982 = vadd.f32 %v604, %v918
  %v983 = vadd.f32 %v609, %v919
  %v984 = vadd.f32 %v614, %v920
  %v985 = vadd.f32 %v619, %v921
  %v986 = vadd.f32 %v624, %v922
  %v987 = vadd.f32 %v629, %v923
  %v988 = vadd.f32 %v634, %v924
  %v989 = vadd.f32 %v639, %v925
  %v990 = vadd.f32 %v644, %v926
  %v991 = vadd.f32 %v649, %v927
  %v992 = vadd.f32 %v654, %v928
  %v993 = vadd.f32 %v659, %v929
  %v994 = vadd.f32 %v664, %v930
  %v995 = vadd.f32 %v669, %v931
  %v996 = vadd.f32 %v674, %v932
  %v997 = vmul.f32 %v933, 0.7978846
  %v998 = vmul.f32 %v934, 0.7978846
  %v999 = vmul.f32 %v935, 0.7978846
  %v1000 = vmul.f32 %v936, 0.7978846
  %v1001 = vmul.f32 %v937, 0.7978846
  %v1002 = vmul.f32 %v938, 0.7978846
  %v1003 = vmul.f32 %v939, 0.7978846
  %v1004 = vmul.f32 %v940, 0.7978846
  %v1005 = vmul.f32 %v941, 0.7978846
  %v1006 = vmul.f32 %v942, 0.7978846
  %v1007 = vmul.f32 %v943, 0.7978846
  %v1008 = vmul.f32 %v944, 0.7978846
  %v1009 = vmul.f32 %v945, 0.7978846
  %v1010 = vmul.f32 %v946, 0.7978846
  %v1011 = vmul.f32 %v947, 0.7978846
  %v1012 = vmul.f32 %v948, 0.7978846
  %v1013 = vmul.f32 %v949, 0.7978846
  %v1014 = vmul.f32 %v950, 0.7978846
  %v1015 = vmul.f32 %v951, 0.7978846
  %v1016 = vmul.f32 %v952, 0.7978846
  %v1017 = vmul.f32 %v953, 0.7978846
  %v1018 = vmul.f32 %v954, 0.7978846
  %v1019 = vmul.f32 %v955, 0.7978846
  %v1020 = vmul.f32 %v956, 0.7978846
  %v1021 = vmul.f32 %v957, 0.7978846
  %v1022 = vmul.f32 %v958, 0.7978846
  %v1023 = vmul.f32 %v959, 0.7978846
  %v1024 = vmul.f32 %v960, 0.7978846
  %v1025 = vmul.f32 %v961, 0.7978846
  %v1026 = vmul.f32 %v962, 0.7978846
  %v1027 = vmul.f32 %v963, 0.7978846
  %v1028 = vmul.f32 %v964, 0.7978846
  %v1029 = vmul.f32 %v965, 0.7978846
  %v1030 = vmul.f32 %v966, 0.7978846
  %v1031 = vmul.f32 %v967, 0.7978846
  %v1032 = vmul.f32 %v968, 0.7978846
  %v1033 = vmul.f32 %v969, 0.7978846
  %v1034 = vmul.f32 %v970, 0.7978846
  %v1035 = vmul.f32 %v971, 0.7978846
  %v1036 = vmul.f32 %v972, 0.7978846
  %v1037 = vmul.f32 %v973, 0.7978846
  %v1038 = vmul.f32 %v974, 0.7978846
  %v1039 = vmul.f32 %v975, 0.7978846
  %v1040 = vmul.f32 %v976, 0.7978846
  %v1041 = vmul.f32 %v977, 0.7978846
  %v1042 = vmul.f32 %v978, 0.7978846
  %v1043 = vmul.f32 %v979, 0.7978846
  %v1044 = vmul.f32 %v980, 0.7978846
  %v1045 = vmul.f32 %v981, 0.7978846
  %v1046 = vmul.f32 %v982, 0.7978846
  %v1047 = vmul.f32 %v983, 0.7978846
  %v1048 = vmul.f32 %v984, 0.7978846
  %v1049 = vmul.f32 %v985, 0.7978846
  %v1050 = vmul.f32 %v986, 0.7978846
  %v1051 = vmul.f32 %v987, 0.7978846
  %v1052 = vmul.f32 %v988, 0.7978846
  %v1053 = vmul.f32 %v989, 0.7978846
  %v1054 = vmul.f32 %v990, 0.7978846
  %v1055 = vmul.f32 %v991, 0.7978846
  %v1056 = vmul.f32 %v992, 0.7978846
  %v1057 = vmul.f32 %v993, 0.7978846
  %v1058 = vmul.f32 %v994, 0.7978846
  %v1059 = vmul.f32 %v995, 0.7978846
  %v1060 = vmul.f32 %v996, 0.7978846
  %v1061 = vtanh.pop %v997
  %v1062 = vtanh.pop %v998
  %v1063 = vtanh.pop %v999
  %v1064 = vtanh.pop %v1000
  %v1065 = vtanh.pop %v1001
  %v1066 = vtanh.pop %v1002
  %v1067 = vtanh.pop %v1003
  %v1068 = vtanh.pop %v1004
  %v1069 = vtanh.pop %v1005
  %v1070 = vtanh.pop %v1006
  %v1071 = vtanh.pop %v1007
  %v1072 = vtanh.pop %v1008
  %v1073 = vtanh.pop %v1009
  %v1074 = vtanh.pop %v1010
  %v1075 = vtanh.pop %v1011
  %v1076 = vtanh.pop %v1012
  %v1077 = vtanh.pop %v1013
  %v1078 = vtanh.pop %v1014
  %v1079 = vtanh.pop %v1015
  %v1080 = vtanh.pop %v1016
  %v1081 = vtanh.pop %v1017
  %v1082 = vtanh.pop %v1018
  %v1083 = vtanh.pop %v1019
  %v1084 = vtanh.pop %v1020
  %v1085 = vtanh.pop %v1021
  %v1086 = vtanh.pop %v1022
  %v1087 = vtanh.pop %v1023
  %v1088 = vtanh.pop %v1024
  %v1089 = vtanh.pop %v1025
  %v1090 = vtanh.pop %v1026
  %v1091 = vtanh.pop %v1027
  %v1092 = vtanh.pop %v1028
  %v1093 = vtanh.pop %v1029
  %v1094 = vtanh.pop %v1030
  %v1095 = vtanh.pop %v1031
  %v1096 = vtanh.pop %v1032
  %v1097 = vtanh.pop %v1033
  %v1098 = vtanh.pop %v1034
  %v1099 = vtanh.pop %v1035
  %v1100 = vtanh.pop %v1036
  %v1101 = vtanh.pop %v1037
  %v1102 = vtanh.pop %v1038
  %v1103 = vtanh.pop %v1039
  %v1104 = vtanh.pop %v1040
  %v1105 = vtanh.pop %v1041
  %v1106 = vtanh.pop %v1042
  %v1107 = vtanh.pop %v1043
  %v1108 = vtanh.pop %v1044
  %v1109 = vtanh.pop %v1045
  %v1110 = vtanh.pop %v1046
  %v1111 = vtanh.pop %v1047
  %v1112 = vtanh.pop %v1048
  %v1113 = vtanh.pop %v1049
  %v1114 = vtanh.pop %v1050
  %v1115 = vtanh.pop %v1051
  %v1116 = vtanh.pop %v1052
  %v1117 = vtanh.pop %v1053
  %v1118 = vtanh.pop %v1054
  %v1119 = vtanh.pop %v1055
  %v1120 = vtanh.pop %v1056
  %v1121 = vtanh.pop %v1057
  %v1122 = vtanh.pop %v1058
  %v1123 = vtanh.pop %v1059
  %v1124 = vtanh.pop %v1060
  %v1125 = vadd.f32 %v1061, 1.0
  %v1126 = vadd.f32 %v1062, 1.0
  %v1127 = vadd.f32 %v1063, 1.0
  %v1128 = vadd.f32 %v1064, 1.0
  %v1129 = vadd.f32 %v1065, 1.0
  %v1130 = vadd.f32 %v1066, 1.0
  %v1131 = vadd.f32 %v1067, 1.0
  %v1132 = vadd.f32 %v1068, 1.0
  %v1133 = vadd.f32 %v1069, 1.0
  %v1134 = vadd.f32 %v1070, 1.0
  %v1135 = vadd.f32 %v1071, 1.0
  %v1136 = vadd.f32 %v1072, 1.0
  %v1137 = vadd.f32 %v1073, 1.0
  %v1138 = vadd.f32 %v1074, 1.0
  %v1139 = vadd.f32 %v1075, 1.0
  %v1140 = vadd.f32 %v1076, 1.0
  %v1141 = vadd.f32 %v1077, 1.0
  %v1142 = vadd.f32 %v1078, 1.0
  %v1143 = vadd.f32 %v1079, 1.0
  %v1144 = vadd.f32 %v1080, 1.0
  %v1145 = vadd.f32 %v1081, 1.0
  %v1146 = vadd.f32 %v1082, 1.0
  %v1147 = vadd.f32 %v1083, 1.0
  %v1148 = vadd.f32 %v1084, 1.0
  %v1149 = vadd.f32 %v1085, 1.0
  %v1150 = vadd.f32 %v1086, 1.0
  %v1151 = vadd.f32 %v1087, 1.0
  %v1152 = vadd.f32 %v1088, 1.0
  %v1153 = vadd.f32 %v1089, 1.0
  %v1154 = vadd.f32 %v1090, 1.0
  %v1155 = vadd.f32 %v1091, 1.0
  %v1156 = vadd.f32 %v1092, 1.0
  %v1157 = vadd.f32 %v1093, 1.0
  %v1158 = vadd.f32 %v1094, 1.0
  %v1159 = vadd.f32 %v1095, 1.0
  %v1160 = vadd.f32 %v1096, 1.0
  %v1161 = vadd.f32 %v1097, 1.0
  %v1162 = vadd.f32 %v1098, 1.0
  %v1163 = vadd.f32 %v1099, 1.0
  %v1164 = vadd.f32 %v1100, 1.0
  %v1165 = vadd.f32 %v1101, 1.0
  %v1166 = vadd.f32 %v1102, 1.0
  %v1167 = vadd.f32 %v1103, 1.0
  %v1168 = vadd.f32 %v1104, 1.0
  %v1169 = vadd.f32 %v1105, 1.0
  %v1170 = vadd.f32 %v1106, 1.0
  %v1171 = vadd.f32 %v1107, 1.0
  %v1172 = vadd.f32 %v1108, 1.0
  %v1173 = vadd.f32 %v1109, 1.0
  %v1174 = vadd.f32 %v1110, 1.0
  %v1175 = vadd.f32 %v1111, 1.0
  %v1176 = vadd.f32 %v1112, 1.0
  %v1177 = vadd.f32 %v1113, 1.0
  %v1178 = vadd.f32 %v1114, 1.0
  %v1179 = vadd.f32 %v1115, 1.0
  %v1180 = vadd.f32 %v1116, 1.0
  %v1181 = vadd.f32 %v1117, 1.0
  %v1182 = vadd.f32 %v1118, 1.0
  %v1183 = vadd.f32 %v1119, 1.0
  %v1184 = vadd.f32 %v1120, 1.0
  %v1185 = vadd.f32 %v1121, 1.0
  %v1186 = vadd.f32 %v1122, 1.0
  %v1187 = vadd.f32 %v1123, 1.0
  %v1188 = vadd.f32 %v1124, 1.0
  %v1189 = vmul.f32 %v677, %v1125
  %v1190 = vmul.f32 %v678, %v1126
  %v1191 = vmul.f32 %v679, %v1127
  %v1192 = vmul.f32 %v680, %v1128
  %v1193 = vmul.f32 %v681, %v1129
  %v1194 = vmul.f32 %v682, %v1130
  %v1195 = vmul.f32 %v683, %v1131
  %v1196 = vmul.f32 %v684, %v1132
  %v1197 = vmul.f32 %v685, %v1133
  %v1198 = vmul.f32 %v686, %v1134
  %v1199 = vmul.f32 %v687, %v1135
  %v1200 = vmul.f32 %v688, %v1136
  %v1201 = vmul.f32 %v689, %v1137
  %v1202 = vmul.f32 %v690, %v1138
  %v1203 = vmul.f32 %v691, %v1139
  %v1204 = vmul.f32 %v692, %v1140
  %v1205 = vmul.f32 %v693, %v1141
  %v1206 = vmul.f32 %v694, %v1142
  %v1207 = vmul.f32 %v695, %v1143
  %v1208 = vmul.f32 %v696, %v1144
  %v1209 = vmul.f32 %v697, %v1145
  %v1210 = vmul.f32 %v698, %v1146
  %v1211 = vmul.f32 %v699, %v1147
  %v1212 = vmul.f32 %v700, %v1148
  %v1213 = vmul.f32 %v701, %v1149
  %v1214 = vmul.f32 %v702, %v1150
  %v1215 = vmul.f32 %v703, %v1151
  %v1216 = vmul.f32 %v704, %v1152
  %v1217 = vmul.f32 %v705, %v1153
  %v1218 = vmul.f32 %v706, %v1154
  %v1219 = vmul.f32 %v707, %v1155
  %v1220 = vmul.f32 %v708, %v1156
  %v1221 = vmul.f32 %v709, %v1157
  %v1222 = vmul.f32 %v710, %v1158
  %v1223 = vmul.f32 %v711, %v1159
  %v1224 = vmul.f32 %v712, %v1160
  %v1225 = vmul.f32 %v713, %v1161
  %v1226 = vmul.f32 %v714, %v1162
  %v1227 = vmul.f32 %v715, %v1163
  %v1228 = vmul.f32 %v716, %v1164
  %v1229 = vmul.f32 %v717, %v1165
  %v1230 = vmul.f32 %v718, %v1166
  %v1231 = vmul.f32 %v719, %v1167
  %v1232 = vmul.f32 %v720, %v1168
  %v1233 = vmul.f32 %v721, %v1169
  %v1234 = vmul.f32 %v722, %v1170
  %v1235 = vmul.f32 %v723, %v1171
  %v1236 = vmul.f32 %v724, %v1172
  %v1237 = vmul.f32 %v725, %v1173
  %v1238 = vmul.f32 %v726, %v1174
  %v1239 = vmul.f32 %v727, %v1175
  %v1240 = vmul.f32 %v728, %v1176
  %v1241 = vmul.f32 %v729, %v1177
  %v1242 = vmul.f32 %v730, %v1178
  %v1243 = vmul.f32 %v731, %v1179
  %v1244 = vmul.f32 %v732, %v1180
  %v1245 = vmul.f32 %v733, %v1181
  %v1246 = vmul.f32 %v734, %v1182
  %v1247 = vmul.f32 %v735, %v1183
  %v1248 = vmul.f32 %v736, %v1184
  %v1249 = vmul.f32 %v737, %v1185
  %v1250 = vmul.f32 %v738, %v1186
  %v1251 = vmul.f32 %v739, %v1187
  %v1252 = vmul.f32 %v740, %v1188
  %v1253 = vld [vmem:[%s3] sm:$0xff]
  %v1254 = vld [vmem:[%s3 + $0x8] sm:$0xff]
  %v1255 = vld [vmem:[%s4] sm:$0x1]
  %v1257 = vlaneseq
  %v1258 = vshrl.u32 %v1257, 7
  %v1259 = vsub.s32 0, %v1258
  %v1260 = vrot.slane %v1255, %v1259
  %vm1262 = vcmask 130048
  %v1264 = vsel %vm1262, %v1189, 0
  %v1267 = vsel %vm1262, %v1190, 0
  %v1270 = vsel %vm1262, %v1191, 0
  %v1273 = vsel %vm1262, %v1192, 0
  %v1276 = vsel %vm1262, %v1193, 0
  %v1279 = vsel %vm1262, %v1194, 0
  %v1282 = vsel %vm1262, %v1195, 0
  %v1285 = vsel %vm1262, %v1196, 0
  %v1288 = vsel %vm1262, %v1197, 0
  %v1291 = vsel %vm1262, %v1198, 0
  %v1294 = vsel %vm1262, %v1199, 0
  %v1297 = vsel %vm1262, %v1200, 0
  %v1300 = vsel %vm1262, %v1201, 0
  %v1303 = vsel %vm1262, %v1202, 0
  %v1306 = vsel %vm1262, %v1203, 0
  %v1309 = vsel %vm1262, %v1204, 0
  %v1312 = vsel %vm1262, %v1205, 0
  %v1315 = vsel %vm1262, %v1206, 0
  %v1318 = vsel %vm1262, %v1207, 0
  %v1321 = vsel %vm1262, %v1208, 0
  %v1324 = vsel %vm1262, %v1209, 0
  %v1327 = vsel %vm1262, %v1210, 0
  %v1330 = vsel %vm1262, %v1211, 0
  %v1333 = vsel %vm1262, %v1212, 0
  %v1336 = vsel %vm1262, %v1213, 0
  %v1339 = vsel %vm1262, %v1214, 0
  %v1342 = vsel %vm1262, %v1215, 0
  %v1345 = vsel %vm1262, %v1216, 0
  %v1348 = vsel %vm1262, %v1217, 0
  %v1351 = vsel %vm1262, %v1218, 0
  %v1354 = vsel %vm1262, %v1219, 0
  %v1357 = vsel %vm1262, %v1220, 0
  %v1360 = vsel %vm1262, %v1221, 0
  %v1363 = vsel %vm1262, %v1222, 0
  %v1366 = vsel %vm1262, %v1223, 0
  %v1369 = vsel %vm1262, %v1224, 0
  %v1372 = vsel %vm1262, %v1225, 0
  %v1375 = vsel %vm1262, %v1226, 0
  %v1378 = vsel %vm1262, %v1227, 0
  %v1381 = vsel %vm1262, %v1228, 0
  %v1384 = vsel %vm1262, %v1229, 0
  %v1387 = vsel %vm1262, %v1230, 0
  %v1390 = vsel %vm1262, %v1231, 0
  %v1393 = vsel %vm1262, %v1232, 0
  %v1396 = vsel %vm1262, %v1233, 0
  %v1399 = vsel %vm1262, %v1234, 0
  %v1402 = vsel %vm1262, %v1235, 0
  %v1405 = vsel %vm1262, %v1236, 0
  %v1408 = vsel %vm1262, %v1237, 0
  %v1411 = vsel %vm1262, %v1238, 0
  %v1414 = vsel %vm1262, %v1239, 0
  %v1417 = vsel %vm1262, %v1240, 0
  %v1420 = vsel %vm1262, %v1241, 0
  %v1423 = vsel %vm1262, %v1242, 0
  %v1426 = vsel %vm1262, %v1243, 0
  %v1429 = vsel %vm1262, %v1244, 0
  %v1432 = vsel %vm1262, %v1245, 0
  %v1435 = vsel %vm1262, %v1246, 0
  %v1438 = vsel %vm1262, %v1247, 0
  %v1441 = vsel %vm1262, %v1248, 0
  %v1444 = vsel %vm1262, %v1249, 0
  %v1447 = vsel %vm1262, %v1250, 0
  %v1450 = vsel %vm1262, %v1251, 0
  %v1453 = vsel %vm1262, %v1252, 0
  %1455 = vmatprep.subr.mxu0 0.0
  %1456 = vmatpush1.msra.mxu0 %v1253
  %1457 = vmatprep.subr.mxu0 0.0
  %1458 = vmatpush1.msra.mxu0 %v1254
  %1459 = vmatprep.subr.mxu0 0.0
  %1460 = vmatpush1.msra.mxu0 0.0
  %1461 = vmatprep.subr.mxu0 0.0
  %1462 = vmatpush1.msra.mxu0 0.0
  %1463 = vmatprep.subr.mxu0 0.0
  %1464 = vmatpush1.msra.mxu0 0.0
  %1465 = vmatprep.subr.mxu0 0.0
  %1466 = vmatpush1.msra.mxu0 0.0
  %1467 = vmatprep.subr.mxu0 0.0
  %1468 = vmatpush1.msra.mxu0 0.0
  %1469 = vmatprep.subr.mxu0 0.0
  %1470 = vmatpush1.msra.mxu0 0.0
  %1471 = vmatprep.subr.mxu0 0.0
  %1472 = vmatpush1.msra.mxu0 0.0
  %1473 = vmatprep.subr.mxu0 0.0
  %1474 = vmatpush1.msra.mxu0 0.0
  %1475 = vmatprep.subr.mxu0 0.0
  %1476 = vmatpush1.msra.mxu0 0.0
  %1477 = vmatprep.subr.mxu0 0.0
  %1478 = vmatpush1.msra.mxu0 0.0
  %1479 = vmatprep.subr.mxu0 0.0
  %1480 = vmatpush1.msra.mxu0 0.0
  %1481 = vmatprep.subr.mxu0 0.0
  %1482 = vmatpush1.msra.mxu0 0.0
  %1483 = vmatprep.subr.mxu0 0.0
  %1484 = vmatpush1.msra.mxu0 0.0
  %1485 = vmatprep.subr.mxu0 0.0
  %1486 = vmatpush1.msra.mxu0 0.0
  %1487 = vmatprep.subr.mxu0 0.0
  %1488 = vmatpush1.msra.mxu0 0.0
  %1489 = vmatprep.subr.mxu0 0.0
  %1490 = vmatpush1.msra.mxu0 0.0
  %1491 = vmatprep.subr.mxu0 0.0
  %1492 = vmatpush1.msra.mxu0 0.0
  %1493 = vmatprep.subr.mxu0 0.0
  %1494 = vmatpush1.msra.mxu0 0.0
  %1495 = vmatprep.subr.mxu0 0.0
  %1496 = vmatpush1.msra.mxu0 0.0
  %1497 = vmatprep.subr.mxu0 0.0
  %1498 = vmatpush1.msra.mxu0 0.0
  %1499 = vmatprep.subr.mxu0 0.0
  %1500 = vmatpush1.msra.mxu0 0.0
  %1501 = vmatprep.subr.mxu0 0.0
  %1502 = vmatpush1.msra.mxu0 0.0
  %1503 = vmatprep.subr.mxu0 0.0
  %1504 = vmatpush1.msra.mxu0 0.0
  %1505 = vmatprep.subr.mxu0 0.0
  %1506 = vmatpush1.msra.mxu0 0.0
  %1507 = vmatprep.subr.mxu0 0.0
  %1508 = vmatpush1.msra.mxu0 0.0
  %1509 = vmatprep.subr.mxu0 0.0
  %1510 = vmatpush1.msra.mxu0 0.0
  %1511 = vmatprep.subr.mxu0 0.0
  %1512 = vmatpush1.msra.mxu0 0.0
  %1513 = vmatprep.subr.mxu0 0.0
  %1514 = vmatpush1.msra.mxu0 0.0
  %1515 = vmatprep.subr.mxu0 0.0
  %1516 = vmatpush1.msra.mxu0 0.0
  %1517 = vmatprep.subr.mxu0 0.0
  %1518 = vmatpush1.msra.mxu0 0.0
  %1519 = vmatprep.mubr.f32.mxu0 0.0
  %1520 = vmatmul.mubr.f32.gmra.mrb[0].mxu0 %v1264
  %v1521 = vpop.f32.mrb[0].mxu0
  %v1522 = vadd.f32 %v1260, %v1521
  %v1523 = vpop.f32.mrb[0].mxu0
  %1524 = vmatprep.mubr.f32.mxu0 0.0
  %1525 = vmatmul.mubr.f32.gmra.mrb[0].mxu0 %v1267
  %v1526 = vpop.f32.mrb[0].mxu0
  %v1527 = vadd.f32 %v1260, %v1526
  %v1528 = vpop.f32.mrb[0].mxu0
  %1529 = vmatprep.mubr.f32.mxu0 0.0
  %1530 = vmatmul.mubr.f32.gmra.mrb[0].mxu0 %v1270
  %v1531 = vpop.f32.mrb[0].mxu0
  %v1532 = vadd.f32 %v1260, %v1531
  %v1533 = vpop.f32.mrb[0].mxu0
  %1534 = vmatprep.mubr.f32.mxu0 0.0
  %1535 = vmatmul.mubr.f32.gmra.mrb[0].mxu0 %v1273
  %v1536 = vpop.f32.mrb[0].mxu0
  %v1537 = vadd.f32 %v1260, %v1536
  %v1538 = vpop.f32.mrb[0].mxu0
  %1539 = vmatprep.mubr.f32.mxu0 0.0
  %1540 = vmatmul.mubr.f32.gmra.mrb[0].mxu0 %v1276
  %v1541 = vpop.f32.mrb[0].mxu0
  %v1542 = vadd.f32 %v1260, %v1541
  %v1543 = vpop.f32.mrb[0].mxu0
  %1544 = vmatprep.mubr.f32.mxu0 0.0
  %1545 = vmatmul.mubr.f32.gmra.mrb[0].mxu0 %v1279
  %v1546 = vpop.f32.mrb[0].mxu0
  %v1547 = vadd.f32 %v1260, %v1546
  %v1548 = vpop.f32.mrb[0].mxu0
  %1549 = vmatprep.mubr.f32.mxu0 0.0
  %1550 = vmatmul.mubr.f32.gmra.mrb[0].mxu0 %v1282
  %v1551 = vpop.f32.mrb[0].mxu0
  %v1552 = vadd.f32 %v1260, %v1551
  %v1553 = vpop.f32.mrb[0].mxu0
  %1554 = vmatprep.mubr.f32.mxu0 0.0
  %1555 = vmatmul.mubr.f32.gmra.mrb[0].mxu0 %v1285
  %v1556 = vpop.f32.mrb[0].mxu0
  %v1557 = vadd.f32 %v1260, %v1556
  %v1558 = vpop.f32.mrb[0].mxu0
  %1559 = vmatprep.mubr.f32.mxu0 0.0
  %1560 = vmatmul.mubr.f32.gmra.mrb[0].mxu0 %v1288
  %v1561 = vpop.f32.mrb[0].mxu0
  %v1562 = vadd.f32 %v1260, %v1561
  %v1563 = vpop.f32.mrb[0].mxu0
  %1564 = vmatprep.mubr.f32.mxu0 0.0
  %1565 = vmatmul.mubr.f32.gmra.mrb[0].mxu0 %v1291
  %v1566 = vpop.f32.mrb[0].mxu0
  %v1567 = vadd.f32 %v1260, %v1566
  %v1568 = vpop.f32.mrb[0].mxu0
  %1569 = vmatprep.mubr.f32.mxu0 0.0
  %1570 = vmatmul.mubr.f32.gmra.mrb[0].mxu0 %v1294
  %v1571 = vpop.f32.mrb[0].mxu0
  %v1572 = vadd.f32 %v1260, %v1571
  %v1573 = vpop.f32.mrb[0].mxu0
  %1574 = vmatprep.mubr.f32.mxu0 0.0
  %1575 = vmatmul.mubr.f32.gmra.mrb[0].mxu0 %v1297
  %v1576 = vpop.f32.mrb[0].mxu0
  %v1577 = vadd.f32 %v1260, %v1576
  %v1578 = vpop.f32.mrb[0].mxu0
  %1579 = vmatprep.mubr.f32.mxu0 0.0
  %1580 = vmatmul.mubr.f32.gmra.mrb[0].mxu0 %v1300
  %v1581 = vpop.f32.mrb[0].mxu0
  %v1582 = vadd.f32 %v1260, %v1581
  %v1583 = vpop.f32.mrb[0].mxu0
  %1584 = vmatprep.mubr.f32.mxu0 0.0
  %1585 = vmatmul.mubr.f32.gmra.mrb[0].mxu0 %v1303
  %v1586 = vpop.f32.mrb[0].mxu0
  %v1587 = vadd.f32 %v1260, %v1586
  %v1588 = vpop.f32.mrb[0].mxu0
  %1589 = vmatprep.mubr.f32.mxu0 0.0
  %1590 = vmatmul.mubr.f32.gmra.mrb[0].mxu0 %v1306
  %v1591 = vpop.f32.mrb[0].mxu0
  %v1592 = vadd.f32 %v1260, %v1591
  %v1593 = vpop.f32.mrb[0].mxu0
  %1594 = vmatprep.mubr.f32.mxu0 0.0
  %1595 = vmatmul.mubr.f32.gmra.mrb[0].mxu0 %v1309
  %v1596 = vpop.f32.mrb[0].mxu0
  %v1597 = vadd.f32 %v1260, %v1596
  %v1598 = vpop.f32.mrb[0].mxu0
  %1599 = vmatprep.mubr.f32.mxu0 0.0
  %1600 = vmatmul.mubr.f32.gmra.mrb[0].mxu0 %v1312
  %v1601 = vpop.f32.mrb[0].mxu0
  %v1602 = vadd.f32 %v1260, %v1601
  %v1603 = vpop.f32.mrb[0].mxu0
  %1604 = vmatprep.mubr.f32.mxu0 0.0
  %1605 = vmatmul.mubr.f32.gmra.mrb[0].mxu0 %v1315
  %v1606 = vpop.f32.mrb[0].mxu0
  %v1607 = vadd.f32 %v1260, %v1606
  %v1608 = vpop.f32.mrb[0].mxu0
  %1609 = vmatprep.mubr.f32.mxu0 0.0
  %1610 = vmatmul.mubr.f32.gmra.mrb[0].mxu0 %v1318
  %v1611 = vpop.f32.mrb[0].mxu0
  %v1612 = vadd.f32 %v1260, %v1611
  %v1613 = vpop.f32.mrb[0].mxu0
  %1614 = vmatprep.mubr.f32.mxu0 0.0
  %1615 = vmatmul.mubr.f32.gmra.mrb[0].mxu0 %v1321
  %v1616 = vpop.f32.mrb[0].mxu0
  %v1617 = vadd.f32 %v1260, %v1616
  %v1618 = vpop.f32.mrb[0].mxu0
  %1619 = vmatprep.mubr.f32.mxu0 0.0
  %1620 = vmatmul.mubr.f32.gmra.mrb[0].mxu0 %v1324
  %v1621 = vpop.f32.mrb[0].mxu0
  %v1622 = vadd.f32 %v1260, %v1621
  %v1623 = vpop.f32.mrb[0].mxu0
  %1624 = vmatprep.mubr.f32.mxu0 0.0
  %1625 = vmatmul.mubr.f32.gmra.mrb[0].mxu0 %v1327
  %v1626 = vpop.f32.mrb[0].mxu0
  %v1627 = vadd.f32 %v1260, %v1626
  %v1628 = vpop.f32.mrb[0].mxu0
  %1629 = vmatprep.mubr.f32.mxu0 0.0
  %1630 = vmatmul.mubr.f32.gmra.mrb[0].mxu0 %v1330
  %v1631 = vpop.f32.mrb[0].mxu0
  %v1632 = vadd.f32 %v1260, %v1631
  %v1633 = vpop.f32.mrb[0].mxu0
  %1634 = vmatprep.mubr.f32.mxu0 0.0
  %1635 = vmatmul.mubr.f32.gmra.mrb[0].mxu0 %v1333
  %v1636 = vpop.f32.mrb[0].mxu0
  %v1637 = vadd.f32 %v1260, %v1636
  %v1638 = vpop.f32.mrb[0].mxu0
  %1639 = vmatprep.mubr.f32.mxu0 0.0
  %1640 = vmatmul.mubr.f32.gmra.mrb[0].mxu0 %v1336
  %v1641 = vpop.f32.mrb[0].mxu0
  %v1642 = vadd.f32 %v1260, %v1641
  %v1643 = vpop.f32.mrb[0].mxu0
  %1644 = vmatprep.mubr.f32.mxu0 0.0
  %1645 = vmatmul.mubr.f32.gmra.mrb[0].mxu0 %v1339
  %v1646 = vpop.f32.mrb[0].mxu0
  %v1647 = vadd.f32 %v1260, %v1646
  %v1648 = vpop.f32.mrb[0].mxu0
  %1649 = vmatprep.mubr.f32.mxu0 0.0
  %1650 = vmatmul.mubr.f32.gmra.mrb[0].mxu0 %v1342
  %v1651 = vpop.f32.mrb[0].mxu0
  %v1652 = vadd.f32 %v1260, %v1651
  %v1653 = vpop.f32.mrb[0].mxu0
  %1654 = vmatprep.mubr.f32.mxu0 0.0
  %1655 = vmatmul.mubr.f32.gmra.mrb[0].mxu0 %v1345
  %v1656 = vpop.f32.mrb[0].mxu0
  %v1657 = vadd.f32 %v1260, %v1656
  %v1658 = vpop.f32.mrb[0].mxu0
  %1659 = vmatprep.mubr.f32.mxu0 0.0
  %1660 = vmatmul.mubr.f32.gmra.mrb[0].mxu0 %v1348
  %v1661 = vpop.f32.mrb[0].mxu0
  %v1662 = vadd.f32 %v1260, %v1661
  %v1663 = vpop.f32.mrb[0].mxu0
  %1664 = vmatprep.mubr.f32.mxu0 0.0
  %1665 = vmatmul.mubr.f32.gmra.mrb[0].mxu0 %v1351
  %v1666 = vpop.f32.mrb[0].mxu0
  %v1667 = vadd.f32 %v1260, %v1666
  %v1668 = vpop.f32.mrb[0].mxu0
  %1669 = vmatprep.mubr.f32.mxu0 0.0
  %1670 = vmatmul.mubr.f32.gmra.mrb[0].mxu0 %v1354
  %v1671 = vpop.f32.mrb[0].mxu0
  %v1672 = vadd.f32 %v1260, %v1671
  %v1673 = vpop.f32.mrb[0].mxu0
  %1674 = vmatprep.mubr.f32.mxu0 0.0
  %1675 = vmatmul.mubr.f32.gmra.mrb[0].mxu0 %v1357
  %v1676 = vpop.f32.mrb[0].mxu0
  %v1677 = vadd.f32 %v1260, %v1676
  %v1678 = vpop.f32.mrb[0].mxu0
  %1679 = vmatprep.mubr.f32.mxu0 0.0
  %1680 = vmatmul.mubr.f32.gmra.mrb[0].mxu0 %v1360
  %v1681 = vpop.f32.mrb[0].mxu0
  %v1682 = vadd.f32 %v1260, %v1681
  %v1683 = vpop.f32.mrb[0].mxu0
  %1684 = vmatprep.mubr.f32.mxu0 0.0
  %1685 = vmatmul.mubr.f32.gmra.mrb[0].mxu0 %v1363
  %v1686 = vpop.f32.mrb[0].mxu0
  %v1687 = vadd.f32 %v1260, %v1686
  %v1688 = vpop.f32.mrb[0].mxu0
  %1689 = vmatprep.mubr.f32.mxu0 0.0
  %1690 = vmatmul.mubr.f32.gmra.mrb[0].mxu0 %v1366
  %v1691 = vpop.f32.mrb[0].mxu0
  %v1692 = vadd.f32 %v1260, %v1691
  %v1693 = vpop.f32.mrb[0].mxu0
  %1694 = vmatprep.mubr.f32.mxu0 0.0
  %1695 = vmatmul.mubr.f32.gmra.mrb[0].mxu0 %v1369
  %v1696 = vpop.f32.mrb[0].mxu0
  %v1697 = vadd.f32 %v1260, %v1696
  %v1698 = vpop.f32.mrb[0].mxu0
  %1699 = vmatprep.mubr.f32.mxu0 0.0
  %1700 = vmatmul.mubr.f32.gmra.mrb[0].mxu0 %v1372
  %v1701 = vpop.f32.mrb[0].mxu0
  %v1702 = vadd.f32 %v1260, %v1701
  %v1703 = vpop.f32.mrb[0].mxu0
  %1704 = vmatprep.mubr.f32.mxu0 0.0
  %1705 = vmatmul.mubr.f32.gmra.mrb[0].mxu0 %v1375
  %v1706 = vpop.f32.mrb[0].mxu0
  %v1707 = vadd.f32 %v1260, %v1706
  %v1708 = vpop.f32.mrb[0].mxu0
  %1709 = vmatprep.mubr.f32.mxu0 0.0
  %1710 = vmatmul.mubr.f32.gmra.mrb[0].mxu0 %v1378
  %v1711 = vpop.f32.mrb[0].mxu0
  %v1712 = vadd.f32 %v1260, %v1711
  %v1713 = vpop.f32.mrb[0].mxu0
  %1714 = vmatprep.mubr.f32.mxu0 0.0
  %1715 = vmatmul.mubr.f32.gmra.mrb[0].mxu0 %v1381
  %v1716 = vpop.f32.mrb[0].mxu0
  %v1717 = vadd.f32 %v1260, %v1716
  %v1718 = vpop.f32.mrb[0].mxu0
  %1719 = vmatprep.mubr.f32.mxu0 0.0
  %1720 = vmatmul.mubr.f32.gmra.mrb[0].mxu0 %v1384
  %v1721 = vpop.f32.mrb[0].mxu0
  %v1722 = vadd.f32 %v1260, %v1721
  %v1723 = vpop.f32.mrb[0].mxu0
  %1724 = vmatprep.mubr.f32.mxu0 0.0
  %1725 = vmatmul.mubr.f32.gmra.mrb[0].mxu0 %v1387
  %v1726 = vpop.f32.mrb[0].mxu0
  %v1727 = vadd.f32 %v1260, %v1726
  %v1728 = vpop.f32.mrb[0].mxu0
  %1729 = vmatprep.mubr.f32.mxu0 0.0
  %1730 = vmatmul.mubr.f32.gmra.mrb[0].mxu0 %v1390
  %v1731 = vpop.f32.mrb[0].mxu0
  %v1732 = vadd.f32 %v1260, %v1731
  %v1733 = vpop.f32.mrb[0].mxu0
  %1734 = vmatprep.mubr.f32.mxu0 0.0
  %1735 = vmatmul.mubr.f32.gmra.mrb[0].mxu0 %v1393
  %v1736 = vpop.f32.mrb[0].mxu0
  %v1737 = vadd.f32 %v1260, %v1736
  %v1738 = vpop.f32.mrb[0].mxu0
  %1739 = vmatprep.mubr.f32.mxu0 0.0
  %1740 = vmatmul.mubr.f32.gmra.mrb[0].mxu0 %v1396
  %v1741 = vpop.f32.mrb[0].mxu0
  %v1742 = vadd.f32 %v1260, %v1741
  %v1743 = vpop.f32.mrb[0].mxu0
  %1744 = vmatprep.mubr.f32.mxu0 0.0
  %1745 = vmatmul.mubr.f32.gmra.mrb[0].mxu0 %v1399
  %v1746 = vpop.f32.mrb[0].mxu0
  %v1747 = vadd.f32 %v1260, %v1746
  %v1748 = vpop.f32.mrb[0].mxu0
  %1749 = vmatprep.mubr.f32.mxu0 0.0
  %1750 = vmatmul.mubr.f32.gmra.mrb[0].mxu0 %v1402
  %v1751 = vpop.f32.mrb[0].mxu0
  %v1752 = vadd.f32 %v1260, %v1751
  %v1753 = vpop.f32.mrb[0].mxu0
  %1754 = vmatprep.mubr.f32.mxu0 0.0
  %1755 = vmatmul.mubr.f32.gmra.mrb[0].mxu0 %v1405
  %v1756 = vpop.f32.mrb[0].mxu0
  %v1757 = vadd.f32 %v1260, %v1756
  %v1758 = vpop.f32.mrb[0].mxu0
  %1759 = vmatprep.mubr.f32.mxu0 0.0
  %1760 = vmatmul.mubr.f32.gmra.mrb[0].mxu0 %v1408
  %v1761 = vpop.f32.mrb[0].mxu0
  %v1762 = vadd.f32 %v1260, %v1761
  %v1763 = vpop.f32.mrb[0].mxu0
  %1764 = vmatprep.mubr.f32.mxu0 0.0
  %1765 = vmatmul.mubr.f32.gmra.mrb[0].mxu0 %v1411
  %v1766 = vpop.f32.mrb[0].mxu0
  %v1767 = vadd.f32 %v1260, %v1766
  %v1768 = vpop.f32.mrb[0].mxu0
  %1769 = vmatprep.mubr.f32.mxu0 0.0
  %1770 = vmatmul.mubr.f32.gmra.mrb[0].mxu0 %v1414
  %v1771 = vpop.f32.mrb[0].mxu0
  %v1772 = vadd.f32 %v1260, %v1771
  %v1773 = vpop.f32.mrb[0].mxu0
  %1774 = vmatprep.mubr.f32.mxu0 0.0
  %1775 = vmatmul.mubr.f32.gmra.mrb[0].mxu0 %v1417
  %v1776 = vpop.f32.mrb[0].mxu0
  %v1777 = vadd.f32 %v1260, %v1776
  %v1778 = vpop.f32.mrb[0].mxu0
  %1779 = vmatprep.mubr.f32.mxu0 0.0
  %1780 = vmatmul.mubr.f32.gmra.mrb[0].mxu0 %v1420
  %v1781 = vpop.f32.mrb[0].mxu0
  %v1782 = vadd.f32 %v1260, %v1781
  %v1783 = vpop.f32.mrb[0].mxu0
  %1784 = vmatprep.mubr.f32.mxu0 0.0
  %1785 = vmatmul.mubr.f32.gmra.mrb[0].mxu0 %v1423
  %v1786 = vpop.f32.mrb[0].mxu0
  %v1787 = vadd.f32 %v1260, %v1786
  %v1788 = vpop.f32.mrb[0].mxu0
  %1789 = vmatprep.mubr.f32.mxu0 0.0
  %1790 = vmatmul.mubr.f32.gmra.mrb[0].mxu0 %v1426
  %v1791 = vpop.f32.mrb[0].mxu0
  %v1792 = vadd.f32 %v1260, %v1791
  %v1793 = vpop.f32.mrb[0].mxu0
  %1794 = vmatprep.mubr.f32.mxu0 0.0
  %1795 = vmatmul.mubr.f32.gmra.mrb[0].mxu0 %v1429
  %v1796 = vpop.f32.mrb[0].mxu0
  %v1797 = vadd.f32 %v1260, %v1796
  %v1798 = vpop.f32.mrb[0].mxu0
  %1799 = vmatprep.mubr.f32.mxu0 0.0
  %1800 = vmatmul.mubr.f32.gmra.mrb[0].mxu0 %v1432
  %v1801 = vpop.f32.mrb[0].mxu0
  %v1802 = vadd.f32 %v1260, %v1801
  %v1803 = vpop.f32.mrb[0].mxu0
  %1804 = vmatprep.mubr.f32.mxu0 0.0
  %1805 = vmatmul.mubr.f32.gmra.mrb[0].mxu0 %v1435
  %v1806 = vpop.f32.mrb[0].mxu0
  %v1807 = vadd.f32 %v1260, %v1806
  %v1808 = vpop.f32.mrb[0].mxu0
  %1809 = vmatprep.mubr.f32.mxu0 0.0
  %1810 = vmatmul.mubr.f32.gmra.mrb[0].mxu0 %v1438
  %v1811 = vpop.f32.mrb[0].mxu0
  %v1812 = vadd.f32 %v1260, %v1811
  %v1813 = vpop.f32.mrb[0].mxu0
  %1814 = vmatprep.mubr.f32.mxu0 0.0
  %1815 = vmatmul.mubr.f32.gmra.mrb[0].mxu0 %v1441
  %v1816 = vpop.f32.mrb[0].mxu0
  %v1817 = vadd.f32 %v1260, %v1816
  %v1818 = vpop.f32.mrb[0].mxu0
  %1819 = vmatprep.mubr.f32.mxu0 0.0
  %1820 = vmatmul.mubr.f32.gmra.mrb[0].mxu0 %v1444
  %v1821 = vpop.f32.mrb[0].mxu0
  %v1822 = vadd.f32 %v1260, %v1821
  %v1823 = vpop.f32.mrb[0].mxu0
  %1824 = vmatprep.mubr.f32.mxu0 0.0
  %1825 = vmatmul.mubr.f32.gmra.mrb[0].mxu0 %v1447
  %v1826 = vpop.f32.mrb[0].mxu0
  %v1827 = vadd.f32 %v1260, %v1826
  %v1828 = vpop.f32.mrb[0].mxu0
  %1829 = vmatprep.mubr.f32.mxu0 0.0
  %1830 = vmatmul.mubr.f32.gmra.mrb[0].mxu0 %v1450
  %v1831 = vpop.f32.mrb[0].mxu0
  %v1832 = vadd.f32 %v1260, %v1831
  %v1833 = vpop.f32.mrb[0].mxu0
  %1834 = vmatprep.mubr.f32.mxu0 0.0
  %1835 = vmatmul.mubr.f32.gmra.mrb[0].mxu0 %v1453
  %v1836 = vpop.f32.mrb[0].mxu0
  %v1837 = vadd.f32 %v1260, %v1836
  %v1838 = vpop.f32.mrb[0].mxu0
  %1839 = vdwg.mxu0
  %1840 = vst.msk [vmem:[%s5] sm:$0xff] %vm1262, %v1522
  %1841 = vst.msk [vmem:[%s5 + $0x8] sm:$0xff] %vm1262, %v1527
  %1842 = vst.msk [vmem:[%s5 + $0x10] sm:$0xff] %vm1262, %v1532
  %1843 = vst.msk [vmem:[%s5 + $0x18] sm:$0xff] %vm1262, %v1537
  %1844 = vst.msk [vmem:[%s5 + $0x20] sm:$0xff] %vm1262, %v1542
  %1845 = vst.msk [vmem:[%s5 + $0x28] sm:$0xff] %vm1262, %v1547
  %1846 = vst.msk [vmem:[%s5 + $0x30] sm:$0xff] %vm1262, %v1552
  %1847 = vst.msk [vmem:[%s5 + $0x38] sm:$0xff] %vm1262, %v1557
  %1848 = vst.msk [vmem:[%s5 + $0x40] sm:$0xff] %vm1262, %v1562
  %1849 = vst.msk [vmem:[%s5 + $0x48] sm:$0xff] %vm1262, %v1567
  %1850 = vst.msk [vmem:[%s5 + $0x50] sm:$0xff] %vm1262, %v1572
  %1851 = vst.msk [vmem:[%s5 + $0x58] sm:$0xff] %vm1262, %v1577
  %1852 = vst.msk [vmem:[%s5 + $0x60] sm:$0xff] %vm1262, %v1582
  %1853 = vst.msk [vmem:[%s5 + $0x68] sm:$0xff] %vm1262, %v1587
  %1854 = vst.msk [vmem:[%s5 + $0x70] sm:$0xff] %vm1262, %v1592
  %1855 = vst.msk [vmem:[%s5 + $0x78] sm:$0xff] %vm1262, %v1597
  %1856 = vst.msk [vmem:[%s5 + $0x80] sm:$0xff] %vm1262, %v1602
  %1857 = vst.msk [vmem:[%s5 + $0x88] sm:$0xff] %vm1262, %v1607
  %1858 = vst.msk [vmem:[%s5 + $0x90] sm:$0xff] %vm1262, %v1612
  %1859 = vst.msk [vmem:[%s5 + $0x98] sm:$0xff] %vm1262, %v1617
  %1860 = vst.msk [vmem:[%s5 + $0xa0] sm:$0xff] %vm1262, %v1622
  %1861 = vst.msk [vmem:[%s5 + $0xa8] sm:$0xff] %vm1262, %v1627
  %1862 = vst.msk [vmem:[%s5 + $0xb0] sm:$0xff] %vm1262, %v1632
  %1863 = vst.msk [vmem:[%s5 + $0xb8] sm:$0xff] %vm1262, %v1637
  %1864 = vst.msk [vmem:[%s5 + $0xc0] sm:$0xff] %vm1262, %v1642
  %1865 = vst.msk [vmem:[%s5 + $0xc8] sm:$0xff] %vm1262, %v1647
  %1866 = vst.msk [vmem:[%s5 + $0xd0] sm:$0xff] %vm1262, %v1652
  %1867 = vst.msk [vmem:[%s5 + $0xd8] sm:$0xff] %vm1262, %v1657
  %1868 = vst.msk [vmem:[%s5 + $0xe0] sm:$0xff] %vm1262, %v1662
  %1869 = vst.msk [vmem:[%s5 + $0xe8] sm:$0xff] %vm1262, %v1667
  %1870 = vst.msk [vmem:[%s5 + $0xf0] sm:$0xff] %vm1262, %v1672
  %1871 = vst.msk [vmem:[%s5 + $0xf8] sm:$0xff] %vm1262, %v1677
  %1872 = vst.msk [vmem:[%s5 + $0x100] sm:$0xff] %vm1262, %v1682
  %1873 = vst.msk [vmem:[%s5 + $0x108] sm:$0xff] %vm1262, %v1687
  %1874 = vst.msk [vmem:[%s5 + $0x110] sm:$0xff] %vm1262, %v1692
  %1875 = vst.msk [vmem:[%s5 + $0x118] sm:$0xff] %vm1262, %v1697
  %1876 = vst.msk [vmem:[%s5 + $0x120] sm:$0xff] %vm1262, %v1702
  %1877 = vst.msk [vmem:[%s5 + $0x128] sm:$0xff] %vm1262, %v1707
  %1878 = vst.msk [vmem:[%s5 + $0x130] sm:$0xff] %vm1262, %v1712
  %1879 = vst.msk [vmem:[%s5 + $0x138] sm:$0xff] %vm1262, %v1717
  %1880 = vst.msk [vmem:[%s5 + $0x140] sm:$0xff] %vm1262, %v1722
  %1881 = vst.msk [vmem:[%s5 + $0x148] sm:$0xff] %vm1262, %v1727
  %1882 = vst.msk [vmem:[%s5 + $0x150] sm:$0xff] %vm1262, %v1732
  %1883 = vst.msk [vmem:[%s5 + $0x158] sm:$0xff] %vm1262, %v1737
  %1884 = vst.msk [vmem:[%s5 + $0x160] sm:$0xff] %vm1262, %v1742
  %1885 = vst.msk [vmem:[%s5 + $0x168] sm:$0xff] %vm1262, %v1747
  %1886 = vst.msk [vmem:[%s5 + $0x170] sm:$0xff] %vm1262, %v1752
  %1887 = vst.msk [vmem:[%s5 + $0x178] sm:$0xff] %vm1262, %v1757
  %1888 = vst.msk [vmem:[%s5 + $0x180] sm:$0xff] %vm1262, %v1762
  %1889 = vst.msk [vmem:[%s5 + $0x188] sm:$0xff] %vm1262, %v1767
  %1890 = vst.msk [vmem:[%s5 + $0x190] sm:$0xff] %vm1262, %v1772
  %1891 = vst.msk [vmem:[%s5 + $0x198] sm:$0xff] %vm1262, %v1777
  %1892 = vst.msk [vmem:[%s5 + $0x1a0] sm:$0xff] %vm1262, %v1782
  %1893 = vst.msk [vmem:[%s5 + $0x1a8] sm:$0xff] %vm1262, %v1787
  %1894 = vst.msk [vmem:[%s5 + $0x1b0] sm:$0xff] %vm1262, %v1792
  %1895 = vst.msk [vmem:[%s5 + $0x1b8] sm:$0xff] %vm1262, %v1797
  %1896 = vst.msk [vmem:[%s5 + $0x1c0] sm:$0xff] %vm1262, %v1802
  %1897 = vst.msk [vmem:[%s5 + $0x1c8] sm:$0xff] %vm1262, %v1807
  %1898 = vst.msk [vmem:[%s5 + $0x1d0] sm:$0xff] %vm1262, %v1812
  %1899 = vst.msk [vmem:[%s5 + $0x1d8] sm:$0xff] %vm1262, %v1817
  %1900 = vst.msk [vmem:[%s5 + $0x1e0] sm:$0xff] %vm1262, %v1822
  %1901 = vst.msk [vmem:[%s5 + $0x1e8] sm:$0xff] %vm1262, %v1827
  %1902 = vst.msk [vmem:[%s5 + $0x1f0] sm:$0xff] %vm1262, %v1832
  %1903 = vst.msk [vmem:[%s5 + $0x1f8] sm:$0xff] %vm1262, %v1837
  // Predicated region
  $region22: #{wavemix_sr_forward.12} parent=0 // pred_check
    _
  $region23: #{wavemix_sr_forward.12} parent=0 // pred_check_branch
    %1905 = sbr.rel (0) target = $region25
  $region24: #{wavemix_sr_forward.12} parent=0 // pred_region
    _
  $region25: #{wavemix_sr_forward.12} parent=0 // pred_fallthru
    _
  // Predicated region
  $region26: #{wavemix_sr_forward.12} parent=0 // pred_check
    _
  $region27: #{wavemix_sr_forward.12} parent=0 // pred_check_branch
    %1907 = sbr.rel (0) target = $region29
  $region28: #{wavemix_sr_forward.12} parent=0 // pred_region
    _
  $region29: #{wavemix_sr_forward.12} parent=0 // pred_fallthru
    _

// kernel: wavemix_sr_forward.13
$region0: #{wavemix_sr_forward.13}
  #allocation0 [shape = 'u32[]', space=smem, size = 0x4, offset = 0x4, fixed_abs, tag = 'smem constant byte address 0x4 - core index']
  #allocation1 [shape = 'u32[144,128]{1,0:T(1,128)}', space=vmem, size = 0x12000, scoped, tag = 'internal scratch']
  %s0 = inlined_call_operand.vmem [shape: f32[512,144], index: 0, kind: input, shape index: {}]
  %s1 = inlined_call_operand.vmem [shape: f32[144,64], index: 1, kind: input, shape index: {}]
  %s2 = inlined_call_operand.vmem [shape: f32[1,64], index: 2, kind: input, shape index: {}]
  %s3 = inlined_call_operand.vmem [shape: f32[512,64], index: 3, kind: input, shape index: {}]
  %s4 = inlined_call_operand.vmem [shape: f32[512,64], index: 4, kind: output, shape index: {}]
  %s5 = sld [smem:[#allocation0]]
  $region26: #{wavemix_sr_forward.13} parent=0
    _
  %s7 = ssub.s32 1, %s5
  %s8 = scalar_select 0, %s7, %s5
  // Predicated region
  $region2: #{wavemix_sr_forward.13} parent=0 // pred_check
    _
  $region3: #{wavemix_sr_forward.13} parent=0 // pred_check_branch
    %10 = sbr.rel (0) target = $region5
  $region4: #{wavemix_sr_forward.13} parent=0 // pred_region
    _
  $region5: #{wavemix_sr_forward.13} parent=0 // pred_fallthru
    _
  // Predicated region
  $region6: #{wavemix_sr_forward.13} parent=0 // pred_check
    _
  $region7: #{wavemix_sr_forward.13} parent=0 // pred_check_branch
    %12 = sbr.rel (0) target = $region9
  $region8: #{wavemix_sr_forward.13} parent=0 // pred_region
    _
  $region9: #{wavemix_sr_forward.13} parent=0 // pred_fallthru
    _
  // Predicated region
  $region10: #{wavemix_sr_forward.13} parent=0 // pred_check
    _
  $region11: #{wavemix_sr_forward.13} parent=0 // pred_check_branch
    %14 = sbr.rel (0) target = $region13
  $region12: #{wavemix_sr_forward.13} parent=0 // pred_region
    _
  $region13: #{wavemix_sr_forward.13} parent=0 // pred_fallthru
    _
  // Predicated region
  $region14: #{wavemix_sr_forward.13} parent=0 // pred_check
    _
  $region15: #{wavemix_sr_forward.13} parent=0 // pred_check_branch
    %16 = sbr.rel (0) target = $region17
  $region16: #{wavemix_sr_forward.13} parent=0 // pred_region
    _
  $region17: #{wavemix_sr_forward.13} parent=0 // pred_fallthru
    _
  %v17 = vld [vmem:[%s0] sm:$0xff]
  %v18 = vld [vmem:[%s0 + $0x8] sm:$0xff]
  %v19 = vld [vmem:[%s0 + $0x10] sm:$0xff]
  %v20 = vld [vmem:[%s0 + $0x18] sm:$0xff]
  %v21 = vld [vmem:[%s0 + $0x20] sm:$0xff]
  %v22 = vld [vmem:[%s0 + $0x28] sm:$0xff]
  %v23 = vld [vmem:[%s0 + $0x30] sm:$0xff]
  %v24 = vld [vmem:[%s0 + $0x38] sm:$0xff]
  %v25 = vld [vmem:[%s0 + $0x40] sm:$0xff]
  %v26 = vld [vmem:[%s0 + $0x48] sm:$0xff]
  %v27 = vld [vmem:[%s0 + $0x50] sm:$0xff]
  %v28 = vld [vmem:[%s0 + $0x58] sm:$0xff]
  %v29 = vld [vmem:[%s0 + $0x60] sm:$0xff]
  %v30 = vld [vmem:[%s0 + $0x68] sm:$0xff]
  %v31 = vld [vmem:[%s0 + $0x70] sm:$0xff]
  %v32 = vld [vmem:[%s0 + $0x78] sm:$0xff]
  %v33 = vld [vmem:[%s0 + $0x80] sm:$0xff]
  %v34 = vld [vmem:[%s0 + $0x88] sm:$0xff]
  %v35 = vld [vmem:[%s0 + $0x90] sm:$0xff]
  %v36 = vld [vmem:[%s0 + $0x98] sm:$0xff]
  %v37 = vld [vmem:[%s0 + $0xa0] sm:$0xff]
  %v38 = vld [vmem:[%s0 + $0xa8] sm:$0xff]
  %v39 = vld [vmem:[%s0 + $0xb0] sm:$0xff]
  %v40 = vld [vmem:[%s0 + $0xb8] sm:$0xff]
  %v41 = vld [vmem:[%s0 + $0xc0] sm:$0xff]
  %v42 = vld [vmem:[%s0 + $0xc8] sm:$0xff]
  %v43 = vld [vmem:[%s0 + $0xd0] sm:$0xff]
  %v44 = vld [vmem:[%s0 + $0xd8] sm:$0xff]
  %v45 = vld [vmem:[%s0 + $0xe0] sm:$0xff]
  %v46 = vld [vmem:[%s0 + $0xe8] sm:$0xff]
  %v47 = vld [vmem:[%s0 + $0xf0] sm:$0xff]
  %v48 = vld [vmem:[%s0 + $0xf8] sm:$0xff]
  %v49 = vld [vmem:[%s0 + $0x100] sm:$0xff]
  %v50 = vld [vmem:[%s0 + $0x108] sm:$0xff]
  %v51 = vld [vmem:[%s0 + $0x110] sm:$0xff]
  %v52 = vld [vmem:[%s0 + $0x118] sm:$0xff]
  %v53 = vld [vmem:[%s0 + $0x120] sm:$0xff]
  %v54 = vld [vmem:[%s0 + $0x128] sm:$0xff]
  %v55 = vld [vmem:[%s0 + $0x130] sm:$0xff]
  %v56 = vld [vmem:[%s0 + $0x138] sm:$0xff]
  %v57 = vld [vmem:[%s0 + $0x140] sm:$0xff]
  %v58 = vld [vmem:[%s0 + $0x148] sm:$0xff]
  %v59 = vld [vmem:[%s0 + $0x150] sm:$0xff]
  %v60 = vld [vmem:[%s0 + $0x158] sm:$0xff]
  %v61 = vld [vmem:[%s0 + $0x160] sm:$0xff]
  %v62 = vld [vmem:[%s0 + $0x168] sm:$0xff]
  %v63 = vld [vmem:[%s0 + $0x170] sm:$0xff]
  %v64 = vld [vmem:[%s0 + $0x178] sm:$0xff]
  %v65 = vld [vmem:[%s0 + $0x180] sm:$0xff]
  %v66 = vld [vmem:[%s0 + $0x188] sm:$0xff]
  %v67 = vld [vmem:[%s0 + $0x190] sm:$0xff]
  %v68 = vld [vmem:[%s0 + $0x198] sm:$0xff]
  %v69 = vld [vmem:[%s0 + $0x1a0] sm:$0xff]
  %v70 = vld [vmem:[%s0 + $0x1a8] sm:$0xff]
  %v71 = vld [vmem:[%s0 + $0x1b0] sm:$0xff]
  %v72 = vld [vmem:[%s0 + $0x1b8] sm:$0xff]
  %v73 = vld [vmem:[%s0 + $0x1c0] sm:$0xff]
  %v74 = vld [vmem:[%s0 + $0x1c8] sm:$0xff]
  %v75 = vld [vmem:[%s0 + $0x1d0] sm:$0xff]
  %v76 = vld [vmem:[%s0 + $0x1d8] sm:$0xff]
  %v77 = vld [vmem:[%s0 + $0x1e0] sm:$0xff]
  %v78 = vld [vmem:[%s0 + $0x1e8] sm:$0xff]
  %v79 = vld [vmem:[%s0 + $0x1f0] sm:$0xff]
  %v80 = vld [vmem:[%s0 + $0x1f8] sm:$0xff]
  %v81 = vld [vmem:[%s0 + $0x200] sm:$0xff]
  %v82 = vld [vmem:[%s0 + $0x208] sm:$0xff]
  %v83 = vld [vmem:[%s0 + $0x210] sm:$0xff]
  %v84 = vld [vmem:[%s0 + $0x218] sm:$0xff]
  %v85 = vld [vmem:[%s0 + $0x220] sm:$0xff]
  %v86 = vld [vmem:[%s0 + $0x228] sm:$0xff]
  %v87 = vld [vmem:[%s0 + $0x230] sm:$0xff]
  %v88 = vld [vmem:[%s0 + $0x238] sm:$0xff]
  %v89 = vld [vmem:[%s0 + $0x240] sm:$0xff]
  %v90 = vld [vmem:[%s0 + $0x248] sm:$0xff]
  %v91 = vld [vmem:[%s0 + $0x250] sm:$0xff]
  %v92 = vld [vmem:[%s0 + $0x258] sm:$0xff]
  %v93 = vld [vmem:[%s0 + $0x260] sm:$0xff]
  %v94 = vld [vmem:[%s0 + $0x268] sm:$0xff]
  %v95 = vld [vmem:[%s0 + $0x270] sm:$0xff]
  %v96 = vld [vmem:[%s0 + $0x278] sm:$0xff]
  %v97 = vld [vmem:[%s0 + $0x280] sm:$0xff]
  %v98 = vld [vmem:[%s0 + $0x288] sm:$0xff]
  %v99 = vld [vmem:[%s0 + $0x290] sm:$0xff]
  %v100 = vld [vmem:[%s0 + $0x298] sm:$0xff]
  %v101 = vld [vmem:[%s0 + $0x2a0] sm:$0xff]
  %v102 = vld [vmem:[%s0 + $0x2a8] sm:$0xff]
  %v103 = vld [vmem:[%s0 + $0x2b0] sm:$0xff]
  %v104 = vld [vmem:[%s0 + $0x2b8] sm:$0xff]
  %v105 = vld [vmem:[%s0 + $0x2c0] sm:$0xff]
  %v106 = vld [vmem:[%s0 + $0x2c8] sm:$0xff]
  %v107 = vld [vmem:[%s0 + $0x2d0] sm:$0xff]
  %v108 = vld [vmem:[%s0 + $0x2d8] sm:$0xff]
  %v109 = vld [vmem:[%s0 + $0x2e0] sm:$0xff]
  %v110 = vld [vmem:[%s0 + $0x2e8] sm:$0xff]
  %v111 = vld [vmem:[%s0 + $0x2f0] sm:$0xff]
  %v112 = vld [vmem:[%s0 + $0x2f8] sm:$0xff]
  %v113 = vld [vmem:[%s0 + $0x300] sm:$0xff]
  %v114 = vld [vmem:[%s0 + $0x308] sm:$0xff]
  %v115 = vld [vmem:[%s0 + $0x310] sm:$0xff]
  %v116 = vld [vmem:[%s0 + $0x318] sm:$0xff]
  %v117 = vld [vmem:[%s0 + $0x320] sm:$0xff]
  %v118 = vld [vmem:[%s0 + $0x328] sm:$0xff]
  %v119 = vld [vmem:[%s0 + $0x330] sm:$0xff]
  %v120 = vld [vmem:[%s0 + $0x338] sm:$0xff]
  %v121 = vld [vmem:[%s0 + $0x340] sm:$0xff]
  %v122 = vld [vmem:[%s0 + $0x348] sm:$0xff]
  %v123 = vld [vmem:[%s0 + $0x350] sm:$0xff]
  %v124 = vld [vmem:[%s0 + $0x358] sm:$0xff]
  %v125 = vld [vmem:[%s0 + $0x360] sm:$0xff]
  %v126 = vld [vmem:[%s0 + $0x368] sm:$0xff]
  %v127 = vld [vmem:[%s0 + $0x370] sm:$0xff]
  %v128 = vld [vmem:[%s0 + $0x378] sm:$0xff]
  %v129 = vld [vmem:[%s0 + $0x380] sm:$0xff]
  %v130 = vld [vmem:[%s0 + $0x388] sm:$0xff]
  %v131 = vld [vmem:[%s0 + $0x390] sm:$0xff]
  %v132 = vld [vmem:[%s0 + $0x398] sm:$0xff]
  %v133 = vld [vmem:[%s0 + $0x3a0] sm:$0xff]
  %v134 = vld [vmem:[%s0 + $0x3a8] sm:$0xff]
  %v135 = vld [vmem:[%s0 + $0x3b0] sm:$0xff]
  %v136 = vld [vmem:[%s0 + $0x3b8] sm:$0xff]
  %v137 = vld [vmem:[%s0 + $0x3c0] sm:$0xff]
  %v138 = vld [vmem:[%s0 + $0x3c8] sm:$0xff]
  %v139 = vld [vmem:[%s0 + $0x3d0] sm:$0xff]
  %v140 = vld [vmem:[%s0 + $0x3d8] sm:$0xff]
  %v141 = vld [vmem:[%s0 + $0x3e0] sm:$0xff]
  %v142 = vld [vmem:[%s0 + $0x3e8] sm:$0xff]
  %v143 = vld [vmem:[%s0 + $0x3f0] sm:$0xff]
  %v144 = vld [vmem:[%s0 + $0x3f8] sm:$0xff]
  %v145 = vld [vmem:[%s1] sm:$0xff]
  %v146 = vld [vmem:[%s1 + $0x8] sm:$0xff]
  %v147 = vld [vmem:[%s1 + $0x10] sm:$0xff]
  %v148 = vld [vmem:[%s1 + $0x18] sm:$0xff]
  %v149 = vld [vmem:[%s1 + $0x20] sm:$0xff]
  %v150 = vld [vmem:[%s1 + $0x28] sm:$0xff]
  %v151 = vld [vmem:[%s1 + $0x30] sm:$0xff]
  %v152 = vld [vmem:[%s1 + $0x38] sm:$0xff]
  %v153 = vld [vmem:[%s1 + $0x40] sm:$0xff]
  %v154 = vld [vmem:[%s1 + $0x48] sm:$0xff]
  %v155 = vld [vmem:[%s1 + $0x50] sm:$0xff]
  %v156 = vld [vmem:[%s1 + $0x58] sm:$0xff]
  %v157 = vld [vmem:[%s1 + $0x60] sm:$0xff]
  %v158 = vld [vmem:[%s1 + $0x68] sm:$0xff]
  %v159 = vld [vmem:[%s1 + $0x70] sm:$0xff]
  %v160 = vld [vmem:[%s1 + $0x78] sm:$0xff]
  %v161 = vld [vmem:[%s1 + $0x80] sm:$0xff]
  %v162 = vld [vmem:[%s1 + $0x88] sm:$0xff]
  %v163 = vld [vmem:[%s2] sm:$0x1]
  %v165 = vlaneseq
  %v166 = vshrl.u32 %v165, 7
  %v167 = vsub.s32 0, %v166
  %v168 = vrot.slane %v163, %v167
  %vm170 = vcmask 130048
  %v172 = vsel %vm170, %v18, 0
  %v175 = vsel %vm170, %v20, 0
  %v178 = vsel %vm170, %v22, 0
  %v181 = vsel %vm170, %v24, 0
  %v184 = vsel %vm170, %v26, 0
  %v187 = vsel %vm170, %v28, 0
  %v190 = vsel %vm170, %v30, 0
  %v193 = vsel %vm170, %v32, 0
  %v196 = vsel %vm170, %v34, 0
  %v199 = vsel %vm170, %v36, 0
  %v202 = vsel %vm170, %v38, 0
  %v205 = vsel %vm170, %v40, 0
  %v208 = vsel %vm170, %v42, 0
  %v211 = vsel %vm170, %v44, 0
  %v214 = vsel %vm170, %v46, 0
  %v217 = vsel %vm170, %v48, 0
  %v220 = vsel %vm170, %v50, 0
  %v223 = vsel %vm170, %v52, 0
  %v226 = vsel %vm170, %v54, 0
  %v229 = vsel %vm170, %v56, 0
  %v232 = vsel %vm170, %v58, 0
  %v235 = vsel %vm170, %v60, 0
  %v238 = vsel %vm170, %v62, 0
  %v241 = vsel %vm170, %v64, 0
  %v244 = vsel %vm170, %v66, 0
  %v247 = vsel %vm170, %v68, 0
  %v250 = vsel %vm170, %v70, 0
  %v253 = vsel %vm170, %v72, 0
  %v256 = vsel %vm170, %v74, 0
  %v259 = vsel %vm170, %v76, 0
  %v262 = vsel %vm170, %v78, 0
  %v265 = vsel %vm170, %v80, 0
  %v268 = vsel %vm170, %v82, 0
  %v271 = vsel %vm170, %v84, 0
  %v274 = vsel %vm170, %v86, 0
  %v277 = vsel %vm170, %v88, 0
  %v280 = vsel %vm170, %v90, 0
  %v283 = vsel %vm170, %v92, 0
  %v286 = vsel %vm170, %v94, 0
  %v289 = vsel %vm170, %v96, 0
  %v292 = vsel %vm170, %v98, 0
  %v295 = vsel %vm170, %v100, 0
  %v298 = vsel %vm170, %v102, 0
  %v301 = vsel %vm170, %v104, 0
  %v304 = vsel %vm170, %v106, 0
  %v307 = vsel %vm170, %v108, 0
  %v310 = vsel %vm170, %v110, 0
  %v313 = vsel %vm170, %v112, 0
  %v316 = vsel %vm170, %v114, 0
  %v319 = vsel %vm170, %v116, 0
  %v322 = vsel %vm170, %v118, 0
  %v325 = vsel %vm170, %v120, 0
  %v328 = vsel %vm170, %v122, 0
  %v331 = vsel %vm170, %v124, 0
  %v334 = vsel %vm170, %v126, 0
  %v337 = vsel %vm170, %v128, 0
  %v340 = vsel %vm170, %v130, 0
  %v343 = vsel %vm170, %v132, 0
  %v346 = vsel %vm170, %v134, 0
  %v349 = vsel %vm170, %v136, 0
  %v352 = vsel %vm170, %v138, 0
  %v355 = vsel %vm170, %v140, 0
  %v358 = vsel %vm170, %v142, 0
  %v361 = vsel %vm170, %v144, 0
  %363 = vmatprep.subr.mxu0 0.0
  %364 = vmatpush1.msra.mxu0 %v145
  %365 = vmatprep.subr.mxu0 0.0
  %366 = vmatpush1.msra.mxu0 %v146
  %367 = vmatprep.subr.mxu0 0.0
  %368 = vmatpush1.msra.mxu0 %v147
  %369 = vmatprep.subr.mxu0 0.0
  %370 = vmatpush1.msra.mxu0 %v148
  %371 = vmatprep.subr.mxu0 0.0
  %372 = vmatpush1.msra.mxu0 %v149
  %373 = vmatprep.subr.mxu0 0.0
  %374 = vmatpush1.msra.mxu0 %v150
  %375 = vmatprep.subr.mxu0 0.0
  %376 = vmatpush1.msra.mxu0 %v151
  %377 = vmatprep.subr.mxu0 0.0
  %378 = vmatpush1.msra.mxu0 %v152
  %379 = vmatprep.subr.mxu0 0.0
  %380 = vmatpush1.msra.mxu0 %v153
  %381 = vmatprep.subr.mxu0 0.0
  %382 = vmatpush1.msra.mxu0 %v154
  %383 = vmatprep.subr.mxu0 0.0
  %384 = vmatpush1.msra.mxu0 %v155
  %385 = vmatprep.subr.mxu0 0.0
  %386 = vmatpush1.msra.mxu0 %v156
  %387 = vmatprep.subr.mxu0 0.0
  %388 = vmatpush1.msra.mxu0 %v157
  %389 = vmatprep.subr.mxu0 0.0
  %390 = vmatpush1.msra.mxu0 %v158
  %391 = vmatprep.subr.mxu0 0.0
  %392 = vmatpush1.msra.mxu0 %v159
  %393 = vmatprep.subr.mxu0 0.0
  %394 = vmatpush1.msra.mxu0 %v160
  %395 = vmatprep.subr.mxu0 0.0
  %396 = vmatpush1.msra.mxu0 %v161
  %397 = vmatprep.subr.mxu0 0.0
  %398 = vmatpush1.msra.mxu0 %v162
  %399 = vmatprep.subr.mxu0 0.0
  %400 = vmatpush1.msra.mxu0 0.0
  %401 = vmatprep.subr.mxu0 0.0
  %402 = vmatpush1.msra.mxu0 0.0
  %403 = vmatprep.subr.mxu0 0.0
  %404 = vmatpush1.msra.mxu0 0.0
  %405 = vmatprep.subr.mxu0 0.0
  %406 = vmatpush1.msra.mxu0 0.0
  %407 = vmatprep.subr.mxu0 0.0
  %408 = vmatpush1.msra.mxu0 0.0
  %409 = vmatprep.subr.mxu0 0.0
  %410 = vmatpush1.msra.mxu0 0.0
  %411 = vmatprep.subr.mxu0 0.0
  %412 = vmatpush1.msra.mxu0 0.0
  %413 = vmatprep.subr.mxu0 0.0
  %414 = vmatpush1.msra.mxu0 0.0
  %415 = vmatprep.subr.mxu0 0.0
  %416 = vmatpush1.msra.mxu0 0.0
  %417 = vmatprep.subr.mxu0 0.0
  %418 = vmatpush1.msra.mxu0 0.0
  %419 = vmatprep.subr.mxu0 0.0
  %420 = vmatpush1.msra.mxu0 0.0
  %421 = vmatprep.subr.mxu0 0.0
  %422 = vmatpush1.msra.mxu0 0.0
  %423 = vmatprep.subr.mxu0 0.0
  %424 = vmatpush1.msra.mxu0 0.0
  %425 = vmatprep.subr.mxu0 0.0
  %426 = vmatpush1.msra.mxu0 0.0
  %427 = vmatprep.mubr.f32.mxu0 %v172
  %428 = vmatmul.mubr.f32.gmra.mrb[0].mxu0 %v17
  %v429 = vpop.f32.mrb[0].mxu0
  %v430 = vadd.f32 %v168, %v429
  %v431 = vpop.f32.mrb[0].mxu0
  %432 = vmatprep.mubr.f32.mxu0 %v175
  %433 = vmatmul.mubr.f32.gmra.mrb[0].mxu0 %v19
  %v434 = vpop.f32.mrb[0].mxu0
  %v435 = vadd.f32 %v168, %v434
  %v436 = vpop.f32.mrb[0].mxu0
  %437 = vmatprep.mubr.f32.mxu0 %v178
  %438 = vmatmul.mubr.f32.gmra.mrb[0].mxu0 %v21
  %v439 = vpop.f32.mrb[0].mxu0
  %v440 = vadd.f32 %v168, %v439
  %v441 = vpop.f32.mrb[0].mxu0
  %442 = vmatprep.mubr.f32.mxu0 %v181
  %443 = vmatmul.mubr.f32.gmra.mrb[0].mxu0 %v23
  %v444 = vpop.f32.mrb[0].mxu0
  %v445 = vadd.f32 %v168, %v444
  %v446 = vpop.f32.mrb[0].mxu0
  %447 = vmatprep.mubr.f32.mxu0 %v184
  %448 = vmatmul.mubr.f32.gmra.mrb[0].mxu0 %v25
  %v449 = vpop.f32.mrb[0].mxu0
  %v450 = vadd.f32 %v168, %v449
  %v451 = vpop.f32.mrb[0].mxu0
  %452 = vmatprep.mubr.f32.mxu0 %v187
  %453 = vmatmul.mubr.f32.gmra.mrb[0].mxu0 %v27
  %v454 = vpop.f32.mrb[0].mxu0
  %v455 = vadd.f32 %v168, %v454
  %v456 = vpop.f32.mrb[0].mxu0
  %457 = vmatprep.mubr.f32.mxu0 %v190
  %458 = vmatmul.mubr.f32.gmra.mrb[0].mxu0 %v29
  %v459 = vpop.f32.mrb[0].mxu0
  %v460 = vadd.f32 %v168, %v459
  %v461 = vpop.f32.mrb[0].mxu0
  %462 = vmatprep.mubr.f32.mxu0 %v193
  %463 = vmatmul.mubr.f32.gmra.mrb[0].mxu0 %v31
  %v464 = vpop.f32.mrb[0].mxu0
  %v465 = vadd.f32 %v168, %v464
  %v466 = vpop.f32.mrb[0].mxu0
  %467 = vmatprep.mubr.f32.mxu0 %v196
  %468 = vmatmul.mubr.f32.gmra.mrb[0].mxu0 %v33
  %v469 = vpop.f32.mrb[0].mxu0
  %v470 = vadd.f32 %v168, %v469
  %v471 = vpop.f32.mrb[0].mxu0
  %472 = vmatprep.mubr.f32.mxu0 %v199
  %473 = vmatmul.mubr.f32.gmra.mrb[0].mxu0 %v35
  %v474 = vpop.f32.mrb[0].mxu0
  %v475 = vadd.f32 %v168, %v474
  %v476 = vpop.f32.mrb[0].mxu0
  %477 = vmatprep.mubr.f32.mxu0 %v202
  %478 = vmatmul.mubr.f32.gmra.mrb[0].mxu0 %v37
  %v479 = vpop.f32.mrb[0].mxu0
  %v480 = vadd.f32 %v168, %v479
  %v481 = vpop.f32.mrb[0].mxu0
  %482 = vmatprep.mubr.f32.mxu0 %v205
  %483 = vmatmul.mubr.f32.gmra.mrb[0].mxu0 %v39
  %v484 = vpop.f32.mrb[0].mxu0
  %v485 = vadd.f32 %v168, %v484
  %v486 = vpop.f32.mrb[0].mxu0
  %487 = vmatprep.mubr.f32.mxu0 %v208
  %488 = vmatmul.mubr.f32.gmra.mrb[0].mxu0 %v41
  %v489 = vpop.f32.mrb[0].mxu0
  %v490 = vadd.f32 %v168, %v489
  %v491 = vpop.f32.mrb[0].mxu0
  %492 = vmatprep.mubr.f32.mxu0 %v211
  %493 = vmatmul.mubr.f32.gmra.mrb[0].mxu0 %v43
  %v494 = vpop.f32.mrb[0].mxu0
  %v495 = vadd.f32 %v168, %v494
  %v496 = vpop.f32.mrb[0].mxu0
  %497 = vmatprep.mubr.f32.mxu0 %v214
  %498 = vmatmul.mubr.f32.gmra.mrb[0].mxu0 %v45
  %v499 = vpop.f32.mrb[0].mxu0
  %v500 = vadd.f32 %v168, %v499
  %v501 = vpop.f32.mrb[0].mxu0
  %502 = vmatprep.mubr.f32.mxu0 %v217
  %503 = vmatmul.mubr.f32.gmra.mrb[0].mxu0 %v47
  %v504 = vpop.f32.mrb[0].mxu0
  %v505 = vadd.f32 %v168, %v504
  %v506 = vpop.f32.mrb[0].mxu0
  %507 = vmatprep.mubr.f32.mxu0 %v220
  %508 = vmatmul.mubr.f32.gmra.mrb[0].mxu0 %v49
  %v509 = vpop.f32.mrb[0].mxu0
  %v510 = vadd.f32 %v168, %v509
  %v511 = vpop.f32.mrb[0].mxu0
  %512 = vmatprep.mubr.f32.mxu0 %v223
  %513 = vmatmul.mubr.f32.gmra.mrb[0].mxu0 %v51
  %v514 = vpop.f32.mrb[0].mxu0
  %v515 = vadd.f32 %v168, %v514
  %v516 = vpop.f32.mrb[0].mxu0
  %517 = vmatprep.mubr.f32.mxu0 %v226
  %518 = vmatmul.mubr.f32.gmra.mrb[0].mxu0 %v53
  %v519 = vpop.f32.mrb[0].mxu0
  %v520 = vadd.f32 %v168, %v519
  %v521 = vpop.f32.mrb[0].mxu0
  %522 = vmatprep.mubr.f32.mxu0 %v229
  %523 = vmatmul.mubr.f32.gmra.mrb[0].mxu0 %v55
  %v524 = vpop.f32.mrb[0].mxu0
  %v525 = vadd.f32 %v168, %v524
  %v526 = vpop.f32.mrb[0].mxu0
  %527 = vmatprep.mubr.f32.mxu0 %v232
  %528 = vmatmul.mubr.f32.gmra.mrb[0].mxu0 %v57
  %v529 = vpop.f32.mrb[0].mxu0
  %v530 = vadd.f32 %v168, %v529
  %v531 = vpop.f32.mrb[0].mxu0
  %532 = vmatprep.mubr.f32.mxu0 %v235
  %533 = vmatmul.mubr.f32.gmra.mrb[0].mxu0 %v59
  %v534 = vpop.f32.mrb[0].mxu0
  %v535 = vadd.f32 %v168, %v534
  %v536 = vpop.f32.mrb[0].mxu0
  %537 = vmatprep.mubr.f32.mxu0 %v238
  %538 = vmatmul.mubr.f32.gmra.mrb[0].mxu0 %v61
  %v539 = vpop.f32.mrb[0].mxu0
  %v540 = vadd.f32 %v168, %v539
  %v541 = vpop.f32.mrb[0].mxu0
  %542 = vmatprep.mubr.f32.mxu0 %v241
  %543 = vmatmul.mubr.f32.gmra.mrb[0].mxu0 %v63
  %v544 = vpop.f32.mrb[0].mxu0
  %v545 = vadd.f32 %v168, %v544
  %v546 = vpop.f32.mrb[0].mxu0
  %547 = vmatprep.mubr.f32.mxu0 %v244
  %548 = vmatmul.mubr.f32.gmra.mrb[0].mxu0 %v65
  %v549 = vpop.f32.mrb[0].mxu0
  %v550 = vadd.f32 %v168, %v549
  %v551 = vpop.f32.mrb[0].mxu0
  %552 = vmatprep.mubr.f32.mxu0 %v247
  %553 = vmatmul.mubr.f32.gmra.mrb[0].mxu0 %v67
  %v554 = vpop.f32.mrb[0].mxu0
  %v555 = vadd.f32 %v168, %v554
  %v556 = vpop.f32.mrb[0].mxu0
  %557 = vmatprep.mubr.f32.mxu0 %v250
  %558 = vmatmul.mubr.f32.gmra.mrb[0].mxu0 %v69
  %v559 = vpop.f32.mrb[0].mxu0
  %v560 = vadd.f32 %v168, %v559
  %v561 = vpop.f32.mrb[0].mxu0
  %562 = vmatprep.mubr.f32.mxu0 %v253
  %563 = vmatmul.mubr.f32.gmra.mrb[0].mxu0 %v71
  %v564 = vpop.f32.mrb[0].mxu0
  %v565 = vadd.f32 %v168, %v564
  %v566 = vpop.f32.mrb[0].mxu0
  %567 = vmatprep.mubr.f32.mxu0 %v256
  %568 = vmatmul.mubr.f32.gmra.mrb[0].mxu0 %v73
  %v569 = vpop.f32.mrb[0].mxu0
  %v570 = vadd.f32 %v168, %v569
  %v571 = vpop.f32.mrb[0].mxu0
  %572 = vmatprep.mubr.f32.mxu0 %v259
  %573 = vmatmul.mubr.f32.gmra.mrb[0].mxu0 %v75
  %v574 = vpop.f32.mrb[0].mxu0
  %v575 = vadd.f32 %v168, %v574
  %v576 = vpop.f32.mrb[0].mxu0
  %577 = vmatprep.mubr.f32.mxu0 %v262
  %578 = vmatmul.mubr.f32.gmra.mrb[0].mxu0 %v77
  %v579 = vpop.f32.mrb[0].mxu0
  %v580 = vadd.f32 %v168, %v579
  %v581 = vpop.f32.mrb[0].mxu0
  %582 = vmatprep.mubr.f32.mxu0 %v265
  %583 = vmatmul.mubr.f32.gmra.mrb[0].mxu0 %v79
  %v584 = vpop.f32.mrb[0].mxu0
  %v585 = vadd.f32 %v168, %v584
  %v586 = vpop.f32.mrb[0].mxu0
  %587 = vmatprep.mubr.f32.mxu0 %v268
  %588 = vmatmul.mubr.f32.gmra.mrb[0].mxu0 %v81
  %v589 = vpop.f32.mrb[0].mxu0
  %v590 = vadd.f32 %v168, %v589
  %v591 = vpop.f32.mrb[0].mxu0
  %592 = vmatprep.mubr.f32.mxu0 %v271
  %593 = vmatmul.mubr.f32.gmra.mrb[0].mxu0 %v83
  %v594 = vpop.f32.mrb[0].mxu0
  %v595 = vadd.f32 %v168, %v594
  %v596 = vpop.f32.mrb[0].mxu0
  %597 = vmatprep.mubr.f32.mxu0 %v274
  %598 = vmatmul.mubr.f32.gmra.mrb[0].mxu0 %v85
  %v599 = vpop.f32.mrb[0].mxu0
  %v600 = vadd.f32 %v168, %v599
  %v601 = vpop.f32.mrb[0].mxu0
  %602 = vmatprep.mubr.f32.mxu0 %v277
  %603 = vmatmul.mubr.f32.gmra.mrb[0].mxu0 %v87
  %v604 = vpop.f32.mrb[0].mxu0
  %v605 = vadd.f32 %v168, %v604
  %v606 = vpop.f32.mrb[0].mxu0
  %607 = vmatprep.mubr.f32.mxu0 %v280
  %608 = vmatmul.mubr.f32.gmra.mrb[0].mxu0 %v89
  %v609 = vpop.f32.mrb[0].mxu0
  %v610 = vadd.f32 %v168, %v609
  %v611 = vpop.f32.mrb[0].mxu0
  %612 = vmatprep.mubr.f32.mxu0 %v283
  %613 = vmatmul.mubr.f32.gmra.mrb[0].mxu0 %v91
  %v614 = vpop.f32.mrb[0].mxu0
  %v615 = vadd.f32 %v168, %v614
  %v616 = vpop.f32.mrb[0].mxu0
  %617 = vmatprep.mubr.f32.mxu0 %v286
  %618 = vmatmul.mubr.f32.gmra.mrb[0].mxu0 %v93
  %v619 = vpop.f32.mrb[0].mxu0
  %v620 = vadd.f32 %v168, %v619
  %v621 = vpop.f32.mrb[0].mxu0
  %622 = vmatprep.mubr.f32.mxu0 %v289
  %623 = vmatmul.mubr.f32.gmra.mrb[0].mxu0 %v95
  %v624 = vpop.f32.mrb[0].mxu0
  %v625 = vadd.f32 %v168, %v624
  %v626 = vpop.f32.mrb[0].mxu0
  %627 = vmatprep.mubr.f32.mxu0 %v292
  %628 = vmatmul.mubr.f32.gmra.mrb[0].mxu0 %v97
  %v629 = vpop.f32.mrb[0].mxu0
  %v630 = vadd.f32 %v168, %v629
  %v631 = vpop.f32.mrb[0].mxu0
  %632 = vmatprep.mubr.f32.mxu0 %v295
  %633 = vmatmul.mubr.f32.gmra.mrb[0].mxu0 %v99
  %v634 = vpop.f32.mrb[0].mxu0
  %v635 = vadd.f32 %v168, %v634
  %v636 = vpop.f32.mrb[0].mxu0
  %637 = vmatprep.mubr.f32.mxu0 %v298
  %638 = vmatmul.mubr.f32.gmra.mrb[0].mxu0 %v101
  %v639 = vpop.f32.mrb[0].mxu0
  %v640 = vadd.f32 %v168, %v639
  %v641 = vpop.f32.mrb[0].mxu0
  %642 = vmatprep.mubr.f32.mxu0 %v301
  %643 = vmatmul.mubr.f32.gmra.mrb[0].mxu0 %v103
  %v644 = vpop.f32.mrb[0].mxu0
  %v645 = vadd.f32 %v168, %v644
  %v646 = vpop.f32.mrb[0].mxu0
  %647 = vmatprep.mubr.f32.mxu0 %v304
  %648 = vmatmul.mubr.f32.gmra.mrb[0].mxu0 %v105
  %v649 = vpop.f32.mrb[0].mxu0
  %v650 = vadd.f32 %v168, %v649
  %v651 = vpop.f32.mrb[0].mxu0
  %652 = vmatprep.mubr.f32.mxu0 %v307
  %653 = vmatmul.mubr.f32.gmra.mrb[0].mxu0 %v107
  %v654 = vpop.f32.mrb[0].mxu0
  %v655 = vadd.f32 %v168, %v654
  %v656 = vpop.f32.mrb[0].mxu0
  %657 = vmatprep.mubr.f32.mxu0 %v310
  %658 = vmatmul.mubr.f32.gmra.mrb[0].mxu0 %v109
  %v659 = vpop.f32.mrb[0].mxu0
  %v660 = vadd.f32 %v168, %v659
  %v661 = vpop.f32.mrb[0].mxu0
  %662 = vmatprep.mubr.f32.mxu0 %v313
  %663 = vmatmul.mubr.f32.gmra.mrb[0].mxu0 %v111
  %v664 = vpop.f32.mrb[0].mxu0
  %v665 = vadd.f32 %v168, %v664
  %v666 = vpop.f32.mrb[0].mxu0
  %667 = vmatprep.mubr.f32.mxu0 %v316
  %668 = vmatmul.mubr.f32.gmra.mrb[0].mxu0 %v113
  %v669 = vpop.f32.mrb[0].mxu0
  %v670 = vadd.f32 %v168, %v669
  %v671 = vpop.f32.mrb[0].mxu0
  %672 = vmatprep.mubr.f32.mxu0 %v319
  %673 = vmatmul.mubr.f32.gmra.mrb[0].mxu0 %v115
  %v674 = vpop.f32.mrb[0].mxu0
  %v675 = vadd.f32 %v168, %v674
  %v676 = vpop.f32.mrb[0].mxu0
  %677 = vmatprep.mubr.f32.mxu0 %v322
  %678 = vmatmul.mubr.f32.gmra.mrb[0].mxu0 %v117
  %v679 = vpop.f32.mrb[0].mxu0
  %v680 = vadd.f32 %v168, %v679
  %v681 = vpop.f32.mrb[0].mxu0
  %682 = vmatprep.mubr.f32.mxu0 %v325
  %683 = vmatmul.mubr.f32.gmra.mrb[0].mxu0 %v119
  %v684 = vpop.f32.mrb[0].mxu0
  %v685 = vadd.f32 %v168, %v684
  %v686 = vpop.f32.mrb[0].mxu0
  %687 = vmatprep.mubr.f32.mxu0 %v328
  %688 = vmatmul.mubr.f32.gmra.mrb[0].mxu0 %v121
  %v689 = vpop.f32.mrb[0].mxu0
  %v690 = vadd.f32 %v168, %v689
  %v691 = vpop.f32.mrb[0].mxu0
  %692 = vmatprep.mubr.f32.mxu0 %v331
  %693 = vmatmul.mubr.f32.gmra.mrb[0].mxu0 %v123
  %v694 = vpop.f32.mrb[0].mxu0
  %v695 = vadd.f32 %v168, %v694
  %v696 = vpop.f32.mrb[0].mxu0
  %697 = vmatprep.mubr.f32.mxu0 %v334
  %698 = vmatmul.mubr.f32.gmra.mrb[0].mxu0 %v125
  %v699 = vpop.f32.mrb[0].mxu0
  %v700 = vadd.f32 %v168, %v699
  %v701 = vpop.f32.mrb[0].mxu0
  %702 = vmatprep.mubr.f32.mxu0 %v337
  %703 = vmatmul.mubr.f32.gmra.mrb[0].mxu0 %v127
  %v704 = vpop.f32.mrb[0].mxu0
  %v705 = vadd.f32 %v168, %v704
  %v706 = vpop.f32.mrb[0].mxu0
  %707 = vmatprep.mubr.f32.mxu0 %v340
  %708 = vmatmul.mubr.f32.gmra.mrb[0].mxu0 %v129
  %v709 = vpop.f32.mrb[0].mxu0
  %v710 = vadd.f32 %v168, %v709
  %v711 = vpop.f32.mrb[0].mxu0
  %712 = vmatprep.mubr.f32.mxu0 %v343
  %713 = vmatmul.mubr.f32.gmra.mrb[0].mxu0 %v131
  %v714 = vpop.f32.mrb[0].mxu0
  %v715 = vadd.f32 %v168, %v714
  %v716 = vpop.f32.mrb[0].mxu0
  %717 = vmatprep.mubr.f32.mxu0 %v346
  %718 = vmatmul.mubr.f32.gmra.mrb[0].mxu0 %v133
  %v719 = vpop.f32.mrb[0].mxu0
  %v720 = vadd.f32 %v168, %v719
  %v721 = vpop.f32.mrb[0].mxu0
  %722 = vmatprep.mubr.f32.mxu0 %v349
  %723 = vmatmul.mubr.f32.gmra.mrb[0].mxu0 %v135
  %v724 = vpop.f32.mrb[0].mxu0
  %v725 = vadd.f32 %v168, %v724
  %v726 = vpop.f32.mrb[0].mxu0
  %727 = vmatprep.mubr.f32.mxu0 %v352
  %728 = vmatmul.mubr.f32.gmra.mrb[0].mxu0 %v137
  %v729 = vpop.f32.mrb[0].mxu0
  %v730 = vadd.f32 %v168, %v729
  %v731 = vpop.f32.mrb[0].mxu0
  %732 = vmatprep.mubr.f32.mxu0 %v355
  %733 = vmatmul.mubr.f32.gmra.mrb[0].mxu0 %v139
  %v734 = vpop.f32.mrb[0].mxu0
  %v735 = vadd.f32 %v168, %v734
  %v736 = vpop.f32.mrb[0].mxu0
  %737 = vmatprep.mubr.f32.mxu0 %v358
  %738 = vmatmul.mubr.f32.gmra.mrb[0].mxu0 %v141
  %v739 = vpop.f32.mrb[0].mxu0
  %v740 = vadd.f32 %v168, %v739
  %v741 = vpop.f32.mrb[0].mxu0
  %742 = vmatprep.mubr.f32.mxu0 %v361
  %743 = vmatmul.mubr.f32.gmra.mrb[0].mxu0 %v143
  %v744 = vpop.f32.mrb[0].mxu0
  %v745 = vadd.f32 %v168, %v744
  %v746 = vpop.f32.mrb[0].mxu0
  %747 = vdwg.mxu0
  %v748 = vld [vmem:[%s3] sm:$0xff]
  %v749 = vld [vmem:[%s3 + $0x8] sm:$0xff]
  %v750 = vld [vmem:[%s3 + $0x10] sm:$0xff]
  %v751 = vld [vmem:[%s3 + $0x18] sm:$0xff]
  %v752 = vld [vmem:[%s3 + $0x20] sm:$0xff]
  %v753 = vld [vmem:[%s3 + $0x28] sm:$0xff]
  %v754 = vld [vmem:[%s3 + $0x30] sm:$0xff]
  %v755 = vld [vmem:[%s3 + $0x38] sm:$0xff]
  %v756 = vld [vmem:[%s3 + $0x40] sm:$0xff]
  %v757 = vld [vmem:[%s3 + $0x48] sm:$0xff]
  %v758 = vld [vmem:[%s3 + $0x50] sm:$0xff]
  %v759 = vld [vmem:[%s3 + $0x58] sm:$0xff]
  %v760 = vld [vmem:[%s3 + $0x60] sm:$0xff]
  %v761 = vld [vmem:[%s3 + $0x68] sm:$0xff]
  %v762 = vld [vmem:[%s3 + $0x70] sm:$0xff]
  %v763 = vld [vmem:[%s3 + $0x78] sm:$0xff]
  %v764 = vld [vmem:[%s3 + $0x80] sm:$0xff]
  %v765 = vld [vmem:[%s3 + $0x88] sm:$0xff]
  %v766 = vld [vmem:[%s3 + $0x90] sm:$0xff]
  %v767 = vld [vmem:[%s3 + $0x98] sm:$0xff]
  %v768 = vld [vmem:[%s3 + $0xa0] sm:$0xff]
  %v769 = vld [vmem:[%s3 + $0xa8] sm:$0xff]
  %v770 = vld [vmem:[%s3 + $0xb0] sm:$0xff]
  %v771 = vld [vmem:[%s3 + $0xb8] sm:$0xff]
  %v772 = vld [vmem:[%s3 + $0xc0] sm:$0xff]
  %v773 = vld [vmem:[%s3 + $0xc8] sm:$0xff]
  %v774 = vld [vmem:[%s3 + $0xd0] sm:$0xff]
  %v775 = vld [vmem:[%s3 + $0xd8] sm:$0xff]
  %v776 = vld [vmem:[%s3 + $0xe0] sm:$0xff]
  %v777 = vld [vmem:[%s3 + $0xe8] sm:$0xff]
  %v778 = vld [vmem:[%s3 + $0xf0] sm:$0xff]
  %v779 = vld [vmem:[%s3 + $0xf8] sm:$0xff]
  %v780 = vld [vmem:[%s3 + $0x100] sm:$0xff]
  %v781 = vld [vmem:[%s3 + $0x108] sm:$0xff]
  %v782 = vld [vmem:[%s3 + $0x110] sm:$0xff]
  %v783 = vld [vmem:[%s3 + $0x118] sm:$0xff]
  %v784 = vld [vmem:[%s3 + $0x120] sm:$0xff]
  %v785 = vld [vmem:[%s3 + $0x128] sm:$0xff]
  %v786 = vld [vmem:[%s3 + $0x130] sm:$0xff]
  %v787 = vld [vmem:[%s3 + $0x138] sm:$0xff]
  %v788 = vld [vmem:[%s3 + $0x140] sm:$0xff]
  %v789 = vld [vmem:[%s3 + $0x148] sm:$0xff]
  %v790 = vld [vmem:[%s3 + $0x150] sm:$0xff]
  %v791 = vld [vmem:[%s3 + $0x158] sm:$0xff]
  %v792 = vld [vmem:[%s3 + $0x160] sm:$0xff]
  %v793 = vld [vmem:[%s3 + $0x168] sm:$0xff]
  %v794 = vld [vmem:[%s3 + $0x170] sm:$0xff]
  %v795 = vld [vmem:[%s3 + $0x178] sm:$0xff]
  %v796 = vld [vmem:[%s3 + $0x180] sm:$0xff]
  %v797 = vld [vmem:[%s3 + $0x188] sm:$0xff]
  %v798 = vld [vmem:[%s3 + $0x190] sm:$0xff]
  %v799 = vld [vmem:[%s3 + $0x198] sm:$0xff]
  %v800 = vld [vmem:[%s3 + $0x1a0] sm:$0xff]
  %v801 = vld [vmem:[%s3 + $0x1a8] sm:$0xff]
  %v802 = vld [vmem:[%s3 + $0x1b0] sm:$0xff]
  %v803 = vld [vmem:[%s3 + $0x1b8] sm:$0xff]
  %v804 = vld [vmem:[%s3 + $0x1c0] sm:$0xff]
  %v805 = vld [vmem:[%s3 + $0x1c8] sm:$0xff]
  %v806 = vld [vmem:[%s3 + $0x1d0] sm:$0xff]
  %v807 = vld [vmem:[%s3 + $0x1d8] sm:$0xff]
  %v808 = vld [vmem:[%s3 + $0x1e0] sm:$0xff]
  %v809 = vld [vmem:[%s3 + $0x1e8] sm:$0xff]
  %v810 = vld [vmem:[%s3 + $0x1f0] sm:$0xff]
  %v811 = vld [vmem:[%s3 + $0x1f8] sm:$0xff]
  %v812 = vadd.f32 %v430, %v748
  %v813 = vadd.f32 %v435, %v749
  %v814 = vadd.f32 %v440, %v750
  %v815 = vadd.f32 %v445, %v751
  %v816 = vadd.f32 %v450, %v752
  %v817 = vadd.f32 %v455, %v753
  %v818 = vadd.f32 %v460, %v754
  %v819 = vadd.f32 %v465, %v755
  %v820 = vadd.f32 %v470, %v756
  %v821 = vadd.f32 %v475, %v757
  %v822 = vadd.f32 %v480, %v758
  %v823 = vadd.f32 %v485, %v759
  %v824 = vadd.f32 %v490, %v760
  %v825 = vadd.f32 %v495, %v761
  %v826 = vadd.f32 %v500, %v762
  %v827 = vadd.f32 %v505, %v763
  %v828 = vadd.f32 %v510, %v764
  %v829 = vadd.f32 %v515, %v765
  %v830 = vadd.f32 %v520, %v766
  %v831 = vadd.f32 %v525, %v767
  %v832 = vadd.f32 %v530, %v768
  %v833 = vadd.f32 %v535, %v769
  %v834 = vadd.f32 %v540, %v770
  %v835 = vadd.f32 %v545, %v771
  %v836 = vadd.f32 %v550, %v772
  %v837 = vadd.f32 %v555, %v773
  %v838 = vadd.f32 %v560, %v774
  %v839 = vadd.f32 %v565, %v775
  %v840 = vadd.f32 %v570, %v776
  %v841 = vadd.f32 %v575, %v777
  %v842 = vadd.f32 %v580, %v778
  %v843 = vadd.f32 %v585, %v779
  %v844 = vadd.f32 %v590, %v780
  %v845 = vadd.f32 %v595, %v781
  %v846 = vadd.f32 %v600, %v782
  %v847 = vadd.f32 %v605, %v783
  %v848 = vadd.f32 %v610, %v784
  %v849 = vadd.f32 %v615, %v785
  %v850 = vadd.f32 %v620, %v786
  %v851 = vadd.f32 %v625, %v787
  %v852 = vadd.f32 %v630, %v788
  %v853 = vadd.f32 %v635, %v789
  %v854 = vadd.f32 %v640, %v790
  %v855 = vadd.f32 %v645, %v791
  %v856 = vadd.f32 %v650, %v792
  %v857 = vadd.f32 %v655, %v793
  %v858 = vadd.f32 %v660, %v794
  %v859 = vadd.f32 %v665, %v795
  %v860 = vadd.f32 %v670, %v796
  %v861 = vadd.f32 %v675, %v797
  %v862 = vadd.f32 %v680, %v798
  %v863 = vadd.f32 %v685, %v799
  %v864 = vadd.f32 %v690, %v800
  %v865 = vadd.f32 %v695, %v801
  %v866 = vadd.f32 %v700, %v802
  %v867 = vadd.f32 %v705, %v803
  %v868 = vadd.f32 %v710, %v804
  %v869 = vadd.f32 %v715, %v805
  %v870 = vadd.f32 %v720, %v806
  %v871 = vadd.f32 %v725, %v807
  %v872 = vadd.f32 %v730, %v808
  %v873 = vadd.f32 %v735, %v809
  %v874 = vadd.f32 %v740, %v810
  %v875 = vadd.f32 %v745, %v811
  %vm876 = vcmask 523264
  %877 = vst.msk [vmem:[%s4] sm:$0xff] %vm876, %v812
  %878 = vst.msk [vmem:[%s4 + $0x8] sm:$0xff] %vm876, %v813
  %879 = vst.msk [vmem:[%s4 + $0x10] sm:$0xff] %vm876, %v814
  %880 = vst.msk [vmem:[%s4 + $0x18] sm:$0xff] %vm876, %v815
  %881 = vst.msk [vmem:[%s4 + $0x20] sm:$0xff] %vm876, %v816
  %882 = vst.msk [vmem:[%s4 + $0x28] sm:$0xff] %vm876, %v817
  %883 = vst.msk [vmem:[%s4 + $0x30] sm:$0xff] %vm876, %v818
  %884 = vst.msk [vmem:[%s4 + $0x38] sm:$0xff] %vm876, %v819
  %885 = vst.msk [vmem:[%s4 + $0x40] sm:$0xff] %vm876, %v820
  %886 = vst.msk [vmem:[%s4 + $0x48] sm:$0xff] %vm876, %v821
  %887 = vst.msk [vmem:[%s4 + $0x50] sm:$0xff] %vm876, %v822
  %888 = vst.msk [vmem:[%s4 + $0x58] sm:$0xff] %vm876, %v823
  %889 = vst.msk [vmem:[%s4 + $0x60] sm:$0xff] %vm876, %v824
  %890 = vst.msk [vmem:[%s4 + $0x68] sm:$0xff] %vm876, %v825
  %891 = vst.msk [vmem:[%s4 + $0x70] sm:$0xff] %vm876, %v826
  %892 = vst.msk [vmem:[%s4 + $0x78] sm:$0xff] %vm876, %v827
  %893 = vst.msk [vmem:[%s4 + $0x80] sm:$0xff] %vm876, %v828
  %894 = vst.msk [vmem:[%s4 + $0x88] sm:$0xff] %vm876, %v829
  %895 = vst.msk [vmem:[%s4 + $0x90] sm:$0xff] %vm876, %v830
  %896 = vst.msk [vmem:[%s4 + $0x98] sm:$0xff] %vm876, %v831
  %897 = vst.msk [vmem:[%s4 + $0xa0] sm:$0xff] %vm876, %v832
  %898 = vst.msk [vmem:[%s4 + $0xa8] sm:$0xff] %vm876, %v833
  %899 = vst.msk [vmem:[%s4 + $0xb0] sm:$0xff] %vm876, %v834
  %900 = vst.msk [vmem:[%s4 + $0xb8] sm:$0xff] %vm876, %v835
  %901 = vst.msk [vmem:[%s4 + $0xc0] sm:$0xff] %vm876, %v836
  %902 = vst.msk [vmem:[%s4 + $0xc8] sm:$0xff] %vm876, %v837
  %903 = vst.msk [vmem:[%s4 + $0xd0] sm:$0xff] %vm876, %v838
  %904 = vst.msk [vmem:[%s4 + $0xd8] sm:$0xff] %vm876, %v839
  %905 = vst.msk [vmem:[%s4 + $0xe0] sm:$0xff] %vm876, %v840
  %906 = vst.msk [vmem:[%s4 + $0xe8] sm:$0xff] %vm876, %v841
  %907 = vst.msk [vmem:[%s4 + $0xf0] sm:$0xff] %vm876, %v842
  %908 = vst.msk [vmem:[%s4 + $0xf8] sm:$0xff] %vm876, %v843
  %909 = vst.msk [vmem:[%s4 + $0x100] sm:$0xff] %vm876, %v844
  %910 = vst.msk [vmem:[%s4 + $0x108] sm:$0xff] %vm876, %v845
  %911 = vst.msk [vmem:[%s4 + $0x110] sm:$0xff] %vm876, %v846
  %912 = vst.msk [vmem:[%s4 + $0x118] sm:$0xff] %vm876, %v847
  %913 = vst.msk [vmem:[%s4 + $0x120] sm:$0xff] %vm876, %v848
  %914 = vst.msk [vmem:[%s4 + $0x128] sm:$0xff] %vm876, %v849
  %915 = vst.msk [vmem:[%s4 + $0x130] sm:$0xff] %vm876, %v850
  %916 = vst.msk [vmem:[%s4 + $0x138] sm:$0xff] %vm876, %v851
  %917 = vst.msk [vmem:[%s4 + $0x140] sm:$0xff] %vm876, %v852
  %918 = vst.msk [vmem:[%s4 + $0x148] sm:$0xff] %vm876, %v853
  %919 = vst.msk [vmem:[%s4 + $0x150] sm:$0xff] %vm876, %v854
  %920 = vst.msk [vmem:[%s4 + $0x158] sm:$0xff] %vm876, %v855
  %921 = vst.msk [vmem:[%s4 + $0x160] sm:$0xff] %vm876, %v856
  %922 = vst.msk [vmem:[%s4 + $0x168] sm:$0xff] %vm876, %v857
  %923 = vst.msk [vmem:[%s4 + $0x170] sm:$0xff] %vm876, %v858
  %924 = vst.msk [vmem:[%s4 + $0x178] sm:$0xff] %vm876, %v859
  %925 = vst.msk [vmem:[%s4 + $0x180] sm:$0xff] %vm876, %v860
  %926 = vst.msk [vmem:[%s4 + $0x188] sm:$0xff] %vm876, %v861
  %927 = vst.msk [vmem:[%s4 + $0x190] sm:$0xff] %vm876, %v862
  %928 = vst.msk [vmem:[%s4 + $0x198] sm:$0xff] %vm876, %v863
  %929 = vst.msk [vmem:[%s4 + $0x1a0] sm:$0xff] %vm876, %v864
  %930 = vst.msk [vmem:[%s4 + $0x1a8] sm:$0xff] %vm876, %v865
  %931 = vst.msk [vmem:[%s4 + $0x1b0] sm:$0xff] %vm876, %v866
  %932 = vst.msk [vmem:[%s4 + $0x1b8] sm:$0xff] %vm876, %v867
  %933 = vst.msk [vmem:[%s4 + $0x1c0] sm:$0xff] %vm876, %v868
  %934 = vst.msk [vmem:[%s4 + $0x1c8] sm:$0xff] %vm876, %v869
  %935 = vst.msk [vmem:[%s4 + $0x1d0] sm:$0xff] %vm876, %v870
  %936 = vst.msk [vmem:[%s4 + $0x1d8] sm:$0xff] %vm876, %v871
  %937 = vst.msk [vmem:[%s4 + $0x1e0] sm:$0xff] %vm876, %v872
  %938 = vst.msk [vmem:[%s4 + $0x1e8] sm:$0xff] %vm876, %v873
  %939 = vst.msk [vmem:[%s4 + $0x1f0] sm:$0xff] %vm876, %v874
  %940 = vst.msk [vmem:[%s4 + $0x1f8] sm:$0xff] %vm876, %v875
  // Predicated region
  $region18: #{wavemix_sr_forward.13} parent=0 // pred_check
    _
  $region19: #{wavemix_sr_forward.13} parent=0 // pred_check_branch
    %942 = sbr.rel (0) target = $region21
  $region20: #{wavemix_sr_forward.13} parent=0 // pred_region
    _
  $region21: #{wavemix_sr_forward.13} parent=0 // pred_fallthru
    _
  // Predicated region
  $region22: #{wavemix_sr_forward.13} parent=0 // pred_check
    _
  $region23: #{wavemix_sr_forward.13} parent=0 // pred_check_branch
    %944 = sbr.rel (0) target = $region25
  $region24: #{wavemix_sr_forward.13} parent=0 // pred_region
    _
  $region25: #{wavemix_sr_forward.13} parent=0 // pred_fallthru
    _

// kernel: wavemix_sr_forward.16
$region0: #{wavemix_sr_forward.16}
  #allocation0 [shape = 'u32[]', space=smem, size = 0x4, offset = 0x4, fixed_abs, tag = 'smem constant byte address 0x4 - core index']
  #allocation1 [shape = 'u32[144,128]{1,0:T(1,128)}', space=vmem, size = 0x12000, scoped, tag = 'internal scratch']
  #allocation2 [shape = 'f32[1,1]{1,0:T(1,128)S(1)}', space=vmem, size = 0x200, scoped, tag = 'scoped memory for wavemix_sr_forward.16']
  %s0 = inlined_call_operand.vmem [shape: f32[2048,144], index: 0, kind: input, shape index: {}]
  %s1 = inlined_call_operand.vmem [shape: f32[144,1], index: 1, kind: input, shape index: {}]
  %s2 = inlined_call_operand.<no memory space> [shape: f32[1,1], index: 2, kind: input, shape index: {}]
  %s3 = inlined_call_operand.vmem [shape: f32[2048,1], index: 3, kind: output, shape index: {}]
  %s4 = sld [smem:[#allocation0]]
  $region45: #{wavemix_sr_forward.16} parent=0
    _
  %s6 = ssub.s32 1, %s4
  %s7 = scalar_select 0, %s6, %s4
  %v8 = vstv %s2
  %9 = vst [vmem:[#allocation2] sm:$0x1] %v8
  loop: start=0, step=1, limit=6
  $region2: #{wavemix_sr_forward.16} parent=0 // loop_pre_header
    _
  $region3: #{wavemix_sr_forward.16} parent=0 // loop_header
    %s11 = sphi 0, %s15
    %p12 = scmp.ge.s32.totalorder %s11, 6
    %s21 = sphi 0, %s23
    %s24 = sphi 0, %s21
    %s25 = sphi 0, %s24
    %s41 = sphi 0, %s25
    %s45 = sphi 0, %s45
    %s47 = sphi 0, %s45
    %s48 = sphi 0, %s47
    %s62 = sphi 0, %s48
    %s66 = sphi 0, %s66
    %s68 = sphi 0, %s66
    %s69 = sphi 0, %s68
    %s83 = sphi 0, %s69
    %s89 = sphi 0, %s91
    %s92 = sphi 0, %s89
    %s93 = sphi 0, %s92
    %s109 = sphi 0, %s93
  $region4: #{wavemix_sr_forward.16} parent=0 // loop_header_branch
    %14 = sbr.rel (%p12) target = $region8
  $region5: #{wavemix_sr_forward.16} parent=0 // loop_body
    %s16 = ssub.s32 %s11, 1
    %s17 = ssub.s32 %s11, 2
    %s18 = sadd.s32 %s11, 1
    %s19 = ssub.s32 %s11, %s18
    %p20 = scmp.eq.s32.totalorder %s19, 0
    %s22 = sadd.s32 %s21, 1
    %s23 = scalar_select %p20, %s21, %s22
    %p26 = pneg %p20
    %p27 = scmp.eq.s32.totalorder %s11, 3
    %p28 = por %p26, %p27
    %p29 = scmp.ne.s32.totalorder %s21, %s24
    %p30 = scmp.eq.s32.totalorder %s11, 0
    %p31 = por %p29, %p30
    %p32 = scmp.ne.s32.totalorder %s21, %s24
    %p33 = scmp.eq.s32.totalorder %s16, 3
    %p34 = por %p32, %p33
    %p35 = scmp.ne.s32.totalorder %s24, %s25
    %p36 = scmp.eq.s32.totalorder %s16, 0
    %p37 = por %p35, %p36
    %p38 = scmp.ne.s32.totalorder %s24, %s25
    %p39 = scmp.eq.s32.totalorder %s17, 3
    %p40 = por %p38, %p39
    %p42 = scmp.ne.s32.totalorder %s25, %s41
    %p43 = scmp.eq.s32.totalorder %s17, 0
    %p44 = por %p42, %p43
    %s46 = sadd.s32 %s45, 1
    %p49 = scmp.eq.s32.totalorder %s11, 3
    %p50 = scmp.ne.s32.totalorder %s45, %s47
    %p51 = scmp.eq.s32.totalorder %s11, 0
    %p52 = por %p50, %p51
    %p53 = scmp.ne.s32.totalorder %s45, %s47
    %p54 = scmp.eq.s32.totalorder %s16, 3
    %p55 = por %p53, %p54
    %p56 = scmp.ne.s32.totalorder %s47, %s48
    %p57 = scmp.eq.s32.totalorder %s16, 0
    %p58 = por %p56, %p57
    %p59 = scmp.ne.s32.totalorder %s47, %s48
    %p60 = scmp.eq.s32.totalorder %s17, 3
    %p61 = por %p59, %p60
    %p63 = scmp.ne.s32.totalorder %s48, %s62
    %p64 = scmp.eq.s32.totalorder %s17, 0
    %p65 = por %p63, %p64
    %s67 = sadd.s32 %s66, 1
    %p70 = scmp.eq.s32.totalorder %s11, 3
    %p71 = scmp.ne.s32.totalorder %s66, %s68
    %p72 = scmp.eq.s32.totalorder %s11, 0
    %p73 = por %p71, %p72
    %p74 = scmp.ne.s32.totalorder %s66, %s68
    %p75 = scmp.eq.s32.totalorder %s16, 3
    %p76 = por %p74, %p75
    %p77 = scmp.ne.s32.totalorder %s68, %s69
    %p78 = scmp.eq.s32.totalorder %s16, 0
    %p79 = por %p77, %p78
    %p80 = scmp.ne.s32.totalorder %s68, %s69
    %p81 = scmp.eq.s32.totalorder %s17, 3
    %p82 = por %p80, %p81
    %p84 = scmp.ne.s32.totalorder %s69, %s83
    %p85 = scmp.eq.s32.totalorder %s17, 0
    %p86 = por %p84, %p85
    %s87 = ssub.s32 %s11, %s18
    %p88 = scmp.eq.s32.totalorder %s87, 0
    %s90 = sadd.s32 %s89, 1
    %s91 = scalar_select %p88, %s89, %s90
    %p94 = pneg %p88
    %p95 = scmp.eq.s32.totalorder %s11, 3
    %p96 = por %p94, %p95
    %p97 = scmp.ne.s32.totalorder %s89, %s92
    %p98 = scmp.eq.s32.totalorder %s11, 0
    %p99 = por %p97, %p98
    %p100 = scmp.ne.s32.totalorder %s89, %s92
    %p101 = scmp.eq.s32.totalorder %s16, 3
    %p102 = por %p100, %p101
    %p103 = scmp.ne.s32.totalorder %s92, %s93
    %p104 = scmp.eq.s32.totalorder %s16, 0
    %p105 = por %p103, %p104
    %p106 = scmp.ne.s32.totalorder %s92, %s93
    %p107 = scmp.eq.s32.totalorder %s17, 3
    %p108 = por %p106, %p107
    %p110 = scmp.ne.s32.totalorder %s93, %s109
    %p111 = scmp.eq.s32.totalorder %s17, 0
    %p112 = por %p110, %p111
    %p113 = scmp.le.s32.totalorder 1, %s11
    %p114 = scmp.lt.s32.totalorder %s11, 5
    %p115 = pnand %p113, %p114
    %p116 = pneg %p115
    // Predicated region
    $region9: #{wavemix_sr_forward.16} parent=5 // pred_check
      _
    $region10: #{wavemix_sr_forward.16} parent=5 // pred_check_branch
      %118 = sbr.rel (%p115) target = $region12
    $region11: #{wavemix_sr_forward.16} parent=5 // pred_region
      %s119 = ssub.s32 %s11, 1
      // Predicated region
      $region13: #{wavemix_sr_forward.16} parent=11 // pred_check
        %p120 = pneg %p58
      $region14: #{wavemix_sr_forward.16} parent=11 // pred_check_branch
        %122 = sbr.rel (%p120) target = $region16
      $region15: #{wavemix_sr_forward.16} parent=11 // pred_region
        _
      $region16: #{wavemix_sr_forward.16} parent=11 // pred_fallthru
        _
      // Predicated region
      $region17: #{wavemix_sr_forward.16} parent=11 // pred_check
        %p123 = pneg %p79
      $region18: #{wavemix_sr_forward.16} parent=11 // pred_check_branch
        %125 = sbr.rel (%p123) target = $region20
      $region19: #{wavemix_sr_forward.16} parent=11 // pred_region
        _
      $region20: #{wavemix_sr_forward.16} parent=11 // pred_fallthru
        _
    $region12: #{wavemix_sr_forward.16} parent=5 // pred_fallthru
      _
    %p126 = scmp.lt.s32.totalorder %s11, 4
    // Predicated region
    $region21: #{wavemix_sr_forward.16} parent=5 // pred_check
      %p127 = pneg %p126
    $region22: #{wavemix_sr_forward.16} parent=5 // pred_check_branch
      %129 = sbr.rel (%p127) target = $region24
    $region23: #{wavemix_sr_forward.16} parent=5 // pred_region
      // Predicated region
      $region25: #{wavemix_sr_forward.16} parent=23 // pred_check
        %p130 = pneg %p31
      $region26: #{wavemix_sr_forward.16} parent=23 // pred_check_branch
        %132 = sbr.rel (%p130) target = $region28
      $region27: #{wavemix_sr_forward.16} parent=23 // pred_region
        %s133 = smul.u32 64, %s11
        %p134 = scmp.lt.s32.totalorder %s133, 255
        %s135 = scalar_select %p134, %s133, 255
        %s136 = smul.addr %s135, 2
        %s137 = smul.addr %s136, 8
        %s138 = scalar_lea.vmem %s0, %s137
        %s139 = smul.u32 64, %s11
      $region28: #{wavemix_sr_forward.16} parent=23 // pred_fallthru
        _
    $region24: #{wavemix_sr_forward.16} parent=5 // pred_fallthru
      _
    %p140 = scmp.le.s32.totalorder 1, %s11
    %p141 = scmp.lt.s32.totalorder %s11, 5
    %p142 = pnand %p140, %p141
    %p143 = pneg %p142
    // Predicated region
    $region29: #{wavemix_sr_forward.16} parent=5 // pred_check
      _
    $region30: #{wavemix_sr_forward.16} parent=5 // pred_check_branch
      %145 = sbr.rel (%p142) target = $region32
    $region31: #{wavemix_sr_forward.16} parent=5 // pred_region
      %s146 = ssub.s32 %s11, 1
      %s147 = smul.u32 64, %s16
      %p148 = scmp.lt.s32.totalorder %s147, 255
      %s149 = scalar_select %p148, %s147, 255
      %s150 = smul.addr %s149, 2
      %s151 = smul.addr %s150, 8
      %s152 = scalar_lea.vmem %s0, %s151
      %p153 = pneg %p37
      %p154 = pneg %p34
      %p155 = pneg %p58
      %p156 = pneg %p55
      %p157 = pneg %p79
      %p158 = pneg %p76
      %p159 = pneg %p105
      %p160 = pneg %p102
      %s161 = smul.u32 64, %s16
      %p162 = scmp.lt.s32.totalorder %s161, 255
      %s163 = scalar_select %p162, %s161, 255
      %s164 = smul.addr %s163, 8
      %s165 = scalar_lea.vmem %s3, %s164
      %s166 = smul.u32 64, %s16
      %p167 = scmp.lt.s32.totalorder %s166, 255
      %s168 = scalar_select %p167, %s166, 255
      %s169 = smul.addr %s168, 2
      %s170 = smul.addr %s169, 8
      %s171 = scalar_lea.vmem %s0, %s170
      %s172 = smul.u32 64, %s16
      %s173 = smul.u32 64, %s16
      %p174 = scmp.lt.s32.totalorder %s173, 255
      %s175 = scalar_select %p174, %s173, 255
      %s176 = smul.addr %s175, 8
      %s177 = scalar_lea.vmem %s3, %s176
      %s178 = smul.u32 64, %s16
      %v179 = vld [vmem:[%s171] sm:$0xff]
      %v180 = vld [vmem:[%s171 + $0x8] sm:$0xff]
      %v181 = vld [vmem:[%s171 + $0x10] sm:$0xff]
      %v182 = vld [vmem:[%s171 + $0x18] sm:$0xff]
      %v183 = vld [vmem:[%s171 + $0x20] sm:$0xff]
      %v184 = vld [vmem:[%s171 + $0x28] sm:$0xff]
      %v185 = vld [vmem:[%s171 + $0x30] sm:$0xff]
      %v186 = vld [vmem:[%s171 + $0x38] sm:$0xff]
      %v187 = vld [vmem:[%s171 + $0x40] sm:$0xff]
      %v188 = vld [vmem:[%s171 + $0x48] sm:$0xff]
      %v189 = vld [vmem:[%s171 + $0x50] sm:$0xff]
      %v190 = vld [vmem:[%s171 + $0x58] sm:$0xff]
      %v191 = vld [vmem:[%s171 + $0x60] sm:$0xff]
      %v192 = vld [vmem:[%s171 + $0x68] sm:$0xff]
      %v193 = vld [vmem:[%s171 + $0x70] sm:$0xff]
      %v194 = vld [vmem:[%s171 + $0x78] sm:$0xff]
      %v195 = vld [vmem:[%s171 + $0x80] sm:$0xff]
      %v196 = vld [vmem:[%s171 + $0x88] sm:$0xff]
      %v197 = vld [vmem:[%s171 + $0x90] sm:$0xff]
      %v198 = vld [vmem:[%s171 + $0x98] sm:$0xff]
      %v199 = vld [vmem:[%s171 + $0xa0] sm:$0xff]
      %v200 = vld [vmem:[%s171 + $0xa8] sm:$0xff]
      %v201 = vld [vmem:[%s171 + $0xb0] sm:$0xff]
      %v202 = vld [vmem:[%s171 + $0xb8] sm:$0xff]
      %v203 = vld [vmem:[%s171 + $0xc0] sm:$0xff]
      %v204 = vld [vmem:[%s171 + $0xc8] sm:$0xff]
      %v205 = vld [vmem:[%s171 + $0xd0] sm:$0xff]
      %v206 = vld [vmem:[%s171 + $0xd8] sm:$0xff]
      %v207 = vld [vmem:[%s171 + $0xe0] sm:$0xff]
      %v208 = vld [vmem:[%s171 + $0xe8] sm:$0xff]
      %v209 = vld [vmem:[%s171 + $0xf0] sm:$0xff]
      %v210 = vld [vmem:[%s171 + $0xf8] sm:$0xff]
      %v211 = vld [vmem:[%s171 + $0x100] sm:$0xff]
      %v212 = vld [vmem:[%s171 + $0x108] sm:$0xff]
      %v213 = vld [vmem:[%s171 + $0x110] sm:$0xff]
      %v214 = vld [vmem:[%s171 + $0x118] sm:$0xff]
      %v215 = vld [vmem:[%s171 + $0x120] sm:$0xff]
      %v216 = vld [vmem:[%s171 + $0x128] sm:$0xff]
      %v217 = vld [vmem:[%s171 + $0x130] sm:$0xff]
      %v218 = vld [vmem:[%s171 + $0x138] sm:$0xff]
      %v219 = vld [vmem:[%s171 + $0x140] sm:$0xff]
      %v220 = vld [vmem:[%s171 + $0x148] sm:$0xff]
      %v221 = vld [vmem:[%s171 + $0x150] sm:$0xff]
      %v222 = vld [vmem:[%s171 + $0x158] sm:$0xff]
      %v223 = vld [vmem:[%s171 + $0x160] sm:$0xff]
      %v224 = vld [vmem:[%s171 + $0x168] sm:$0xff]
      %v225 = vld [vmem:[%s171 + $0x170] sm:$0xff]
      %v226 = vld [vmem:[%s171 + $0x178] sm:$0xff]
      %v227 = vld [vmem:[%s171 + $0x180] sm:$0xff]
      %v228 = vld [vmem:[%s171 + $0x188] sm:$0xff]
      %v229 = vld [vmem:[%s171 + $0x190] sm:$0xff]
      %v230 = vld [vmem:[%s171 + $0x198] sm:$0xff]
      %v231 = vld [vmem:[%s171 + $0x1a0] sm:$0xff]
      %v232 = vld [vmem:[%s171 + $0x1a8] sm:$0xff]
      %v233 = vld [vmem:[%s171 + $0x1b0] sm:$0xff]
      %v234 = vld [vmem:[%s171 + $0x1b8] sm:$0xff]
      %v235 = vld [vmem:[%s171 + $0x1c0] sm:$0xff]
      %v236 = vld [vmem:[%s171 + $0x1c8] sm:$0xff]
      %v237 = vld [vmem:[%s171 + $0x1d0] sm:$0xff]
      %v238 = vld [vmem:[%s171 + $0x1d8] sm:$0xff]
      %v239 = vld [vmem:[%s171 + $0x1e0] sm:$0xff]
      %v240 = vld [vmem:[%s171 + $0x1e8] sm:$0xff]
      %v241 = vld [vmem:[%s171 + $0x1f0] sm:$0xff]
      %v242 = vld [vmem:[%s171 + $0x1f8] sm:$0xff]
      %v243 = vld [vmem:[%s171 + $0x200] sm:$0xff]
      %v244 = vld [vmem:[%s171 + $0x208] sm:$0xff]
      %v245 = vld [vmem:[%s171 + $0x210] sm:$0xff]
      %v246 = vld [vmem:[%s171 + $0x218] sm:$0xff]
      %v247 = vld [vmem:[%s171 + $0x220] sm:$0xff]
      %v248 = vld [vmem:[%s171 + $0x228] sm:$0xff]
      %v249 = vld [vmem:[%s171 + $0x230] sm:$0xff]
      %v250 = vld [vmem:[%s171 + $0x238] sm:$0xff]
      %v251 = vld [vmem:[%s171 + $0x240] sm:$0xff]
      %v252 = vld [vmem:[%s171 + $0x248] sm:$0xff]
      %v253 = vld [vmem:[%s171 + $0x250] sm:$0xff]
      %v254 = vld [vmem:[%s171 + $0x258] sm:$0xff]
      %v255 = vld [vmem:[%s171 + $0x260] sm:$0xff]
      %v256 = vld [vmem:[%s171 + $0x268] sm:$0xff]
      %v257 = vld [vmem:[%s171 + $0x270] sm:$0xff]
      %v258 = vld [vmem:[%s171 + $0x278] sm:$0xff]
      %v259 = vld [vmem:[%s171 + $0x280] sm:$0xff]
      %v260 = vld [vmem:[%s171 + $0x288] sm:$0xff]
      %v261 = vld [vmem:[%s171 + $0x290] sm:$0xff]
      %v262 = vld [vmem:[%s171 + $0x298] sm:$0xff]
      %v263 = vld [vmem:[%s171 + $0x2a0] sm:$0xff]
      %v264 = vld [vmem:[%s171 + $0x2a8] sm:$0xff]
      %v265 = vld [vmem:[%s171 + $0x2b0] sm:$0xff]
      %v266 = vld [vmem:[%s171 + $0x2b8] sm:$0xff]
      %v267 = vld [vmem:[%s171 + $0x2c0] sm:$0xff]
      %v268 = vld [vmem:[%s171 + $0x2c8] sm:$0xff]
      %v269 = vld [vmem:[%s171 + $0x2d0] sm:$0xff]
      %v270 = vld [vmem:[%s171 + $0x2d8] sm:$0xff]
      %v271 = vld [vmem:[%s171 + $0x2e0] sm:$0xff]
      %v272 = vld [vmem:[%s171 + $0x2e8] sm:$0xff]
      %v273 = vld [vmem:[%s171 + $0x2f0] sm:$0xff]
      %v274 = vld [vmem:[%s171 + $0x2f8] sm:$0xff]
      %v275 = vld [vmem:[%s171 + $0x300] sm:$0xff]
      %v276 = vld [vmem:[%s171 + $0x308] sm:$0xff]
      %v277 = vld [vmem:[%s171 + $0x310] sm:$0xff]
      %v278 = vld [vmem:[%s171 + $0x318] sm:$0xff]
      %v279 = vld [vmem:[%s171 + $0x320] sm:$0xff]
      %v280 = vld [vmem:[%s171 + $0x328] sm:$0xff]
      %v281 = vld [vmem:[%s171 + $0x330] sm:$0xff]
      %v282 = vld [vmem:[%s171 + $0x338] sm:$0xff]
      %v283 = vld [vmem:[%s171 + $0x340] sm:$0xff]
      %v284 = vld [vmem:[%s171 + $0x348] sm:$0xff]
      %v285 = vld [vmem:[%s171 + $0x350] sm:$0xff]
      %v286 = vld [vmem:[%s171 + $0x358] sm:$0xff]
      %v287 = vld [vmem:[%s171 + $0x360] sm:$0xff]
      %v288 = vld [vmem:[%s171 + $0x368] sm:$0xff]
      %v289 = vld [vmem:[%s171 + $0x370] sm:$0xff]
      %v290 = vld [vmem:[%s171 + $0x378] sm:$0xff]
      %v291 = vld [vmem:[%s171 + $0x380] sm:$0xff]
      %v292 = vld [vmem:[%s171 + $0x388] sm:$0xff]
      %v293 = vld [vmem:[%s171 + $0x390] sm:$0xff]
      %v294 = vld [vmem:[%s171 + $0x398] sm:$0xff]
      %v295 = vld [vmem:[%s171 + $0x3a0] sm:$0xff]
      %v296 = vld [vmem:[%s171 + $0x3a8] sm:$0xff]
      %v297 = vld [vmem:[%s171 + $0x3b0] sm:$0xff]
      %v298 = vld [vmem:[%s171 + $0x3b8] sm:$0xff]
      %v299 = vld [vmem:[%s171 + $0x3c0] sm:$0xff]
      %v300 = vld [vmem:[%s171 + $0x3c8] sm:$0xff]
      %v301 = vld [vmem:[%s171 + $0x3d0] sm:$0xff]
      %v302 = vld [vmem:[%s171 + $0x3d8] sm:$0xff]
      %v303 = vld [vmem:[%s171 + $0x3e0] sm:$0xff]
      %v304 = vld [vmem:[%s171 + $0x3e8] sm:$0xff]
      %v305 = vld [vmem:[%s171 + $0x3f0] sm:$0xff]
      %v306 = vld [vmem:[%s171 + $0x3f8] sm:$0xff]
      %v307 = vld [vmem:[%s1] sm:$0xff]
      %v308 = vld [vmem:[%s1 + $0x8] sm:$0xff]
      %v309 = vld [vmem:[%s1 + $0x10] sm:$0xff]
      %v310 = vld [vmem:[%s1 + $0x18] sm:$0xff]
      %v311 = vld [vmem:[%s1 + $0x20] sm:$0xff]
      %v312 = vld [vmem:[%s1 + $0x28] sm:$0xff]
      %v313 = vld [vmem:[%s1 + $0x30] sm:$0xff]
      %v314 = vld [vmem:[%s1 + $0x38] sm:$0xff]
      %v315 = vld [vmem:[%s1 + $0x40] sm:$0xff]
      %v316 = vld [vmem:[%s1 + $0x48] sm:$0xff]
      %v317 = vld [vmem:[%s1 + $0x50] sm:$0xff]
      %v318 = vld [vmem:[%s1 + $0x58] sm:$0xff]
      %v319 = vld [vmem:[%s1 + $0x60] sm:$0xff]
      %v320 = vld [vmem:[%s1 + $0x68] sm:$0xff]
      %v321 = vld [vmem:[%s1 + $0x70] sm:$0xff]
      %v322 = vld [vmem:[%s1 + $0x78] sm:$0xff]
      %v323 = vld [vmem:[%s1 + $0x80] sm:$0xff]
      %v324 = vld [vmem:[%s1 + $0x88] sm:$0xff]
      %v325 = vld [vmem:[#allocation2] sm:$0x1]
      %v327 = vlaneseq
      %v328 = vshrl.u32 %v327, 7
      %v329 = vsub.s32 0, %v328
      %v330 = vrot.slane %v325, %v329
      %vm332 = vcmask 130048
      %v334 = vsel %vm332, %v180, 0
      %v337 = vsel %vm332, %v182, 0
      %v340 = vsel %vm332, %v184, 0
      %v343 = vsel %vm332, %v186, 0
      %v346 = vsel %vm332, %v188, 0
      %v349 = vsel %vm332, %v190, 0
      %v352 = vsel %vm332, %v192, 0
      %v355 = vsel %vm332, %v194, 0
      %v358 = vsel %vm332, %v196, 0
      %v361 = vsel %vm332, %v198, 0
      %v364 = vsel %vm332, %v200, 0
      %v367 = vsel %vm332, %v202, 0
      %v370 = vsel %vm332, %v204, 0
      %v373 = vsel %vm332, %v206, 0
      %v376 = vsel %vm332, %v208, 0
      %v379 = vsel %vm332, %v210, 0
      %v382 = vsel %vm332, %v212, 0
      %v385 = vsel %vm332, %v214, 0
      %v388 = vsel %vm332, %v216, 0
      %v391 = vsel %vm332, %v218, 0
      %v394 = vsel %vm332, %v220, 0
      %v397 = vsel %vm332, %v222, 0
      %v400 = vsel %vm332, %v224, 0
      %v403 = vsel %vm332, %v226, 0
      %v406 = vsel %vm332, %v228, 0
      %v409 = vsel %vm332, %v230, 0
      %v412 = vsel %vm332, %v232, 0
      %v415 = vsel %vm332, %v234, 0
      %v418 = vsel %vm332, %v236, 0
      %v421 = vsel %vm332, %v238, 0
      %v424 = vsel %vm332, %v240, 0
      %v427 = vsel %vm332, %v242, 0
      %v430 = vsel %vm332, %v244, 0
      %v433 = vsel %vm332, %v246, 0
      %v436 = vsel %vm332, %v248, 0
      %v439 = vsel %vm332, %v250, 0
      %v442 = vsel %vm332, %v252, 0
      %v445 = vsel %vm332, %v254, 0
      %v448 = vsel %vm332, %v256, 0
      %v451 = vsel %vm332, %v258, 0
      %v454 = vsel %vm332, %v260, 0
      %v457 = vsel %vm332, %v262, 0
      %v460 = vsel %vm332, %v264, 0
      %v463 = vsel %vm332, %v266, 0
      %v466 = vsel %vm332, %v268, 0
      %v469 = vsel %vm332, %v270, 0
      %v472 = vsel %vm332, %v272, 0
      %v475 = vsel %vm332, %v274, 0
      %v478 = vsel %vm332, %v276, 0
      %v481 = vsel %vm332, %v278, 0
      %v484 = vsel %vm332, %v280, 0
      %v487 = vsel %vm332, %v282, 0
      %v490 = vsel %vm332, %v284, 0
      %v493 = vsel %vm332, %v286, 0
      %v496 = vsel %vm332, %v288, 0
      %v499 = vsel %vm332, %v290, 0
      %v502 = vsel %vm332, %v292, 0
      %v505 = vsel %vm332, %v294, 0
      %v508 = vsel %vm332, %v296, 0
      %v511 = vsel %vm332, %v298, 0
      %v514 = vsel %vm332, %v300, 0
      %v517 = vsel %vm332, %v302, 0
      %v520 = vsel %vm332, %v304, 0
      %v523 = vsel %vm332, %v306, 0
      %525 = vmatprep.subr.mxu0 0.0
      %526 = vmatpush1.msra.mxu0 %v307
      %527 = vmatprep.subr.mxu0 0.0
      %528 = vmatpush1.msra.mxu0 %v308
      %529 = vmatprep.subr.mxu0 0.0
      %530 = vmatpush1.msra.mxu0 %v309
      %531 = vmatprep.subr.mxu0 0.0
      %532 = vmatpush1.msra.mxu0 %v310
      %533 = vmatprep.subr.mxu0 0.0
      %534 = vmatpush1.msra.mxu0 %v311
      %535 = vmatprep.subr.mxu0 0.0
      %536 = vmatpush1.msra.mxu0 %v312
      %537 = vmatprep.subr.mxu0 0.0
      %538 = vmatpush1.msra.mxu0 %v313
      %539 = vmatprep.subr.mxu0 0.0
      %540 = vmatpush1.msra.mxu0 %v314
      %541 = vmatprep.subr.mxu0 0.0
      %542 = vmatpush1.msra.mxu0 %v315
      %543 = vmatprep.subr.mxu0 0.0
      %544 = vmatpush1.msra.mxu0 %v316
      %545 = vmatprep.subr.mxu0 0.0
      %546 = vmatpush1.msra.mxu0 %v317
      %547 = vmatprep.subr.mxu0 0.0
      %548 = vmatpush1.msra.mxu0 %v318
      %549 = vmatprep.subr.mxu0 0.0
      %550 = vmatpush1.msra.mxu0 %v319
      %551 = vmatprep.subr.mxu0 0.0
      %552 = vmatpush1.msra.mxu0 %v320
      %553 = vmatprep.subr.mxu0 0.0
      %554 = vmatpush1.msra.mxu0 %v321
      %555 = vmatprep.subr.mxu0 0.0
      %556 = vmatpush1.msra.mxu0 %v322
      %557 = vmatprep.subr.mxu0 0.0
      %558 = vmatpush1.msra.mxu0 %v323
      %559 = vmatprep.subr.mxu0 0.0
      %560 = vmatpush1.msra.mxu0 %v324
      %561 = vmatprep.subr.mxu0 0.0
      %562 = vmatpush1.msra.mxu0 0.0
      %563 = vmatprep.subr.mxu0 0.0
      %564 = vmatpush1.msra.mxu0 0.0
      %565 = vmatprep.subr.mxu0 0.0
      %566 = vmatpush1.msra.mxu0 0.0
      %567 = vmatprep.subr.mxu0 0.0
      %568 = vmatpush1.msra.mxu0 0.0
      %569 = vmatprep.subr.mxu0 0.0
      %570 = vmatpush1.msra.mxu0 0.0
      %571 = vmatprep.subr.mxu0 0.0
      %572 = vmatpush1.msra.mxu0 0.0
      %573 = vmatprep.subr.mxu0 0.0
      %574 = vmatpush1.msra.mxu0 0.0
      %575 = vmatprep.subr.mxu0 0.0
      %576 = vmatpush1.msra.mxu0 0.0
      %577 = vmatprep.subr.mxu0 0.0
      %578 = vmatpush1.msra.mxu0 0.0
      %579 = vmatprep.subr.mxu0 0.0
      %580 = vmatpush1.msra.mxu0 0.0
      %581 = vmatprep.subr.mxu0 0.0
      %582 = vmatpush1.msra.mxu0 0.0
      %583 = vmatprep.subr.mxu0 0.0
      %584 = vmatpush1.msra.mxu0 0.0
      %585 = vmatprep.subr.mxu0 0.0
      %586 = vmatpush1.msra.mxu0 0.0
      %587 = vmatprep.subr.mxu0 0.0
      %588 = vmatpush1.msra.mxu0 0.0
      %589 = vmatprep.mubr.f32.mxu0 %v334
      %590 = vmatmul.mubr.f32.gmra.mrb[0].mxu0 %v179
      %v591 = vpop.f32.mrb[0].mxu0
      %v592 = vadd.f32 %v330, %v591
      %v593 = vpop.f32.mrb[0].mxu0
      %594 = vmatprep.mubr.f32.mxu0 %v337
      %595 = vmatmul.mubr.f32.gmra.mrb[0].mxu0 %v181
      %v596 = vpop.f32.mrb[0].mxu0
      %v597 = vadd.f32 %v330, %v596
      %v598 = vpop.f32.mrb[0].mxu0
      %599 = vmatprep.mubr.f32.mxu0 %v340
      %600 = vmatmul.mubr.f32.gmra.mrb[0].mxu0 %v183
      %v601 = vpop.f32.mrb[0].mxu0
      %v602 = vadd.f32 %v330, %v601
      %v603 = vpop.f32.mrb[0].mxu0
      %604 = vmatprep.mubr.f32.mxu0 %v343
      %605 = vmatmul.mubr.f32.gmra.mrb[0].mxu0 %v185
      %v606 = vpop.f32.mrb[0].mxu0
      %v607 = vadd.f32 %v330, %v606
      %v608 = vpop.f32.mrb[0].mxu0
      %609 = vmatprep.mubr.f32.mxu0 %v346
      %610 = vmatmul.mubr.f32.gmra.mrb[0].mxu0 %v187
      %v611 = vpop.f32.mrb[0].mxu0
      %v612 = vadd.f32 %v330, %v611
      %v613 = vpop.f32.mrb[0].mxu0
      %614 = vmatprep.mubr.f32.mxu0 %v349
      %615 = vmatmul.mubr.f32.gmra.mrb[0].mxu0 %v189
      %v616 = vpop.f32.mrb[0].mxu0
      %v617 = vadd.f32 %v330, %v616
      %v618 = vpop.f32.mrb[0].mxu0
      %619 = vmatprep.mubr.f32.mxu0 %v352
      %620 = vmatmul.mubr.f32.gmra.mrb[0].mxu0 %v191
      %v621 = vpop.f32.mrb[0].mxu0
      %v622 = vadd.f32 %v330, %v621
      %v623 = vpop.f32.mrb[0].mxu0
      %624 = vmatprep.mubr.f32.mxu0 %v355
      %625 = vmatmul.mubr.f32.gmra.mrb[0].mxu0 %v193
      %v626 = vpop.f32.mrb[0].mxu0
      %v627 = vadd.f32 %v330, %v626
      %v628 = vpop.f32.mrb[0].mxu0
      %629 = vmatprep.mubr.f32.mxu0 %v358
      %630 = vmatmul.mubr.f32.gmra.mrb[0].mxu0 %v195
      %v631 = vpop.f32.mrb[0].mxu0
      %v632 = vadd.f32 %v330, %v631
      %v633 = vpop.f32.mrb[0].mxu0
      %634 = vmatprep.mubr.f32.mxu0 %v361
      %635 = vmatmul.mubr.f32.gmra.mrb[0].mxu0 %v197
      %v636 = vpop.f32.mrb[0].mxu0
      %v637 = vadd.f32 %v330, %v636
      %v638 = vpop.f32.mrb[0].mxu0
      %639 = vmatprep.mubr.f32.mxu0 %v364
      %640 = vmatmul.mubr.f32.gmra.mrb[0].mxu0 %v199
      %v641 = vpop.f32.mrb[0].mxu0
      %v642 = vadd.f32 %v330, %v641
      %v643 = vpop.f32.mrb[0].mxu0
      %644 = vmatprep.mubr.f32.mxu0 %v367
      %645 = vmatmul.mubr.f32.gmra.mrb[0].mxu0 %v201
      %v646 = vpop.f32.mrb[0].mxu0
      %v647 = vadd.f32 %v330, %v646
      %v648 = vpop.f32.mrb[0].mxu0
      %649 = vmatprep.mubr.f32.mxu0 %v370
      %650 = vmatmul.mubr.f32.gmra.mrb[0].mxu0 %v203
      %v651 = vpop.f32.mrb[0].mxu0
      %v652 = vadd.f32 %v330, %v651
      %v653 = vpop.f32.mrb[0].mxu0
      %654 = vmatprep.mubr.f32.mxu0 %v373
      %655 = vmatmul.mubr.f32.gmra.mrb[0].mxu0 %v205
      %v656 = vpop.f32.mrb[0].mxu0
      %v657 = vadd.f32 %v330, %v656
      %v658 = vpop.f32.mrb[0].mxu0
      %659 = vmatprep.mubr.f32.mxu0 %v376
      %660 = vmatmul.mubr.f32.gmra.mrb[0].mxu0 %v207
      %v661 = vpop.f32.mrb[0].mxu0
      %v662 = vadd.f32 %v330, %v661
      %v663 = vpop.f32.mrb[0].mxu0
      %664 = vmatprep.mubr.f32.mxu0 %v379
      %665 = vmatmul.mubr.f32.gmra.mrb[0].mxu0 %v209
      %v666 = vpop.f32.mrb[0].mxu0
      %v667 = vadd.f32 %v330, %v666
      %v668 = vpop.f32.mrb[0].mxu0
      %669 = vmatprep.mubr.f32.mxu0 %v382
      %670 = vmatmul.mubr.f32.gmra.mrb[0].mxu0 %v211
      %v671 = vpop.f32.mrb[0].mxu0
      %v672 = vadd.f32 %v330, %v671
      %v673 = vpop.f32.mrb[0].mxu0
      %674 = vmatprep.mubr.f32.mxu0 %v385
      %675 = vmatmul.mubr.f32.gmra.mrb[0].mxu0 %v213
      %v676 = vpop.f32.mrb[0].mxu0
      %v677 = vadd.f32 %v330, %v676
      %v678 = vpop.f32.mrb[0].mxu0
      %679 = vmatprep.mubr.f32.mxu0 %v388
      %680 = vmatmul.mubr.f32.gmra.mrb[0].mxu0 %v215
      %v681 = vpop.f32.mrb[0].mxu0
      %v682 = vadd.f32 %v330, %v681
      %v683 = vpop.f32.mrb[0].mxu0
      %684 = vmatprep.mubr.f32.mxu0 %v391
      %685 = vmatmul.mubr.f32.gmra.mrb[0].mxu0 %v217
      %v686 = vpop.f32.mrb[0].mxu0
      %v687 = vadd.f32 %v330, %v686
      %v688 = vpop.f32.mrb[0].mxu0
      %689 = vmatprep.mubr.f32.mxu0 %v394
      %690 = vmatmul.mubr.f32.gmra.mrb[0].mxu0 %v219
      %v691 = vpop.f32.mrb[0].mxu0
      %v692 = vadd.f32 %v330, %v691
      %v693 = vpop.f32.mrb[0].mxu0
      %694 = vmatprep.mubr.f32.mxu0 %v397
      %695 = vmatmul.mubr.f32.gmra.mrb[0].mxu0 %v221
      %v696 = vpop.f32.mrb[0].mxu0
      %v697 = vadd.f32 %v330, %v696
      %v698 = vpop.f32.mrb[0].mxu0
      %699 = vmatprep.mubr.f32.mxu0 %v400
      %700 = vmatmul.mubr.f32.gmra.mrb[0].mxu0 %v223
      %v701 = vpop.f32.mrb[0].mxu0
      %v702 = vadd.f32 %v330, %v701
      %v703 = vpop.f32.mrb[0].mxu0
      %704 = vmatprep.mubr.f32.mxu0 %v403
      %705 = vmatmul.mubr.f32.gmra.mrb[0].mxu0 %v225
      %v706 = vpop.f32.mrb[0].mxu0
      %v707 = vadd.f32 %v330, %v706
      %v708 = vpop.f32.mrb[0].mxu0
      %709 = vmatprep.mubr.f32.mxu0 %v406
      %710 = vmatmul.mubr.f32.gmra.mrb[0].mxu0 %v227
      %v711 = vpop.f32.mrb[0].mxu0
      %v712 = vadd.f32 %v330, %v711
      %v713 = vpop.f32.mrb[0].mxu0
      %714 = vmatprep.mubr.f32.mxu0 %v409
      %715 = vmatmul.mubr.f32.gmra.mrb[0].mxu0 %v229
      %v716 = vpop.f32.mrb[0].mxu0
      %v717 = vadd.f32 %v330, %v716
      %v718 = vpop.f32.mrb[0].mxu0
      %719 = vmatprep.mubr.f32.mxu0 %v412
      %720 = vmatmul.mubr.f32.gmra.mrb[0].mxu0 %v231
      %v721 = vpop.f32.mrb[0].mxu0
      %v722 = vadd.f32 %v330, %v721
      %v723 = vpop.f32.mrb[0].mxu0
      %724 = vmatprep.mubr.f32.mxu0 %v415
      %725 = vmatmul.mubr.f32.gmra.mrb[0].mxu0 %v233
      %v726 = vpop.f32.mrb[0].mxu0
      %v727 = vadd.f32 %v330, %v726
      %v728 = vpop.f32.mrb[0].mxu0
      %729 = vmatprep.mubr.f32.mxu0 %v418
      %730 = vmatmul.mubr.f32.gmra.mrb[0].mxu0 %v235
      %v731 = vpop.f32.mrb[0].mxu0
      %v732 = vadd.f32 %v330, %v731
      %v733 = vpop.f32.mrb[0].mxu0
      %734 = vmatprep.mubr.f32.mxu0 %v421
      %735 = vmatmul.mubr.f32.gmra.mrb[0].mxu0 %v237
      %v736 = vpop.f32.mrb[0].mxu0
      %v737 = vadd.f32 %v330, %v736
      %v738 = vpop.f32.mrb[0].mxu0
      %739 = vmatprep.mubr.f32.mxu0 %v424
      %740 = vmatmul.mubr.f32.gmra.mrb[0].mxu0 %v239
      %v741 = vpop.f32.mrb[0].mxu0
      %v742 = vadd.f32 %v330, %v741
      %v743 = vpop.f32.mrb[0].mxu0
      %744 = vmatprep.mubr.f32.mxu0 %v427
      %745 = vmatmul.mubr.f32.gmra.mrb[0].mxu0 %v241
      %v746 = vpop.f32.mrb[0].mxu0
      %v747 = vadd.f32 %v330, %v746
      %v748 = vpop.f32.mrb[0].mxu0
      %749 = vmatprep.mubr.f32.mxu0 %v430
      %750 = vmatmul.mubr.f32.gmra.mrb[0].mxu0 %v243
      %v751 = vpop.f32.mrb[0].mxu0
      %v752 = vadd.f32 %v330, %v751
      %v753 = vpop.f32.mrb[0].mxu0
      %754 = vmatprep.mubr.f32.mxu0 %v433
      %755 = vmatmul.mubr.f32.gmra.mrb[0].mxu0 %v245
      %v756 = vpop.f32.mrb[0].mxu0
      %v757 = vadd.f32 %v330, %v756
      %v758 = vpop.f32.mrb[0].mxu0
      %759 = vmatprep.mubr.f32.mxu0 %v436
      %760 = vmatmul.mubr.f32.gmra.mrb[0].mxu0 %v247
      %v761 = vpop.f32.mrb[0].mxu0
      %v762 = vadd.f32 %v330, %v761
      %v763 = vpop.f32.mrb[0].mxu0
      %764 = vmatprep.mubr.f32.mxu0 %v439
      %765 = vmatmul.mubr.f32.gmra.mrb[0].mxu0 %v249
      %v766 = vpop.f32.mrb[0].mxu0
      %v767 = vadd.f32 %v330, %v766
      %v768 = vpop.f32.mrb[0].mxu0
      %769 = vmatprep.mubr.f32.mxu0 %v442
      %770 = vmatmul.mubr.f32.gmra.mrb[0].mxu0 %v251
      %v771 = vpop.f32.mrb[0].mxu0
      %v772 = vadd.f32 %v330, %v771
      %v773 = vpop.f32.mrb[0].mxu0
      %774 = vmatprep.mubr.f32.mxu0 %v445
      %775 = vmatmul.mubr.f32.gmra.mrb[0].mxu0 %v253
      %v776 = vpop.f32.mrb[0].mxu0
      %v777 = vadd.f32 %v330, %v776
      %v778 = vpop.f32.mrb[0].mxu0
      %779 = vmatprep.mubr.f32.mxu0 %v448
      %780 = vmatmul.mubr.f32.gmra.mrb[0].mxu0 %v255
      %v781 = vpop.f32.mrb[0].mxu0
      %v782 = vadd.f32 %v330, %v781
      %v783 = vpop.f32.mrb[0].mxu0
      %784 = vmatprep.mubr.f32.mxu0 %v451
      %785 = vmatmul.mubr.f32.gmra.mrb[0].mxu0 %v257
      %v786 = vpop.f32.mrb[0].mxu0
      %v787 = vadd.f32 %v330, %v786
      %v788 = vpop.f32.mrb[0].mxu0
      %789 = vmatprep.mubr.f32.mxu0 %v454
      %790 = vmatmul.mubr.f32.gmra.mrb[0].mxu0 %v259
      %v791 = vpop.f32.mrb[0].mxu0
      %v792 = vadd.f32 %v330, %v791
      %v793 = vpop.f32.mrb[0].mxu0
      %794 = vmatprep.mubr.f32.mxu0 %v457
      %795 = vmatmul.mubr.f32.gmra.mrb[0].mxu0 %v261
      %v796 = vpop.f32.mrb[0].mxu0
      %v797 = vadd.f32 %v330, %v796
      %v798 = vpop.f32.mrb[0].mxu0
      %799 = vmatprep.mubr.f32.mxu0 %v460
      %800 = vmatmul.mubr.f32.gmra.mrb[0].mxu0 %v263
      %v801 = vpop.f32.mrb[0].mxu0
      %v802 = vadd.f32 %v330, %v801
      %v803 = vpop.f32.mrb[0].mxu0
      %804 = vmatprep.mubr.f32.mxu0 %v463
      %805 = vmatmul.mubr.f32.gmra.mrb[0].mxu0 %v265
      %v806 = vpop.f32.mrb[0].mxu0
      %v807 = vadd.f32 %v330, %v806
      %v808 = vpop.f32.mrb[0].mxu0
      %809 = vmatprep.mubr.f32.mxu0 %v466
      %810 = vmatmul.mubr.f32.gmra.mrb[0].mxu0 %v267
      %v811 = vpop.f32.mrb[0].mxu0
      %v812 = vadd.f32 %v330, %v811
      %v813 = vpop.f32.mrb[0].mxu0
      %814 = vmatprep.mubr.f32.mxu0 %v469
      %815 = vmatmul.mubr.f32.gmra.mrb[0].mxu0 %v269
      %v816 = vpop.f32.mrb[0].mxu0
      %v817 = vadd.f32 %v330, %v816
      %v818 = vpop.f32.mrb[0].mxu0
      %819 = vmatprep.mubr.f32.mxu0 %v472
      %820 = vmatmul.mubr.f32.gmra.mrb[0].mxu0 %v271
      %v821 = vpop.f32.mrb[0].mxu0
      %v822 = vadd.f32 %v330, %v821
      %v823 = vpop.f32.mrb[0].mxu0
      %824 = vmatprep.mubr.f32.mxu0 %v475
      %825 = vmatmul.mubr.f32.gmra.mrb[0].mxu0 %v273
      %v826 = vpop.f32.mrb[0].mxu0
      %v827 = vadd.f32 %v330, %v826
      %v828 = vpop.f32.mrb[0].mxu0
      %829 = vmatprep.mubr.f32.mxu0 %v478
      %830 = vmatmul.mubr.f32.gmra.mrb[0].mxu0 %v275
      %v831 = vpop.f32.mrb[0].mxu0
      %v832 = vadd.f32 %v330, %v831
      %v833 = vpop.f32.mrb[0].mxu0
      %834 = vmatprep.mubr.f32.mxu0 %v481
      %835 = vmatmul.mubr.f32.gmra.mrb[0].mxu0 %v277
      %v836 = vpop.f32.mrb[0].mxu0
      %v837 = vadd.f32 %v330, %v836
      %v838 = vpop.f32.mrb[0].mxu0
      %839 = vmatprep.mubr.f32.mxu0 %v484
      %840 = vmatmul.mubr.f32.gmra.mrb[0].mxu0 %v279
      %v841 = vpop.f32.mrb[0].mxu0
      %v842 = vadd.f32 %v330, %v841
      %v843 = vpop.f32.mrb[0].mxu0
      %844 = vmatprep.mubr.f32.mxu0 %v487
      %845 = vmatmul.mubr.f32.gmra.mrb[0].mxu0 %v281
      %v846 = vpop.f32.mrb[0].mxu0
      %v847 = vadd.f32 %v330, %v846
      %v848 = vpop.f32.mrb[0].mxu0
      %849 = vmatprep.mubr.f32.mxu0 %v490
      %850 = vmatmul.mubr.f32.gmra.mrb[0].mxu0 %v283
      %v851 = vpop.f32.mrb[0].mxu0
      %v852 = vadd.f32 %v330, %v851
      %v853 = vpop.f32.mrb[0].mxu0
      %854 = vmatprep.mubr.f32.mxu0 %v493
      %855 = vmatmul.mubr.f32.gmra.mrb[0].mxu0 %v285
      %v856 = vpop.f32.mrb[0].mxu0
      %v857 = vadd.f32 %v330, %v856
      %v858 = vpop.f32.mrb[0].mxu0
      %859 = vmatprep.mubr.f32.mxu0 %v496
      %860 = vmatmul.mubr.f32.gmra.mrb[0].mxu0 %v287
      %v861 = vpop.f32.mrb[0].mxu0
      %v862 = vadd.f32 %v330, %v861
      %v863 = vpop.f32.mrb[0].mxu0
      %864 = vmatprep.mubr.f32.mxu0 %v499
      %865 = vmatmul.mubr.f32.gmra.mrb[0].mxu0 %v289
      %v866 = vpop.f32.mrb[0].mxu0
      %v867 = vadd.f32 %v330, %v866
      %v868 = vpop.f32.mrb[0].mxu0
      %869 = vmatprep.mubr.f32.mxu0 %v502
      %870 = vmatmul.mubr.f32.gmra.mrb[0].mxu0 %v291
      %v871 = vpop.f32.mrb[0].mxu0
      %v872 = vadd.f32 %v330, %v871
      %v873 = vpop.f32.mrb[0].mxu0
      %874 = vmatprep.mubr.f32.mxu0 %v505
      %875 = vmatmul.mubr.f32.gmra.mrb[0].mxu0 %v293
      %v876 = vpop.f32.mrb[0].mxu0
      %v877 = vadd.f32 %v330, %v876
      %v878 = vpop.f32.mrb[0].mxu0
      %879 = vmatprep.mubr.f32.mxu0 %v508
      %880 = vmatmul.mubr.f32.gmra.mrb[0].mxu0 %v295
      %v881 = vpop.f32.mrb[0].mxu0
      %v882 = vadd.f32 %v330, %v881
      %v883 = vpop.f32.mrb[0].mxu0
      %884 = vmatprep.mubr.f32.mxu0 %v511
      %885 = vmatmul.mubr.f32.gmra.mrb[0].mxu0 %v297
      %v886 = vpop.f32.mrb[0].mxu0
      %v887 = vadd.f32 %v330, %v886
      %v888 = vpop.f32.mrb[0].mxu0
      %889 = vmatprep.mubr.f32.mxu0 %v514
      %890 = vmatmul.mubr.f32.gmra.mrb[0].mxu0 %v299
      %v891 = vpop.f32.mrb[0].mxu0
      %v892 = vadd.f32 %v330, %v891
      %v893 = vpop.f32.mrb[0].mxu0
      %894 = vmatprep.mubr.f32.mxu0 %v517
      %895 = vmatmul.mubr.f32.gmra.mrb[0].mxu0 %v301
      %v896 = vpop.f32.mrb[0].mxu0
      %v897 = vadd.f32 %v330, %v896
      %v898 = vpop.f32.mrb[0].mxu0
      %899 = vmatprep.mubr.f32.mxu0 %v520
      %900 = vmatmul.mubr.f32.gmra.mrb[0].mxu0 %v303
      %v901 = vpop.f32.mrb[0].mxu0
      %v902 = vadd.f32 %v330, %v901
      %v903 = vpop.f32.mrb[0].mxu0
      %904 = vmatprep.mubr.f32.mxu0 %v523
      %905 = vmatmul.mubr.f32.gmra.mrb[0].mxu0 %v305
      %v906 = vpop.f32.mrb[0].mxu0
      %v907 = vadd.f32 %v330, %v906
      %v908 = vpop.f32.mrb[0].mxu0
      %909 = vdwg.mxu0
      %vm910 = vcmask 7168
      %911 = vst.msk [vmem:[%s177] sm:$0xff] %vm910, %v592
      %912 = vst.msk [vmem:[%s177 + $0x8] sm:$0xff] %vm910, %v597
      %913 = vst.msk [vmem:[%s177 + $0x10] sm:$0xff] %vm910, %v602
      %914 = vst.msk [vmem:[%s177 + $0x18] sm:$0xff] %vm910, %v607
      %915 = vst.msk [vmem:[%s177 + $0x20] sm:$0xff] %vm910, %v612
      %916 = vst.msk [vmem:[%s177 + $0x28] sm:$0xff] %vm910, %v617
      %917 = vst.msk [vmem:[%s177 + $0x30] sm:$0xff] %vm910, %v622
      %918 = vst.msk [vmem:[%s177 + $0x38] sm:$0xff] %vm910, %v627
      %919 = vst.msk [vmem:[%s177 + $0x40] sm:$0xff] %vm910, %v632
      %920 = vst.msk [vmem:[%s177 + $0x48] sm:$0xff] %vm910, %v637
      %921 = vst.msk [vmem:[%s177 + $0x50] sm:$0xff] %vm910, %v642
      %922 = vst.msk [vmem:[%s177 + $0x58] sm:$0xff] %vm910, %v647
      %923 = vst.msk [vmem:[%s177 + $0x60] sm:$0xff] %vm910, %v652
      %924 = vst.msk [vmem:[%s177 + $0x68] sm:$0xff] %vm910, %v657
      %925 = vst.msk [vmem:[%s177 + $0x70] sm:$0xff] %vm910, %v662
      %926 = vst.msk [vmem:[%s177 + $0x78] sm:$0xff] %vm910, %v667
      %927 = vst.msk [vmem:[%s177 + $0x80] sm:$0xff] %vm910, %v672
      %928 = vst.msk [vmem:[%s177 + $0x88] sm:$0xff] %vm910, %v677
      %929 = vst.msk [vmem:[%s177 + $0x90] sm:$0xff] %vm910, %v682
      %930 = vst.msk [vmem:[%s177 + $0x98] sm:$0xff] %vm910, %v687
      %931 = vst.msk [vmem:[%s177 + $0xa0] sm:$0xff] %vm910, %v692
      %932 = vst.msk [vmem:[%s177 + $0xa8] sm:$0xff] %vm910, %v697
      %933 = vst.msk [vmem:[%s177 + $0xb0] sm:$0xff] %vm910, %v702
      %934 = vst.msk [vmem:[%s177 + $0xb8] sm:$0xff] %vm910, %v707
      %935 = vst.msk [vmem:[%s177 + $0xc0] sm:$0xff] %vm910, %v712
      %936 = vst.msk [vmem:[%s177 + $0xc8] sm:$0xff] %vm910, %v717
      %937 = vst.msk [vmem:[%s177 + $0xd0] sm:$0xff] %vm910, %v722
      %938 = vst.msk [vmem:[%s177 + $0xd8] sm:$0xff] %vm910, %v727
      %939 = vst.msk [vmem:[%s177 + $0xe0] sm:$0xff] %vm910, %v732
      %940 = vst.msk [vmem:[%s177 + $0xe8] sm:$0xff] %vm910, %v737
      %941 = vst.msk [vmem:[%s177 + $0xf0] sm:$0xff] %vm910, %v742
      %942 = vst.msk [vmem:[%s177 + $0xf8] sm:$0xff] %vm910, %v747
      %943 = vst.msk [vmem:[%s177 + $0x100] sm:$0xff] %vm910, %v752
      %944 = vst.msk [vmem:[%s177 + $0x108] sm:$0xff] %vm910, %v757
      %945 = vst.msk [vmem:[%s177 + $0x110] sm:$0xff] %vm910, %v762
      %946 = vst.msk [vmem:[%s177 + $0x118] sm:$0xff] %vm910, %v767
      %947 = vst.msk [vmem:[%s177 + $0x120] sm:$0xff] %vm910, %v772
      %948 = vst.msk [vmem:[%s177 + $0x128] sm:$0xff] %vm910, %v777
      %949 = vst.msk [vmem:[%s177 + $0x130] sm:$0xff] %vm910, %v782
      %950 = vst.msk [vmem:[%s177 + $0x138] sm:$0xff] %vm910, %v787
      %951 = vst.msk [vmem:[%s177 + $0x140] sm:$0xff] %vm910, %v792
      %952 = vst.msk [vmem:[%s177 + $0x148] sm:$0xff] %vm910, %v797
      %953 = vst.msk [vmem:[%s177 + $0x150] sm:$0xff] %vm910, %v802
      %954 = vst.msk [vmem:[%s177 + $0x158] sm:$0xff] %vm910, %v807
      %955 = vst.msk [vmem:[%s177 + $0x160] sm:$0xff] %vm910, %v812
      %956 = vst.msk [vmem:[%s177 + $0x168] sm:$0xff] %vm910, %v817
      %957 = vst.msk [vmem:[%s177 + $0x170] sm:$0xff] %vm910, %v822
      %958 = vst.msk [vmem:[%s177 + $0x178] sm:$0xff] %vm910, %v827
      %959 = vst.msk [vmem:[%s177 + $0x180] sm:$0xff] %vm910, %v832
      %960 = vst.msk [vmem:[%s177 + $0x188] sm:$0xff] %vm910, %v837
      %961 = vst.msk [vmem:[%s177 + $0x190] sm:$0xff] %vm910, %v842
      %962 = vst.msk [vmem:[%s177 + $0x198] sm:$0xff] %vm910, %v847
      %963 = vst.msk [vmem:[%s177 + $0x1a0] sm:$0xff] %vm910, %v852
      %964 = vst.msk [vmem:[%s177 + $0x1a8] sm:$0xff] %vm910, %v857
      %965 = vst.msk [vmem:[%s177 + $0x1b0] sm:$0xff] %vm910, %v862
      %966 = vst.msk [vmem:[%s177 + $0x1b8] sm:$0xff] %vm910, %v867
      %967 = vst.msk [vmem:[%s177 + $0x1c0] sm:$0xff] %vm910, %v872
      %968 = vst.msk [vmem:[%s177 + $0x1c8] sm:$0xff] %vm910, %v877
      %969 = vst.msk [vmem:[%s177 + $0x1d0] sm:$0xff] %vm910, %v882
      %970 = vst.msk [vmem:[%s177 + $0x1d8] sm:$0xff] %vm910, %v887
      %971 = vst.msk [vmem:[%s177 + $0x1e0] sm:$0xff] %vm910, %v892
      %972 = vst.msk [vmem:[%s177 + $0x1e8] sm:$0xff] %vm910, %v897
      %973 = vst.msk [vmem:[%s177 + $0x1f0] sm:$0xff] %vm910, %v902
      %974 = vst.msk [vmem:[%s177 + $0x1f8] sm:$0xff] %vm910, %v907
      %s975 = smul.u32 64, %s16
      %p976 = scmp.lt.s32.totalorder %s975, 255
      %s977 = scalar_select %p976, %s975, 255
      %s978 = smul.addr %s977, 8
      %s979 = scalar_lea.vmem %s3, %s978
      // Predicated region
      $region33: #{wavemix_sr_forward.16} parent=31 // pred_check
        %p980 = pneg %p102
      $region34: #{wavemix_sr_forward.16} parent=31 // pred_check_branch
        %982 = sbr.rel (%p980) target = $region36
      $region35: #{wavemix_sr_forward.16} parent=31 // pred_region
        %s983 = smul.u32 64, %s16
      $region36: #{wavemix_sr_forward.16} parent=31 // pred_fallthru
        _
    $region32: #{wavemix_sr_forward.16} parent=5 // pred_fallthru
      _
    %p984 = scmp.le.s32.totalorder 2, %s11
    // Predicated region
    $region37: #{wavemix_sr_forward.16} parent=5 // pred_check
      %p985 = pneg %p984
    $region38: #{wavemix_sr_forward.16} parent=5 // pred_check_branch
      %987 = sbr.rel (%p985) target = $region40
    $region39: #{wavemix_sr_forward.16} parent=5 // pred_region
      %s988 = ssub.s32 %s11, 2
      // Predicated region
      $region41: #{wavemix_sr_forward.16} parent=39 // pred_check
        %p989 = pneg %p108
      $region42: #{wavemix_sr_forward.16} parent=39 // pred_check_branch
        %991 = sbr.rel (%p989) target = $region44
      $region43: #{wavemix_sr_forward.16} parent=39 // pred_region
        %s992 = smul.u32 64, %s17
        %p993 = scmp.lt.s32.totalorder %s992, 255
        %s994 = scalar_select %p993, %s992, 255
        %s995 = smul.addr %s994, 8
        %s996 = scalar_lea.vmem %s3, %s995
      $region44: #{wavemix_sr_forward.16} parent=39 // pred_fallthru
        _
    $region40: #{wavemix_sr_forward.16} parent=5 // pred_fallthru
      _
  $region6: #{wavemix_sr_forward.16} parent=0 // loop_footer
    %s15 = sadd.s32 1, %s11
  $region7: #{wavemix_sr_forward.16} parent=0 // loop_footer_branch
    %10 = sbr.rel target = $region3
  $region8: #{wavemix_sr_forward.16} parent=0 // loop_exit
    _

// kernel: wavemix_sr_forward.17
$region0: #{wavemix_sr_forward.17}
  #allocation0 [shape = 'u32[]', space=smem, size = 0x4, offset = 0x4, fixed_abs, tag = 'smem constant byte address 0x4 - core index']
  #allocation1 [shape = 'u32[144,128]{1,0:T(1,128)}', space=vmem, size = 0x12000, scoped, tag = 'internal scratch']
  %s0 = inlined_call_operand.vmem [shape: f32[512,18], index: 0, kind: input, shape index: {}]
  %s1 = inlined_call_operand.vmem [shape: f32[18,8], index: 1, kind: input, shape index: {}]
  %s2 = inlined_call_operand.vmem [shape: f32[1,8], index: 2, kind: input, shape index: {}]
  %s3 = inlined_call_operand.vmem [shape: f32[512,8], index: 3, kind: output, shape index: {}]
  %s4 = sld [smem:[#allocation0]]
  $region22: #{wavemix_sr_forward.17} parent=0
    _
  %s6 = ssub.s32 1, %s4
  %s7 = scalar_select 0, %s6, %s4
  // Predicated region
  $region2: #{wavemix_sr_forward.17} parent=0 // pred_check
    _
  $region3: #{wavemix_sr_forward.17} parent=0 // pred_check_branch
    %9 = sbr.rel (0) target = $region5
  $region4: #{wavemix_sr_forward.17} parent=0 // pred_region
    _
  $region5: #{wavemix_sr_forward.17} parent=0 // pred_fallthru
    _
  // Predicated region
  $region6: #{wavemix_sr_forward.17} parent=0 // pred_check
    _
  $region7: #{wavemix_sr_forward.17} parent=0 // pred_check_branch
    %11 = sbr.rel (0) target = $region9
  $region8: #{wavemix_sr_forward.17} parent=0 // pred_region
    _
  $region9: #{wavemix_sr_forward.17} parent=0 // pred_fallthru
    _
  // Predicated region
  $region10: #{wavemix_sr_forward.17} parent=0 // pred_check
    _
  $region11: #{wavemix_sr_forward.17} parent=0 // pred_check_branch
    %13 = sbr.rel (0) target = $region13
  $region12: #{wavemix_sr_forward.17} parent=0 // pred_region
    _
  $region13: #{wavemix_sr_forward.17} parent=0 // pred_fallthru
    _
  %v14 = vld [vmem:[%s0] sm:$0xff]
  %v15 = vld [vmem:[%s0 + $0x8] sm:$0xff]
  %v16 = vld [vmem:[%s0 + $0x10] sm:$0xff]
  %v17 = vld [vmem:[%s0 + $0x18] sm:$0xff]
  %v18 = vld [vmem:[%s0 + $0x20] sm:$0xff]
  %v19 = vld [vmem:[%s0 + $0x28] sm:$0xff]
  %v20 = vld [vmem:[%s0 + $0x30] sm:$0xff]
  %v21 = vld [vmem:[%s0 + $0x38] sm:$0xff]
  %v22 = vld [vmem:[%s0 + $0x40] sm:$0xff]
  %v23 = vld [vmem:[%s0 + $0x48] sm:$0xff]
  %v24 = vld [vmem:[%s0 + $0x50] sm:$0xff]
  %v25 = vld [vmem:[%s0 + $0x58] sm:$0xff]
  %v26 = vld [vmem:[%s0 + $0x60] sm:$0xff]
  %v27 = vld [vmem:[%s0 + $0x68] sm:$0xff]
  %v28 = vld [vmem:[%s0 + $0x70] sm:$0xff]
  %v29 = vld [vmem:[%s0 + $0x78] sm:$0xff]
  %v30 = vld [vmem:[%s0 + $0x80] sm:$0xff]
  %v31 = vld [vmem:[%s0 + $0x88] sm:$0xff]
  %v32 = vld [vmem:[%s0 + $0x90] sm:$0xff]
  %v33 = vld [vmem:[%s0 + $0x98] sm:$0xff]
  %v34 = vld [vmem:[%s0 + $0xa0] sm:$0xff]
  %v35 = vld [vmem:[%s0 + $0xa8] sm:$0xff]
  %v36 = vld [vmem:[%s0 + $0xb0] sm:$0xff]
  %v37 = vld [vmem:[%s0 + $0xb8] sm:$0xff]
  %v38 = vld [vmem:[%s0 + $0xc0] sm:$0xff]
  %v39 = vld [vmem:[%s0 + $0xc8] sm:$0xff]
  %v40 = vld [vmem:[%s0 + $0xd0] sm:$0xff]
  %v41 = vld [vmem:[%s0 + $0xd8] sm:$0xff]
  %v42 = vld [vmem:[%s0 + $0xe0] sm:$0xff]
  %v43 = vld [vmem:[%s0 + $0xe8] sm:$0xff]
  %v44 = vld [vmem:[%s0 + $0xf0] sm:$0xff]
  %v45 = vld [vmem:[%s0 + $0xf8] sm:$0xff]
  %v46 = vld [vmem:[%s0 + $0x100] sm:$0xff]
  %v47 = vld [vmem:[%s0 + $0x108] sm:$0xff]
  %v48 = vld [vmem:[%s0 + $0x110] sm:$0xff]
  %v49 = vld [vmem:[%s0 + $0x118] sm:$0xff]
  %v50 = vld [vmem:[%s0 + $0x120] sm:$0xff]
  %v51 = vld [vmem:[%s0 + $0x128] sm:$0xff]
  %v52 = vld [vmem:[%s0 + $0x130] sm:$0xff]
  %v53 = vld [vmem:[%s0 + $0x138] sm:$0xff]
  %v54 = vld [vmem:[%s0 + $0x140] sm:$0xff]
  %v55 = vld [vmem:[%s0 + $0x148] sm:$0xff]
  %v56 = vld [vmem:[%s0 + $0x150] sm:$0xff]
  %v57 = vld [vmem:[%s0 + $0x158] sm:$0xff]
  %v58 = vld [vmem:[%s0 + $0x160] sm:$0xff]
  %v59 = vld [vmem:[%s0 + $0x168] sm:$0xff]
  %v60 = vld [vmem:[%s0 + $0x170] sm:$0xff]
  %v61 = vld [vmem:[%s0 + $0x178] sm:$0xff]
  %v62 = vld [vmem:[%s0 + $0x180] sm:$0xff]
  %v63 = vld [vmem:[%s0 + $0x188] sm:$0xff]
  %v64 = vld [vmem:[%s0 + $0x190] sm:$0xff]
  %v65 = vld [vmem:[%s0 + $0x198] sm:$0xff]
  %v66 = vld [vmem:[%s0 + $0x1a0] sm:$0xff]
  %v67 = vld [vmem:[%s0 + $0x1a8] sm:$0xff]
  %v68 = vld [vmem:[%s0 + $0x1b0] sm:$0xff]
  %v69 = vld [vmem:[%s0 + $0x1b8] sm:$0xff]
  %v70 = vld [vmem:[%s0 + $0x1c0] sm:$0xff]
  %v71 = vld [vmem:[%s0 + $0x1c8] sm:$0xff]
  %v72 = vld [vmem:[%s0 + $0x1d0] sm:$0xff]
  %v73 = vld [vmem:[%s0 + $0x1d8] sm:$0xff]
  %v74 = vld [vmem:[%s0 + $0x1e0] sm:$0xff]
  %v75 = vld [vmem:[%s0 + $0x1e8] sm:$0xff]
  %v76 = vld [vmem:[%s0 + $0x1f0] sm:$0xff]
  %v77 = vld [vmem:[%s0 + $0x1f8] sm:$0xff]
  %v78 = vld [vmem:[%s1] sm:$0xff]
  %v79 = vld [vmem:[%s1 + $0x8] sm:$0xff]
  %v80 = vld [vmem:[%s1 + $0x10] sm:$0x3]
  %v81 = vld [vmem:[%s2] sm:$0x1]
  %v83 = vlaneseq
  %v84 = vshrl.u32 %v83, 7
  %v85 = vsub.s32 0, %v84
  %v86 = vrot.slane %v81, %v85
  %vm88 = vcmask 146432
  %v90 = vsel %vm88, %v14, 0
  %v93 = vsel %vm88, %v15, 0
  %v96 = vsel %vm88, %v16, 0
  %v99 = vsel %vm88, %v17, 0
  %v102 = vsel %vm88, %v18, 0
  %v105 = vsel %vm88, %v19, 0
  %v108 = vsel %vm88, %v20, 0
  %v111 = vsel %vm88, %v21, 0
  %v114 = vsel %vm88, %v22, 0
  %v117 = vsel %vm88, %v23, 0
  %v120 = vsel %vm88, %v24, 0
  %v123 = vsel %vm88, %v25, 0
  %v126 = vsel %vm88, %v26, 0
  %v129 = vsel %vm88, %v27, 0
  %v132 = vsel %vm88, %v28, 0
  %v135 = vsel %vm88, %v29, 0
  %v138 = vsel %vm88, %v30, 0
  %v141 = vsel %vm88, %v31, 0
  %v144 = vsel %vm88, %v32, 0
  %v147 = vsel %vm88, %v33, 0
  %v150 = vsel %vm88, %v34, 0
  %v153 = vsel %vm88, %v35, 0
  %v156 = vsel %vm88, %v36, 0
  %v159 = vsel %vm88, %v37, 0
  %v162 = vsel %vm88, %v38, 0
  %v165 = vsel %vm88, %v39, 0
  %v168 = vsel %vm88, %v40, 0
  %v171 = vsel %vm88, %v41, 0
  %v174 = vsel %vm88, %v42, 0
  %v177 = vsel %vm88, %v43, 0
  %v180 = vsel %vm88, %v44, 0
  %v183 = vsel %vm88, %v45, 0
  %v186 = vsel %vm88, %v46, 0
  %v189 = vsel %vm88, %v47, 0
  %v192 = vsel %vm88, %v48, 0
  %v195 = vsel %vm88, %v49, 0
  %v198 = vsel %vm88, %v50, 0
  %v201 = vsel %vm88, %v51, 0
  %v204 = vsel %vm88, %v52, 0
  %v207 = vsel %vm88, %v53, 0
  %v210 = vsel %vm88, %v54, 0
  %v213 = vsel %vm88, %v55, 0
  %v216 = vsel %vm88, %v56, 0
  %v219 = vsel %vm88, %v57, 0
  %v222 = vsel %vm88, %v58, 0
  %v225 = vsel %vm88, %v59, 0
  %v228 = vsel %vm88, %v60, 0
  %v231 = vsel %vm88, %v61, 0
  %v234 = vsel %vm88, %v62, 0
  %v237 = vsel %vm88, %v63, 0
  %v240 = vsel %vm88, %v64, 0
  %v243 = vsel %vm88, %v65, 0
  %v246 = vsel %vm88, %v66, 0
  %v249 = vsel %vm88, %v67, 0
  %v252 = vsel %vm88, %v68, 0
  %v255 = vsel %vm88, %v69, 0
  %v258 = vsel %vm88, %v70, 0
  %v261 = vsel %vm88, %v71, 0
  %v264 = vsel %vm88, %v72, 0
  %v267 = vsel %vm88, %v73, 0
  %v270 = vsel %vm88, %v74, 0
  %v273 = vsel %vm88, %v75, 0
  %v276 = vsel %vm88, %v76, 0
  %v279 = vsel %vm88, %v77, 0
  %vm281 = vcmask 1041408
  %v283 = vsel %vm281, %v80, 0
  %285 = vmatprep.subr.mxu0 0.0
  %286 = vmatpush1.msra.mxu0 %v78
  %287 = vmatprep.subr.mxu0 0.0
  %288 = vmatpush1.msra.mxu0 %v79
  %289 = vmatprep.subr.mxu0 0.0
  %290 = vmatpush1.msra.mxu0 %v283
  %291 = vmatprep.subr.mxu0 0.0
  %292 = vmatpush1.msra.mxu0 0.0
  %293 = vmatprep.subr.mxu0 0.0
  %294 = vmatpush1.msra.mxu0 0.0
  %295 = vmatprep.subr.mxu0 0.0
  %296 = vmatpush1.msra.mxu0 0.0
  %297 = vmatprep.subr.mxu0 0.0
  %298 = vmatpush1.msra.mxu0 0.0
  %299 = vmatprep.subr.mxu0 0.0
  %300 = vmatpush1.msra.mxu0 0.0
  %301 = vmatprep.subr.mxu0 0.0
  %302 = vmatpush1.msra.mxu0 0.0
  %303 = vmatprep.subr.mxu0 0.0
  %304 = vmatpush1.msra.mxu0 0.0
  %305 = vmatprep.subr.mxu0 0.0
  %306 = vmatpush1.msra.mxu0 0.0
  %307 = vmatprep.subr.mxu0 0.0
  %308 = vmatpush1.msra.mxu0 0.0
  %309 = vmatprep.subr.mxu0 0.0
  %310 = vmatpush1.msra.mxu0 0.0
  %311 = vmatprep.subr.mxu0 0.0
  %312 = vmatpush1.msra.mxu0 0.0
  %313 = vmatprep.subr.mxu0 0.0
  %314 = vmatpush1.msra.mxu0 0.0
  %315 = vmatprep.subr.mxu0 0.0
  %316 = vmatpush1.msra.mxu0 0.0
  %317 = vmatprep.subr.mxu0 0.0
  %318 = vmatpush1.msra.mxu0 0.0
  %319 = vmatprep.subr.mxu0 0.0
  %320 = vmatpush1.msra.mxu0 0.0
  %321 = vmatprep.subr.mxu0 0.0
  %322 = vmatpush1.msra.mxu0 0.0
  %323 = vmatprep.subr.mxu0 0.0
  %324 = vmatpush1.msra.mxu0 0.0
  %325 = vmatprep.subr.mxu0 0.0
  %326 = vmatpush1.msra.mxu0 0.0
  %327 = vmatprep.subr.mxu0 0.0
  %328 = vmatpush1.msra.mxu0 0.0
  %329 = vmatprep.subr.mxu0 0.0
  %330 = vmatpush1.msra.mxu0 0.0
  %331 = vmatprep.subr.mxu0 0.0
  %332 = vmatpush1.msra.mxu0 0.0
  %333 = vmatprep.subr.mxu0 0.0
  %334 = vmatpush1.msra.mxu0 0.0
  %335 = vmatprep.subr.mxu0 0.0
  %336 = vmatpush1.msra.mxu0 0.0
  %337 = vmatprep.subr.mxu0 0.0
  %338 = vmatpush1.msra.mxu0 0.0
  %339 = vmatprep.subr.mxu0 0.0
  %340 = vmatpush1.msra.mxu0 0.0
  %341 = vmatprep.subr.mxu0 0.0
  %342 = vmatpush1.msra.mxu0 0.0
  %343 = vmatprep.subr.mxu0 0.0
  %344 = vmatpush1.msra.mxu0 0.0
  %345 = vmatprep.subr.mxu0 0.0
  %346 = vmatpush1.msra.mxu0 0.0
  %347 = vmatprep.subr.mxu0 0.0
  %348 = vmatpush1.msra.mxu0 0.0
  %349 = vmatprep.mubr.f32.mxu0 0.0
  %350 = vmatmul.mubr.f32.gmra.mrb[0].mxu0 %v90
  %v351 = vpop.f32.mrb[0].mxu0
  %v352 = vadd.f32 %v86, %v351
  %v353 = vpop.f32.mrb[0].mxu0
  %354 = vmatprep.mubr.f32.mxu0 0.0
  %355 = vmatmul.mubr.f32.gmra.mrb[0].mxu0 %v93
  %v356 = vpop.f32.mrb[0].mxu0
  %v357 = vadd.f32 %v86, %v356
  %v358 = vpop.f32.mrb[0].mxu0
  %359 = vmatprep.mubr.f32.mxu0 0.0
  %360 = vmatmul.mubr.f32.gmra.mrb[0].mxu0 %v96
  %v361 = vpop.f32.mrb[0].mxu0
  %v362 = vadd.f32 %v86, %v361
  %v363 = vpop.f32.mrb[0].mxu0
  %364 = vmatprep.mubr.f32.mxu0 0.0
  %365 = vmatmul.mubr.f32.gmra.mrb[0].mxu0 %v99
  %v366 = vpop.f32.mrb[0].mxu0
  %v367 = vadd.f32 %v86, %v366
  %v368 = vpop.f32.mrb[0].mxu0
  %369 = vmatprep.mubr.f32.mxu0 0.0
  %370 = vmatmul.mubr.f32.gmra.mrb[0].mxu0 %v102
  %v371 = vpop.f32.mrb[0].mxu0
  %v372 = vadd.f32 %v86, %v371
  %v373 = vpop.f32.mrb[0].mxu0
  %374 = vmatprep.mubr.f32.mxu0 0.0
  %375 = vmatmul.mubr.f32.gmra.mrb[0].mxu0 %v105
  %v376 = vpop.f32.mrb[0].mxu0
  %v377 = vadd.f32 %v86, %v376
  %v378 = vpop.f32.mrb[0].mxu0
  %379 = vmatprep.mubr.f32.mxu0 0.0
  %380 = vmatmul.mubr.f32.gmra.mrb[0].mxu0 %v108
  %v381 = vpop.f32.mrb[0].mxu0
  %v382 = vadd.f32 %v86, %v381
  %v383 = vpop.f32.mrb[0].mxu0
  %384 = vmatprep.mubr.f32.mxu0 0.0
  %385 = vmatmul.mubr.f32.gmra.mrb[0].mxu0 %v111
  %v386 = vpop.f32.mrb[0].mxu0
  %v387 = vadd.f32 %v86, %v386
  %v388 = vpop.f32.mrb[0].mxu0
  %389 = vmatprep.mubr.f32.mxu0 0.0
  %390 = vmatmul.mubr.f32.gmra.mrb[0].mxu0 %v114
  %v391 = vpop.f32.mrb[0].mxu0
  %v392 = vadd.f32 %v86, %v391
  %v393 = vpop.f32.mrb[0].mxu0
  %394 = vmatprep.mubr.f32.mxu0 0.0
  %395 = vmatmul.mubr.f32.gmra.mrb[0].mxu0 %v117
  %v396 = vpop.f32.mrb[0].mxu0
  %v397 = vadd.f32 %v86, %v396
  %v398 = vpop.f32.mrb[0].mxu0
  %399 = vmatprep.mubr.f32.mxu0 0.0
  %400 = vmatmul.mubr.f32.gmra.mrb[0].mxu0 %v120
  %v401 = vpop.f32.mrb[0].mxu0
  %v402 = vadd.f32 %v86, %v401
  %v403 = vpop.f32.mrb[0].mxu0
  %404 = vmatprep.mubr.f32.mxu0 0.0
  %405 = vmatmul.mubr.f32.gmra.mrb[0].mxu0 %v123
  %v406 = vpop.f32.mrb[0].mxu0
  %v407 = vadd.f32 %v86, %v406
  %v408 = vpop.f32.mrb[0].mxu0
  %409 = vmatprep.mubr.f32.mxu0 0.0
  %410 = vmatmul.mubr.f32.gmra.mrb[0].mxu0 %v126
  %v411 = vpop.f32.mrb[0].mxu0
  %v412 = vadd.f32 %v86, %v411
  %v413 = vpop.f32.mrb[0].mxu0
  %414 = vmatprep.mubr.f32.mxu0 0.0
  %415 = vmatmul.mubr.f32.gmra.mrb[0].mxu0 %v129
  %v416 = vpop.f32.mrb[0].mxu0
  %v417 = vadd.f32 %v86, %v416
  %v418 = vpop.f32.mrb[0].mxu0
  %419 = vmatprep.mubr.f32.mxu0 0.0
  %420 = vmatmul.mubr.f32.gmra.mrb[0].mxu0 %v132
  %v421 = vpop.f32.mrb[0].mxu0
  %v422 = vadd.f32 %v86, %v421
  %v423 = vpop.f32.mrb[0].mxu0
  %424 = vmatprep.mubr.f32.mxu0 0.0
  %425 = vmatmul.mubr.f32.gmra.mrb[0].mxu0 %v135
  %v426 = vpop.f32.mrb[0].mxu0
  %v427 = vadd.f32 %v86, %v426
  %v428 = vpop.f32.mrb[0].mxu0
  %429 = vmatprep.mubr.f32.mxu0 0.0
  %430 = vmatmul.mubr.f32.gmra.mrb[0].mxu0 %v138
  %v431 = vpop.f32.mrb[0].mxu0
  %v432 = vadd.f32 %v86, %v431
  %v433 = vpop.f32.mrb[0].mxu0
  %434 = vmatprep.mubr.f32.mxu0 0.0
  %435 = vmatmul.mubr.f32.gmra.mrb[0].mxu0 %v141
  %v436 = vpop.f32.mrb[0].mxu0
  %v437 = vadd.f32 %v86, %v436
  %v438 = vpop.f32.mrb[0].mxu0
  %439 = vmatprep.mubr.f32.mxu0 0.0
  %440 = vmatmul.mubr.f32.gmra.mrb[0].mxu0 %v144
  %v441 = vpop.f32.mrb[0].mxu0
  %v442 = vadd.f32 %v86, %v441
  %v443 = vpop.f32.mrb[0].mxu0
  %444 = vmatprep.mubr.f32.mxu0 0.0
  %445 = vmatmul.mubr.f32.gmra.mrb[0].mxu0 %v147
  %v446 = vpop.f32.mrb[0].mxu0
  %v447 = vadd.f32 %v86, %v446
  %v448 = vpop.f32.mrb[0].mxu0
  %449 = vmatprep.mubr.f32.mxu0 0.0
  %450 = vmatmul.mubr.f32.gmra.mrb[0].mxu0 %v150
  %v451 = vpop.f32.mrb[0].mxu0
  %v452 = vadd.f32 %v86, %v451
  %v453 = vpop.f32.mrb[0].mxu0
  %454 = vmatprep.mubr.f32.mxu0 0.0
  %455 = vmatmul.mubr.f32.gmra.mrb[0].mxu0 %v153
  %v456 = vpop.f32.mrb[0].mxu0
  %v457 = vadd.f32 %v86, %v456
  %v458 = vpop.f32.mrb[0].mxu0
  %459 = vmatprep.mubr.f32.mxu0 0.0
  %460 = vmatmul.mubr.f32.gmra.mrb[0].mxu0 %v156
  %v461 = vpop.f32.mrb[0].mxu0
  %v462 = vadd.f32 %v86, %v461
  %v463 = vpop.f32.mrb[0].mxu0
  %464 = vmatprep.mubr.f32.mxu0 0.0
  %465 = vmatmul.mubr.f32.gmra.mrb[0].mxu0 %v159
  %v466 = vpop.f32.mrb[0].mxu0
  %v467 = vadd.f32 %v86, %v466
  %v468 = vpop.f32.mrb[0].mxu0
  %469 = vmatprep.mubr.f32.mxu0 0.0
  %470 = vmatmul.mubr.f32.gmra.mrb[0].mxu0 %v162
  %v471 = vpop.f32.mrb[0].mxu0
  %v472 = vadd.f32 %v86, %v471
  %v473 = vpop.f32.mrb[0].mxu0
  %474 = vmatprep.mubr.f32.mxu0 0.0
  %475 = vmatmul.mubr.f32.gmra.mrb[0].mxu0 %v165
  %v476 = vpop.f32.mrb[0].mxu0
  %v477 = vadd.f32 %v86, %v476
  %v478 = vpop.f32.mrb[0].mxu0
  %479 = vmatprep.mubr.f32.mxu0 0.0
  %480 = vmatmul.mubr.f32.gmra.mrb[0].mxu0 %v168
  %v481 = vpop.f32.mrb[0].mxu0
  %v482 = vadd.f32 %v86, %v481
  %v483 = vpop.f32.mrb[0].mxu0
  %484 = vmatprep.mubr.f32.mxu0 0.0
  %485 = vmatmul.mubr.f32.gmra.mrb[0].mxu0 %v171
  %v486 = vpop.f32.mrb[0].mxu0
  %v487 = vadd.f32 %v86, %v486
  %v488 = vpop.f32.mrb[0].mxu0
  %489 = vmatprep.mubr.f32.mxu0 0.0
  %490 = vmatmul.mubr.f32.gmra.mrb[0].mxu0 %v174
  %v491 = vpop.f32.mrb[0].mxu0
  %v492 = vadd.f32 %v86, %v491
  %v493 = vpop.f32.mrb[0].mxu0
  %494 = vmatprep.mubr.f32.mxu0 0.0
  %495 = vmatmul.mubr.f32.gmra.mrb[0].mxu0 %v177
  %v496 = vpop.f32.mrb[0].mxu0
  %v497 = vadd.f32 %v86, %v496
  %v498 = vpop.f32.mrb[0].mxu0
  %499 = vmatprep.mubr.f32.mxu0 0.0
  %500 = vmatmul.mubr.f32.gmra.mrb[0].mxu0 %v180
  %v501 = vpop.f32.mrb[0].mxu0
  %v502 = vadd.f32 %v86, %v501
  %v503 = vpop.f32.mrb[0].mxu0
  %504 = vmatprep.mubr.f32.mxu0 0.0
  %505 = vmatmul.mubr.f32.gmra.mrb[0].mxu0 %v183
  %v506 = vpop.f32.mrb[0].mxu0
  %v507 = vadd.f32 %v86, %v506
  %v508 = vpop.f32.mrb[0].mxu0
  %509 = vmatprep.mubr.f32.mxu0 0.0
  %510 = vmatmul.mubr.f32.gmra.mrb[0].mxu0 %v186
  %v511 = vpop.f32.mrb[0].mxu0
  %v512 = vadd.f32 %v86, %v511
  %v513 = vpop.f32.mrb[0].mxu0
  %514 = vmatprep.mubr.f32.mxu0 0.0
  %515 = vmatmul.mubr.f32.gmra.mrb[0].mxu0 %v189
  %v516 = vpop.f32.mrb[0].mxu0
  %v517 = vadd.f32 %v86, %v516
  %v518 = vpop.f32.mrb[0].mxu0
  %519 = vmatprep.mubr.f32.mxu0 0.0
  %520 = vmatmul.mubr.f32.gmra.mrb[0].mxu0 %v192
  %v521 = vpop.f32.mrb[0].mxu0
  %v522 = vadd.f32 %v86, %v521
  %v523 = vpop.f32.mrb[0].mxu0
  %524 = vmatprep.mubr.f32.mxu0 0.0
  %525 = vmatmul.mubr.f32.gmra.mrb[0].mxu0 %v195
  %v526 = vpop.f32.mrb[0].mxu0
  %v527 = vadd.f32 %v86, %v526
  %v528 = vpop.f32.mrb[0].mxu0
  %529 = vmatprep.mubr.f32.mxu0 0.0
  %530 = vmatmul.mubr.f32.gmra.mrb[0].mxu0 %v198
  %v531 = vpop.f32.mrb[0].mxu0
  %v532 = vadd.f32 %v86, %v531
  %v533 = vpop.f32.mrb[0].mxu0
  %534 = vmatprep.mubr.f32.mxu0 0.0
  %535 = vmatmul.mubr.f32.gmra.mrb[0].mxu0 %v201
  %v536 = vpop.f32.mrb[0].mxu0
  %v537 = vadd.f32 %v86, %v536
  %v538 = vpop.f32.mrb[0].mxu0
  %539 = vmatprep.mubr.f32.mxu0 0.0
  %540 = vmatmul.mubr.f32.gmra.mrb[0].mxu0 %v204
  %v541 = vpop.f32.mrb[0].mxu0
  %v542 = vadd.f32 %v86, %v541
  %v543 = vpop.f32.mrb[0].mxu0
  %544 = vmatprep.mubr.f32.mxu0 0.0
  %545 = vmatmul.mubr.f32.gmra.mrb[0].mxu0 %v207
  %v546 = vpop.f32.mrb[0].mxu0
  %v547 = vadd.f32 %v86, %v546
  %v548 = vpop.f32.mrb[0].mxu0
  %549 = vmatprep.mubr.f32.mxu0 0.0
  %550 = vmatmul.mubr.f32.gmra.mrb[0].mxu0 %v210
  %v551 = vpop.f32.mrb[0].mxu0
  %v552 = vadd.f32 %v86, %v551
  %v553 = vpop.f32.mrb[0].mxu0
  %554 = vmatprep.mubr.f32.mxu0 0.0
  %555 = vmatmul.mubr.f32.gmra.mrb[0].mxu0 %v213
  %v556 = vpop.f32.mrb[0].mxu0
  %v557 = vadd.f32 %v86, %v556
  %v558 = vpop.f32.mrb[0].mxu0
  %559 = vmatprep.mubr.f32.mxu0 0.0
  %560 = vmatmul.mubr.f32.gmra.mrb[0].mxu0 %v216
  %v561 = vpop.f32.mrb[0].mxu0
  %v562 = vadd.f32 %v86, %v561
  %v563 = vpop.f32.mrb[0].mxu0
  %564 = vmatprep.mubr.f32.mxu0 0.0
  %565 = vmatmul.mubr.f32.gmra.mrb[0].mxu0 %v219
  %v566 = vpop.f32.mrb[0].mxu0
  %v567 = vadd.f32 %v86, %v566
  %v568 = vpop.f32.mrb[0].mxu0
  %569 = vmatprep.mubr.f32.mxu0 0.0
  %570 = vmatmul.mubr.f32.gmra.mrb[0].mxu0 %v222
  %v571 = vpop.f32.mrb[0].mxu0
  %v572 = vadd.f32 %v86, %v571
  %v573 = vpop.f32.mrb[0].mxu0
  %574 = vmatprep.mubr.f32.mxu0 0.0
  %575 = vmatmul.mubr.f32.gmra.mrb[0].mxu0 %v225
  %v576 = vpop.f32.mrb[0].mxu0
  %v577 = vadd.f32 %v86, %v576
  %v578 = vpop.f32.mrb[0].mxu0
  %579 = vmatprep.mubr.f32.mxu0 0.0
  %580 = vmatmul.mubr.f32.gmra.mrb[0].mxu0 %v228
  %v581 = vpop.f32.mrb[0].mxu0
  %v582 = vadd.f32 %v86, %v581
  %v583 = vpop.f32.mrb[0].mxu0
  %584 = vmatprep.mubr.f32.mxu0 0.0
  %585 = vmatmul.mubr.f32.gmra.mrb[0].mxu0 %v231
  %v586 = vpop.f32.mrb[0].mxu0
  %v587 = vadd.f32 %v86, %v586
  %v588 = vpop.f32.mrb[0].mxu0
  %589 = vmatprep.mubr.f32.mxu0 0.0
  %590 = vmatmul.mubr.f32.gmra.mrb[0].mxu0 %v234
  %v591 = vpop.f32.mrb[0].mxu0
  %v592 = vadd.f32 %v86, %v591
  %v593 = vpop.f32.mrb[0].mxu0
  %594 = vmatprep.mubr.f32.mxu0 0.0
  %595 = vmatmul.mubr.f32.gmra.mrb[0].mxu0 %v237
  %v596 = vpop.f32.mrb[0].mxu0
  %v597 = vadd.f32 %v86, %v596
  %v598 = vpop.f32.mrb[0].mxu0
  %599 = vmatprep.mubr.f32.mxu0 0.0
  %600 = vmatmul.mubr.f32.gmra.mrb[0].mxu0 %v240
  %v601 = vpop.f32.mrb[0].mxu0
  %v602 = vadd.f32 %v86, %v601
  %v603 = vpop.f32.mrb[0].mxu0
  %604 = vmatprep.mubr.f32.mxu0 0.0
  %605 = vmatmul.mubr.f32.gmra.mrb[0].mxu0 %v243
  %v606 = vpop.f32.mrb[0].mxu0
  %v607 = vadd.f32 %v86, %v606
  %v608 = vpop.f32.mrb[0].mxu0
  %609 = vmatprep.mubr.f32.mxu0 0.0
  %610 = vmatmul.mubr.f32.gmra.mrb[0].mxu0 %v246
  %v611 = vpop.f32.mrb[0].mxu0
  %v612 = vadd.f32 %v86, %v611
  %v613 = vpop.f32.mrb[0].mxu0
  %614 = vmatprep.mubr.f32.mxu0 0.0
  %615 = vmatmul.mubr.f32.gmra.mrb[0].mxu0 %v249
  %v616 = vpop.f32.mrb[0].mxu0
  %v617 = vadd.f32 %v86, %v616
  %v618 = vpop.f32.mrb[0].mxu0
  %619 = vmatprep.mubr.f32.mxu0 0.0
  %620 = vmatmul.mubr.f32.gmra.mrb[0].mxu0 %v252
  %v621 = vpop.f32.mrb[0].mxu0
  %v622 = vadd.f32 %v86, %v621
  %v623 = vpop.f32.mrb[0].mxu0
  %624 = vmatprep.mubr.f32.mxu0 0.0
  %625 = vmatmul.mubr.f32.gmra.mrb[0].mxu0 %v255
  %v626 = vpop.f32.mrb[0].mxu0
  %v627 = vadd.f32 %v86, %v626
  %v628 = vpop.f32.mrb[0].mxu0
  %629 = vmatprep.mubr.f32.mxu0 0.0
  %630 = vmatmul.mubr.f32.gmra.mrb[0].mxu0 %v258
  %v631 = vpop.f32.mrb[0].mxu0
  %v632 = vadd.f32 %v86, %v631
  %v633 = vpop.f32.mrb[0].mxu0
  %634 = vmatprep.mubr.f32.mxu0 0.0
  %635 = vmatmul.mubr.f32.gmra.mrb[0].mxu0 %v261
  %v636 = vpop.f32.mrb[0].mxu0
  %v637 = vadd.f32 %v86, %v636
  %v638 = vpop.f32.mrb[0].mxu0
  %639 = vmatprep.mubr.f32.mxu0 0.0
  %640 = vmatmul.mubr.f32.gmra.mrb[0].mxu0 %v264
  %v641 = vpop.f32.mrb[0].mxu0
  %v642 = vadd.f32 %v86, %v641
  %v643 = vpop.f32.mrb[0].mxu0
  %644 = vmatprep.mubr.f32.mxu0 0.0
  %645 = vmatmul.mubr.f32.gmra.mrb[0].mxu0 %v267
  %v646 = vpop.f32.mrb[0].mxu0
  %v647 = vadd.f32 %v86, %v646
  %v648 = vpop.f32.mrb[0].mxu0
  %649 = vmatprep.mubr.f32.mxu0 0.0
  %650 = vmatmul.mubr.f32.gmra.mrb[0].mxu0 %v270
  %v651 = vpop.f32.mrb[0].mxu0
  %v652 = vadd.f32 %v86, %v651
  %v653 = vpop.f32.mrb[0].mxu0
  %654 = vmatprep.mubr.f32.mxu0 0.0
  %655 = vmatmul.mubr.f32.gmra.mrb[0].mxu0 %v273
  %v656 = vpop.f32.mrb[0].mxu0
  %v657 = vadd.f32 %v86, %v656
  %v658 = vpop.f32.mrb[0].mxu0
  %659 = vmatprep.mubr.f32.mxu0 0.0
  %660 = vmatmul.mubr.f32.gmra.mrb[0].mxu0 %v276
  %v661 = vpop.f32.mrb[0].mxu0
  %v662 = vadd.f32 %v86, %v661
  %v663 = vpop.f32.mrb[0].mxu0
  %664 = vmatprep.mubr.f32.mxu0 0.0
  %665 = vmatmul.mubr.f32.gmra.mrb[0].mxu0 %v279
  %v666 = vpop.f32.mrb[0].mxu0
  %v667 = vadd.f32 %v86, %v666
  %v668 = vpop.f32.mrb[0].mxu0
  %669 = vdwg.mxu0
  %vm670 = vcmask 64512
  %671 = vst.msk [vmem:[%s3] sm:$0xff] %vm670, %v352
  %672 = vst.msk [vmem:[%s3 + $0x8] sm:$0xff] %vm670, %v357
  %673 = vst.msk [vmem:[%s3 + $0x10] sm:$0xff] %vm670, %v362
  %674 = vst.msk [vmem:[%s3 + $0x18] sm:$0xff] %vm670, %v367
  %675 = vst.msk [vmem:[%s3 + $0x20] sm:$0xff] %vm670, %v372
  %676 = vst.msk [vmem:[%s3 + $0x28] sm:$0xff] %vm670, %v377
  %677 = vst.msk [vmem:[%s3 + $0x30] sm:$0xff] %vm670, %v382
  %678 = vst.msk [vmem:[%s3 + $0x38] sm:$0xff] %vm670, %v387
  %679 = vst.msk [vmem:[%s3 + $0x40] sm:$0xff] %vm670, %v392
  %680 = vst.msk [vmem:[%s3 + $0x48] sm:$0xff] %vm670, %v397
  %681 = vst.msk [vmem:[%s3 + $0x50] sm:$0xff] %vm670, %v402
  %682 = vst.msk [vmem:[%s3 + $0x58] sm:$0xff] %vm670, %v407
  %683 = vst.msk [vmem:[%s3 + $0x60] sm:$0xff] %vm670, %v412
  %684 = vst.msk [vmem:[%s3 + $0x68] sm:$0xff] %vm670, %v417
  %685 = vst.msk [vmem:[%s3 + $0x70] sm:$0xff] %vm670, %v422
  %686 = vst.msk [vmem:[%s3 + $0x78] sm:$0xff] %vm670, %v427
  %687 = vst.msk [vmem:[%s3 + $0x80] sm:$0xff] %vm670, %v432
  %688 = vst.msk [vmem:[%s3 + $0x88] sm:$0xff] %vm670, %v437
  %689 = vst.msk [vmem:[%s3 + $0x90] sm:$0xff] %vm670, %v442
  %690 = vst.msk [vmem:[%s3 + $0x98] sm:$0xff] %vm670, %v447
  %691 = vst.msk [vmem:[%s3 + $0xa0] sm:$0xff] %vm670, %v452
  %692 = vst.msk [vmem:[%s3 + $0xa8] sm:$0xff] %vm670, %v457
  %693 = vst.msk [vmem:[%s3 + $0xb0] sm:$0xff] %vm670, %v462
  %694 = vst.msk [vmem:[%s3 + $0xb8] sm:$0xff] %vm670, %v467
  %695 = vst.msk [vmem:[%s3 + $0xc0] sm:$0xff] %vm670, %v472
  %696 = vst.msk [vmem:[%s3 + $0xc8] sm:$0xff] %vm670, %v477
  %697 = vst.msk [vmem:[%s3 + $0xd0] sm:$0xff] %vm670, %v482
  %698 = vst.msk [vmem:[%s3 + $0xd8] sm:$0xff] %vm670, %v487
  %699 = vst.msk [vmem:[%s3 + $0xe0] sm:$0xff] %vm670, %v492
  %700 = vst.msk [vmem:[%s3 + $0xe8] sm:$0xff] %vm670, %v497
  %701 = vst.msk [vmem:[%s3 + $0xf0] sm:$0xff] %vm670, %v502
  %702 = vst.msk [vmem:[%s3 + $0xf8] sm:$0xff] %vm670, %v507
  %703 = vst.msk [vmem:[%s3 + $0x100] sm:$0xff] %vm670, %v512
  %704 = vst.msk [vmem:[%s3 + $0x108] sm:$0xff] %vm670, %v517
  %705 = vst.msk [vmem:[%s3 + $0x110] sm:$0xff] %vm670, %v522
  %706 = vst.msk [vmem:[%s3 + $0x118] sm:$0xff] %vm670, %v527
  %707 = vst.msk [vmem:[%s3 + $0x120] sm:$0xff] %vm670, %v532
  %708 = vst.msk [vmem:[%s3 + $0x128] sm:$0xff] %vm670, %v537
  %709 = vst.msk [vmem:[%s3 + $0x130] sm:$0xff] %vm670, %v542
  %710 = vst.msk [vmem:[%s3 + $0x138] sm:$0xff] %vm670, %v547
  %711 = vst.msk [vmem:[%s3 + $0x140] sm:$0xff] %vm670, %v552
  %712 = vst.msk [vmem:[%s3 + $0x148] sm:$0xff] %vm670, %v557
  %713 = vst.msk [vmem:[%s3 + $0x150] sm:$0xff] %vm670, %v562
  %714 = vst.msk [vmem:[%s3 + $0x158] sm:$0xff] %vm670, %v567
  %715 = vst.msk [vmem:[%s3 + $0x160] sm:$0xff] %vm670, %v572
  %716 = vst.msk [vmem:[%s3 + $0x168] sm:$0xff] %vm670, %v577
  %717 = vst.msk [vmem:[%s3 + $0x170] sm:$0xff] %vm670, %v582
  %718 = vst.msk [vmem:[%s3 + $0x178] sm:$0xff] %vm670, %v587
  %719 = vst.msk [vmem:[%s3 + $0x180] sm:$0xff] %vm670, %v592
  %720 = vst.msk [vmem:[%s3 + $0x188] sm:$0xff] %vm670, %v597
  %721 = vst.msk [vmem:[%s3 + $0x190] sm:$0xff] %vm670, %v602
  %722 = vst.msk [vmem:[%s3 + $0x198] sm:$0xff] %vm670, %v607
  %723 = vst.msk [vmem:[%s3 + $0x1a0] sm:$0xff] %vm670, %v612
  %724 = vst.msk [vmem:[%s3 + $0x1a8] sm:$0xff] %vm670, %v617
  %725 = vst.msk [vmem:[%s3 + $0x1b0] sm:$0xff] %vm670, %v622
  %726 = vst.msk [vmem:[%s3 + $0x1b8] sm:$0xff] %vm670, %v627
  %727 = vst.msk [vmem:[%s3 + $0x1c0] sm:$0xff] %vm670, %v632
  %728 = vst.msk [vmem:[%s3 + $0x1c8] sm:$0xff] %vm670, %v637
  %729 = vst.msk [vmem:[%s3 + $0x1d0] sm:$0xff] %vm670, %v642
  %730 = vst.msk [vmem:[%s3 + $0x1d8] sm:$0xff] %vm670, %v647
  %731 = vst.msk [vmem:[%s3 + $0x1e0] sm:$0xff] %vm670, %v652
  %732 = vst.msk [vmem:[%s3 + $0x1e8] sm:$0xff] %vm670, %v657
  %733 = vst.msk [vmem:[%s3 + $0x1f0] sm:$0xff] %vm670, %v662
  %734 = vst.msk [vmem:[%s3 + $0x1f8] sm:$0xff] %vm670, %v667
  // Predicated region
  $region14: #{wavemix_sr_forward.17} parent=0 // pred_check
    _
  $region15: #{wavemix_sr_forward.17} parent=0 // pred_check_branch
    %736 = sbr.rel (0) target = $region17
  $region16: #{wavemix_sr_forward.17} parent=0 // pred_region
    _
  $region17: #{wavemix_sr_forward.17} parent=0 // pred_fallthru
    _
  // Predicated region
  $region18: #{wavemix_sr_forward.17} parent=0 // pred_check
    _
  $region19: #{wavemix_sr_forward.17} parent=0 // pred_check_branch
    %738 = sbr.rel (0) target = $region21
  $region20: #{wavemix_sr_forward.17} parent=0 // pred_region
    _
  $region21: #{wavemix_sr_forward.17} parent=0 // pred_fallthru
    _

</llo_original>
